<compile_context>
chip_gen: v6e
topology: v6e:2x2x1
jax: 0.10.0
libtpu: 0.0.40
codegen_flags: <defaults>
</compile_context>

<pallas_src>
import functools

import jax
import jax.numpy as jnp
from jax.experimental import pallas as pl
from jax.experimental.pallas import tpu as pltpu


def _round_up(x, m):
    return (x + m - 1) // m * m


def _choose_tiling(batch, tile_b=None, max_tile=512):
    """Pick (tile_b, padded_batch).

    tile_b is a multiple of 8 and divides padded_batch.  For large batches we
    use 512-row tiles; for medium batches we split into exactly two tiles so
    v7x's two TensorCores both get work; tiny batches run as a single tile.
    """
    if tile_b is not None:
        tile_b = _round_up(tile_b, 8)
        return tile_b, _round_up(max(batch, tile_b), tile_b)
    bp = _round_up(batch, 8)
    if bp >= 2 * max_tile:
        return max_tile, _round_up(bp, max_tile)
    if bp >= 256:
        t = _round_up(pl.cdiv(bp, 2), 8)       # two tiles, 128..512 rows each
        return t, 2 * t
    return bp, bp                              # small batch: single tile


# ---------------------------------------------------------------------------
# Kernel: one batch tile, all weights VMEM-resident.
# ---------------------------------------------------------------------------
def _vae_kernel(
    x_ref, eps_ref,
    w1_ref, b1_ref, w2_ref, b2_ref, w3_ref, b3_ref,
    w4_ref, b4_ref, w5_ref, b5_ref, w6_ref, b6_ref,
    recon_ref, mulogvar_ref,
    *, z_dim,
):
    f32 = jnp.float32
    bf16 = jnp.bfloat16

    def dense(a, w_ref, b_ref):
        # MXU in bf16, f32 accumulation, f32 bias add.
        return jnp.dot(a.astype(bf16), w_ref[...],
                       preferred_element_type=f32) + b_ref[...]

    # ---- encoder -----------------------------------------------------------
    h = jnp.maximum(dense(x_ref[...], w1_ref, b1_ref), 0.0)      # relu(fc1)
    h = jnp.maximum(dense(h, w2_ref, b2_ref), 0.0)               # relu(fc2)

    # fused fc31 || fc32 -> one lane-dense (TB, 2*z_dim) matmul.
    packed = dense(h, w3_ref, b3_ref)      # [:, :z] = mu, [:, z:] = log_var
    mulogvar_ref[...] = packed             # packed lane-dense f32 output

    # ---- reparameterization on the packed layout ----------------------------
    # Roll log_var into the mu lanes so std lines up with mu / eps (XLU, cheap).
    rolled = pltpu.roll(packed, shift=z_dim, axis=1)
    col = jax.lax.broadcasted_iota(jnp.int32, packed.shape, 1)
    std_like = jnp.exp(jnp.where(col < z_dim, 0.5 * rolled, 0.0))
    # CORRECTNESS NOTE: lanes [0,z): z = mu + eps*std.  Lanes [z,2z) become
    # log_var + eps*1; this is harmless ONLY because (a) eps is zero-padded in
    # lanes [z,2z) by the wrapper and (b) w4's rows [z,2z) are zero-padded, so
    # those lanes never reach the decoder.  Do not drop either pad.
    z_packed = packed + eps_ref[...] * std_like

    # ---- decoder -------------------------------------------------------------
    d = jnp.maximum(dense(z_packed, w4_ref, b4_ref), 0.0)        # relu(fc4)
    d = jnp.maximum(dense(d, w5_ref, b5_ref), 0.0)               # relu(fc5)
    logits = dense(d, w6_ref, b6_ref)                            # fc6
    # sigmoid = 1 / (1 + exp(-x)): exp on EUP, divide via approx-reciprocal
    # (EUP slot) instead of a full-precision f32 VPU divide sequence.
    e = jnp.exp(-logits)
    recon = pl.reciprocal(1.0 + e, approx=True)
    # bf16 store: halves the 896-lane HBM writeback / vst pressure.
    recon_ref[...] = recon.astype(recon_ref.dtype)


# ---------------------------------------------------------------------------
# Wrapper
# ---------------------------------------------------------------------------
def vae_forward(x_nchw, eps, params, *, x_dim, z_dim, tile_b=None):
    """Runs the VAE forward pass. Returns (recon, mu, log_var)."""
    f32, bf16 = jnp.float32, jnp.bfloat16
    batch = x_nchw.shape[0]
    # x.view(-1, 784); cast to bf16 BEFORE padding so the pad pass moves half
    # the bytes (kernel consumes bf16 MXU operands anyway).
    x_flat = x_nchw.reshape(batch, x_dim).astype(bf16)

    xp = _round_up(x_dim, 128)      # 784 -> 896  (lane-dense K for fc1, N for fc6)
    zp = 2 * z_dim                  # packed mu || log_var width (128 for z=64)
    tile_b, bp = _choose_tiling(batch, tile_b)
    n_tiles = bp // tile_b

    h1 = params["w1"].shape[1]
    h2 = params["w2"].shape[1]

    # ---- pack / pad parameters: bf16 weights, f32 biases ---------------------
    w1 = jnp.pad(params["w1"], ((0, xp - x_dim), (0, 0))).astype(bf16)
    b1 = params["b1"].astype(f32)
    w2 = params["w2"].astype(bf16)
    b2 = params["b2"].astype(f32)
    w3 = jnp.concatenate([params["w31"], params["w32"]], axis=1).astype(bf16)
    b3 = jnp.concatenate([params["b31"], params["b32"]], axis=1).astype(f32)
    # fc4 weight zero-padded in rows [z, 2z): kills the stale log_var lanes of
    # the packed reparameterization output (see kernel CORRECTNESS NOTE).
    w4 = jnp.pad(params["w4"], ((0, zp - z_dim), (0, 0))).astype(bf16)
    b4 = params["b4"].astype(f32)
    w5 = params["w5"].astype(bf16)
    b5 = params["b5"].astype(f32)
    w6 = jnp.pad(params["w6"], ((0, 0), (0, xp - x_dim))).astype(bf16)
    b6 = jnp.pad(params["b6"], ((0, 0), (0, xp - x_dim))).astype(f32)
    weights = [w1, b1, w2, b2, w3, b3, w4, b4, w5, b5, w6, b6]

    # ---- pad inputs ----------------------------------------------------------
    x_in = jnp.pad(x_flat, ((0, bp - batch), (0, xp - x_dim)))
    # eps stays f32; zero-padded in lanes [z, 2z) (required, see note above).
    eps_in = jnp.pad(eps.astype(f32), ((0, bp - batch), (0, zp - z_dim)))

    # ---- specs ---------------------------------------------------------------
    def batch_map(i):
        return (i, 0)

    def resident_map(i):        # weights: same block every iteration -> no re-DMA
        return (0, 0)

    in_specs = (
        [pl.BlockSpec((tile_b, xp), batch_map),
         pl.BlockSpec((tile_b, zp), batch_map)]
        + [pl.BlockSpec(w.shape, resident_map) for w in weights]
    )
    out_specs = (
        pl.BlockSpec((tile_b, xp), batch_map),
        pl.BlockSpec((tile_b, zp), batch_map),
    )

    # ---- advisory cost estimate ---------------------------------------------
    flops = 2 * bp * (xp * h1 + h1 * h2 + h2 * zp + zp * h2 + h2 * h1 + h1 * xp)
    # reparam exp (~zp lanes/row) + sigmoid as exp + reciprocal (~2*xp lanes/row)
    transcendentals = bp * (zp + 2 * xp)
    bytes_accessed = (
        x_in.size * 2 + eps_in.size * 4
        + sum(int(w.size) * w.dtype.itemsize for w in weights)
        + bp * xp * 2      # bf16 reconstruction
        + bp * zp * 4      # f32 packed mu || log_var
    )

    recon_pad, mulogvar = pl.pallas_call(
        functools.partial(_vae_kernel, z_dim=z_dim),
        out_shape=(
            jax.ShapeDtypeStruct((bp, xp), bf16),       # padded reconstruction (bf16)
            jax.ShapeDtypeStruct((bp, zp), f32),        # packed mu || log_var
        ),
        grid_spec=pltpu.PrefetchScalarGridSpec(
            num_scalar_prefetch=0,
            grid=(n_tiles,),
            in_specs=in_specs,
            out_specs=out_specs,
        ),
        compiler_params=pltpu.CompilerParams(
            dimension_semantics=("parallel",),
            vmem_limit_bytes=16 << 20,
        ),
        cost_estimate=pl.CostEstimate(
            flops=int(flops),
            transcendentals=int(transcendentals),
            bytes_accessed=int(bytes_accessed),
        ),
    )(x_in, eps_in, *weights)

    # NOTE: these slices are whole-batch HBM copies; fuse into the downstream
    # loss (or consume padded shapes) if this wrapper cost matters.
    recon = recon_pad[:batch, :x_dim]
    mu = mulogvar[:batch, :z_dim]
    log_var = mulogvar[:batch, z_dim:zp]
    return recon, mu, log_var


# ---------------------------------------------------------------------------
# Deterministic parameter construction (PyTorch Linear init, [in,out] layout).
# ---------------------------------------------------------------------------
def init_params(key, x_dim, h_dim1, h_dim2, z_dim):
    def linear(key, fan_in, fan_out):
        kw, kb = jax.random.split(key)
        bound = 1.0 / jnp.sqrt(jnp.float32(fan_in))
        w = jax.random.uniform(kw, (fan_in, fan_out), jnp.float32, -bound, bound)
        b = jax.random.uniform(kb, (1, fan_out), jnp.float32, -bound, bound)
        return w, b

    keys = jax.random.split(key, 7)
    p = {}
    p["w1"], p["b1"] = linear(keys[0], x_dim, h_dim1)     # fc1
    p["w2"], p["b2"] = linear(keys[1], h_dim1, h_dim2)    # fc2
    p["w31"], p["b31"] = linear(keys[2], h_dim2, z_dim)   # fc31 (mu)
    p["w32"], p["b32"] = linear(keys[3], h_dim2, z_dim)   # fc32 (log_var)
    p["w4"], p["b4"] = linear(keys[4], z_dim, h_dim2)     # fc4
    p["w5"], p["b5"] = linear(keys[5], h_dim2, h_dim1)    # fc5
    p["w6"], p["b6"] = linear(keys[6], h_dim1, x_dim)     # fc6
    return p


# ---------------------------------------------------------------------------
# Pure-JAX reference with the same bf16-operand / f32-accumulate matmuls.
# (Intentionally matches the kernel's bf16 MXU quantization; deviation from a
# pure-f32 PyTorch VAE is at the few-1e-3 level and accepted by design.)
# ---------------------------------------------------------------------------
def vae_forward_ref(x_nchw, eps, params, *, x_dim):
    bf16, f32 = jnp.bfloat16, jnp.float32

    def dense(a, w, b):
        return jnp.dot(a.astype(bf16), w.astype(bf16),
                       preferred_element_type=f32) + b

    x = x_nchw.reshape(x_nchw.shape[0], x_dim).astype(f32)
    h = jax.nn.relu(dense(x, params["w1"], params["b1"]))
    h = jax.nn.relu(dense(h, params["w2"], params["b2"]))
    mu = dense(h, params["w31"], params["b31"])
    log_var = dense(h, params["w32"], params["b32"])
    z = eps * jnp.exp(0.5 * log_var) + mu
    d = jax.nn.relu(dense(z, params["w4"], params["b4"]))
    d = jax.nn.relu(dense(d, params["w5"], params["b5"]))
    recon = jax.nn.sigmoid(dense(d, params["w6"], params["b6"]))
    return recon, mu, log_var


if __name__ == "__main__":
    # forward() hardcodes x.view(-1, 784); z_dim=64 so mu||log_var packs to 128.
    X_DIM, H_DIM1, H_DIM2, Z_DIM = 784, 256, 128, 64
    BATCH = 512          # auto-tiling -> two 256-row tiles (exercises the grid)

    key = jax.random.PRNGKey(0)
    k_params, k_x, k_eps = jax.random.split(key, 3)

    params = init_params(k_params, X_DIM, H_DIM1, H_DIM2, Z_DIM)
    x = jax.random.uniform(k_x, (BATCH, 1, 28, 28), jnp.float32)     # MNIST-like NCHW
    eps = jax.random.normal(k_eps, (BATCH, Z_DIM), jnp.float32)      # torch.randn_like

    recon, mu, log_var = vae_forward(x, eps, params, x_dim=X_DIM, z_dim=Z_DIM)
    jax.block_until_ready((recon, mu, log_var))

    r_ref, mu_ref, lv_ref = vae_forward_ref(x, eps, params, x_dim=X_DIM)
    assert recon.shape == (BATCH, X_DIM)
    assert mu.shape == (BATCH, Z_DIM) and log_var.shape == (BATCH, Z_DIM)
    # recon is stored in bf16 and uses approx-reciprocal sigmoid -> 1e-2 tol;
    # mu / log_var are exact f32 outputs of the fused fc31||fc32 matmul.
    assert jnp.allclose(recon.astype(jnp.float32), r_ref, atol=1e-2, rtol=1e-2)
    assert jnp.allclose(mu, mu_ref, atol=5e-3, rtol=5e-3)
    assert jnp.allclose(log_var, lv_ref, atol=5e-3, rtol=5e-3)

    print("KERNEL_OK")
</pallas_src>

<mosaic_0001>
module attributes {stable_mosaic.version = 11 : i64} {
  func.func @_vae_kernel(%arg0: i32, %arg1: memref<256x896xbf16, #tpu.memory_space<vmem>>, %arg2: memref<256x128xf32, #tpu.memory_space<vmem>>, %arg3: memref<896x256xbf16, #tpu.memory_space<vmem>>, %arg4: memref<1x256xf32, #tpu.memory_space<vmem>>, %arg5: memref<256x128xbf16, #tpu.memory_space<vmem>>, %arg6: memref<1x128xf32, #tpu.memory_space<vmem>>, %arg7: memref<128x128xbf16, #tpu.memory_space<vmem>>, %arg8: memref<1x128xf32, #tpu.memory_space<vmem>>, %arg9: memref<128x128xbf16, #tpu.memory_space<vmem>>, %arg10: memref<1x128xf32, #tpu.memory_space<vmem>>, %arg11: memref<128x256xbf16, #tpu.memory_space<vmem>>, %arg12: memref<1x256xf32, #tpu.memory_space<vmem>>, %arg13: memref<256x896xbf16, #tpu.memory_space<vmem>>, %arg14: memref<1x896xf32, #tpu.memory_space<vmem>>, %arg15: memref<256x896xbf16, #tpu.memory_space<vmem>>, %arg16: memref<256x128xf32, #tpu.memory_space<vmem>>) attributes {dimension_semantics = [#tpu.dimension_semantics<parallel>], iteration_bounds = array<i64: 2>, scalar_prefetch = 0 : i64, scratch_operands = 0 : i64, tpu.core_type = #tpu.core_type<tc>, window_params = [{transform_indices = @transform_0, window_bounds = array<i64: 256, 896>}, {transform_indices = @transform_1, window_bounds = array<i64: 256, 128>}, {pipeline_mode = #tpu.pipeline_mode<synchronous>, transform_indices = @transform_2, window_bounds = array<i64: 896, 256>}, {pipeline_mode = #tpu.pipeline_mode<synchronous>, transform_indices = @transform_3, window_bounds = array<i64: 1, 256>}, {pipeline_mode = #tpu.pipeline_mode<synchronous>, transform_indices = @transform_4, window_bounds = array<i64: 256, 128>}, {pipeline_mode = #tpu.pipeline_mode<synchronous>, transform_indices = @transform_5, window_bounds = array<i64: 1, 128>}, {pipeline_mode = #tpu.pipeline_mode<synchronous>, transform_indices = @transform_6, window_bounds = array<i64: 128, 128>}, {pipeline_mode = #tpu.pipeline_mode<synchronous>, transform_indices = @transform_7, window_bounds = array<i64: 1, 128>}, {pipeline_mode = #tpu.pipeline_mode<synchronous>, transform_indices = @transform_8, window_bounds = array<i64: 128, 128>}, {pipeline_mode = #tpu.pipeline_mode<synchronous>, transform_indices = @transform_9, window_bounds = array<i64: 1, 128>}, {pipeline_mode = #tpu.pipeline_mode<synchronous>, transform_indices = @transform_10, window_bounds = array<i64: 128, 256>}, {pipeline_mode = #tpu.pipeline_mode<synchronous>, transform_indices = @transform_11, window_bounds = array<i64: 1, 256>}, {pipeline_mode = #tpu.pipeline_mode<synchronous>, transform_indices = @transform_12, window_bounds = array<i64: 256, 896>}, {pipeline_mode = #tpu.pipeline_mode<synchronous>, transform_indices = @transform_13, window_bounds = array<i64: 1, 896>}, {transform_indices = @transform_14, window_bounds = array<i64: 256, 896>}, {transform_indices = @transform_15, window_bounds = array<i64: 256, 128>}]} {
    %c0 = arith.constant 0 : index
    %c0_0 = arith.constant 0 : index
    %0 = vector.load %arg1[%c0, %c0_0] : memref<256x896xbf16, #tpu.memory_space<vmem>>, vector<256x896xbf16>
    %c0_1 = arith.constant 0 : index
    %c0_2 = arith.constant 0 : index
    %1 = vector.load %arg3[%c0_1, %c0_2] : memref<896x256xbf16, #tpu.memory_space<vmem>>, vector<896x256xbf16>
    %cst = arith.constant dense<0.000000e+00> : vector<256x256xf32>
    %2 = tpu.matmul %0, %1, %cst {dimension_numbers = #tpu.dot_dimension_numbers<[1], [0], [0], [1], [0, 0, 1, 1], [], []>} : vector<256x896xbf16>, vector<896x256xbf16>, vector<256x256xf32> -> vector<256x256xf32>
    %c0_3 = arith.constant 0 : index
    %c0_4 = arith.constant 0 : index
    %3 = vector.load %arg4[%c0_3, %c0_4] : memref<1x256xf32, #tpu.memory_space<vmem>>, vector<1x256xf32>
    %4 = vector.broadcast %3 : vector<1x256xf32> to vector<256x256xf32>
    %5 = arith.addf %2, %4 : vector<256x256xf32>
    %cst_5 = arith.constant 0.000000e+00 : f32
    %6 = vector.broadcast %cst_5 : f32 to vector<256x256xf32>
    %7 = arith.maximumf %5, %6 : vector<256x256xf32>
    %8 = arith.truncf %7 : vector<256x256xf32> to vector<256x256xbf16>
    %c0_6 = arith.constant 0 : index
    %c0_7 = arith.constant 0 : index
    %9 = vector.load %arg5[%c0_6, %c0_7] : memref<256x128xbf16, #tpu.memory_space<vmem>>, vector<256x128xbf16>
    %cst_8 = arith.constant dense<0.000000e+00> : vector<256x128xf32>
    %10 = tpu.matmul %8, %9, %cst_8 {dimension_numbers = #tpu.dot_dimension_numbers<[1], [0], [0], [1], [0, 0, 1, 1], [], []>} : vector<256x256xbf16>, vector<256x128xbf16>, vector<256x128xf32> -> vector<256x128xf32>
    %c0_9 = arith.constant 0 : index
    %c0_10 = arith.constant 0 : index
    %11 = vector.load %arg6[%c0_9, %c0_10] : memref<1x128xf32, #tpu.memory_space<vmem>>, vector<1x128xf32>
    %12 = vector.broadcast %11 : vector<1x128xf32> to vector<256x128xf32>
    %13 = arith.addf %10, %12 : vector<256x128xf32>
    %cst_11 = arith.constant 0.000000e+00 : f32
    %14 = vector.broadcast %cst_11 : f32 to vector<256x128xf32>
    %15 = arith.maximumf %13, %14 : vector<256x128xf32>
    %16 = arith.truncf %15 : vector<256x128xf32> to vector<256x128xbf16>
    %c0_12 = arith.constant 0 : index
    %c0_13 = arith.constant 0 : index
    %17 = vector.load %arg7[%c0_12, %c0_13] : memref<128x128xbf16, #tpu.memory_space<vmem>>, vector<128x128xbf16>
    %cst_14 = arith.constant dense<0.000000e+00> : vector<256x128xf32>
    %18 = tpu.matmul %16, %17, %cst_14 {dimension_numbers = #tpu.dot_dimension_numbers<[1], [0], [0], [1], [0, 0, 1, 1], [], []>} : vector<256x128xbf16>, vector<128x128xbf16>, vector<256x128xf32> -> vector<256x128xf32>
    %c0_15 = arith.constant 0 : index
    %c0_16 = arith.constant 0 : index
    %19 = vector.load %arg8[%c0_15, %c0_16] : memref<1x128xf32, #tpu.memory_space<vmem>>, vector<1x128xf32>
    %20 = vector.broadcast %19 : vector<1x128xf32> to vector<256x128xf32>
    %21 = arith.addf %18, %20 : vector<256x128xf32>
    %c0_17 = arith.constant 0 : index
    %c0_18 = arith.constant 0 : index
    %22 = vector.load %arg16[%c0_17, %c0_18] : memref<256x128xf32, #tpu.memory_space<vmem>>, vector<256x128xf32>
    tpu.vector_store %arg16[%c0_17, %c0_18], %21 {strides = array<i32>} : memref<256x128xf32, #tpu.memory_space<vmem>>, vector<256x128xf32>,
    %c64_i32 = arith.constant 64 : i32
    %23 = tpu.dynamic_rotate %21 by %c64_i32 dim 1 : vector<256x128xf32>, i32 -> vector<256x128xf32>
    %24 = tpu.iota {dimensions = array<i32: 1>} : vector<256x128xi32>
    %c64_i32_19 = arith.constant 64 : i32
    %25 = vector.broadcast %c64_i32_19 : i32 to vector<256x128xi32>
    %26 = arith.cmpi slt, %24, %25 : vector<256x128xi32>
    %cst_20 = arith.constant 5.000000e-01 : f32
    %27 = vector.broadcast %cst_20 : f32 to vector<256x128xf32>
    %28 = arith.mulf %27, %23 : vector<256x128xf32>
    %cst_21 = arith.constant 0.000000e+00 : f32
    %29 = vector.broadcast %cst_21 : f32 to vector<256x128xf32>
    %30 = arith.select %26, %28, %29 : vector<256x128xi1>, vector<256x128xf32>
    %31 = math.exp %30 : vector<256x128xf32>
    %c0_22 = arith.constant 0 : index
    %c0_23 = arith.constant 0 : index
    %32 = vector.load %arg2[%c0_22, %c0_23] : memref<256x128xf32, #tpu.memory_space<vmem>>, vector<256x128xf32>
    %33 = arith.mulf %32, %31 : vector<256x128xf32>
    %34 = arith.addf %21, %33 : vector<256x128xf32>
    %35 = arith.truncf %34 : vector<256x128xf32> to vector<256x128xbf16>
    %c0_24 = arith.constant 0 : index
    %c0_25 = arith.constant 0 : index
    %36 = vector.load %arg9[%c0_24, %c0_25] : memref<128x128xbf16, #tpu.memory_space<vmem>>, vector<128x128xbf16>
    %cst_26 = arith.constant dense<0.000000e+00> : vector<256x128xf32>
    %37 = tpu.matmul %35, %36, %cst_26 {dimension_numbers = #tpu.dot_dimension_numbers<[1], [0], [0], [1], [0, 0, 1, 1], [], []>} : vector<256x128xbf16>, vector<128x128xbf16>, vector<256x128xf32> -> vector<256x128xf32>
    %c0_27 = arith.constant 0 : index
    %c0_28 = arith.constant 0 : index
    %38 = vector.load %arg10[%c0_27, %c0_28] : memref<1x128xf32, #tpu.memory_space<vmem>>, vector<1x128xf32>
    %39 = vector.broadcast %38 : vector<1x128xf32> to vector<256x128xf32>
    %40 = arith.addf %37, %39 : vector<256x128xf32>
    %cst_29 = arith.constant 0.000000e+00 : f32
    %41 = vector.broadcast %cst_29 : f32 to vector<256x128xf32>
    %42 = arith.maximumf %40, %41 : vector<256x128xf32>
    %43 = arith.truncf %42 : vector<256x128xf32> to vector<256x128xbf16>
    %c0_30 = arith.constant 0 : index
    %c0_31 = arith.constant 0 : index
    %44 = vector.load %arg11[%c0_30, %c0_31] : memref<128x256xbf16, #tpu.memory_space<vmem>>, vector<128x256xbf16>
    %cst_32 = arith.constant dense<0.000000e+00> : vector<256x256xf32>
    %45 = tpu.matmul %43, %44, %cst_32 {dimension_numbers = #tpu.dot_dimension_numbers<[1], [0], [0], [1], [0, 0, 1, 1], [], []>} : vector<256x128xbf16>, vector<128x256xbf16>, vector<256x256xf32> -> vector<256x256xf32>
    %c0_33 = arith.constant 0 : index
    %c0_34 = arith.constant 0 : index
    %46 = vector.load %arg12[%c0_33, %c0_34] : memref<1x256xf32, #tpu.memory_space<vmem>>, vector<1x256xf32>
    %47 = vector.broadcast %46 : vector<1x256xf32> to vector<256x256xf32>
    %48 = arith.addf %45, %47 : vector<256x256xf32>
    %cst_35 = arith.constant 0.000000e+00 : f32
    %49 = vector.broadcast %cst_35 : f32 to vector<256x256xf32>
    %50 = arith.maximumf %48, %49 : vector<256x256xf32>
    %51 = arith.truncf %50 : vector<256x256xf32> to vector<256x256xbf16>
    %c0_36 = arith.constant 0 : index
    %c0_37 = arith.constant 0 : index
    %52 = vector.load %arg13[%c0_36, %c0_37] : memref<256x896xbf16, #tpu.memory_space<vmem>>, vector<256x896xbf16>
    %cst_38 = arith.constant dense<0.000000e+00> : vector<256x896xf32>
    %53 = tpu.matmul %51, %52, %cst_38 {dimension_numbers = #tpu.dot_dimension_numbers<[1], [0], [0], [1], [0, 0, 1, 1], [], []>} : vector<256x256xbf16>, vector<256x896xbf16>, vector<256x896xf32> -> vector<256x896xf32>
    %c0_39 = arith.constant 0 : index
    %c0_40 = arith.constant 0 : index
    %54 = vector.load %arg14[%c0_39, %c0_40] : memref<1x896xf32, #tpu.memory_space<vmem>>, vector<1x896xf32>
    %55 = vector.broadcast %54 : vector<1x896xf32> to vector<256x896xf32>
    %56 = arith.addf %53, %55 : vector<256x896xf32>
    %cst_41 = arith.constant 0.000000e+00 : f32
    %57 = vector.broadcast %cst_41 : f32 to vector<256x896xf32>
    %58 = arith.subf %57, %56 : vector<256x896xf32>
    %59 = math.exp %58 : vector<256x896xf32>
    %cst_42 = arith.constant 1.000000e+00 : f32
    %60 = vector.broadcast %cst_42 : f32 to vector<256x896xf32>
    %61 = arith.addf %60, %59 : vector<256x896xf32>
    %62 = tpu.reciprocal %61 {approx = true} : vector<256x896xf32> -> vector<256x896xf32>
    %63 = arith.truncf %62 : vector<256x896xf32> to vector<256x896xbf16>
    %c0_43 = arith.constant 0 : index
    %c0_44 = arith.constant 0 : index
    %64 = vector.load %arg15[%c0_43, %c0_44] : memref<256x896xbf16, #tpu.memory_space<vmem>>, vector<256x896xbf16>
    tpu.vector_store %arg15[%c0_43, %c0_44], %63 {strides = array<i32>} : memref<256x896xbf16, #tpu.memory_space<vmem>>, vector<256x896xbf16>,
    return
  }
  func.func @transform_0(%arg0: i32) -> (i32, i32) {
    %c0_i32 = arith.constant 0 : i32
    %c0_i32_0 = arith.constant 0 : i32
    return %arg0, %c0_i32 : i32, i32
  }
  func.func @transform_1(%arg0: i32) -> (i32, i32) {
    %c0_i32 = arith.constant 0 : i32
    %c0_i32_0 = arith.constant 0 : i32
    return %arg0, %c0_i32 : i32, i32
  }
  func.func @transform_2(%arg0: i32) -> (i32, i32) {
    %c0_i32 = arith.constant 0 : i32
    %c0_i32_0 = arith.constant 0 : i32
    %c0_i32_1 = arith.constant 0 : i32
    return %c0_i32, %c0_i32_0 : i32, i32
  }
  func.func @transform_3(%arg0: i32) -> (i32, i32) {
    %c0_i32 = arith.constant 0 : i32
    %c0_i32_0 = arith.constant 0 : i32
    %c0_i32_1 = arith.constant 0 : i32
    return %c0_i32, %c0_i32_0 : i32, i32
  }
  func.func @transform_4(%arg0: i32) -> (i32, i32) {
    %c0_i32 = arith.constant 0 : i32
    %c0_i32_0 = arith.constant 0 : i32
    %c0_i32_1 = arith.constant 0 : i32
    return %c0_i32, %c0_i32_0 : i32, i32
  }
  func.func @transform_5(%arg0: i32) -> (i32, i32) {
    %c0_i32 = arith.constant 0 : i32
    %c0_i32_0 = arith.constant 0 : i32
    %c0_i32_1 = arith.constant 0 : i32
    return %c0_i32, %c0_i32_0 : i32, i32
  }
  func.func @transform_6(%arg0: i32) -> (i32, i32) {
    %c0_i32 = arith.constant 0 : i32
    %c0_i32_0 = arith.constant 0 : i32
    %c0_i32_1 = arith.constant 0 : i32
    return %c0_i32, %c0_i32_0 : i32, i32
  }
  func.func @transform_7(%arg0: i32) -> (i32, i32) {
    %c0_i32 = arith.constant 0 : i32
    %c0_i32_0 = arith.constant 0 : i32
    %c0_i32_1 = arith.constant 0 : i32
    return %c0_i32, %c0_i32_0 : i32, i32
  }
  func.func @transform_8(%arg0: i32) -> (i32, i32) {
    %c0_i32 = arith.constant 0 : i32
    %c0_i32_0 = arith.constant 0 : i32
    %c0_i32_1 = arith.constant 0 : i32
    return %c0_i32, %c0_i32_0 : i32, i32
  }
  func.func @transform_9(%arg0: i32) -> (i32, i32) {
    %c0_i32 = arith.constant 0 : i32
    %c0_i32_0 = arith.constant 0 : i32
    %c0_i32_1 = arith.constant 0 : i32
    return %c0_i32, %c0_i32_0 : i32, i32
  }
  func.func @transform_10(%arg0: i32) -> (i32, i32) {
    %c0_i32 = arith.constant 0 : i32
    %c0_i32_0 = arith.constant 0 : i32
    %c0_i32_1 = arith.constant 0 : i32
    return %c0_i32, %c0_i32_0 : i32, i32
  }
  func.func @transform_11(%arg0: i32) -> (i32, i32) {
    %c0_i32 = arith.constant 0 : i32
    %c0_i32_0 = arith.constant 0 : i32
    %c0_i32_1 = arith.constant 0 : i32
    return %c0_i32, %c0_i32_0 : i32, i32
  }
  func.func @transform_12(%arg0: i32) -> (i32, i32) {
    %c0_i32 = arith.constant 0 : i32
    %c0_i32_0 = arith.constant 0 : i32
    %c0_i32_1 = arith.constant 0 : i32
    return %c0_i32, %c0_i32_0 : i32, i32
  }
  func.func @transform_13(%arg0: i32) -> (i32, i32) {
    %c0_i32 = arith.constant 0 : i32
    %c0_i32_0 = arith.constant 0 : i32
    %c0_i32_1 = arith.constant 0 : i32
    return %c0_i32, %c0_i32_0 : i32, i32
  }
  func.func @transform_14(%arg0: i32) -> (i32, i32) {
    %c0_i32 = arith.constant 0 : i32
    %c0_i32_0 = arith.constant 0 : i32
    return %arg0, %c0_i32 : i32, i32
  }
  func.func @transform_15(%arg0: i32) -> (i32, i32) {
    %c0_i32 = arith.constant 0 : i32
    %c0_i32_0 = arith.constant 0 : i32
    return %arg0, %c0_i32 : i32, i32
  }
}

</mosaic_0001>

<llo_original>
// kernel: tpu_custom_call.1
$region0: #{tpu_custom_call.1}
  #allocation0 [shape = 'u32[]', space=smem, size = 0x4, offset = 0x4, fixed_abs, tag = 'smem constant byte address 0x4 - core index']
  #allocation1 [shape = 'u32[144,128]{1,0:T(1,128)}', space=vmem, size = 0x12000, scoped, tag = 'internal scratch']
  %s0 = inlined_call_operand.hbm [shape: bf16[512,896], index: 0, kind: input, shape index: {}]
  %s1 = inlined_call_operand.hbm [shape: f32[512,128], index: 1, kind: input, shape index: {}]
  %s2 = inlined_call_operand.hbm [shape: bf16[896,256], index: 2, kind: input, shape index: {}]
  %s3 = inlined_call_operand.vmem [shape: f32[1,256], index: 3, kind: input, shape index: {}]
  %s4 = inlined_call_operand.hbm [shape: bf16[256,128], index: 4, kind: input, shape index: {}]
  %s5 = inlined_call_operand.vmem [shape: f32[1,128], index: 5, kind: input, shape index: {}]
  %s6 = inlined_call_operand.hbm [shape: bf16[128,128], index: 6, kind: input, shape index: {}]
  %s7 = inlined_call_operand.vmem [shape: f32[1,128], index: 7, kind: input, shape index: {}]
  %s8 = inlined_call_operand.hbm [shape: bf16[128,128], index: 8, kind: input, shape index: {}]
  %s9 = inlined_call_operand.vmem [shape: f32[1,128], index: 9, kind: input, shape index: {}]
  %s10 = inlined_call_operand.hbm [shape: bf16[128,256], index: 10, kind: input, shape index: {}]
  %s11 = inlined_call_operand.vmem [shape: f32[1,256], index: 11, kind: input, shape index: {}]
  %s12 = inlined_call_operand.hbm [shape: bf16[256,896], index: 12, kind: input, shape index: {}]
  %s13 = inlined_call_operand.vmem [shape: f32[1,896], index: 13, kind: input, shape index: {}]
  %s14 = inlined_call_operand.hbm [shape: bf16[512,896], index: 14, kind: output, shape index: {0}]
  %s15 = inlined_call_operand.hbm [shape: f32[512,128], index: 15, kind: output, shape index: {1}]
  %16 = xla_tuple %s14, %s15
  %s17 = sld [smem:[#allocation0]]
  $region129: #{tpu_custom_call.1} parent=0
    _
  %s19 = ssub.s32 1, %s17
  %s20 = scalar_select 0, %s19, %s17
  $region1: #{tpu_custom_call.1} parent=0
    #allocation2 [shape = 'u8[917504]{0}', space=vmem, size = 0xe0000, scoped, tag = 'input window, operand 0']
    #allocation3 [shape = 's32[2]{0}', space=sflag, size = 0x8, scoped, tag = 'scoped memory for tpu_custom_call.1']
    #allocation4 [shape = 's32[2]{0}', space=sflag, size = 0x8, scoped, tag = 'scoped memory for tpu_custom_call.1']
    #allocation5 [shape = 'u8[262144]{0}', space=vmem, size = 0x40000, scoped, tag = 'input window, operand 1']
    #allocation6 [shape = 's32[2]{0}', space=sflag, size = 0x8, scoped, tag = 'scoped memory for tpu_custom_call.1']
    #allocation7 [shape = 'u8[458752]{0}', space=vmem, size = 0x70000, scoped, tag = 'input window, operand 2, single buffered']
    #allocation8 [shape = 'u8[65536]{0}', space=vmem, size = 0x10000, scoped, tag = 'input window, operand 4, single buffered']
    #allocation9 [shape = 's32[1]{0}', space=sflag, size = 0x4, scoped, tag = 'scoped memory for tpu_custom_call.1']
    #allocation10 [shape = 'u8[32768]{0}', space=vmem, size = 0x8000, scoped, tag = 'input window, operand 6, single buffered']
    #allocation11 [shape = 'u8[32768]{0}', space=vmem, size = 0x8000, scoped, tag = 'input window, operand 8, single buffered']
    #allocation12 [shape = 's32[1]{0}', space=sflag, size = 0x4, scoped, tag = 'scoped memory for tpu_custom_call.1']
    #allocation13 [shape = 'u8[65536]{0}', space=vmem, size = 0x10000, scoped, tag = 'input window, operand 10, single buffered']
    #allocation14 [shape = 'u8[458752]{0}', space=vmem, size = 0x70000, scoped, tag = 'input window, operand 12, single buffered']
    #allocation15 [shape = 's32[1]{0}', space=sflag, size = 0x4, scoped, tag = 'scoped memory for tpu_custom_call.1']
    #allocation16 [shape = 'u8[917504]{0}', space=vmem, size = 0xe0000, scoped, tag = 'output window, operand 0']
    #allocation17 [shape = 'u8[262144]{0}', space=vmem, size = 0x40000, scoped, tag = 'output window, operand 1']
    #allocation18 [shape = 's32[2]{0}', space=sflag, size = 0x8, scoped, tag = 'scoped memory for tpu_custom_call.1']
    %21 = vsyncpa [#allocation3], 0
    %s22 = scalar_lea.sflag [#allocation3], 1
    %23 = vsyncpa %s22, 0
    %24 = vsyncpa [#allocation6], 0
    %s25 = scalar_lea.sflag [#allocation6], 1
    %26 = vsyncpa %s25, 0
    %27 = vsyncpa [#allocation9], 0
    %28 = vsyncpa [#allocation12], 0
    %29 = vsyncpa [#allocation15], 0
    %30 = vsyncpa [#allocation4], 0
    %s31 = scalar_lea.sflag [#allocation4], 1
    %32 = vsyncpa %s31, 0
    %33 = vsyncpa [#allocation18], 0
    %s34 = scalar_lea.sflag [#allocation18], 1
    %35 = vsyncpa %s34, 0
    loop: start=0, step=1, limit=4
    $region2: #{tpu_custom_call.1} parent=1 // loop_pre_header
      _
    $region3: #{tpu_custom_call.1} parent=1 // loop_header
      %s37 = sphi 0, %s41
      %p38 = scmp.ge.s32.totalorder %s37, 4
      %s47 = sphi 0, %s49
      %s50 = sphi 0, %s47
      %s51 = sphi 0, %s50
      %s67 = sphi 0, %s51
      %s73 = sphi 0, %s75
      %s76 = sphi 0, %s73
      %s77 = sphi 0, %s76
      %s93 = sphi 0, %s77
      %s97 = sphi 0, %s97
      %s99 = sphi 0, %s97
      %s100 = sphi 0, %s99
      %s114 = sphi 0, %s100
      %s118 = sphi 0, %s118
      %s120 = sphi 0, %s118
      %s121 = sphi 0, %s120
      %s135 = sphi 0, %s121
      %s139 = sphi 0, %s139
      %s141 = sphi 0, %s139
      %s142 = sphi 0, %s141
      %s156 = sphi 0, %s142
      %s160 = sphi 0, %s160
      %s162 = sphi 0, %s160
      %s163 = sphi 0, %s162
      %s177 = sphi 0, %s163
      %s181 = sphi 0, %s181
      %s183 = sphi 0, %s181
      %s184 = sphi 0, %s183
      %s198 = sphi 0, %s184
      %s202 = sphi 0, %s202
      %s204 = sphi 0, %s202
      %s205 = sphi 0, %s204
      %s219 = sphi 0, %s205
      %s223 = sphi 0, %s223
      %s225 = sphi 0, %s223
      %s226 = sphi 0, %s225
      %s240 = sphi 0, %s226
      %s244 = sphi 0, %s244
      %s246 = sphi 0, %s244
      %s247 = sphi 0, %s246
      %s261 = sphi 0, %s247
      %s265 = sphi 0, %s265
      %s267 = sphi 0, %s265
      %s268 = sphi 0, %s267
      %s282 = sphi 0, %s268
      %s286 = sphi 0, %s286
      %s288 = sphi 0, %s286
      %s289 = sphi 0, %s288
      %s303 = sphi 0, %s289
      %s307 = sphi 0, %s307
      %s309 = sphi 0, %s307
      %s310 = sphi 0, %s309
      %s324 = sphi 0, %s310
      %s328 = sphi 0, %s328
      %s330 = sphi 0, %s328
      %s331 = sphi 0, %s330
      %s345 = sphi 0, %s331
      %s351 = sphi 0, %s353
      %s354 = sphi 0, %s351
      %s355 = sphi 0, %s354
      %s371 = sphi 0, %s355
      %s377 = sphi 0, %s379
      %s380 = sphi 0, %s377
      %s381 = sphi 0, %s380
      %s397 = sphi 0, %s381
    $region4: #{tpu_custom_call.1} parent=1 // loop_header_branch
      %40 = sbr.rel (%p38) target = $region8
    $region5: #{tpu_custom_call.1} parent=1 // loop_body
      %s42 = ssub.s32 %s37, 1
      %s43 = ssub.s32 %s37, 2
      %s44 = sadd.s32 %s37, 1
      %s45 = ssub.s32 %s37, %s44
      %p46 = scmp.eq.s32.totalorder %s45, 0
      %s48 = sadd.s32 %s47, 1
      %s49 = scalar_select %p46, %s47, %s48
      %p52 = pneg %p46
      %p53 = scmp.eq.s32.totalorder %s37, 1
      %p54 = por %p52, %p53
      %p55 = scmp.ne.s32.totalorder %s47, %s50
      %p56 = scmp.eq.s32.totalorder %s37, 0
      %p57 = por %p55, %p56
      %p58 = scmp.ne.s32.totalorder %s47, %s50
      %p59 = scmp.eq.s32.totalorder %s42, 1
      %p60 = por %p58, %p59
      %p61 = scmp.ne.s32.totalorder %s50, %s51
      %p62 = scmp.eq.s32.totalorder %s42, 0
      %p63 = por %p61, %p62
      %p64 = scmp.ne.s32.totalorder %s50, %s51
      %p65 = scmp.eq.s32.totalorder %s43, 1
      %p66 = por %p64, %p65
      %p68 = scmp.ne.s32.totalorder %s51, %s67
      %p69 = scmp.eq.s32.totalorder %s43, 0
      %p70 = por %p68, %p69
      %s71 = ssub.s32 %s37, %s44
      %p72 = scmp.eq.s32.totalorder %s71, 0
      %s74 = sadd.s32 %s73, 1
      %s75 = scalar_select %p72, %s73, %s74
      %p78 = pneg %p72
      %p79 = scmp.eq.s32.totalorder %s37, 1
      %p80 = por %p78, %p79
      %p81 = scmp.ne.s32.totalorder %s73, %s76
      %p82 = scmp.eq.s32.totalorder %s37, 0
      %p83 = por %p81, %p82
      %p84 = scmp.ne.s32.totalorder %s73, %s76
      %p85 = scmp.eq.s32.totalorder %s42, 1
      %p86 = por %p84, %p85
      %p87 = scmp.ne.s32.totalorder %s76, %s77
      %p88 = scmp.eq.s32.totalorder %s42, 0
      %p89 = por %p87, %p88
      %p90 = scmp.ne.s32.totalorder %s76, %s77
      %p91 = scmp.eq.s32.totalorder %s43, 1
      %p92 = por %p90, %p91
      %p94 = scmp.ne.s32.totalorder %s77, %s93
      %p95 = scmp.eq.s32.totalorder %s43, 0
      %p96 = por %p94, %p95
      %s98 = sadd.s32 %s97, 1
      %p101 = scmp.eq.s32.totalorder %s37, 1
      %p102 = scmp.ne.s32.totalorder %s97, %s99
      %p103 = scmp.eq.s32.totalorder %s37, 0
      %p104 = por %p102, %p103
      %p105 = scmp.ne.s32.totalorder %s97, %s99
      %p106 = scmp.eq.s32.totalorder %s42, 1
      %p107 = por %p105, %p106
      %p108 = scmp.ne.s32.totalorder %s99, %s100
      %p109 = scmp.eq.s32.totalorder %s42, 0
      %p110 = por %p108, %p109
      %p111 = scmp.ne.s32.totalorder %s99, %s100
      %p112 = scmp.eq.s32.totalorder %s43, 1
      %p113 = por %p111, %p112
      %p115 = scmp.ne.s32.totalorder %s100, %s114
      %p116 = scmp.eq.s32.totalorder %s43, 0
      %p117 = por %p115, %p116
      %s119 = sadd.s32 %s118, 1
      %p122 = scmp.eq.s32.totalorder %s37, 1
      %p123 = scmp.ne.s32.totalorder %s118, %s120
      %p124 = scmp.eq.s32.totalorder %s37, 0
      %p125 = por %p123, %p124
      %p126 = scmp.ne.s32.totalorder %s118, %s120
      %p127 = scmp.eq.s32.totalorder %s42, 1
      %p128 = por %p126, %p127
      %p129 = scmp.ne.s32.totalorder %s120, %s121
      %p130 = scmp.eq.s32.totalorder %s42, 0
      %p131 = por %p129, %p130
      %p132 = scmp.ne.s32.totalorder %s120, %s121
      %p133 = scmp.eq.s32.totalorder %s43, 1
      %p134 = por %p132, %p133
      %p136 = scmp.ne.s32.totalorder %s121, %s135
      %p137 = scmp.eq.s32.totalorder %s43, 0
      %p138 = por %p136, %p137
      %s140 = sadd.s32 %s139, 1
      %p143 = scmp.eq.s32.totalorder %s37, 1
      %p144 = scmp.ne.s32.totalorder %s139, %s141
      %p145 = scmp.eq.s32.totalorder %s37, 0
      %p146 = por %p144, %p145
      %p147 = scmp.ne.s32.totalorder %s139, %s141
      %p148 = scmp.eq.s32.totalorder %s42, 1
      %p149 = por %p147, %p148
      %p150 = scmp.ne.s32.totalorder %s141, %s142
      %p151 = scmp.eq.s32.totalorder %s42, 0
      %p152 = por %p150, %p151
      %p153 = scmp.ne.s32.totalorder %s141, %s142
      %p154 = scmp.eq.s32.totalorder %s43, 1
      %p155 = por %p153, %p154
      %p157 = scmp.ne.s32.totalorder %s142, %s156
      %p158 = scmp.eq.s32.totalorder %s43, 0
      %p159 = por %p157, %p158
      %s161 = sadd.s32 %s160, 1
      %p164 = scmp.eq.s32.totalorder %s37, 1
      %p165 = scmp.ne.s32.totalorder %s160, %s162
      %p166 = scmp.eq.s32.totalorder %s37, 0
      %p167 = por %p165, %p166
      %p168 = scmp.ne.s32.totalorder %s160, %s162
      %p169 = scmp.eq.s32.totalorder %s42, 1
      %p170 = por %p168, %p169
      %p171 = scmp.ne.s32.totalorder %s162, %s163
      %p172 = scmp.eq.s32.totalorder %s42, 0
      %p173 = por %p171, %p172
      %p174 = scmp.ne.s32.totalorder %s162, %s163
      %p175 = scmp.eq.s32.totalorder %s43, 1
      %p176 = por %p174, %p175
      %p178 = scmp.ne.s32.totalorder %s163, %s177
      %p179 = scmp.eq.s32.totalorder %s43, 0
      %p180 = por %p178, %p179
      %s182 = sadd.s32 %s181, 1
      %p185 = scmp.eq.s32.totalorder %s37, 1
      %p186 = scmp.ne.s32.totalorder %s181, %s183
      %p187 = scmp.eq.s32.totalorder %s37, 0
      %p188 = por %p186, %p187
      %p189 = scmp.ne.s32.totalorder %s181, %s183
      %p190 = scmp.eq.s32.totalorder %s42, 1
      %p191 = por %p189, %p190
      %p192 = scmp.ne.s32.totalorder %s183, %s184
      %p193 = scmp.eq.s32.totalorder %s42, 0
      %p194 = por %p192, %p193
      %p195 = scmp.ne.s32.totalorder %s183, %s184
      %p196 = scmp.eq.s32.totalorder %s43, 1
      %p197 = por %p195, %p196
      %p199 = scmp.ne.s32.totalorder %s184, %s198
      %p200 = scmp.eq.s32.totalorder %s43, 0
      %p201 = por %p199, %p200
      %s203 = sadd.s32 %s202, 1
      %p206 = scmp.eq.s32.totalorder %s37, 1
      %p207 = scmp.ne.s32.totalorder %s202, %s204
      %p208 = scmp.eq.s32.totalorder %s37, 0
      %p209 = por %p207, %p208
      %p210 = scmp.ne.s32.totalorder %s202, %s204
      %p211 = scmp.eq.s32.totalorder %s42, 1
      %p212 = por %p210, %p211
      %p213 = scmp.ne.s32.totalorder %s204, %s205
      %p214 = scmp.eq.s32.totalorder %s42, 0
      %p215 = por %p213, %p214
      %p216 = scmp.ne.s32.totalorder %s204, %s205
      %p217 = scmp.eq.s32.totalorder %s43, 1
      %p218 = por %p216, %p217
      %p220 = scmp.ne.s32.totalorder %s205, %s219
      %p221 = scmp.eq.s32.totalorder %s43, 0
      %p222 = por %p220, %p221
      %s224 = sadd.s32 %s223, 1
      %p227 = scmp.eq.s32.totalorder %s37, 1
      %p228 = scmp.ne.s32.totalorder %s223, %s225
      %p229 = scmp.eq.s32.totalorder %s37, 0
      %p230 = por %p228, %p229
      %p231 = scmp.ne.s32.totalorder %s223, %s225
      %p232 = scmp.eq.s32.totalorder %s42, 1
      %p233 = por %p231, %p232
      %p234 = scmp.ne.s32.totalorder %s225, %s226
      %p235 = scmp.eq.s32.totalorder %s42, 0
      %p236 = por %p234, %p235
      %p237 = scmp.ne.s32.totalorder %s225, %s226
      %p238 = scmp.eq.s32.totalorder %s43, 1
      %p239 = por %p237, %p238
      %p241 = scmp.ne.s32.totalorder %s226, %s240
      %p242 = scmp.eq.s32.totalorder %s43, 0
      %p243 = por %p241, %p242
      %s245 = sadd.s32 %s244, 1
      %p248 = scmp.eq.s32.totalorder %s37, 1
      %p249 = scmp.ne.s32.totalorder %s244, %s246
      %p250 = scmp.eq.s32.totalorder %s37, 0
      %p251 = por %p249, %p250
      %p252 = scmp.ne.s32.totalorder %s244, %s246
      %p253 = scmp.eq.s32.totalorder %s42, 1
      %p254 = por %p252, %p253
      %p255 = scmp.ne.s32.totalorder %s246, %s247
      %p256 = scmp.eq.s32.totalorder %s42, 0
      %p257 = por %p255, %p256
      %p258 = scmp.ne.s32.totalorder %s246, %s247
      %p259 = scmp.eq.s32.totalorder %s43, 1
      %p260 = por %p258, %p259
      %p262 = scmp.ne.s32.totalorder %s247, %s261
      %p263 = scmp.eq.s32.totalorder %s43, 0
      %p264 = por %p262, %p263
      %s266 = sadd.s32 %s265, 1
      %p269 = scmp.eq.s32.totalorder %s37, 1
      %p270 = scmp.ne.s32.totalorder %s265, %s267
      %p271 = scmp.eq.s32.totalorder %s37, 0
      %p272 = por %p270, %p271
      %p273 = scmp.ne.s32.totalorder %s265, %s267
      %p274 = scmp.eq.s32.totalorder %s42, 1
      %p275 = por %p273, %p274
      %p276 = scmp.ne.s32.totalorder %s267, %s268
      %p277 = scmp.eq.s32.totalorder %s42, 0
      %p278 = por %p276, %p277
      %p279 = scmp.ne.s32.totalorder %s267, %s268
      %p280 = scmp.eq.s32.totalorder %s43, 1
      %p281 = por %p279, %p280
      %p283 = scmp.ne.s32.totalorder %s268, %s282
      %p284 = scmp.eq.s32.totalorder %s43, 0
      %p285 = por %p283, %p284
      %s287 = sadd.s32 %s286, 1
      %p290 = scmp.eq.s32.totalorder %s37, 1
      %p291 = scmp.ne.s32.totalorder %s286, %s288
      %p292 = scmp.eq.s32.totalorder %s37, 0
      %p293 = por %p291, %p292
      %p294 = scmp.ne.s32.totalorder %s286, %s288
      %p295 = scmp.eq.s32.totalorder %s42, 1
      %p296 = por %p294, %p295
      %p297 = scmp.ne.s32.totalorder %s288, %s289
      %p298 = scmp.eq.s32.totalorder %s42, 0
      %p299 = por %p297, %p298
      %p300 = scmp.ne.s32.totalorder %s288, %s289
      %p301 = scmp.eq.s32.totalorder %s43, 1
      %p302 = por %p300, %p301
      %p304 = scmp.ne.s32.totalorder %s289, %s303
      %p305 = scmp.eq.s32.totalorder %s43, 0
      %p306 = por %p304, %p305
      %s308 = sadd.s32 %s307, 1
      %p311 = scmp.eq.s32.totalorder %s37, 1
      %p312 = scmp.ne.s32.totalorder %s307, %s309
      %p313 = scmp.eq.s32.totalorder %s37, 0
      %p314 = por %p312, %p313
      %p315 = scmp.ne.s32.totalorder %s307, %s309
      %p316 = scmp.eq.s32.totalorder %s42, 1
      %p317 = por %p315, %p316
      %p318 = scmp.ne.s32.totalorder %s309, %s310
      %p319 = scmp.eq.s32.totalorder %s42, 0
      %p320 = por %p318, %p319
      %p321 = scmp.ne.s32.totalorder %s309, %s310
      %p322 = scmp.eq.s32.totalorder %s43, 1
      %p323 = por %p321, %p322
      %p325 = scmp.ne.s32.totalorder %s310, %s324
      %p326 = scmp.eq.s32.totalorder %s43, 0
      %p327 = por %p325, %p326
      %s329 = sadd.s32 %s328, 1
      %p332 = scmp.eq.s32.totalorder %s37, 1
      %p333 = scmp.ne.s32.totalorder %s328, %s330
      %p334 = scmp.eq.s32.totalorder %s37, 0
      %p335 = por %p333, %p334
      %p336 = scmp.ne.s32.totalorder %s328, %s330
      %p337 = scmp.eq.s32.totalorder %s42, 1
      %p338 = por %p336, %p337
      %p339 = scmp.ne.s32.totalorder %s330, %s331
      %p340 = scmp.eq.s32.totalorder %s42, 0
      %p341 = por %p339, %p340
      %p342 = scmp.ne.s32.totalorder %s330, %s331
      %p343 = scmp.eq.s32.totalorder %s43, 1
      %p344 = por %p342, %p343
      %p346 = scmp.ne.s32.totalorder %s331, %s345
      %p347 = scmp.eq.s32.totalorder %s43, 0
      %p348 = por %p346, %p347
      %s349 = ssub.s32 %s37, %s44
      %p350 = scmp.eq.s32.totalorder %s349, 0
      %s352 = sadd.s32 %s351, 1
      %s353 = scalar_select %p350, %s351, %s352
      %p356 = pneg %p350
      %p357 = scmp.eq.s32.totalorder %s37, 1
      %p358 = por %p356, %p357
      %p359 = scmp.ne.s32.totalorder %s351, %s354
      %p360 = scmp.eq.s32.totalorder %s37, 0
      %p361 = por %p359, %p360
      %p362 = scmp.ne.s32.totalorder %s351, %s354
      %p363 = scmp.eq.s32.totalorder %s42, 1
      %p364 = por %p362, %p363
      %p365 = scmp.ne.s32.totalorder %s354, %s355
      %p366 = scmp.eq.s32.totalorder %s42, 0
      %p367 = por %p365, %p366
      %p368 = scmp.ne.s32.totalorder %s354, %s355
      %p369 = scmp.eq.s32.totalorder %s43, 1
      %p370 = por %p368, %p369
      %p372 = scmp.ne.s32.totalorder %s355, %s371
      %p373 = scmp.eq.s32.totalorder %s43, 0
      %p374 = por %p372, %p373
      %s375 = ssub.s32 %s37, %s44
      %p376 = scmp.eq.s32.totalorder %s375, 0
      %s378 = sadd.s32 %s377, 1
      %s379 = scalar_select %p376, %s377, %s378
      %p382 = pneg %p376
      %p383 = scmp.eq.s32.totalorder %s37, 1
      %p384 = por %p382, %p383
      %p385 = scmp.ne.s32.totalorder %s377, %s380
      %p386 = scmp.eq.s32.totalorder %s37, 0
      %p387 = por %p385, %p386
      %p388 = scmp.ne.s32.totalorder %s377, %s380
      %p389 = scmp.eq.s32.totalorder %s42, 1
      %p390 = por %p388, %p389
      %p391 = scmp.ne.s32.totalorder %s380, %s381
      %p392 = scmp.eq.s32.totalorder %s42, 0
      %p393 = por %p391, %p392
      %p394 = scmp.ne.s32.totalorder %s380, %s381
      %p395 = scmp.eq.s32.totalorder %s43, 1
      %p396 = por %p394, %p395
      %p398 = scmp.ne.s32.totalorder %s381, %s397
      %p399 = scmp.eq.s32.totalorder %s43, 0
      %p400 = por %p398, %p399
      %p401 = scmp.le.s32.totalorder 1, %s37
      %p402 = scmp.lt.s32.totalorder %s37, 3
      %p403 = pnand %p401, %p402
      %p404 = pneg %p403
      // Predicated region
      $region9: #{tpu_custom_call.1} parent=5 // pred_check
        _
      $region10: #{tpu_custom_call.1} parent=5 // pred_check_branch
        %406 = sbr.rel (%p403) target = $region12
      $region11: #{tpu_custom_call.1} parent=5 // pred_region
        %s407 = ssub.s32 %s37, 1
        // Predicated region
        $region13: #{tpu_custom_call.1} parent=11 // pred_check
          %p408 = pneg %p110
        $region14: #{tpu_custom_call.1} parent=11 // pred_check_branch
          %410 = sbr.rel (%p408) target = $region16
        $region15: #{tpu_custom_call.1} parent=11 // pred_region
          %s412 = ssub.s32 14336, 14336
          %413 = vsyncadd [#allocation6], %s412
          %s414 = sshll.u32 [#allocation7], 4
          %s415 = int_to_ptr.vmem [resolvable:$true] %s414
          %420 = dma.hbm_to_vmem [thread:$0]  %s2, 14336, %s415, [#allocation6], 128, 128, 8
        $region16: #{tpu_custom_call.1} parent=11 // pred_fallthru
          _
        // Predicated region
        $region17: #{tpu_custom_call.1} parent=11 // pred_check
          %p421 = pneg %p131
        $region18: #{tpu_custom_call.1} parent=11 // pred_check_branch
          %423 = sbr.rel (%p421) target = $region20
        $region19: #{tpu_custom_call.1} parent=11 // pred_region
          _
        $region20: #{tpu_custom_call.1} parent=11 // pred_fallthru
          _
        // Predicated region
        $region21: #{tpu_custom_call.1} parent=11 // pred_check
          %p424 = pneg %p152
        $region22: #{tpu_custom_call.1} parent=11 // pred_check_branch
          %426 = sbr.rel (%p424) target = $region24
        $region23: #{tpu_custom_call.1} parent=11 // pred_region
          %s428 = ssub.s32 2048, 2048
          %429 = vsyncadd [#allocation9], %s428
          %s430 = sshll.u32 [#allocation8], 4
          %s431 = int_to_ptr.vmem [resolvable:$true] %s430
          %436 = dma.hbm_to_vmem [thread:$0]  %s4, 2048, %s431, [#allocation9], 64, 64, 4
        $region24: #{tpu_custom_call.1} parent=11 // pred_fallthru
          _
        // Predicated region
        $region25: #{tpu_custom_call.1} parent=11 // pred_check
          %p437 = pneg %p173
        $region26: #{tpu_custom_call.1} parent=11 // pred_check_branch
          %439 = sbr.rel (%p437) target = $region28
        $region27: #{tpu_custom_call.1} parent=11 // pred_region
          _
        $region28: #{tpu_custom_call.1} parent=11 // pred_fallthru
          _
        // Predicated region
        $region29: #{tpu_custom_call.1} parent=11 // pred_check
          %p440 = pneg %p194
        $region30: #{tpu_custom_call.1} parent=11 // pred_check_branch
          %442 = sbr.rel (%p440) target = $region32
        $region31: #{tpu_custom_call.1} parent=11 // pred_region
          %s444 = ssub.s32 1024, 1024
          %445 = vsyncadd [#allocation9], %s444
          %s446 = sshll.u32 [#allocation10], 4
          %s447 = int_to_ptr.vmem [resolvable:$true] %s446
          %452 = dma.hbm_to_vmem [thread:$0]  %s6, 1024, %s447, [#allocation9], 64, 64, 4
        $region32: #{tpu_custom_call.1} parent=11 // pred_fallthru
          _
        // Predicated region
        $region33: #{tpu_custom_call.1} parent=11 // pred_check
          %p453 = pneg %p215
        $region34: #{tpu_custom_call.1} parent=11 // pred_check_branch
          %455 = sbr.rel (%p453) target = $region36
        $region35: #{tpu_custom_call.1} parent=11 // pred_region
          _
        $region36: #{tpu_custom_call.1} parent=11 // pred_fallthru
          _
        // Predicated region
        $region37: #{tpu_custom_call.1} parent=11 // pred_check
          %p456 = pneg %p236
        $region38: #{tpu_custom_call.1} parent=11 // pred_check_branch
          %458 = sbr.rel (%p456) target = $region40
        $region39: #{tpu_custom_call.1} parent=11 // pred_region
          %s460 = ssub.s32 1024, 1024
          %461 = vsyncadd [#allocation12], %s460
          %s462 = sshll.u32 [#allocation11], 4
          %s463 = int_to_ptr.vmem [resolvable:$true] %s462
          %468 = dma.hbm_to_vmem [thread:$0]  %s8, 1024, %s463, [#allocation12], 64, 64, 4
        $region40: #{tpu_custom_call.1} parent=11 // pred_fallthru
          _
        // Predicated region
        $region41: #{tpu_custom_call.1} parent=11 // pred_check
          %p469 = pneg %p257
        $region42: #{tpu_custom_call.1} parent=11 // pred_check_branch
          %471 = sbr.rel (%p469) target = $region44
        $region43: #{tpu_custom_call.1} parent=11 // pred_region
          _
        $region44: #{tpu_custom_call.1} parent=11 // pred_fallthru
          _
        // Predicated region
        $region45: #{tpu_custom_call.1} parent=11 // pred_check
          %p472 = pneg %p278
        $region46: #{tpu_custom_call.1} parent=11 // pred_check_branch
          %474 = sbr.rel (%p472) target = $region48
        $region47: #{tpu_custom_call.1} parent=11 // pred_region
          %s476 = ssub.s32 2048, 2048
          %477 = vsyncadd [#allocation12], %s476
          %s478 = sshll.u32 [#allocation13], 4
          %s479 = int_to_ptr.vmem [resolvable:$true] %s478
          %484 = dma.hbm_to_vmem [thread:$0]  %s10, 2048, %s479, [#allocation12], 128, 128, 8
        $region48: #{tpu_custom_call.1} parent=11 // pred_fallthru
          _
        // Predicated region
        $region49: #{tpu_custom_call.1} parent=11 // pred_check
          %p485 = pneg %p299
        $region50: #{tpu_custom_call.1} parent=11 // pred_check_branch
          %487 = sbr.rel (%p485) target = $region52
        $region51: #{tpu_custom_call.1} parent=11 // pred_region
          _
        $region52: #{tpu_custom_call.1} parent=11 // pred_fallthru
          _
        // Predicated region
        $region53: #{tpu_custom_call.1} parent=11 // pred_check
          %p488 = pneg %p320
        $region54: #{tpu_custom_call.1} parent=11 // pred_check_branch
          %490 = sbr.rel (%p488) target = $region56
        $region55: #{tpu_custom_call.1} parent=11 // pred_region
          %s492 = ssub.s32 14336, 14336
          %493 = vsyncadd [#allocation15], %s492
          %s494 = sshll.u32 [#allocation14], 4
          %s495 = int_to_ptr.vmem [resolvable:$true] %s494
          %500 = dma.hbm_to_vmem [thread:$0]  %s12, 14336, %s495, [#allocation15], 448, 448, 28
        $region56: #{tpu_custom_call.1} parent=11 // pred_fallthru
          _
        // Predicated region
        $region57: #{tpu_custom_call.1} parent=11 // pred_check
          %p501 = pneg %p341
        $region58: #{tpu_custom_call.1} parent=11 // pred_check_branch
          %503 = sbr.rel (%p501) target = $region60
        $region59: #{tpu_custom_call.1} parent=11 // pred_region
          _
        $region60: #{tpu_custom_call.1} parent=11 // pred_fallthru
          _
      $region12: #{tpu_custom_call.1} parent=5 // pred_fallthru
        _
      %p504 = scmp.lt.s32.totalorder %s37, 2
      // Predicated region
      $region61: #{tpu_custom_call.1} parent=5 // pred_check
        %p505 = pneg %p504
      $region62: #{tpu_custom_call.1} parent=5 // pred_check_branch
        %507 = sbr.rel (%p505) target = $region64
      $region63: #{tpu_custom_call.1} parent=5 // pred_region
        // Predicated region
        $region65: #{tpu_custom_call.1} parent=63 // pred_check
          %p508 = pneg %p57
        $region66: #{tpu_custom_call.1} parent=63 // pred_check_branch
          %510 = sbr.rel (%p508) target = $region68
        $region67: #{tpu_custom_call.1} parent=63 // pred_region
          %s511 = sand.u32 %s47, 1
          %s512 = scalar_lea.sflag [#allocation3], %s511
          %s513 = sand.u32 %s47, 1
          %s514 = smul.addr %s513, 896
          %s515 = scalar_lea.vmem [#allocation2], %s514
          %s516 = smul.u32 32, %s37
          %s518 = ssub.s32 14336, 14336
          %519 = vsyncadd %s512, %s518
          %s520 = smul.addr %s516, 7
          %s521 = smul.addr %s520, 64
          %s522 = scalar_lea.hbm %s0, %s521
          %s523 = sshll.u32 %s515, 4
          %s524 = int_to_ptr.vmem [resolvable:$true] %s523
          %529 = dma.hbm_to_vmem [thread:$0]  %s522, 14336, %s524, %s512, 448, 448, 28
        $region68: #{tpu_custom_call.1} parent=63 // pred_fallthru
          _
        // Predicated region
        $region69: #{tpu_custom_call.1} parent=63 // pred_check
          %p530 = pneg %p83
        $region70: #{tpu_custom_call.1} parent=63 // pred_check_branch
          %532 = sbr.rel (%p530) target = $region72
        $region71: #{tpu_custom_call.1} parent=63 // pred_region
          %s533 = sand.u32 %s37, 1
          %s534 = scalar_lea.sflag [#allocation6], %s533
          %s535 = sand.u32 %s73, 1
          %s536 = smul.addr %s535, 256
          %s537 = scalar_lea.vmem [#allocation5], %s536
          %s538 = smul.u32 32, %s37
          %s540 = ssub.s32 4096, 4096
          %541 = vsyncadd %s534, %s540
          %s542 = smul.addr %s538, 128
          %s543 = scalar_lea.hbm %s1, %s542
          %s544 = sshll.u32 %s537, 4
          %s545 = int_to_ptr.vmem [resolvable:$true] %s544
          %550 = dma.hbm_to_vmem [thread:$0]  %s543, 4096, %s545, %s534, 128, 128, 8
        $region72: #{tpu_custom_call.1} parent=63 // pred_fallthru
          _
      $region64: #{tpu_custom_call.1} parent=5 // pred_fallthru
        _
      %p551 = scmp.le.s32.totalorder 1, %s37
      %p552 = scmp.lt.s32.totalorder %s37, 3
      %p553 = pnand %p551, %p552
      %p554 = pneg %p553
      // Predicated region
      $region73: #{tpu_custom_call.1} parent=5 // pred_check
        _
      $region74: #{tpu_custom_call.1} parent=5 // pred_check_branch
        %556 = sbr.rel (%p553) target = $region76
      $region75: #{tpu_custom_call.1} parent=5 // pred_region
        %s557 = ssub.s32 %s37, 1
        %s558 = sand.u32 %s50, 1
        %s559 = scalar_lea.sflag [#allocation3], %s558
        %s560 = sand.u32 %s50, 1
        %s561 = smul.addr %s560, 896
        %s562 = scalar_lea.vmem [#allocation2], %s561
        // Predicated region
        $region77: #{tpu_custom_call.1} parent=75 // pred_check
          %p563 = pneg %p63
        $region78: #{tpu_custom_call.1} parent=75 // pred_check_branch
          %565 = sbr.rel (%p563) target = $region80
        $region79: #{tpu_custom_call.1} parent=75 // pred_region
          %566 = dma.done %s559, 14336
        $region80: #{tpu_custom_call.1} parent=75 // pred_fallthru
          _
        %s567 = sand.u32 %s42, 1
        %s568 = scalar_lea.sflag [#allocation6], %s567
        %s569 = sand.u32 %s76, 1
        %s570 = smul.addr %s569, 256
        %s571 = scalar_lea.vmem [#allocation5], %s570
        // Predicated region
        $region81: #{tpu_custom_call.1} parent=75 // pred_check
          %p572 = pneg %p89
        $region82: #{tpu_custom_call.1} parent=75 // pred_check_branch
          %574 = sbr.rel (%p572) target = $region84
        $region83: #{tpu_custom_call.1} parent=75 // pred_region
          %575 = dma.done %s568, 4096
        $region84: #{tpu_custom_call.1} parent=75 // pred_fallthru
          _
        // Predicated region
        $region85: #{tpu_custom_call.1} parent=75 // pred_check
          %p576 = pneg %p110
        $region86: #{tpu_custom_call.1} parent=75 // pred_check_branch
          %578 = sbr.rel (%p576) target = $region88
        $region87: #{tpu_custom_call.1} parent=75 // pred_region
          %579 = dma.done [#allocation6], 14336
        $region88: #{tpu_custom_call.1} parent=75 // pred_fallthru
          _
        // Predicated region
        $region89: #{tpu_custom_call.1} parent=75 // pred_check
          %p580 = pneg %p152
        $region90: #{tpu_custom_call.1} parent=75 // pred_check_branch
          %582 = sbr.rel (%p580) target = $region92
        $region91: #{tpu_custom_call.1} parent=75 // pred_region
          %583 = dma.done [#allocation9], 2048
        $region92: #{tpu_custom_call.1} parent=75 // pred_fallthru
          _
        // Predicated region
        $region93: #{tpu_custom_call.1} parent=75 // pred_check
          %p584 = pneg %p194
        $region94: #{tpu_custom_call.1} parent=75 // pred_check_branch
          %586 = sbr.rel (%p584) target = $region96
        $region95: #{tpu_custom_call.1} parent=75 // pred_region
          %587 = dma.done [#allocation9], 1024
        $region96: #{tpu_custom_call.1} parent=75 // pred_fallthru
          _
        // Predicated region
        $region97: #{tpu_custom_call.1} parent=75 // pred_check
          %p588 = pneg %p236
        $region98: #{tpu_custom_call.1} parent=75 // pred_check_branch
          %590 = sbr.rel (%p588) target = $region100
        $region99: #{tpu_custom_call.1} parent=75 // pred_region
          %591 = dma.done [#allocation12], 1024
        $region100: #{tpu_custom_call.1} parent=75 // pred_fallthru
          _
        // Predicated region
        $region101: #{tpu_custom_call.1} parent=75 // pred_check
          %p592 = pneg %p278
        $region102: #{tpu_custom_call.1} parent=75 // pred_check_branch
          %594 = sbr.rel (%p592) target = $region104
        $region103: #{tpu_custom_call.1} parent=75 // pred_region
          %595 = dma.done [#allocation12], 2048
        $region104: #{tpu_custom_call.1} parent=75 // pred_fallthru
          _
        // Predicated region
        $region105: #{tpu_custom_call.1} parent=75 // pred_check
          %p596 = pneg %p320
        $region106: #{tpu_custom_call.1} parent=75 // pred_check_branch
          %598 = sbr.rel (%p596) target = $region108
        $region107: #{tpu_custom_call.1} parent=75 // pred_region
          %599 = dma.done [#allocation15], 14336
        $region108: #{tpu_custom_call.1} parent=75 // pred_fallthru
          _
        %s600 = sand.u32 %s50, 1
        %s601 = scalar_lea.sflag [#allocation3], %s600
        %s602 = sand.u32 %s50, 1
        %s603 = smul.addr %s602, 896
        %s604 = scalar_lea.vmem [#allocation2], %s603
        %p605 = pneg %p63
        %p606 = pneg %p60
        %s607 = sand.u32 %s42, 1
        %s608 = scalar_lea.sflag [#allocation6], %s607
        %s609 = sand.u32 %s76, 1
        %s610 = smul.addr %s609, 256
        %s611 = scalar_lea.vmem [#allocation5], %s610
        %p612 = pneg %p89
        %p613 = pneg %p86
        %p614 = pneg %p110
        %p615 = pneg %p107
        %p616 = pneg %p131
        %p617 = pneg %p128
        %p618 = pneg %p152
        %p619 = pneg %p149
        %p620 = pneg %p173
        %p621 = pneg %p170
        %p622 = pneg %p194
        %p623 = pneg %p191
        %p624 = pneg %p215
        %p625 = pneg %p212
        %p626 = pneg %p236
        %p627 = pneg %p233
        %p628 = pneg %p257
        %p629 = pneg %p254
        %p630 = pneg %p278
        %p631 = pneg %p275
        %p632 = pneg %p299
        %p633 = pneg %p296
        %p634 = pneg %p320
        %p635 = pneg %p317
        %p636 = pneg %p341
        %p637 = pneg %p338
        %p638 = pneg %p367
        %p639 = pneg %p364
        %s640 = sand.u32 %s354, 1
        %s641 = scalar_lea.sflag [#allocation4], %s640
        %s642 = sand.u32 %s354, 1
        %s643 = smul.addr %s642, 896
        %s644 = scalar_lea.vmem [#allocation16], %s643
        %p645 = pneg %p393
        %p646 = pneg %p390
        %s647 = sand.u32 %s380, 1
        %s648 = scalar_lea.sflag [#allocation18], %s647
        %s649 = sand.u32 %s380, 1
        %s650 = smul.addr %s649, 256
        %s651 = scalar_lea.vmem [#allocation17], %s650
        %s652 = smul.u32 32, %s42
        %s653 = smul.u32 32, %s42
        %s654 = smul.u32 32, %s42
        %s655 = smul.u32 32, %s42
        %v657 = vld [vmem:[%s562] sm:$0xff]
        %v658 = vld [vmem:[%s562 + $0x8] sm:$0xff]
        %v659 = vld [vmem:[%s562 + $0x10] sm:$0xff]
        %v660 = vld [vmem:[%s562 + $0x18] sm:$0xf]
        %v661 = vld [vmem:[%s562 + $0x1c] sm:$0xff]
        %v662 = vld [vmem:[%s562 + $0x24] sm:$0xff]
        %v663 = vld [vmem:[%s562 + $0x2c] sm:$0xff]
        %v664 = vld [vmem:[%s562 + $0x34] sm:$0xf]
        %v665 = vld [vmem:[%s562 + $0x38] sm:$0xff]
        %v666 = vld [vmem:[%s562 + $0x40] sm:$0xff]
        %v667 = vld [vmem:[%s562 + $0x48] sm:$0xff]
        %v668 = vld [vmem:[%s562 + $0x50] sm:$0xf]
        %v669 = vld [vmem:[%s562 + $0x54] sm:$0xff]
        %v670 = vld [vmem:[%s562 + $0x5c] sm:$0xff]
        %v671 = vld [vmem:[%s562 + $0x64] sm:$0xff]
        %v672 = vld [vmem:[%s562 + $0x6c] sm:$0xf]
        %v673 = vld [vmem:[%s562 + $0x70] sm:$0xff]
        %v674 = vld [vmem:[%s562 + $0x78] sm:$0xff]
        %v675 = vld [vmem:[%s562 + $0x80] sm:$0xff]
        %v676 = vld [vmem:[%s562 + $0x88] sm:$0xf]
        %v677 = vld [vmem:[%s562 + $0x8c] sm:$0xff]
        %v678 = vld [vmem:[%s562 + $0x94] sm:$0xff]
        %v679 = vld [vmem:[%s562 + $0x9c] sm:$0xff]
        %v680 = vld [vmem:[%s562 + $0xa4] sm:$0xf]
        %v681 = vld [vmem:[%s562 + $0xa8] sm:$0xff]
        %v682 = vld [vmem:[%s562 + $0xb0] sm:$0xff]
        %v683 = vld [vmem:[%s562 + $0xb8] sm:$0xff]
        %v684 = vld [vmem:[%s562 + $0xc0] sm:$0xf]
        %v685 = vld [vmem:[%s562 + $0xc4] sm:$0xff]
        %v686 = vld [vmem:[%s562 + $0xcc] sm:$0xff]
        %v687 = vld [vmem:[%s562 + $0xd4] sm:$0xff]
        %v688 = vld [vmem:[%s562 + $0xdc] sm:$0xf]
        %v689 = vld [vmem:[%s562 + $0xe0] sm:$0xff]
        %v690 = vld [vmem:[%s562 + $0xe8] sm:$0xff]
        %v691 = vld [vmem:[%s562 + $0xf0] sm:$0xff]
        %v692 = vld [vmem:[%s562 + $0xf8] sm:$0xf]
        %v693 = vld [vmem:[%s562 + $0xfc] sm:$0xff]
        %v694 = vld [vmem:[%s562 + $0x104] sm:$0xff]
        %v695 = vld [vmem:[%s562 + $0x10c] sm:$0xff]
        %v696 = vld [vmem:[%s562 + $0x114] sm:$0xf]
        %v697 = vld [vmem:[%s562 + $0x118] sm:$0xff]
        %v698 = vld [vmem:[%s562 + $0x120] sm:$0xff]
        %v699 = vld [vmem:[%s562 + $0x128] sm:$0xff]
        %v700 = vld [vmem:[%s562 + $0x130] sm:$0xf]
        %v701 = vld [vmem:[%s562 + $0x134] sm:$0xff]
        %v702 = vld [vmem:[%s562 + $0x13c] sm:$0xff]
        %v703 = vld [vmem:[%s562 + $0x144] sm:$0xff]
        %v704 = vld [vmem:[%s562 + $0x14c] sm:$0xf]
        %v705 = vld [vmem:[%s562 + $0x150] sm:$0xff]
        %v706 = vld [vmem:[%s562 + $0x158] sm:$0xff]
        %v707 = vld [vmem:[%s562 + $0x160] sm:$0xff]
        %v708 = vld [vmem:[%s562 + $0x168] sm:$0xf]
        %v709 = vld [vmem:[%s562 + $0x16c] sm:$0xff]
        %v710 = vld [vmem:[%s562 + $0x174] sm:$0xff]
        %v711 = vld [vmem:[%s562 + $0x17c] sm:$0xff]
        %v712 = vld [vmem:[%s562 + $0x184] sm:$0xf]
        %v713 = vld [vmem:[%s562 + $0x188] sm:$0xff]
        %v714 = vld [vmem:[%s562 + $0x190] sm:$0xff]
        %v715 = vld [vmem:[%s562 + $0x198] sm:$0xff]
        %v716 = vld [vmem:[%s562 + $0x1a0] sm:$0xf]
        %v717 = vld [vmem:[%s562 + $0x1a4] sm:$0xff]
        %v718 = vld [vmem:[%s562 + $0x1ac] sm:$0xff]
        %v719 = vld [vmem:[%s562 + $0x1b4] sm:$0xff]
        %v720 = vld [vmem:[%s562 + $0x1bc] sm:$0xf]
        %v721 = vld [vmem:[%s562 + $0x1c0] sm:$0xff]
        %v722 = vld [vmem:[%s562 + $0x1c8] sm:$0xff]
        %v723 = vld [vmem:[%s562 + $0x1d0] sm:$0xff]
        %v724 = vld [vmem:[%s562 + $0x1d8] sm:$0xf]
        %v725 = vld [vmem:[%s562 + $0x1dc] sm:$0xff]
        %v726 = vld [vmem:[%s562 + $0x1e4] sm:$0xff]
        %v727 = vld [vmem:[%s562 + $0x1ec] sm:$0xff]
        %v728 = vld [vmem:[%s562 + $0x1f4] sm:$0xf]
        %v729 = vld [vmem:[%s562 + $0x1f8] sm:$0xff]
        %v730 = vld [vmem:[%s562 + $0x200] sm:$0xff]
        %v731 = vld [vmem:[%s562 + $0x208] sm:$0xff]
        %v732 = vld [vmem:[%s562 + $0x210] sm:$0xf]
        %v733 = vld [vmem:[%s562 + $0x214] sm:$0xff]
        %v734 = vld [vmem:[%s562 + $0x21c] sm:$0xff]
        %v735 = vld [vmem:[%s562 + $0x224] sm:$0xff]
        %v736 = vld [vmem:[%s562 + $0x22c] sm:$0xf]
        %v737 = vld [vmem:[%s562 + $0x230] sm:$0xff]
        %v738 = vld [vmem:[%s562 + $0x238] sm:$0xff]
        %v739 = vld [vmem:[%s562 + $0x240] sm:$0xff]
        %v740 = vld [vmem:[%s562 + $0x248] sm:$0xf]
        %v741 = vld [vmem:[%s562 + $0x24c] sm:$0xff]
        %v742 = vld [vmem:[%s562 + $0x254] sm:$0xff]
        %v743 = vld [vmem:[%s562 + $0x25c] sm:$0xff]
        %v744 = vld [vmem:[%s562 + $0x264] sm:$0xf]
        %v745 = vld [vmem:[%s562 + $0x268] sm:$0xff]
        %v746 = vld [vmem:[%s562 + $0x270] sm:$0xff]
        %v747 = vld [vmem:[%s562 + $0x278] sm:$0xff]
        %v748 = vld [vmem:[%s562 + $0x280] sm:$0xf]
        %v749 = vld [vmem:[%s562 + $0x284] sm:$0xff]
        %v750 = vld [vmem:[%s562 + $0x28c] sm:$0xff]
        %v751 = vld [vmem:[%s562 + $0x294] sm:$0xff]
        %v752 = vld [vmem:[%s562 + $0x29c] sm:$0xf]
        %v753 = vld [vmem:[%s562 + $0x2a0] sm:$0xff]
        %v754 = vld [vmem:[%s562 + $0x2a8] sm:$0xff]
        %v755 = vld [vmem:[%s562 + $0x2b0] sm:$0xff]
        %v756 = vld [vmem:[%s562 + $0x2b8] sm:$0xf]
        %v757 = vld [vmem:[%s562 + $0x2bc] sm:$0xff]
        %v758 = vld [vmem:[%s562 + $0x2c4] sm:$0xff]
        %v759 = vld [vmem:[%s562 + $0x2cc] sm:$0xff]
        %v760 = vld [vmem:[%s562 + $0x2d4] sm:$0xf]
        %v761 = vld [vmem:[%s562 + $0x2d8] sm:$0xff]
        %v762 = vld [vmem:[%s562 + $0x2e0] sm:$0xff]
        %v763 = vld [vmem:[%s562 + $0x2e8] sm:$0xff]
        %v764 = vld [vmem:[%s562 + $0x2f0] sm:$0xf]
        %v765 = vld [vmem:[%s562 + $0x2f4] sm:$0xff]
        %v766 = vld [vmem:[%s562 + $0x2fc] sm:$0xff]
        %v767 = vld [vmem:[%s562 + $0x304] sm:$0xff]
        %v768 = vld [vmem:[%s562 + $0x30c] sm:$0xf]
        %v769 = vld [vmem:[%s562 + $0x310] sm:$0xff]
        %v770 = vld [vmem:[%s562 + $0x318] sm:$0xff]
        %v771 = vld [vmem:[%s562 + $0x320] sm:$0xff]
        %v772 = vld [vmem:[%s562 + $0x328] sm:$0xf]
        %v773 = vld [vmem:[%s562 + $0x32c] sm:$0xff]
        %v774 = vld [vmem:[%s562 + $0x334] sm:$0xff]
        %v775 = vld [vmem:[%s562 + $0x33c] sm:$0xff]
        %v776 = vld [vmem:[%s562 + $0x344] sm:$0xf]
        %v777 = vld [vmem:[%s562 + $0x348] sm:$0xff]
        %v778 = vld [vmem:[%s562 + $0x350] sm:$0xff]
        %v779 = vld [vmem:[%s562 + $0x358] sm:$0xff]
        %v780 = vld [vmem:[%s562 + $0x360] sm:$0xf]
        %v781 = vld [vmem:[%s562 + $0x364] sm:$0xff]
        %v782 = vld [vmem:[%s562 + $0x36c] sm:$0xff]
        %v783 = vld [vmem:[%s562 + $0x374] sm:$0xff]
        %v784 = vld [vmem:[%s562 + $0x37c] sm:$0xf]
        %v785 = vld [vmem:[#allocation7] sm:$0xff]
        %v786 = vld [vmem:[#allocation7 + $0x8] sm:$0xff]
        %v787 = vld [vmem:[#allocation7 + $0x10] sm:$0xff]
        %v788 = vld [vmem:[#allocation7 + $0x18] sm:$0xff]
        %v789 = vld [vmem:[#allocation7 + $0x20] sm:$0xff]
        %v790 = vld [vmem:[#allocation7 + $0x28] sm:$0xff]
        %v791 = vld [vmem:[#allocation7 + $0x30] sm:$0xff]
        %v792 = vld [vmem:[#allocation7 + $0x38] sm:$0xff]
        %v793 = vld [vmem:[#allocation7 + $0x40] sm:$0xff]
        %v794 = vld [vmem:[#allocation7 + $0x48] sm:$0xff]
        %v795 = vld [vmem:[#allocation7 + $0x50] sm:$0xff]
        %v796 = vld [vmem:[#allocation7 + $0x58] sm:$0xff]
        %v797 = vld [vmem:[#allocation7 + $0x60] sm:$0xff]
        %v798 = vld [vmem:[#allocation7 + $0x68] sm:$0xff]
        %v799 = vld [vmem:[#allocation7 + $0x70] sm:$0xff]
        %v800 = vld [vmem:[#allocation7 + $0x78] sm:$0xff]
        %v801 = vld [vmem:[#allocation7 + $0x80] sm:$0xff]
        %v802 = vld [vmem:[#allocation7 + $0x88] sm:$0xff]
        %v803 = vld [vmem:[#allocation7 + $0x90] sm:$0xff]
        %v804 = vld [vmem:[#allocation7 + $0x98] sm:$0xff]
        %v805 = vld [vmem:[#allocation7 + $0xa0] sm:$0xff]
        %v806 = vld [vmem:[#allocation7 + $0xa8] sm:$0xff]
        %v807 = vld [vmem:[#allocation7 + $0xb0] sm:$0xff]
        %v808 = vld [vmem:[#allocation7 + $0xb8] sm:$0xff]
        %v809 = vld [vmem:[#allocation7 + $0xc0] sm:$0xff]
        %v810 = vld [vmem:[#allocation7 + $0xc8] sm:$0xff]
        %v811 = vld [vmem:[#allocation7 + $0xd0] sm:$0xff]
        %v812 = vld [vmem:[#allocation7 + $0xd8] sm:$0xff]
        %v813 = vld [vmem:[#allocation7 + $0xe0] sm:$0xff]
        %v814 = vld [vmem:[#allocation7 + $0xe8] sm:$0xff]
        %v815 = vld [vmem:[#allocation7 + $0xf0] sm:$0xff]
        %v816 = vld [vmem:[#allocation7 + $0xf8] sm:$0xff]
        %v817 = vld [vmem:[#allocation7 + $0x100] sm:$0xff]
        %v818 = vld [vmem:[#allocation7 + $0x108] sm:$0xff]
        %v819 = vld [vmem:[#allocation7 + $0x110] sm:$0xff]
        %v820 = vld [vmem:[#allocation7 + $0x118] sm:$0xff]
        %v821 = vld [vmem:[#allocation7 + $0x120] sm:$0xff]
        %v822 = vld [vmem:[#allocation7 + $0x128] sm:$0xff]
        %v823 = vld [vmem:[#allocation7 + $0x130] sm:$0xff]
        %v824 = vld [vmem:[#allocation7 + $0x138] sm:$0xff]
        %v825 = vld [vmem:[#allocation7 + $0x140] sm:$0xff]
        %v826 = vld [vmem:[#allocation7 + $0x148] sm:$0xff]
        %v827 = vld [vmem:[#allocation7 + $0x150] sm:$0xff]
        %v828 = vld [vmem:[#allocation7 + $0x158] sm:$0xff]
        %v829 = vld [vmem:[#allocation7 + $0x160] sm:$0xff]
        %v830 = vld [vmem:[#allocation7 + $0x168] sm:$0xff]
        %v831 = vld [vmem:[#allocation7 + $0x170] sm:$0xff]
        %v832 = vld [vmem:[#allocation7 + $0x178] sm:$0xff]
        %v833 = vld [vmem:[#allocation7 + $0x180] sm:$0xff]
        %v834 = vld [vmem:[#allocation7 + $0x188] sm:$0xff]
        %v835 = vld [vmem:[#allocation7 + $0x190] sm:$0xff]
        %v836 = vld [vmem:[#allocation7 + $0x198] sm:$0xff]
        %v837 = vld [vmem:[#allocation7 + $0x1a0] sm:$0xff]
        %v838 = vld [vmem:[#allocation7 + $0x1a8] sm:$0xff]
        %v839 = vld [vmem:[#allocation7 + $0x1b0] sm:$0xff]
        %v840 = vld [vmem:[#allocation7 + $0x1b8] sm:$0xff]
        %v841 = vld [vmem:[#allocation7 + $0x1c0] sm:$0xff]
        %v842 = vld [vmem:[#allocation7 + $0x1c8] sm:$0xff]
        %v843 = vld [vmem:[#allocation7 + $0x1d0] sm:$0xff]
        %v844 = vld [vmem:[#allocation7 + $0x1d8] sm:$0xff]
        %v845 = vld [vmem:[#allocation7 + $0x1e0] sm:$0xff]
        %v846 = vld [vmem:[#allocation7 + $0x1e8] sm:$0xff]
        %v847 = vld [vmem:[#allocation7 + $0x1f0] sm:$0xff]
        %v848 = vld [vmem:[#allocation7 + $0x1f8] sm:$0xff]
        %v849 = vld [vmem:[#allocation7 + $0x200] sm:$0xff]
        %v850 = vld [vmem:[#allocation7 + $0x208] sm:$0xff]
        %v851 = vld [vmem:[#allocation7 + $0x210] sm:$0xff]
        %v852 = vld [vmem:[#allocation7 + $0x218] sm:$0xff]
        %v853 = vld [vmem:[#allocation7 + $0x220] sm:$0xff]
        %v854 = vld [vmem:[#allocation7 + $0x228] sm:$0xff]
        %v855 = vld [vmem:[#allocation7 + $0x230] sm:$0xff]
        %v856 = vld [vmem:[#allocation7 + $0x238] sm:$0xff]
        %v857 = vld [vmem:[#allocation7 + $0x240] sm:$0xff]
        %v858 = vld [vmem:[#allocation7 + $0x248] sm:$0xff]
        %v859 = vld [vmem:[#allocation7 + $0x250] sm:$0xff]
        %v860 = vld [vmem:[#allocation7 + $0x258] sm:$0xff]
        %v861 = vld [vmem:[#allocation7 + $0x260] sm:$0xff]
        %v862 = vld [vmem:[#allocation7 + $0x268] sm:$0xff]
        %v863 = vld [vmem:[#allocation7 + $0x270] sm:$0xff]
        %v864 = vld [vmem:[#allocation7 + $0x278] sm:$0xff]
        %v865 = vld [vmem:[#allocation7 + $0x280] sm:$0xff]
        %v866 = vld [vmem:[#allocation7 + $0x288] sm:$0xff]
        %v867 = vld [vmem:[#allocation7 + $0x290] sm:$0xff]
        %v868 = vld [vmem:[#allocation7 + $0x298] sm:$0xff]
        %v869 = vld [vmem:[#allocation7 + $0x2a0] sm:$0xff]
        %v870 = vld [vmem:[#allocation7 + $0x2a8] sm:$0xff]
        %v871 = vld [vmem:[#allocation7 + $0x2b0] sm:$0xff]
        %v872 = vld [vmem:[#allocation7 + $0x2b8] sm:$0xff]
        %v873 = vld [vmem:[#allocation7 + $0x2c0] sm:$0xff]
        %v874 = vld [vmem:[#allocation7 + $0x2c8] sm:$0xff]
        %v875 = vld [vmem:[#allocation7 + $0x2d0] sm:$0xff]
        %v876 = vld [vmem:[#allocation7 + $0x2d8] sm:$0xff]
        %v877 = vld [vmem:[#allocation7 + $0x2e0] sm:$0xff]
        %v878 = vld [vmem:[#allocation7 + $0x2e8] sm:$0xff]
        %v879 = vld [vmem:[#allocation7 + $0x2f0] sm:$0xff]
        %v880 = vld [vmem:[#allocation7 + $0x2f8] sm:$0xff]
        %v881 = vld [vmem:[#allocation7 + $0x300] sm:$0xff]
        %v882 = vld [vmem:[#allocation7 + $0x308] sm:$0xff]
        %v883 = vld [vmem:[#allocation7 + $0x310] sm:$0xff]
        %v884 = vld [vmem:[#allocation7 + $0x318] sm:$0xff]
        %v885 = vld [vmem:[#allocation7 + $0x320] sm:$0xff]
        %v886 = vld [vmem:[#allocation7 + $0x328] sm:$0xff]
        %v887 = vld [vmem:[#allocation7 + $0x330] sm:$0xff]
        %v888 = vld [vmem:[#allocation7 + $0x338] sm:$0xff]
        %v889 = vld [vmem:[#allocation7 + $0x340] sm:$0xff]
        %v890 = vld [vmem:[#allocation7 + $0x348] sm:$0xff]
        %v891 = vld [vmem:[#allocation7 + $0x350] sm:$0xff]
        %v892 = vld [vmem:[#allocation7 + $0x358] sm:$0xff]
        %v893 = vld [vmem:[#allocation7 + $0x360] sm:$0xff]
        %v894 = vld [vmem:[#allocation7 + $0x368] sm:$0xff]
        %v895 = vld [vmem:[#allocation7 + $0x370] sm:$0xff]
        %v896 = vld [vmem:[#allocation7 + $0x378] sm:$0xff]
        %v897 = vld [vmem:[%s3] sm:$0x3]
        %v899 = vlaneseq
        %v900 = vshrl.u32 %v899, 7
        %v901 = vsub.s32 0, %v900
        %v902 = vrot.slane %v897, %v901
        %v903 = vlaneseq
        %v904 = vshrl.u32 %v903, 7
        %v905 = vsub.s32 1, %v904
        %v906 = vrot.slane %v897, %v905
        %v1037 = vunpack.c.l.b16 %v657
        %v1038 = vunpack.c.h.b16 %v657
        %v1039 = vunpack.c.l.b16 %v658
        %v1040 = vunpack.c.h.b16 %v658
        %v1041 = vunpack.c.l.b16 %v659
        %v1042 = vunpack.c.h.b16 %v659
        %v1043 = vunpack.c.l.b16 %v660
        %v1044 = vunpack.c.l.b16 %v661
        %v1045 = vunpack.c.h.b16 %v661
        %v1046 = vunpack.c.l.b16 %v662
        %v1047 = vunpack.c.h.b16 %v662
        %v1048 = vunpack.c.l.b16 %v663
        %v1049 = vunpack.c.h.b16 %v663
        %v1050 = vunpack.c.l.b16 %v664
        %v1051 = vunpack.c.l.b16 %v665
        %v1052 = vunpack.c.h.b16 %v665
        %v1053 = vunpack.c.l.b16 %v666
        %v1054 = vunpack.c.h.b16 %v666
        %v1055 = vunpack.c.l.b16 %v667
        %v1056 = vunpack.c.h.b16 %v667
        %v1057 = vunpack.c.l.b16 %v668
        %v1058 = vunpack.c.l.b16 %v669
        %v1059 = vunpack.c.h.b16 %v669
        %v1060 = vunpack.c.l.b16 %v670
        %v1061 = vunpack.c.h.b16 %v670
        %v1062 = vunpack.c.l.b16 %v671
        %v1063 = vunpack.c.h.b16 %v671
        %v1064 = vunpack.c.l.b16 %v672
        %v1065 = vunpack.c.l.b16 %v673
        %v1066 = vunpack.c.h.b16 %v673
        %v1067 = vunpack.c.l.b16 %v674
        %v1068 = vunpack.c.h.b16 %v674
        %v1069 = vunpack.c.l.b16 %v675
        %v1070 = vunpack.c.h.b16 %v675
        %v1071 = vunpack.c.l.b16 %v676
        %v1072 = vunpack.c.l.b16 %v677
        %v1073 = vunpack.c.h.b16 %v677
        %v1074 = vunpack.c.l.b16 %v678
        %v1075 = vunpack.c.h.b16 %v678
        %v1076 = vunpack.c.l.b16 %v679
        %v1077 = vunpack.c.h.b16 %v679
        %v1078 = vunpack.c.l.b16 %v680
        %v1079 = vunpack.c.l.b16 %v681
        %v1080 = vunpack.c.h.b16 %v681
        %v1081 = vunpack.c.l.b16 %v682
        %v1082 = vunpack.c.h.b16 %v682
        %v1083 = vunpack.c.l.b16 %v683
        %v1084 = vunpack.c.h.b16 %v683
        %v1085 = vunpack.c.l.b16 %v684
        %v1086 = vunpack.c.l.b16 %v685
        %v1087 = vunpack.c.h.b16 %v685
        %v1088 = vunpack.c.l.b16 %v686
        %v1089 = vunpack.c.h.b16 %v686
        %v1090 = vunpack.c.l.b16 %v687
        %v1091 = vunpack.c.h.b16 %v687
        %v1092 = vunpack.c.l.b16 %v688
        %v1093 = vunpack.c.l.b16 %v689
        %v1094 = vunpack.c.h.b16 %v689
        %v1095 = vunpack.c.l.b16 %v690
        %v1096 = vunpack.c.h.b16 %v690
        %v1097 = vunpack.c.l.b16 %v691
        %v1098 = vunpack.c.h.b16 %v691
        %v1099 = vunpack.c.l.b16 %v692
        %v1100 = vunpack.c.l.b16 %v693
        %v1101 = vunpack.c.h.b16 %v693
        %v1102 = vunpack.c.l.b16 %v694
        %v1103 = vunpack.c.h.b16 %v694
        %v1104 = vunpack.c.l.b16 %v695
        %v1105 = vunpack.c.h.b16 %v695
        %v1106 = vunpack.c.l.b16 %v696
        %v1107 = vunpack.c.l.b16 %v697
        %v1108 = vunpack.c.h.b16 %v697
        %v1109 = vunpack.c.l.b16 %v698
        %v1110 = vunpack.c.h.b16 %v698
        %v1111 = vunpack.c.l.b16 %v699
        %v1112 = vunpack.c.h.b16 %v699
        %v1113 = vunpack.c.l.b16 %v700
        %v1114 = vunpack.c.l.b16 %v701
        %v1115 = vunpack.c.h.b16 %v701
        %v1116 = vunpack.c.l.b16 %v702
        %v1117 = vunpack.c.h.b16 %v702
        %v1118 = vunpack.c.l.b16 %v703
        %v1119 = vunpack.c.h.b16 %v703
        %v1120 = vunpack.c.l.b16 %v704
        %v1121 = vunpack.c.l.b16 %v705
        %v1122 = vunpack.c.h.b16 %v705
        %v1123 = vunpack.c.l.b16 %v706
        %v1124 = vunpack.c.h.b16 %v706
        %v1125 = vunpack.c.l.b16 %v707
        %v1126 = vunpack.c.h.b16 %v707
        %v1127 = vunpack.c.l.b16 %v708
        %v1128 = vunpack.c.l.b16 %v709
        %v1129 = vunpack.c.h.b16 %v709
        %v1130 = vunpack.c.l.b16 %v710
        %v1131 = vunpack.c.h.b16 %v710
        %v1132 = vunpack.c.l.b16 %v711
        %v1133 = vunpack.c.h.b16 %v711
        %v1134 = vunpack.c.l.b16 %v712
        %v1135 = vunpack.c.l.b16 %v713
        %v1136 = vunpack.c.h.b16 %v713
        %v1137 = vunpack.c.l.b16 %v714
        %v1138 = vunpack.c.h.b16 %v714
        %v1139 = vunpack.c.l.b16 %v715
        %v1140 = vunpack.c.h.b16 %v715
        %v1141 = vunpack.c.l.b16 %v716
        %v1142 = vunpack.c.l.b16 %v717
        %v1143 = vunpack.c.h.b16 %v717
        %v1144 = vunpack.c.l.b16 %v718
        %v1145 = vunpack.c.h.b16 %v718
        %v1146 = vunpack.c.l.b16 %v719
        %v1147 = vunpack.c.h.b16 %v719
        %v1148 = vunpack.c.l.b16 %v720
        %v1149 = vunpack.c.l.b16 %v721
        %v1150 = vunpack.c.h.b16 %v721
        %v1151 = vunpack.c.l.b16 %v722
        %v1152 = vunpack.c.h.b16 %v722
        %v1153 = vunpack.c.l.b16 %v723
        %v1154 = vunpack.c.h.b16 %v723
        %v1155 = vunpack.c.l.b16 %v724
        %v1156 = vunpack.c.l.b16 %v725
        %v1157 = vunpack.c.h.b16 %v725
        %v1158 = vunpack.c.l.b16 %v726
        %v1159 = vunpack.c.h.b16 %v726
        %v1160 = vunpack.c.l.b16 %v727
        %v1161 = vunpack.c.h.b16 %v727
        %v1162 = vunpack.c.l.b16 %v728
        %v1163 = vunpack.c.l.b16 %v729
        %v1164 = vunpack.c.h.b16 %v729
        %v1165 = vunpack.c.l.b16 %v730
        %v1166 = vunpack.c.h.b16 %v730
        %v1167 = vunpack.c.l.b16 %v731
        %v1168 = vunpack.c.h.b16 %v731
        %v1169 = vunpack.c.l.b16 %v732
        %v1170 = vunpack.c.l.b16 %v733
        %v1171 = vunpack.c.h.b16 %v733
        %v1172 = vunpack.c.l.b16 %v734
        %v1173 = vunpack.c.h.b16 %v734
        %v1174 = vunpack.c.l.b16 %v735
        %v1175 = vunpack.c.h.b16 %v735
        %v1176 = vunpack.c.l.b16 %v736
        %v1177 = vunpack.c.l.b16 %v737
        %v1178 = vunpack.c.h.b16 %v737
        %v1179 = vunpack.c.l.b16 %v738
        %v1180 = vunpack.c.h.b16 %v738
        %v1181 = vunpack.c.l.b16 %v739
        %v1182 = vunpack.c.h.b16 %v739
        %v1183 = vunpack.c.l.b16 %v740
        %v1184 = vunpack.c.l.b16 %v741
        %v1185 = vunpack.c.h.b16 %v741
        %v1186 = vunpack.c.l.b16 %v742
        %v1187 = vunpack.c.h.b16 %v742
        %v1188 = vunpack.c.l.b16 %v743
        %v1189 = vunpack.c.h.b16 %v743
        %v1190 = vunpack.c.l.b16 %v744
        %v1191 = vunpack.c.l.b16 %v745
        %v1192 = vunpack.c.h.b16 %v745
        %v1193 = vunpack.c.l.b16 %v746
        %v1194 = vunpack.c.h.b16 %v746
        %v1195 = vunpack.c.l.b16 %v747
        %v1196 = vunpack.c.h.b16 %v747
        %v1197 = vunpack.c.l.b16 %v748
        %v1198 = vunpack.c.l.b16 %v749
        %v1199 = vunpack.c.h.b16 %v749
        %v1200 = vunpack.c.l.b16 %v750
        %v1201 = vunpack.c.h.b16 %v750
        %v1202 = vunpack.c.l.b16 %v751
        %v1203 = vunpack.c.h.b16 %v751
        %v1204 = vunpack.c.l.b16 %v752
        %v1205 = vunpack.c.l.b16 %v753
        %v1206 = vunpack.c.h.b16 %v753
        %v1207 = vunpack.c.l.b16 %v754
        %v1208 = vunpack.c.h.b16 %v754
        %v1209 = vunpack.c.l.b16 %v755
        %v1210 = vunpack.c.h.b16 %v755
        %v1211 = vunpack.c.l.b16 %v756
        %v1212 = vunpack.c.l.b16 %v757
        %v1213 = vunpack.c.h.b16 %v757
        %v1214 = vunpack.c.l.b16 %v758
        %v1215 = vunpack.c.h.b16 %v758
        %v1216 = vunpack.c.l.b16 %v759
        %v1217 = vunpack.c.h.b16 %v759
        %v1218 = vunpack.c.l.b16 %v760
        %v1219 = vunpack.c.l.b16 %v761
        %v1220 = vunpack.c.h.b16 %v761
        %v1221 = vunpack.c.l.b16 %v762
        %v1222 = vunpack.c.h.b16 %v762
        %v1223 = vunpack.c.l.b16 %v763
        %v1224 = vunpack.c.h.b16 %v763
        %v1225 = vunpack.c.l.b16 %v764
        %v1226 = vunpack.c.l.b16 %v765
        %v1227 = vunpack.c.h.b16 %v765
        %v1228 = vunpack.c.l.b16 %v766
        %v1229 = vunpack.c.h.b16 %v766
        %v1230 = vunpack.c.l.b16 %v767
        %v1231 = vunpack.c.h.b16 %v767
        %v1232 = vunpack.c.l.b16 %v768
        %v1233 = vunpack.c.l.b16 %v769
        %v1234 = vunpack.c.h.b16 %v769
        %v1235 = vunpack.c.l.b16 %v770
        %v1236 = vunpack.c.h.b16 %v770
        %v1237 = vunpack.c.l.b16 %v771
        %v1238 = vunpack.c.h.b16 %v771
        %v1239 = vunpack.c.l.b16 %v772
        %v1240 = vunpack.c.l.b16 %v773
        %v1241 = vunpack.c.h.b16 %v773
        %v1242 = vunpack.c.l.b16 %v774
        %v1243 = vunpack.c.h.b16 %v774
        %v1244 = vunpack.c.l.b16 %v775
        %v1245 = vunpack.c.h.b16 %v775
        %v1246 = vunpack.c.l.b16 %v776
        %v1247 = vunpack.c.l.b16 %v777
        %v1248 = vunpack.c.h.b16 %v777
        %v1249 = vunpack.c.l.b16 %v778
        %v1250 = vunpack.c.h.b16 %v778
        %v1251 = vunpack.c.l.b16 %v779
        %v1252 = vunpack.c.h.b16 %v779
        %v1253 = vunpack.c.l.b16 %v780
        %v1254 = vunpack.c.l.b16 %v781
        %v1255 = vunpack.c.h.b16 %v781
        %v1256 = vunpack.c.l.b16 %v782
        %v1257 = vunpack.c.h.b16 %v782
        %v1258 = vunpack.c.l.b16 %v783
        %v1259 = vunpack.c.h.b16 %v783
        %v1260 = vunpack.c.l.b16 %v784
        %v1261 = vpack.c.b16 %v1044, %v1037
        %v1262 = vpack.c.b16 %v1045, %v1038
        %v1263 = vpack.c.b16 %v1046, %v1039
        %v1264 = vpack.c.b16 %v1047, %v1040
        %v1265 = vpack.c.b16 %v1048, %v1041
        %v1266 = vpack.c.b16 %v1049, %v1042
        %v1267 = vpack.c.b16 %v1050, %v1043
        %v1268 = vpack.c.b16 %v1058, %v1051
        %v1269 = vpack.c.b16 %v1059, %v1052
        %v1270 = vpack.c.b16 %v1060, %v1053
        %v1271 = vpack.c.b16 %v1061, %v1054
        %v1272 = vpack.c.b16 %v1062, %v1055
        %v1273 = vpack.c.b16 %v1063, %v1056
        %v1274 = vpack.c.b16 %v1064, %v1057
        %v1275 = vpack.c.b16 %v1072, %v1065
        %v1276 = vpack.c.b16 %v1073, %v1066
        %v1277 = vpack.c.b16 %v1074, %v1067
        %v1278 = vpack.c.b16 %v1075, %v1068
        %v1279 = vpack.c.b16 %v1076, %v1069
        %v1280 = vpack.c.b16 %v1077, %v1070
        %v1281 = vpack.c.b16 %v1078, %v1071
        %v1282 = vpack.c.b16 %v1086, %v1079
        %v1283 = vpack.c.b16 %v1087, %v1080
        %v1284 = vpack.c.b16 %v1088, %v1081
        %v1285 = vpack.c.b16 %v1089, %v1082
        %v1286 = vpack.c.b16 %v1090, %v1083
        %v1287 = vpack.c.b16 %v1091, %v1084
        %v1288 = vpack.c.b16 %v1092, %v1085
        %v1289 = vpack.c.b16 %v1100, %v1093
        %v1290 = vpack.c.b16 %v1101, %v1094
        %v1291 = vpack.c.b16 %v1102, %v1095
        %v1292 = vpack.c.b16 %v1103, %v1096
        %v1293 = vpack.c.b16 %v1104, %v1097
        %v1294 = vpack.c.b16 %v1105, %v1098
        %v1295 = vpack.c.b16 %v1106, %v1099
        %v1296 = vpack.c.b16 %v1114, %v1107
        %v1297 = vpack.c.b16 %v1115, %v1108
        %v1298 = vpack.c.b16 %v1116, %v1109
        %v1299 = vpack.c.b16 %v1117, %v1110
        %v1300 = vpack.c.b16 %v1118, %v1111
        %v1301 = vpack.c.b16 %v1119, %v1112
        %v1302 = vpack.c.b16 %v1120, %v1113
        %v1303 = vpack.c.b16 %v1128, %v1121
        %v1304 = vpack.c.b16 %v1129, %v1122
        %v1305 = vpack.c.b16 %v1130, %v1123
        %v1306 = vpack.c.b16 %v1131, %v1124
        %v1307 = vpack.c.b16 %v1132, %v1125
        %v1308 = vpack.c.b16 %v1133, %v1126
        %v1309 = vpack.c.b16 %v1134, %v1127
        %v1310 = vpack.c.b16 %v1142, %v1135
        %v1311 = vpack.c.b16 %v1143, %v1136
        %v1312 = vpack.c.b16 %v1144, %v1137
        %v1313 = vpack.c.b16 %v1145, %v1138
        %v1314 = vpack.c.b16 %v1146, %v1139
        %v1315 = vpack.c.b16 %v1147, %v1140
        %v1316 = vpack.c.b16 %v1148, %v1141
        %v1317 = vpack.c.b16 %v1156, %v1149
        %v1318 = vpack.c.b16 %v1157, %v1150
        %v1319 = vpack.c.b16 %v1158, %v1151
        %v1320 = vpack.c.b16 %v1159, %v1152
        %v1321 = vpack.c.b16 %v1160, %v1153
        %v1322 = vpack.c.b16 %v1161, %v1154
        %v1323 = vpack.c.b16 %v1162, %v1155
        %v1324 = vpack.c.b16 %v1170, %v1163
        %v1325 = vpack.c.b16 %v1171, %v1164
        %v1326 = vpack.c.b16 %v1172, %v1165
        %v1327 = vpack.c.b16 %v1173, %v1166
        %v1328 = vpack.c.b16 %v1174, %v1167
        %v1329 = vpack.c.b16 %v1175, %v1168
        %v1330 = vpack.c.b16 %v1176, %v1169
        %v1331 = vpack.c.b16 %v1184, %v1177
        %v1332 = vpack.c.b16 %v1185, %v1178
        %v1333 = vpack.c.b16 %v1186, %v1179
        %v1334 = vpack.c.b16 %v1187, %v1180
        %v1335 = vpack.c.b16 %v1188, %v1181
        %v1336 = vpack.c.b16 %v1189, %v1182
        %v1337 = vpack.c.b16 %v1190, %v1183
        %v1338 = vpack.c.b16 %v1198, %v1191
        %v1339 = vpack.c.b16 %v1199, %v1192
        %v1340 = vpack.c.b16 %v1200, %v1193
        %v1341 = vpack.c.b16 %v1201, %v1194
        %v1342 = vpack.c.b16 %v1202, %v1195
        %v1343 = vpack.c.b16 %v1203, %v1196
        %v1344 = vpack.c.b16 %v1204, %v1197
        %v1345 = vpack.c.b16 %v1212, %v1205
        %v1346 = vpack.c.b16 %v1213, %v1206
        %v1347 = vpack.c.b16 %v1214, %v1207
        %v1348 = vpack.c.b16 %v1215, %v1208
        %v1349 = vpack.c.b16 %v1216, %v1209
        %v1350 = vpack.c.b16 %v1217, %v1210
        %v1351 = vpack.c.b16 %v1218, %v1211
        %v1352 = vpack.c.b16 %v1226, %v1219
        %v1353 = vpack.c.b16 %v1227, %v1220
        %v1354 = vpack.c.b16 %v1228, %v1221
        %v1355 = vpack.c.b16 %v1229, %v1222
        %v1356 = vpack.c.b16 %v1230, %v1223
        %v1357 = vpack.c.b16 %v1231, %v1224
        %v1358 = vpack.c.b16 %v1232, %v1225
        %v1359 = vpack.c.b16 %v1240, %v1233
        %v1360 = vpack.c.b16 %v1241, %v1234
        %v1361 = vpack.c.b16 %v1242, %v1235
        %v1362 = vpack.c.b16 %v1243, %v1236
        %v1363 = vpack.c.b16 %v1244, %v1237
        %v1364 = vpack.c.b16 %v1245, %v1238
        %v1365 = vpack.c.b16 %v1246, %v1239
        %v1366 = vpack.c.b16 %v1254, %v1247
        %v1367 = vpack.c.b16 %v1255, %v1248
        %v1368 = vpack.c.b16 %v1256, %v1249
        %v1369 = vpack.c.b16 %v1257, %v1250
        %v1370 = vpack.c.b16 %v1258, %v1251
        %v1371 = vpack.c.b16 %v1259, %v1252
        %v1372 = vpack.c.b16 %v1260, %v1253
        %v1597 = vunpack.c.l.b16 %v785
        %v1598 = vunpack.c.h.b16 %v785
        %v1599 = vunpack.c.l.b16 %v786
        %v1600 = vunpack.c.h.b16 %v786
        %v1601 = vunpack.c.l.b16 %v787
        %v1602 = vunpack.c.h.b16 %v787
        %v1603 = vunpack.c.l.b16 %v788
        %v1604 = vunpack.c.h.b16 %v788
        %v1605 = vunpack.c.l.b16 %v789
        %v1606 = vunpack.c.h.b16 %v789
        %v1607 = vunpack.c.l.b16 %v790
        %v1608 = vunpack.c.h.b16 %v790
        %v1609 = vunpack.c.l.b16 %v791
        %v1610 = vunpack.c.h.b16 %v791
        %v1611 = vunpack.c.l.b16 %v792
        %v1612 = vunpack.c.h.b16 %v792
        %v1613 = vunpack.c.l.b16 %v793
        %v1614 = vunpack.c.h.b16 %v793
        %v1615 = vunpack.c.l.b16 %v794
        %v1616 = vunpack.c.h.b16 %v794
        %v1617 = vunpack.c.l.b16 %v795
        %v1618 = vunpack.c.h.b16 %v795
        %v1619 = vunpack.c.l.b16 %v796
        %v1620 = vunpack.c.h.b16 %v796
        %v1621 = vunpack.c.l.b16 %v797
        %v1622 = vunpack.c.h.b16 %v797
        %v1623 = vunpack.c.l.b16 %v798
        %v1624 = vunpack.c.h.b16 %v798
        %v1625 = vunpack.c.l.b16 %v799
        %v1626 = vunpack.c.h.b16 %v799
        %v1627 = vunpack.c.l.b16 %v800
        %v1628 = vunpack.c.h.b16 %v800
        %v1629 = vunpack.c.l.b16 %v801
        %v1630 = vunpack.c.h.b16 %v801
        %v1631 = vunpack.c.l.b16 %v802
        %v1632 = vunpack.c.h.b16 %v802
        %v1633 = vunpack.c.l.b16 %v803
        %v1634 = vunpack.c.h.b16 %v803
        %v1635 = vunpack.c.l.b16 %v804
        %v1636 = vunpack.c.h.b16 %v804
        %v1637 = vunpack.c.l.b16 %v805
        %v1638 = vunpack.c.h.b16 %v805
        %v1639 = vunpack.c.l.b16 %v806
        %v1640 = vunpack.c.h.b16 %v806
        %v1641 = vunpack.c.l.b16 %v807
        %v1642 = vunpack.c.h.b16 %v807
        %v1643 = vunpack.c.l.b16 %v808
        %v1644 = vunpack.c.h.b16 %v808
        %v1645 = vunpack.c.l.b16 %v809
        %v1646 = vunpack.c.h.b16 %v809
        %v1647 = vunpack.c.l.b16 %v810
        %v1648 = vunpack.c.h.b16 %v810
        %v1649 = vunpack.c.l.b16 %v811
        %v1650 = vunpack.c.h.b16 %v811
        %v1651 = vunpack.c.l.b16 %v812
        %v1652 = vunpack.c.h.b16 %v812
        %v1653 = vunpack.c.l.b16 %v813
        %v1654 = vunpack.c.h.b16 %v813
        %v1655 = vunpack.c.l.b16 %v814
        %v1656 = vunpack.c.h.b16 %v814
        %v1657 = vunpack.c.l.b16 %v815
        %v1658 = vunpack.c.h.b16 %v815
        %v1659 = vunpack.c.l.b16 %v816
        %v1660 = vunpack.c.h.b16 %v816
        %v1661 = vunpack.c.l.b16 %v817
        %v1662 = vunpack.c.h.b16 %v817
        %v1663 = vunpack.c.l.b16 %v818
        %v1664 = vunpack.c.h.b16 %v818
        %v1665 = vunpack.c.l.b16 %v819
        %v1666 = vunpack.c.h.b16 %v819
        %v1667 = vunpack.c.l.b16 %v820
        %v1668 = vunpack.c.h.b16 %v820
        %v1669 = vunpack.c.l.b16 %v821
        %v1670 = vunpack.c.h.b16 %v821
        %v1671 = vunpack.c.l.b16 %v822
        %v1672 = vunpack.c.h.b16 %v822
        %v1673 = vunpack.c.l.b16 %v823
        %v1674 = vunpack.c.h.b16 %v823
        %v1675 = vunpack.c.l.b16 %v824
        %v1676 = vunpack.c.h.b16 %v824
        %v1677 = vunpack.c.l.b16 %v825
        %v1678 = vunpack.c.h.b16 %v825
        %v1679 = vunpack.c.l.b16 %v826
        %v1680 = vunpack.c.h.b16 %v826
        %v1681 = vunpack.c.l.b16 %v827
        %v1682 = vunpack.c.h.b16 %v827
        %v1683 = vunpack.c.l.b16 %v828
        %v1684 = vunpack.c.h.b16 %v828
        %v1685 = vunpack.c.l.b16 %v829
        %v1686 = vunpack.c.h.b16 %v829
        %v1687 = vunpack.c.l.b16 %v830
        %v1688 = vunpack.c.h.b16 %v830
        %v1689 = vunpack.c.l.b16 %v831
        %v1690 = vunpack.c.h.b16 %v831
        %v1691 = vunpack.c.l.b16 %v832
        %v1692 = vunpack.c.h.b16 %v832
        %v1693 = vunpack.c.l.b16 %v833
        %v1694 = vunpack.c.h.b16 %v833
        %v1695 = vunpack.c.l.b16 %v834
        %v1696 = vunpack.c.h.b16 %v834
        %v1697 = vunpack.c.l.b16 %v835
        %v1698 = vunpack.c.h.b16 %v835
        %v1699 = vunpack.c.l.b16 %v836
        %v1700 = vunpack.c.h.b16 %v836
        %v1701 = vunpack.c.l.b16 %v837
        %v1702 = vunpack.c.h.b16 %v837
        %v1703 = vunpack.c.l.b16 %v838
        %v1704 = vunpack.c.h.b16 %v838
        %v1705 = vunpack.c.l.b16 %v839
        %v1706 = vunpack.c.h.b16 %v839
        %v1707 = vunpack.c.l.b16 %v840
        %v1708 = vunpack.c.h.b16 %v840
        %v1709 = vunpack.c.l.b16 %v841
        %v1710 = vunpack.c.h.b16 %v841
        %v1711 = vunpack.c.l.b16 %v842
        %v1712 = vunpack.c.h.b16 %v842
        %v1713 = vunpack.c.l.b16 %v843
        %v1714 = vunpack.c.h.b16 %v843
        %v1715 = vunpack.c.l.b16 %v844
        %v1716 = vunpack.c.h.b16 %v844
        %v1717 = vunpack.c.l.b16 %v845
        %v1718 = vunpack.c.h.b16 %v845
        %v1719 = vunpack.c.l.b16 %v846
        %v1720 = vunpack.c.h.b16 %v846
        %v1721 = vunpack.c.l.b16 %v847
        %v1722 = vunpack.c.h.b16 %v847
        %v1723 = vunpack.c.l.b16 %v848
        %v1724 = vunpack.c.h.b16 %v848
        %v1725 = vunpack.c.l.b16 %v849
        %v1726 = vunpack.c.h.b16 %v849
        %v1727 = vunpack.c.l.b16 %v850
        %v1728 = vunpack.c.h.b16 %v850
        %v1729 = vunpack.c.l.b16 %v851
        %v1730 = vunpack.c.h.b16 %v851
        %v1731 = vunpack.c.l.b16 %v852
        %v1732 = vunpack.c.h.b16 %v852
        %v1733 = vunpack.c.l.b16 %v853
        %v1734 = vunpack.c.h.b16 %v853
        %v1735 = vunpack.c.l.b16 %v854
        %v1736 = vunpack.c.h.b16 %v854
        %v1737 = vunpack.c.l.b16 %v855
        %v1738 = vunpack.c.h.b16 %v855
        %v1739 = vunpack.c.l.b16 %v856
        %v1740 = vunpack.c.h.b16 %v856
        %v1741 = vunpack.c.l.b16 %v857
        %v1742 = vunpack.c.h.b16 %v857
        %v1743 = vunpack.c.l.b16 %v858
        %v1744 = vunpack.c.h.b16 %v858
        %v1745 = vunpack.c.l.b16 %v859
        %v1746 = vunpack.c.h.b16 %v859
        %v1747 = vunpack.c.l.b16 %v860
        %v1748 = vunpack.c.h.b16 %v860
        %v1749 = vunpack.c.l.b16 %v861
        %v1750 = vunpack.c.h.b16 %v861
        %v1751 = vunpack.c.l.b16 %v862
        %v1752 = vunpack.c.h.b16 %v862
        %v1753 = vunpack.c.l.b16 %v863
        %v1754 = vunpack.c.h.b16 %v863
        %v1755 = vunpack.c.l.b16 %v864
        %v1756 = vunpack.c.h.b16 %v864
        %v1757 = vunpack.c.l.b16 %v865
        %v1758 = vunpack.c.h.b16 %v865
        %v1759 = vunpack.c.l.b16 %v866
        %v1760 = vunpack.c.h.b16 %v866
        %v1761 = vunpack.c.l.b16 %v867
        %v1762 = vunpack.c.h.b16 %v867
        %v1763 = vunpack.c.l.b16 %v868
        %v1764 = vunpack.c.h.b16 %v868
        %v1765 = vunpack.c.l.b16 %v869
        %v1766 = vunpack.c.h.b16 %v869
        %v1767 = vunpack.c.l.b16 %v870
        %v1768 = vunpack.c.h.b16 %v870
        %v1769 = vunpack.c.l.b16 %v871
        %v1770 = vunpack.c.h.b16 %v871
        %v1771 = vunpack.c.l.b16 %v872
        %v1772 = vunpack.c.h.b16 %v872
        %v1773 = vunpack.c.l.b16 %v873
        %v1774 = vunpack.c.h.b16 %v873
        %v1775 = vunpack.c.l.b16 %v874
        %v1776 = vunpack.c.h.b16 %v874
        %v1777 = vunpack.c.l.b16 %v875
        %v1778 = vunpack.c.h.b16 %v875
        %v1779 = vunpack.c.l.b16 %v876
        %v1780 = vunpack.c.h.b16 %v876
        %v1781 = vunpack.c.l.b16 %v877
        %v1782 = vunpack.c.h.b16 %v877
        %v1783 = vunpack.c.l.b16 %v878
        %v1784 = vunpack.c.h.b16 %v878
        %v1785 = vunpack.c.l.b16 %v879
        %v1786 = vunpack.c.h.b16 %v879
        %v1787 = vunpack.c.l.b16 %v880
        %v1788 = vunpack.c.h.b16 %v880
        %v1789 = vunpack.c.l.b16 %v881
        %v1790 = vunpack.c.h.b16 %v881
        %v1791 = vunpack.c.l.b16 %v882
        %v1792 = vunpack.c.h.b16 %v882
        %v1793 = vunpack.c.l.b16 %v883
        %v1794 = vunpack.c.h.b16 %v883
        %v1795 = vunpack.c.l.b16 %v884
        %v1796 = vunpack.c.h.b16 %v884
        %v1797 = vunpack.c.l.b16 %v885
        %v1798 = vunpack.c.h.b16 %v885
        %v1799 = vunpack.c.l.b16 %v886
        %v1800 = vunpack.c.h.b16 %v886
        %v1801 = vunpack.c.l.b16 %v887
        %v1802 = vunpack.c.h.b16 %v887
        %v1803 = vunpack.c.l.b16 %v888
        %v1804 = vunpack.c.h.b16 %v888
        %v1805 = vunpack.c.l.b16 %v889
        %v1806 = vunpack.c.h.b16 %v889
        %v1807 = vunpack.c.l.b16 %v890
        %v1808 = vunpack.c.h.b16 %v890
        %v1809 = vunpack.c.l.b16 %v891
        %v1810 = vunpack.c.h.b16 %v891
        %v1811 = vunpack.c.l.b16 %v892
        %v1812 = vunpack.c.h.b16 %v892
        %v1813 = vunpack.c.l.b16 %v893
        %v1814 = vunpack.c.h.b16 %v893
        %v1815 = vunpack.c.l.b16 %v894
        %v1816 = vunpack.c.h.b16 %v894
        %v1817 = vunpack.c.l.b16 %v895
        %v1818 = vunpack.c.h.b16 %v895
        %v1819 = vunpack.c.l.b16 %v896
        %v1820 = vunpack.c.h.b16 %v896
        %v1821 = vpack.c.b16 %v1599, %v1597
        %v1822 = vpack.c.b16 %v1600, %v1598
        %v1823 = vpack.c.b16 %v1603, %v1601
        %v1824 = vpack.c.b16 %v1604, %v1602
        %v1825 = vpack.c.b16 %v1607, %v1605
        %v1826 = vpack.c.b16 %v1608, %v1606
        %v1827 = vpack.c.b16 %v1611, %v1609
        %v1828 = vpack.c.b16 %v1612, %v1610
        %v1829 = vpack.c.b16 %v1615, %v1613
        %v1830 = vpack.c.b16 %v1616, %v1614
        %v1831 = vpack.c.b16 %v1619, %v1617
        %v1832 = vpack.c.b16 %v1620, %v1618
        %v1833 = vpack.c.b16 %v1623, %v1621
        %v1834 = vpack.c.b16 %v1624, %v1622
        %v1835 = vpack.c.b16 %v1627, %v1625
        %v1836 = vpack.c.b16 %v1628, %v1626
        %v1837 = vpack.c.b16 %v1631, %v1629
        %v1838 = vpack.c.b16 %v1632, %v1630
        %v1839 = vpack.c.b16 %v1635, %v1633
        %v1840 = vpack.c.b16 %v1636, %v1634
        %v1841 = vpack.c.b16 %v1639, %v1637
        %v1842 = vpack.c.b16 %v1640, %v1638
        %v1843 = vpack.c.b16 %v1643, %v1641
        %v1844 = vpack.c.b16 %v1644, %v1642
        %v1845 = vpack.c.b16 %v1647, %v1645
        %v1846 = vpack.c.b16 %v1648, %v1646
        %v1847 = vpack.c.b16 %v1651, %v1649
        %v1848 = vpack.c.b16 %v1652, %v1650
        %v1849 = vpack.c.b16 %v1655, %v1653
        %v1850 = vpack.c.b16 %v1656, %v1654
        %v1851 = vpack.c.b16 %v1659, %v1657
        %v1852 = vpack.c.b16 %v1660, %v1658
        %v1853 = vpack.c.b16 %v1663, %v1661
        %v1854 = vpack.c.b16 %v1664, %v1662
        %v1855 = vpack.c.b16 %v1667, %v1665
        %v1856 = vpack.c.b16 %v1668, %v1666
        %v1857 = vpack.c.b16 %v1671, %v1669
        %v1858 = vpack.c.b16 %v1672, %v1670
        %v1859 = vpack.c.b16 %v1675, %v1673
        %v1860 = vpack.c.b16 %v1676, %v1674
        %v1861 = vpack.c.b16 %v1679, %v1677
        %v1862 = vpack.c.b16 %v1680, %v1678
        %v1863 = vpack.c.b16 %v1683, %v1681
        %v1864 = vpack.c.b16 %v1684, %v1682
        %v1865 = vpack.c.b16 %v1687, %v1685
        %v1866 = vpack.c.b16 %v1688, %v1686
        %v1867 = vpack.c.b16 %v1691, %v1689
        %v1868 = vpack.c.b16 %v1692, %v1690
        %v1869 = vpack.c.b16 %v1695, %v1693
        %v1870 = vpack.c.b16 %v1696, %v1694
        %v1871 = vpack.c.b16 %v1699, %v1697
        %v1872 = vpack.c.b16 %v1700, %v1698
        %v1873 = vpack.c.b16 %v1703, %v1701
        %v1874 = vpack.c.b16 %v1704, %v1702
        %v1875 = vpack.c.b16 %v1707, %v1705
        %v1876 = vpack.c.b16 %v1708, %v1706
        %v1877 = vpack.c.b16 %v1711, %v1709
        %v1878 = vpack.c.b16 %v1712, %v1710
        %v1879 = vpack.c.b16 %v1715, %v1713
        %v1880 = vpack.c.b16 %v1716, %v1714
        %v1881 = vpack.c.b16 %v1719, %v1717
        %v1882 = vpack.c.b16 %v1720, %v1718
        %v1883 = vpack.c.b16 %v1723, %v1721
        %v1884 = vpack.c.b16 %v1724, %v1722
        %v1885 = vpack.c.b16 %v1727, %v1725
        %v1886 = vpack.c.b16 %v1728, %v1726
        %v1887 = vpack.c.b16 %v1731, %v1729
        %v1888 = vpack.c.b16 %v1732, %v1730
        %v1889 = vpack.c.b16 %v1735, %v1733
        %v1890 = vpack.c.b16 %v1736, %v1734
        %v1891 = vpack.c.b16 %v1739, %v1737
        %v1892 = vpack.c.b16 %v1740, %v1738
        %v1893 = vpack.c.b16 %v1743, %v1741
        %v1894 = vpack.c.b16 %v1744, %v1742
        %v1895 = vpack.c.b16 %v1747, %v1745
        %v1896 = vpack.c.b16 %v1748, %v1746
        %v1897 = vpack.c.b16 %v1751, %v1749
        %v1898 = vpack.c.b16 %v1752, %v1750
        %v1899 = vpack.c.b16 %v1755, %v1753
        %v1900 = vpack.c.b16 %v1756, %v1754
        %v1901 = vpack.c.b16 %v1759, %v1757
        %v1902 = vpack.c.b16 %v1760, %v1758
        %v1903 = vpack.c.b16 %v1763, %v1761
        %v1904 = vpack.c.b16 %v1764, %v1762
        %v1905 = vpack.c.b16 %v1767, %v1765
        %v1906 = vpack.c.b16 %v1768, %v1766
        %v1907 = vpack.c.b16 %v1771, %v1769
        %v1908 = vpack.c.b16 %v1772, %v1770
        %v1909 = vpack.c.b16 %v1775, %v1773
        %v1910 = vpack.c.b16 %v1776, %v1774
        %v1911 = vpack.c.b16 %v1779, %v1777
        %v1912 = vpack.c.b16 %v1780, %v1778
        %v1913 = vpack.c.b16 %v1783, %v1781
        %v1914 = vpack.c.b16 %v1784, %v1782
        %v1915 = vpack.c.b16 %v1787, %v1785
        %v1916 = vpack.c.b16 %v1788, %v1786
        %v1917 = vpack.c.b16 %v1791, %v1789
        %v1918 = vpack.c.b16 %v1792, %v1790
        %v1919 = vpack.c.b16 %v1795, %v1793
        %v1920 = vpack.c.b16 %v1796, %v1794
        %v1921 = vpack.c.b16 %v1799, %v1797
        %v1922 = vpack.c.b16 %v1800, %v1798
        %v1923 = vpack.c.b16 %v1803, %v1801
        %v1924 = vpack.c.b16 %v1804, %v1802
        %v1925 = vpack.c.b16 %v1807, %v1805
        %v1926 = vpack.c.b16 %v1808, %v1806
        %v1927 = vpack.c.b16 %v1811, %v1809
        %v1928 = vpack.c.b16 %v1812, %v1810
        %v1929 = vpack.c.b16 %v1815, %v1813
        %v1930 = vpack.c.b16 %v1816, %v1814
        %v1931 = vpack.c.b16 %v1819, %v1817
        %v1932 = vpack.c.b16 %v1820, %v1818
        %2045 = vmatprep.subr.bf16.mxu0 %v1836
        %2046 = vmatpush1.bf16.msra.mxu0 %v1835
        %2047 = vmatprep.subr.bf16.mxu0 %v1834
        %2048 = vmatpush1.bf16.msra.mxu0 %v1833
        %2049 = vmatprep.subr.bf16.mxu0 %v1832
        %2050 = vmatpush1.bf16.msra.mxu0 %v1831
        %2051 = vmatprep.subr.bf16.mxu0 %v1830
        %2052 = vmatpush1.bf16.msra.mxu0 %v1829
        %2053 = vmatprep.subr.bf16.mxu0 %v1828
        %2054 = vmatpush1.bf16.msra.mxu0 %v1827
        %2055 = vmatprep.subr.bf16.mxu0 %v1826
        %2056 = vmatpush1.bf16.msra.mxu0 %v1825
        %2057 = vmatprep.subr.bf16.mxu0 %v1824
        %2058 = vmatpush1.bf16.msra.mxu0 %v1823
        %2059 = vmatprep.subr.bf16.mxu0 %v1822
        %2060 = vmatpush1.bf16.msra.mxu0 %v1821
        %2061 = vmatprep.subr.bf16.mxu0 %v1852
        %2062 = vmatpush2.bf16.msra.mxu0 %v1851
        %2063 = vmatprep.subr.bf16.mxu0 %v1850
        %2064 = vmatpush2.bf16.msra.mxu0 %v1849
        %2065 = vmatprep.subr.bf16.mxu0 %v1848
        %2066 = vmatpush2.bf16.msra.mxu0 %v1847
        %2067 = vmatprep.subr.bf16.mxu0 %v1846
        %2068 = vmatpush2.bf16.msra.mxu0 %v1845
        %2069 = vmatprep.subr.bf16.mxu0 %v1844
        %2070 = vmatpush2.bf16.msra.mxu0 %v1843
        %2071 = vmatprep.subr.bf16.mxu0 %v1842
        %2072 = vmatpush2.bf16.msra.mxu0 %v1841
        %2073 = vmatprep.subr.bf16.mxu0 %v1840
        %2074 = vmatpush2.bf16.msra.mxu0 %v1839
        %2075 = vmatprep.subr.bf16.mxu0 %v1838
        %2076 = vmatpush2.bf16.msra.mxu0 %v1837
        %2077 = vmatprep.mubr.bf16.mxu0 %v1262
        %2078 = vmatmul.mubr.bf16.gmra.mxu0 %v1261
        %v2079 = vpop.f32.mrf.mxu0
        %v2080 = vadd.f32 %v902, %v2079
        %v2081 = vpop.f32.mrf.mxu0
        %v2082 = vadd.f32 %v906, %v2081
        %v2083 = vpop.f32.mrf.mxu0
        %v2084 = vadd.f32 %v902, %v2083
        %v2085 = vpop.f32.mrf.mxu0
        %v2086 = vadd.f32 %v906, %v2085
        %2087 = vmatprep.mubr.bf16.mxu0 %v1269
        %2088 = vmatmul.mubr.bf16.gmra.mxu0 %v1268
        %v2089 = vpop.f32.mrf.mxu0
        %v2090 = vadd.f32 %v902, %v2089
        %v2091 = vpop.f32.mrf.mxu0
        %v2092 = vadd.f32 %v906, %v2091
        %v2093 = vpop.f32.mrf.mxu0
        %v2094 = vadd.f32 %v902, %v2093
        %v2095 = vpop.f32.mrf.mxu0
        %v2096 = vadd.f32 %v906, %v2095
        %2097 = vmatprep.mubr.bf16.mxu0 %v1276
        %2098 = vmatmul.mubr.bf16.gmra.mxu0 %v1275
        %v2099 = vpop.f32.mrf.mxu0
        %v2100 = vadd.f32 %v902, %v2099
        %v2101 = vpop.f32.mrf.mxu0
        %v2102 = vadd.f32 %v906, %v2101
        %v2103 = vpop.f32.mrf.mxu0
        %v2104 = vadd.f32 %v902, %v2103
        %v2105 = vpop.f32.mrf.mxu0
        %v2106 = vadd.f32 %v906, %v2105
        %2107 = vmatprep.mubr.bf16.mxu0 %v1283
        %2108 = vmatmul.mubr.bf16.gmra.mxu0 %v1282
        %v2109 = vpop.f32.mrf.mxu0
        %v2110 = vadd.f32 %v902, %v2109
        %v2111 = vpop.f32.mrf.mxu0
        %v2112 = vadd.f32 %v906, %v2111
        %v2113 = vpop.f32.mrf.mxu0
        %v2114 = vadd.f32 %v902, %v2113
        %v2115 = vpop.f32.mrf.mxu0
        %v2116 = vadd.f32 %v906, %v2115
        %2117 = vmatprep.mubr.bf16.mxu0 %v1290
        %2118 = vmatmul.mubr.bf16.gmra.mxu0 %v1289
        %v2119 = vpop.f32.mrf.mxu0
        %v2120 = vadd.f32 %v902, %v2119
        %v2121 = vpop.f32.mrf.mxu0
        %v2122 = vadd.f32 %v906, %v2121
        %v2123 = vpop.f32.mrf.mxu0
        %v2124 = vadd.f32 %v902, %v2123
        %v2125 = vpop.f32.mrf.mxu0
        %v2126 = vadd.f32 %v906, %v2125
        %2127 = vmatprep.mubr.bf16.mxu0 %v1297
        %2128 = vmatmul.mubr.bf16.gmra.mxu0 %v1296
        %v2129 = vpop.f32.mrf.mxu0
        %v2130 = vadd.f32 %v902, %v2129
        %v2131 = vpop.f32.mrf.mxu0
        %v2132 = vadd.f32 %v906, %v2131
        %v2133 = vpop.f32.mrf.mxu0
        %v2134 = vadd.f32 %v902, %v2133
        %v2135 = vpop.f32.mrf.mxu0
        %v2136 = vadd.f32 %v906, %v2135
        %2137 = vmatprep.mubr.bf16.mxu0 %v1304
        %2138 = vmatmul.mubr.bf16.gmra.mxu0 %v1303
        %v2139 = vpop.f32.mrf.mxu0
        %v2140 = vadd.f32 %v902, %v2139
        %v2141 = vpop.f32.mrf.mxu0
        %v2142 = vadd.f32 %v906, %v2141
        %v2143 = vpop.f32.mrf.mxu0
        %v2144 = vadd.f32 %v902, %v2143
        %v2145 = vpop.f32.mrf.mxu0
        %v2146 = vadd.f32 %v906, %v2145
        %2147 = vmatprep.mubr.bf16.mxu0 %v1311
        %2148 = vmatmul.mubr.bf16.gmra.mxu0 %v1310
        %v2149 = vpop.f32.mrf.mxu0
        %v2150 = vadd.f32 %v902, %v2149
        %v2151 = vpop.f32.mrf.mxu0
        %v2152 = vadd.f32 %v906, %v2151
        %v2153 = vpop.f32.mrf.mxu0
        %v2154 = vadd.f32 %v902, %v2153
        %v2155 = vpop.f32.mrf.mxu0
        %v2156 = vadd.f32 %v906, %v2155
        %2157 = vmatprep.mubr.bf16.mxu0 %v1318
        %2158 = vmatmul.mubr.bf16.gmra.mxu0 %v1317
        %v2159 = vpop.f32.mrf.mxu0
        %v2160 = vadd.f32 %v902, %v2159
        %v2161 = vpop.f32.mrf.mxu0
        %v2162 = vadd.f32 %v906, %v2161
        %v2163 = vpop.f32.mrf.mxu0
        %v2164 = vadd.f32 %v902, %v2163
        %v2165 = vpop.f32.mrf.mxu0
        %v2166 = vadd.f32 %v906, %v2165
        %2167 = vmatprep.mubr.bf16.mxu0 %v1325
        %2168 = vmatmul.mubr.bf16.gmra.mxu0 %v1324
        %v2169 = vpop.f32.mrf.mxu0
        %v2170 = vadd.f32 %v902, %v2169
        %v2171 = vpop.f32.mrf.mxu0
        %v2172 = vadd.f32 %v906, %v2171
        %v2173 = vpop.f32.mrf.mxu0
        %v2174 = vadd.f32 %v902, %v2173
        %v2175 = vpop.f32.mrf.mxu0
        %v2176 = vadd.f32 %v906, %v2175
        %2177 = vmatprep.mubr.bf16.mxu0 %v1332
        %2178 = vmatmul.mubr.bf16.gmra.mxu0 %v1331
        %v2179 = vpop.f32.mrf.mxu0
        %v2180 = vadd.f32 %v902, %v2179
        %v2181 = vpop.f32.mrf.mxu0
        %v2182 = vadd.f32 %v906, %v2181
        %v2183 = vpop.f32.mrf.mxu0
        %v2184 = vadd.f32 %v902, %v2183
        %v2185 = vpop.f32.mrf.mxu0
        %v2186 = vadd.f32 %v906, %v2185
        %2187 = vmatprep.mubr.bf16.mxu0 %v1339
        %2188 = vmatmul.mubr.bf16.gmra.mxu0 %v1338
        %v2189 = vpop.f32.mrf.mxu0
        %v2190 = vadd.f32 %v902, %v2189
        %v2191 = vpop.f32.mrf.mxu0
        %v2192 = vadd.f32 %v906, %v2191
        %v2193 = vpop.f32.mrf.mxu0
        %v2194 = vadd.f32 %v902, %v2193
        %v2195 = vpop.f32.mrf.mxu0
        %v2196 = vadd.f32 %v906, %v2195
        %2197 = vmatprep.mubr.bf16.mxu0 %v1346
        %2198 = vmatmul.mubr.bf16.gmra.mxu0 %v1345
        %v2199 = vpop.f32.mrf.mxu0
        %v2200 = vadd.f32 %v902, %v2199
        %v2201 = vpop.f32.mrf.mxu0
        %v2202 = vadd.f32 %v906, %v2201
        %v2203 = vpop.f32.mrf.mxu0
        %v2204 = vadd.f32 %v902, %v2203
        %v2205 = vpop.f32.mrf.mxu0
        %v2206 = vadd.f32 %v906, %v2205
        %2207 = vmatprep.mubr.bf16.mxu0 %v1353
        %2208 = vmatmul.mubr.bf16.gmra.mxu0 %v1352
        %v2209 = vpop.f32.mrf.mxu0
        %v2210 = vadd.f32 %v902, %v2209
        %v2211 = vpop.f32.mrf.mxu0
        %v2212 = vadd.f32 %v906, %v2211
        %v2213 = vpop.f32.mrf.mxu0
        %v2214 = vadd.f32 %v902, %v2213
        %v2215 = vpop.f32.mrf.mxu0
        %v2216 = vadd.f32 %v906, %v2215
        %2217 = vmatprep.mubr.bf16.mxu0 %v1360
        %2218 = vmatmul.mubr.bf16.gmra.mxu0 %v1359
        %v2219 = vpop.f32.mrf.mxu0
        %v2220 = vadd.f32 %v902, %v2219
        %v2221 = vpop.f32.mrf.mxu0
        %v2222 = vadd.f32 %v906, %v2221
        %v2223 = vpop.f32.mrf.mxu0
        %v2224 = vadd.f32 %v902, %v2223
        %v2225 = vpop.f32.mrf.mxu0
        %v2226 = vadd.f32 %v906, %v2225
        %2227 = vmatprep.mubr.bf16.mxu0 %v1367
        %2228 = vmatmul.mubr.bf16.gmra.mxu0 %v1366
        %v2229 = vpop.f32.mrf.mxu0
        %v2230 = vadd.f32 %v902, %v2229
        %v2231 = vpop.f32.mrf.mxu0
        %v2232 = vadd.f32 %v906, %v2231
        %v2233 = vpop.f32.mrf.mxu0
        %v2234 = vadd.f32 %v902, %v2233
        %v2235 = vpop.f32.mrf.mxu0
        %v2236 = vadd.f32 %v906, %v2235
        %2237 = vdwg.mxu0
        %2238 = vmatprep.subr.bf16.mxu0 %v1868
        %2239 = vmatpush1.bf16.msra.mxu0 %v1867
        %2240 = vmatprep.subr.bf16.mxu0 %v1866
        %2241 = vmatpush1.bf16.msra.mxu0 %v1865
        %2242 = vmatprep.subr.bf16.mxu0 %v1864
        %2243 = vmatpush1.bf16.msra.mxu0 %v1863
        %2244 = vmatprep.subr.bf16.mxu0 %v1862
        %2245 = vmatpush1.bf16.msra.mxu0 %v1861
        %2246 = vmatprep.subr.bf16.mxu0 %v1860
        %2247 = vmatpush1.bf16.msra.mxu0 %v1859
        %2248 = vmatprep.subr.bf16.mxu0 %v1858
        %2249 = vmatpush1.bf16.msra.mxu0 %v1857
        %2250 = vmatprep.subr.bf16.mxu0 %v1856
        %2251 = vmatpush1.bf16.msra.mxu0 %v1855
        %2252 = vmatprep.subr.bf16.mxu0 %v1854
        %2253 = vmatpush1.bf16.msra.mxu0 %v1853
        %2254 = vmatprep.subr.bf16.mxu0 %v1884
        %2255 = vmatpush2.bf16.msra.mxu0 %v1883
        %2256 = vmatprep.subr.bf16.mxu0 %v1882
        %2257 = vmatpush2.bf16.msra.mxu0 %v1881
        %2258 = vmatprep.subr.bf16.mxu0 %v1880
        %2259 = vmatpush2.bf16.msra.mxu0 %v1879
        %2260 = vmatprep.subr.bf16.mxu0 %v1878
        %2261 = vmatpush2.bf16.msra.mxu0 %v1877
        %2262 = vmatprep.subr.bf16.mxu0 %v1876
        %2263 = vmatpush2.bf16.msra.mxu0 %v1875
        %2264 = vmatprep.subr.bf16.mxu0 %v1874
        %2265 = vmatpush2.bf16.msra.mxu0 %v1873
        %2266 = vmatprep.subr.bf16.mxu0 %v1872
        %2267 = vmatpush2.bf16.msra.mxu0 %v1871
        %2268 = vmatprep.subr.bf16.mxu0 %v1870
        %2269 = vmatpush2.bf16.msra.mxu0 %v1869
        %2270 = vmatprep.mubr.bf16.mxu0 %v1264
        %2271 = vmatmul.mubr.bf16.gmra.mxu0 %v1263
        %v2272 = vpop.f32.mrf.mxu0
        %v2273 = vadd.f32 %v2080, %v2272
        %v2274 = vpop.f32.mrf.mxu0
        %v2275 = vadd.f32 %v2082, %v2274
        %v2276 = vpop.f32.mrf.mxu0
        %v2277 = vadd.f32 %v2084, %v2276
        %v2278 = vpop.f32.mrf.mxu0
        %v2279 = vadd.f32 %v2086, %v2278
        %2280 = vmatprep.mubr.bf16.mxu0 %v1271
        %2281 = vmatmul.mubr.bf16.gmra.mxu0 %v1270
        %v2282 = vpop.f32.mrf.mxu0
        %v2283 = vadd.f32 %v2090, %v2282
        %v2284 = vpop.f32.mrf.mxu0
        %v2285 = vadd.f32 %v2092, %v2284
        %v2286 = vpop.f32.mrf.mxu0
        %v2287 = vadd.f32 %v2094, %v2286
        %v2288 = vpop.f32.mrf.mxu0
        %v2289 = vadd.f32 %v2096, %v2288
        %2290 = vmatprep.mubr.bf16.mxu0 %v1278
        %2291 = vmatmul.mubr.bf16.gmra.mxu0 %v1277
        %v2292 = vpop.f32.mrf.mxu0
        %v2293 = vadd.f32 %v2100, %v2292
        %v2294 = vpop.f32.mrf.mxu0
        %v2295 = vadd.f32 %v2102, %v2294
        %v2296 = vpop.f32.mrf.mxu0
        %v2297 = vadd.f32 %v2104, %v2296
        %v2298 = vpop.f32.mrf.mxu0
        %v2299 = vadd.f32 %v2106, %v2298
        %2300 = vmatprep.mubr.bf16.mxu0 %v1285
        %2301 = vmatmul.mubr.bf16.gmra.mxu0 %v1284
        %v2302 = vpop.f32.mrf.mxu0
        %v2303 = vadd.f32 %v2110, %v2302
        %v2304 = vpop.f32.mrf.mxu0
        %v2305 = vadd.f32 %v2112, %v2304
        %v2306 = vpop.f32.mrf.mxu0
        %v2307 = vadd.f32 %v2114, %v2306
        %v2308 = vpop.f32.mrf.mxu0
        %v2309 = vadd.f32 %v2116, %v2308
        %2310 = vmatprep.mubr.bf16.mxu0 %v1292
        %2311 = vmatmul.mubr.bf16.gmra.mxu0 %v1291
        %v2312 = vpop.f32.mrf.mxu0
        %v2313 = vadd.f32 %v2120, %v2312
        %v2314 = vpop.f32.mrf.mxu0
        %v2315 = vadd.f32 %v2122, %v2314
        %v2316 = vpop.f32.mrf.mxu0
        %v2317 = vadd.f32 %v2124, %v2316
        %v2318 = vpop.f32.mrf.mxu0
        %v2319 = vadd.f32 %v2126, %v2318
        %2320 = vmatprep.mubr.bf16.mxu0 %v1299
        %2321 = vmatmul.mubr.bf16.gmra.mxu0 %v1298
        %v2322 = vpop.f32.mrf.mxu0
        %v2323 = vadd.f32 %v2130, %v2322
        %v2324 = vpop.f32.mrf.mxu0
        %v2325 = vadd.f32 %v2132, %v2324
        %v2326 = vpop.f32.mrf.mxu0
        %v2327 = vadd.f32 %v2134, %v2326
        %v2328 = vpop.f32.mrf.mxu0
        %v2329 = vadd.f32 %v2136, %v2328
        %2330 = vmatprep.mubr.bf16.mxu0 %v1306
        %2331 = vmatmul.mubr.bf16.gmra.mxu0 %v1305
        %v2332 = vpop.f32.mrf.mxu0
        %v2333 = vadd.f32 %v2140, %v2332
        %v2334 = vpop.f32.mrf.mxu0
        %v2335 = vadd.f32 %v2142, %v2334
        %v2336 = vpop.f32.mrf.mxu0
        %v2337 = vadd.f32 %v2144, %v2336
        %v2338 = vpop.f32.mrf.mxu0
        %v2339 = vadd.f32 %v2146, %v2338
        %2340 = vmatprep.mubr.bf16.mxu0 %v1313
        %2341 = vmatmul.mubr.bf16.gmra.mxu0 %v1312
        %v2342 = vpop.f32.mrf.mxu0
        %v2343 = vadd.f32 %v2150, %v2342
        %v2344 = vpop.f32.mrf.mxu0
        %v2345 = vadd.f32 %v2152, %v2344
        %v2346 = vpop.f32.mrf.mxu0
        %v2347 = vadd.f32 %v2154, %v2346
        %v2348 = vpop.f32.mrf.mxu0
        %v2349 = vadd.f32 %v2156, %v2348
        %2350 = vmatprep.mubr.bf16.mxu0 %v1320
        %2351 = vmatmul.mubr.bf16.gmra.mxu0 %v1319
        %v2352 = vpop.f32.mrf.mxu0
        %v2353 = vadd.f32 %v2160, %v2352
        %v2354 = vpop.f32.mrf.mxu0
        %v2355 = vadd.f32 %v2162, %v2354
        %v2356 = vpop.f32.mrf.mxu0
        %v2357 = vadd.f32 %v2164, %v2356
        %v2358 = vpop.f32.mrf.mxu0
        %v2359 = vadd.f32 %v2166, %v2358
        %2360 = vmatprep.mubr.bf16.mxu0 %v1327
        %2361 = vmatmul.mubr.bf16.gmra.mxu0 %v1326
        %v2362 = vpop.f32.mrf.mxu0
        %v2363 = vadd.f32 %v2170, %v2362
        %v2364 = vpop.f32.mrf.mxu0
        %v2365 = vadd.f32 %v2172, %v2364
        %v2366 = vpop.f32.mrf.mxu0
        %v2367 = vadd.f32 %v2174, %v2366
        %v2368 = vpop.f32.mrf.mxu0
        %v2369 = vadd.f32 %v2176, %v2368
        %2370 = vmatprep.mubr.bf16.mxu0 %v1334
        %2371 = vmatmul.mubr.bf16.gmra.mxu0 %v1333
        %v2372 = vpop.f32.mrf.mxu0
        %v2373 = vadd.f32 %v2180, %v2372
        %v2374 = vpop.f32.mrf.mxu0
        %v2375 = vadd.f32 %v2182, %v2374
        %v2376 = vpop.f32.mrf.mxu0
        %v2377 = vadd.f32 %v2184, %v2376
        %v2378 = vpop.f32.mrf.mxu0
        %v2379 = vadd.f32 %v2186, %v2378
        %2380 = vmatprep.mubr.bf16.mxu0 %v1341
        %2381 = vmatmul.mubr.bf16.gmra.mxu0 %v1340
        %v2382 = vpop.f32.mrf.mxu0
        %v2383 = vadd.f32 %v2190, %v2382
        %v2384 = vpop.f32.mrf.mxu0
        %v2385 = vadd.f32 %v2192, %v2384
        %v2386 = vpop.f32.mrf.mxu0
        %v2387 = vadd.f32 %v2194, %v2386
        %v2388 = vpop.f32.mrf.mxu0
        %v2389 = vadd.f32 %v2196, %v2388
        %2390 = vmatprep.mubr.bf16.mxu0 %v1348
        %2391 = vmatmul.mubr.bf16.gmra.mxu0 %v1347
        %v2392 = vpop.f32.mrf.mxu0
        %v2393 = vadd.f32 %v2200, %v2392
        %v2394 = vpop.f32.mrf.mxu0
        %v2395 = vadd.f32 %v2202, %v2394
        %v2396 = vpop.f32.mrf.mxu0
        %v2397 = vadd.f32 %v2204, %v2396
        %v2398 = vpop.f32.mrf.mxu0
        %v2399 = vadd.f32 %v2206, %v2398
        %2400 = vmatprep.mubr.bf16.mxu0 %v1355
        %2401 = vmatmul.mubr.bf16.gmra.mxu0 %v1354
        %v2402 = vpop.f32.mrf.mxu0
        %v2403 = vadd.f32 %v2210, %v2402
        %v2404 = vpop.f32.mrf.mxu0
        %v2405 = vadd.f32 %v2212, %v2404
        %v2406 = vpop.f32.mrf.mxu0
        %v2407 = vadd.f32 %v2214, %v2406
        %v2408 = vpop.f32.mrf.mxu0
        %v2409 = vadd.f32 %v2216, %v2408
        %2410 = vmatprep.mubr.bf16.mxu0 %v1362
        %2411 = vmatmul.mubr.bf16.gmra.mxu0 %v1361
        %v2412 = vpop.f32.mrf.mxu0
        %v2413 = vadd.f32 %v2220, %v2412
        %v2414 = vpop.f32.mrf.mxu0
        %v2415 = vadd.f32 %v2222, %v2414
        %v2416 = vpop.f32.mrf.mxu0
        %v2417 = vadd.f32 %v2224, %v2416
        %v2418 = vpop.f32.mrf.mxu0
        %v2419 = vadd.f32 %v2226, %v2418
        %2420 = vmatprep.mubr.bf16.mxu0 %v1369
        %2421 = vmatmul.mubr.bf16.gmra.mxu0 %v1368
        %v2422 = vpop.f32.mrf.mxu0
        %v2423 = vadd.f32 %v2230, %v2422
        %v2424 = vpop.f32.mrf.mxu0
        %v2425 = vadd.f32 %v2232, %v2424
        %v2426 = vpop.f32.mrf.mxu0
        %v2427 = vadd.f32 %v2234, %v2426
        %v2428 = vpop.f32.mrf.mxu0
        %v2429 = vadd.f32 %v2236, %v2428
        %2430 = vdwg.mxu0
        %2431 = vmatprep.subr.bf16.mxu0 %v1900
        %2432 = vmatpush1.bf16.msra.mxu0 %v1899
        %2433 = vmatprep.subr.bf16.mxu0 %v1898
        %2434 = vmatpush1.bf16.msra.mxu0 %v1897
        %2435 = vmatprep.subr.bf16.mxu0 %v1896
        %2436 = vmatpush1.bf16.msra.mxu0 %v1895
        %2437 = vmatprep.subr.bf16.mxu0 %v1894
        %2438 = vmatpush1.bf16.msra.mxu0 %v1893
        %2439 = vmatprep.subr.bf16.mxu0 %v1892
        %2440 = vmatpush1.bf16.msra.mxu0 %v1891
        %2441 = vmatprep.subr.bf16.mxu0 %v1890
        %2442 = vmatpush1.bf16.msra.mxu0 %v1889
        %2443 = vmatprep.subr.bf16.mxu0 %v1888
        %2444 = vmatpush1.bf16.msra.mxu0 %v1887
        %2445 = vmatprep.subr.bf16.mxu0 %v1886
        %2446 = vmatpush1.bf16.msra.mxu0 %v1885
        %2447 = vmatprep.subr.bf16.mxu0 %v1916
        %2448 = vmatpush2.bf16.msra.mxu0 %v1915
        %2449 = vmatprep.subr.bf16.mxu0 %v1914
        %2450 = vmatpush2.bf16.msra.mxu0 %v1913
        %2451 = vmatprep.subr.bf16.mxu0 %v1912
        %2452 = vmatpush2.bf16.msra.mxu0 %v1911
        %2453 = vmatprep.subr.bf16.mxu0 %v1910
        %2454 = vmatpush2.bf16.msra.mxu0 %v1909
        %2455 = vmatprep.subr.bf16.mxu0 %v1908
        %2456 = vmatpush2.bf16.msra.mxu0 %v1907
        %2457 = vmatprep.subr.bf16.mxu0 %v1906
        %2458 = vmatpush2.bf16.msra.mxu0 %v1905
        %2459 = vmatprep.subr.bf16.mxu0 %v1904
        %2460 = vmatpush2.bf16.msra.mxu0 %v1903
        %2461 = vmatprep.subr.bf16.mxu0 %v1902
        %2462 = vmatpush2.bf16.msra.mxu0 %v1901
        %2463 = vmatprep.mubr.bf16.mxu0 %v1266
        %2464 = vmatmul.mubr.bf16.gmra.mxu0 %v1265
        %v2465 = vpop.f32.mrf.mxu0
        %v2466 = vadd.f32 %v2273, %v2465
        %v2467 = vpop.f32.mrf.mxu0
        %v2468 = vadd.f32 %v2275, %v2467
        %v2469 = vpop.f32.mrf.mxu0
        %v2470 = vadd.f32 %v2277, %v2469
        %v2471 = vpop.f32.mrf.mxu0
        %v2472 = vadd.f32 %v2279, %v2471
        %2473 = vmatprep.mubr.bf16.mxu0 %v1273
        %2474 = vmatmul.mubr.bf16.gmra.mxu0 %v1272
        %v2475 = vpop.f32.mrf.mxu0
        %v2476 = vadd.f32 %v2283, %v2475
        %v2477 = vpop.f32.mrf.mxu0
        %v2478 = vadd.f32 %v2285, %v2477
        %v2479 = vpop.f32.mrf.mxu0
        %v2480 = vadd.f32 %v2287, %v2479
        %v2481 = vpop.f32.mrf.mxu0
        %v2482 = vadd.f32 %v2289, %v2481
        %2483 = vmatprep.mubr.bf16.mxu0 %v1280
        %2484 = vmatmul.mubr.bf16.gmra.mxu0 %v1279
        %v2485 = vpop.f32.mrf.mxu0
        %v2486 = vadd.f32 %v2293, %v2485
        %v2487 = vpop.f32.mrf.mxu0
        %v2488 = vadd.f32 %v2295, %v2487
        %v2489 = vpop.f32.mrf.mxu0
        %v2490 = vadd.f32 %v2297, %v2489
        %v2491 = vpop.f32.mrf.mxu0
        %v2492 = vadd.f32 %v2299, %v2491
        %2493 = vmatprep.mubr.bf16.mxu0 %v1287
        %2494 = vmatmul.mubr.bf16.gmra.mxu0 %v1286
        %v2495 = vpop.f32.mrf.mxu0
        %v2496 = vadd.f32 %v2303, %v2495
        %v2497 = vpop.f32.mrf.mxu0
        %v2498 = vadd.f32 %v2305, %v2497
        %v2499 = vpop.f32.mrf.mxu0
        %v2500 = vadd.f32 %v2307, %v2499
        %v2501 = vpop.f32.mrf.mxu0
        %v2502 = vadd.f32 %v2309, %v2501
        %2503 = vmatprep.mubr.bf16.mxu0 %v1294
        %2504 = vmatmul.mubr.bf16.gmra.mxu0 %v1293
        %v2505 = vpop.f32.mrf.mxu0
        %v2506 = vadd.f32 %v2313, %v2505
        %v2507 = vpop.f32.mrf.mxu0
        %v2508 = vadd.f32 %v2315, %v2507
        %v2509 = vpop.f32.mrf.mxu0
        %v2510 = vadd.f32 %v2317, %v2509
        %v2511 = vpop.f32.mrf.mxu0
        %v2512 = vadd.f32 %v2319, %v2511
        %2513 = vmatprep.mubr.bf16.mxu0 %v1301
        %2514 = vmatmul.mubr.bf16.gmra.mxu0 %v1300
        %v2515 = vpop.f32.mrf.mxu0
        %v2516 = vadd.f32 %v2323, %v2515
        %v2517 = vpop.f32.mrf.mxu0
        %v2518 = vadd.f32 %v2325, %v2517
        %v2519 = vpop.f32.mrf.mxu0
        %v2520 = vadd.f32 %v2327, %v2519
        %v2521 = vpop.f32.mrf.mxu0
        %v2522 = vadd.f32 %v2329, %v2521
        %2523 = vmatprep.mubr.bf16.mxu0 %v1308
        %2524 = vmatmul.mubr.bf16.gmra.mxu0 %v1307
        %v2525 = vpop.f32.mrf.mxu0
        %v2526 = vadd.f32 %v2333, %v2525
        %v2527 = vpop.f32.mrf.mxu0
        %v2528 = vadd.f32 %v2335, %v2527
        %v2529 = vpop.f32.mrf.mxu0
        %v2530 = vadd.f32 %v2337, %v2529
        %v2531 = vpop.f32.mrf.mxu0
        %v2532 = vadd.f32 %v2339, %v2531
        %2533 = vmatprep.mubr.bf16.mxu0 %v1315
        %2534 = vmatmul.mubr.bf16.gmra.mxu0 %v1314
        %v2535 = vpop.f32.mrf.mxu0
        %v2536 = vadd.f32 %v2343, %v2535
        %v2537 = vpop.f32.mrf.mxu0
        %v2538 = vadd.f32 %v2345, %v2537
        %v2539 = vpop.f32.mrf.mxu0
        %v2540 = vadd.f32 %v2347, %v2539
        %v2541 = vpop.f32.mrf.mxu0
        %v2542 = vadd.f32 %v2349, %v2541
        %2543 = vmatprep.mubr.bf16.mxu0 %v1322
        %2544 = vmatmul.mubr.bf16.gmra.mxu0 %v1321
        %v2545 = vpop.f32.mrf.mxu0
        %v2546 = vadd.f32 %v2353, %v2545
        %v2547 = vpop.f32.mrf.mxu0
        %v2548 = vadd.f32 %v2355, %v2547
        %v2549 = vpop.f32.mrf.mxu0
        %v2550 = vadd.f32 %v2357, %v2549
        %v2551 = vpop.f32.mrf.mxu0
        %v2552 = vadd.f32 %v2359, %v2551
        %2553 = vmatprep.mubr.bf16.mxu0 %v1329
        %2554 = vmatmul.mubr.bf16.gmra.mxu0 %v1328
        %v2555 = vpop.f32.mrf.mxu0
        %v2556 = vadd.f32 %v2363, %v2555
        %v2557 = vpop.f32.mrf.mxu0
        %v2558 = vadd.f32 %v2365, %v2557
        %v2559 = vpop.f32.mrf.mxu0
        %v2560 = vadd.f32 %v2367, %v2559
        %v2561 = vpop.f32.mrf.mxu0
        %v2562 = vadd.f32 %v2369, %v2561
        %2563 = vmatprep.mubr.bf16.mxu0 %v1336
        %2564 = vmatmul.mubr.bf16.gmra.mxu0 %v1335
        %v2565 = vpop.f32.mrf.mxu0
        %v2566 = vadd.f32 %v2373, %v2565
        %v2567 = vpop.f32.mrf.mxu0
        %v2568 = vadd.f32 %v2375, %v2567
        %v2569 = vpop.f32.mrf.mxu0
        %v2570 = vadd.f32 %v2377, %v2569
        %v2571 = vpop.f32.mrf.mxu0
        %v2572 = vadd.f32 %v2379, %v2571
        %2573 = vmatprep.mubr.bf16.mxu0 %v1343
        %2574 = vmatmul.mubr.bf16.gmra.mxu0 %v1342
        %v2575 = vpop.f32.mrf.mxu0
        %v2576 = vadd.f32 %v2383, %v2575
        %v2577 = vpop.f32.mrf.mxu0
        %v2578 = vadd.f32 %v2385, %v2577
        %v2579 = vpop.f32.mrf.mxu0
        %v2580 = vadd.f32 %v2387, %v2579
        %v2581 = vpop.f32.mrf.mxu0
        %v2582 = vadd.f32 %v2389, %v2581
        %2583 = vmatprep.mubr.bf16.mxu0 %v1350
        %2584 = vmatmul.mubr.bf16.gmra.mxu0 %v1349
        %v2585 = vpop.f32.mrf.mxu0
        %v2586 = vadd.f32 %v2393, %v2585
        %v2587 = vpop.f32.mrf.mxu0
        %v2588 = vadd.f32 %v2395, %v2587
        %v2589 = vpop.f32.mrf.mxu0
        %v2590 = vadd.f32 %v2397, %v2589
        %v2591 = vpop.f32.mrf.mxu0
        %v2592 = vadd.f32 %v2399, %v2591
        %2593 = vmatprep.mubr.bf16.mxu0 %v1357
        %2594 = vmatmul.mubr.bf16.gmra.mxu0 %v1356
        %v2595 = vpop.f32.mrf.mxu0
        %v2596 = vadd.f32 %v2403, %v2595
        %v2597 = vpop.f32.mrf.mxu0
        %v2598 = vadd.f32 %v2405, %v2597
        %v2599 = vpop.f32.mrf.mxu0
        %v2600 = vadd.f32 %v2407, %v2599
        %v2601 = vpop.f32.mrf.mxu0
        %v2602 = vadd.f32 %v2409, %v2601
        %2603 = vmatprep.mubr.bf16.mxu0 %v1364
        %2604 = vmatmul.mubr.bf16.gmra.mxu0 %v1363
        %v2605 = vpop.f32.mrf.mxu0
        %v2606 = vadd.f32 %v2413, %v2605
        %v2607 = vpop.f32.mrf.mxu0
        %v2608 = vadd.f32 %v2415, %v2607
        %v2609 = vpop.f32.mrf.mxu0
        %v2610 = vadd.f32 %v2417, %v2609
        %v2611 = vpop.f32.mrf.mxu0
        %v2612 = vadd.f32 %v2419, %v2611
        %2613 = vmatprep.mubr.bf16.mxu0 %v1371
        %2614 = vmatmul.mubr.bf16.gmra.mxu0 %v1370
        %v2615 = vpop.f32.mrf.mxu0
        %v2616 = vadd.f32 %v2423, %v2615
        %v2617 = vpop.f32.mrf.mxu0
        %v2618 = vadd.f32 %v2425, %v2617
        %v2619 = vpop.f32.mrf.mxu0
        %v2620 = vadd.f32 %v2427, %v2619
        %v2621 = vpop.f32.mrf.mxu0
        %v2622 = vadd.f32 %v2429, %v2621
        %2623 = vdwg.mxu0
        %2624 = vmatprep.subr.bf16.mxu0 %v1932
        %2625 = vmatpush1.bf16.msra.mxu0 %v1931
        %2626 = vmatprep.subr.bf16.mxu0 %v1930
        %2627 = vmatpush1.bf16.msra.mxu0 %v1929
        %2628 = vmatprep.subr.bf16.mxu0 %v1928
        %2629 = vmatpush1.bf16.msra.mxu0 %v1927
        %2630 = vmatprep.subr.bf16.mxu0 %v1926
        %2631 = vmatpush1.bf16.msra.mxu0 %v1925
        %2632 = vmatprep.subr.bf16.mxu0 %v1924
        %2633 = vmatpush1.bf16.msra.mxu0 %v1923
        %2634 = vmatprep.subr.bf16.mxu0 %v1922
        %2635 = vmatpush1.bf16.msra.mxu0 %v1921
        %2636 = vmatprep.subr.bf16.mxu0 %v1920
        %2637 = vmatpush1.bf16.msra.mxu0 %v1919
        %2638 = vmatprep.subr.bf16.mxu0 %v1918
        %2639 = vmatpush1.bf16.msra.mxu0 %v1917
        %2640 = vmatprep.subr.bf16.mxu0 0
        %2641 = vmatpush2.bf16.msra.mxu0 0
        %2642 = vmatprep.subr.bf16.mxu0 0
        %2643 = vmatpush2.bf16.msra.mxu0 0
        %2644 = vmatprep.subr.bf16.mxu0 0
        %2645 = vmatpush2.bf16.msra.mxu0 0
        %2646 = vmatprep.subr.bf16.mxu0 0
        %2647 = vmatpush2.bf16.msra.mxu0 0
        %2648 = vmatprep.subr.bf16.mxu0 0
        %2649 = vmatpush2.bf16.msra.mxu0 0
        %2650 = vmatprep.subr.bf16.mxu0 0
        %2651 = vmatpush2.bf16.msra.mxu0 0
        %2652 = vmatprep.subr.bf16.mxu0 0
        %2653 = vmatpush2.bf16.msra.mxu0 0
        %2654 = vmatprep.subr.bf16.mxu0 0
        %2655 = vmatpush2.bf16.msra.mxu0 0
        %2656 = vmatprep.mubr.bf16.mxu0 0
        %2657 = vmatmul.mubr.bf16.gmra.mxu0 %v1267
        %v2658 = vpop.f32.mrf.mxu0
        %v2659 = vadd.f32 %v2466, %v2658
        %v2660 = vpop.f32.mrf.mxu0
        %v2661 = vadd.f32 %v2468, %v2660
        %v2662 = vpop.f32.mrf.mxu0
        %v2663 = vadd.f32 %v2470, %v2662
        %v2664 = vpop.f32.mrf.mxu0
        %v2665 = vadd.f32 %v2472, %v2664
        %2666 = vmatprep.mubr.bf16.mxu0 0
        %2667 = vmatmul.mubr.bf16.gmra.mxu0 %v1274
        %v2668 = vpop.f32.mrf.mxu0
        %v2669 = vadd.f32 %v2476, %v2668
        %v2670 = vpop.f32.mrf.mxu0
        %v2671 = vadd.f32 %v2478, %v2670
        %v2672 = vpop.f32.mrf.mxu0
        %v2673 = vadd.f32 %v2480, %v2672
        %v2674 = vpop.f32.mrf.mxu0
        %v2675 = vadd.f32 %v2482, %v2674
        %2676 = vmatprep.mubr.bf16.mxu0 0
        %2677 = vmatmul.mubr.bf16.gmra.mxu0 %v1281
        %v2678 = vpop.f32.mrf.mxu0
        %v2679 = vadd.f32 %v2486, %v2678
        %v2680 = vpop.f32.mrf.mxu0
        %v2681 = vadd.f32 %v2488, %v2680
        %v2682 = vpop.f32.mrf.mxu0
        %v2683 = vadd.f32 %v2490, %v2682
        %v2684 = vpop.f32.mrf.mxu0
        %v2685 = vadd.f32 %v2492, %v2684
        %2686 = vmatprep.mubr.bf16.mxu0 0
        %2687 = vmatmul.mubr.bf16.gmra.mxu0 %v1288
        %v2688 = vpop.f32.mrf.mxu0
        %v2689 = vadd.f32 %v2496, %v2688
        %v2690 = vpop.f32.mrf.mxu0
        %v2691 = vadd.f32 %v2498, %v2690
        %v2692 = vpop.f32.mrf.mxu0
        %v2693 = vadd.f32 %v2500, %v2692
        %v2694 = vpop.f32.mrf.mxu0
        %v2695 = vadd.f32 %v2502, %v2694
        %2696 = vmatprep.mubr.bf16.mxu0 0
        %2697 = vmatmul.mubr.bf16.gmra.mxu0 %v1295
        %v2698 = vpop.f32.mrf.mxu0
        %v2699 = vadd.f32 %v2506, %v2698
        %v2700 = vpop.f32.mrf.mxu0
        %v2701 = vadd.f32 %v2508, %v2700
        %v2702 = vpop.f32.mrf.mxu0
        %v2703 = vadd.f32 %v2510, %v2702
        %v2704 = vpop.f32.mrf.mxu0
        %v2705 = vadd.f32 %v2512, %v2704
        %2706 = vmatprep.mubr.bf16.mxu0 0
        %2707 = vmatmul.mubr.bf16.gmra.mxu0 %v1302
        %v2708 = vpop.f32.mrf.mxu0
        %v2709 = vadd.f32 %v2516, %v2708
        %v2710 = vpop.f32.mrf.mxu0
        %v2711 = vadd.f32 %v2518, %v2710
        %v2712 = vpop.f32.mrf.mxu0
        %v2713 = vadd.f32 %v2520, %v2712
        %v2714 = vpop.f32.mrf.mxu0
        %v2715 = vadd.f32 %v2522, %v2714
        %2716 = vmatprep.mubr.bf16.mxu0 0
        %2717 = vmatmul.mubr.bf16.gmra.mxu0 %v1309
        %v2718 = vpop.f32.mrf.mxu0
        %v2719 = vadd.f32 %v2526, %v2718
        %v2720 = vpop.f32.mrf.mxu0
        %v2721 = vadd.f32 %v2528, %v2720
        %v2722 = vpop.f32.mrf.mxu0
        %v2723 = vadd.f32 %v2530, %v2722
        %v2724 = vpop.f32.mrf.mxu0
        %v2725 = vadd.f32 %v2532, %v2724
        %2726 = vmatprep.mubr.bf16.mxu0 0
        %2727 = vmatmul.mubr.bf16.gmra.mxu0 %v1316
        %v2728 = vpop.f32.mrf.mxu0
        %v2729 = vadd.f32 %v2536, %v2728
        %v2730 = vpop.f32.mrf.mxu0
        %v2731 = vadd.f32 %v2538, %v2730
        %v2732 = vpop.f32.mrf.mxu0
        %v2733 = vadd.f32 %v2540, %v2732
        %v2734 = vpop.f32.mrf.mxu0
        %v2735 = vadd.f32 %v2542, %v2734
        %2736 = vmatprep.mubr.bf16.mxu0 0
        %2737 = vmatmul.mubr.bf16.gmra.mxu0 %v1323
        %v2738 = vpop.f32.mrf.mxu0
        %v2739 = vadd.f32 %v2546, %v2738
        %v2740 = vpop.f32.mrf.mxu0
        %v2741 = vadd.f32 %v2548, %v2740
        %v2742 = vpop.f32.mrf.mxu0
        %v2743 = vadd.f32 %v2550, %v2742
        %v2744 = vpop.f32.mrf.mxu0
        %v2745 = vadd.f32 %v2552, %v2744
        %2746 = vmatprep.mubr.bf16.mxu0 0
        %2747 = vmatmul.mubr.bf16.gmra.mxu0 %v1330
        %v2748 = vpop.f32.mrf.mxu0
        %v2749 = vadd.f32 %v2556, %v2748
        %v2750 = vpop.f32.mrf.mxu0
        %v2751 = vadd.f32 %v2558, %v2750
        %v2752 = vpop.f32.mrf.mxu0
        %v2753 = vadd.f32 %v2560, %v2752
        %v2754 = vpop.f32.mrf.mxu0
        %v2755 = vadd.f32 %v2562, %v2754
        %2756 = vmatprep.mubr.bf16.mxu0 0
        %2757 = vmatmul.mubr.bf16.gmra.mxu0 %v1337
        %v2758 = vpop.f32.mrf.mxu0
        %v2759 = vadd.f32 %v2566, %v2758
        %v2760 = vpop.f32.mrf.mxu0
        %v2761 = vadd.f32 %v2568, %v2760
        %v2762 = vpop.f32.mrf.mxu0
        %v2763 = vadd.f32 %v2570, %v2762
        %v2764 = vpop.f32.mrf.mxu0
        %v2765 = vadd.f32 %v2572, %v2764
        %2766 = vmatprep.mubr.bf16.mxu0 0
        %2767 = vmatmul.mubr.bf16.gmra.mxu0 %v1344
        %v2768 = vpop.f32.mrf.mxu0
        %v2769 = vadd.f32 %v2576, %v2768
        %v2770 = vpop.f32.mrf.mxu0
        %v2771 = vadd.f32 %v2578, %v2770
        %v2772 = vpop.f32.mrf.mxu0
        %v2773 = vadd.f32 %v2580, %v2772
        %v2774 = vpop.f32.mrf.mxu0
        %v2775 = vadd.f32 %v2582, %v2774
        %2776 = vmatprep.mubr.bf16.mxu0 0
        %2777 = vmatmul.mubr.bf16.gmra.mxu0 %v1351
        %v2778 = vpop.f32.mrf.mxu0
        %v2779 = vadd.f32 %v2586, %v2778
        %v2780 = vpop.f32.mrf.mxu0
        %v2781 = vadd.f32 %v2588, %v2780
        %v2782 = vpop.f32.mrf.mxu0
        %v2783 = vadd.f32 %v2590, %v2782
        %v2784 = vpop.f32.mrf.mxu0
        %v2785 = vadd.f32 %v2592, %v2784
        %2786 = vmatprep.mubr.bf16.mxu0 0
        %2787 = vmatmul.mubr.bf16.gmra.mxu0 %v1358
        %v2788 = vpop.f32.mrf.mxu0
        %v2789 = vadd.f32 %v2596, %v2788
        %v2790 = vpop.f32.mrf.mxu0
        %v2791 = vadd.f32 %v2598, %v2790
        %v2792 = vpop.f32.mrf.mxu0
        %v2793 = vadd.f32 %v2600, %v2792
        %v2794 = vpop.f32.mrf.mxu0
        %v2795 = vadd.f32 %v2602, %v2794
        %2796 = vmatprep.mubr.bf16.mxu0 0
        %2797 = vmatmul.mubr.bf16.gmra.mxu0 %v1365
        %v2798 = vpop.f32.mrf.mxu0
        %v2799 = vadd.f32 %v2606, %v2798
        %v2800 = vpop.f32.mrf.mxu0
        %v2801 = vadd.f32 %v2608, %v2800
        %v2802 = vpop.f32.mrf.mxu0
        %v2803 = vadd.f32 %v2610, %v2802
        %v2804 = vpop.f32.mrf.mxu0
        %v2805 = vadd.f32 %v2612, %v2804
        %2806 = vmatprep.mubr.bf16.mxu0 0
        %2807 = vmatmul.mubr.bf16.gmra.mxu0 %v1372
        %v2808 = vpop.f32.mrf.mxu0
        %v2809 = vadd.f32 %v2616, %v2808
        %v2810 = vpop.f32.mrf.mxu0
        %v2811 = vadd.f32 %v2618, %v2810
        %v2812 = vpop.f32.mrf.mxu0
        %v2813 = vadd.f32 %v2620, %v2812
        %v2814 = vpop.f32.mrf.mxu0
        %v2815 = vadd.f32 %v2622, %v2814
        %2816 = vdwg.mxu0
        %v2817 = vmax.f32 %v2659, 0.0
        %v2818 = vmax.f32 %v2661, 0.0
        %v2819 = vmax.f32 %v2663, 0.0
        %v2820 = vmax.f32 %v2665, 0.0
        %v2821 = vmax.f32 %v2669, 0.0
        %v2822 = vmax.f32 %v2671, 0.0
        %v2823 = vmax.f32 %v2673, 0.0
        %v2824 = vmax.f32 %v2675, 0.0
        %v2825 = vmax.f32 %v2679, 0.0
        %v2826 = vmax.f32 %v2681, 0.0
        %v2827 = vmax.f32 %v2683, 0.0
        %v2828 = vmax.f32 %v2685, 0.0
        %v2829 = vmax.f32 %v2689, 0.0
        %v2830 = vmax.f32 %v2691, 0.0
        %v2831 = vmax.f32 %v2693, 0.0
        %v2832 = vmax.f32 %v2695, 0.0
        %v2833 = vmax.f32 %v2699, 0.0
        %v2834 = vmax.f32 %v2701, 0.0
        %v2835 = vmax.f32 %v2703, 0.0
        %v2836 = vmax.f32 %v2705, 0.0
        %v2837 = vmax.f32 %v2709, 0.0
        %v2838 = vmax.f32 %v2711, 0.0
        %v2839 = vmax.f32 %v2713, 0.0
        %v2840 = vmax.f32 %v2715, 0.0
        %v2841 = vmax.f32 %v2719, 0.0
        %v2842 = vmax.f32 %v2721, 0.0
        %v2843 = vmax.f32 %v2723, 0.0
        %v2844 = vmax.f32 %v2725, 0.0
        %v2845 = vmax.f32 %v2729, 0.0
        %v2846 = vmax.f32 %v2731, 0.0
        %v2847 = vmax.f32 %v2733, 0.0
        %v2848 = vmax.f32 %v2735, 0.0
        %v2849 = vmax.f32 %v2739, 0.0
        %v2850 = vmax.f32 %v2741, 0.0
        %v2851 = vmax.f32 %v2743, 0.0
        %v2852 = vmax.f32 %v2745, 0.0
        %v2853 = vmax.f32 %v2749, 0.0
        %v2854 = vmax.f32 %v2751, 0.0
        %v2855 = vmax.f32 %v2753, 0.0
        %v2856 = vmax.f32 %v2755, 0.0
        %v2857 = vmax.f32 %v2759, 0.0
        %v2858 = vmax.f32 %v2761, 0.0
        %v2859 = vmax.f32 %v2763, 0.0
        %v2860 = vmax.f32 %v2765, 0.0
        %v2861 = vmax.f32 %v2769, 0.0
        %v2862 = vmax.f32 %v2771, 0.0
        %v2863 = vmax.f32 %v2773, 0.0
        %v2864 = vmax.f32 %v2775, 0.0
        %v2865 = vmax.f32 %v2779, 0.0
        %v2866 = vmax.f32 %v2781, 0.0
        %v2867 = vmax.f32 %v2783, 0.0
        %v2868 = vmax.f32 %v2785, 0.0
        %v2869 = vmax.f32 %v2789, 0.0
        %v2870 = vmax.f32 %v2791, 0.0
        %v2871 = vmax.f32 %v2793, 0.0
        %v2872 = vmax.f32 %v2795, 0.0
        %v2873 = vmax.f32 %v2799, 0.0
        %v2874 = vmax.f32 %v2801, 0.0
        %v2875 = vmax.f32 %v2803, 0.0
        %v2876 = vmax.f32 %v2805, 0.0
        %v2877 = vmax.f32 %v2809, 0.0
        %v2878 = vmax.f32 %v2811, 0.0
        %v2879 = vmax.f32 %v2813, 0.0
        %v2880 = vmax.f32 %v2815, 0.0
        %v2881 = vpack.c.bf16 %v2819, %v2817
        %v2882 = vpack.c.bf16 %v2820, %v2818
        %v2883 = vpack.c.bf16 %v2823, %v2821
        %v2884 = vpack.c.bf16 %v2824, %v2822
        %v2885 = vpack.c.bf16 %v2827, %v2825
        %v2886 = vpack.c.bf16 %v2828, %v2826
        %v2887 = vpack.c.bf16 %v2831, %v2829
        %v2888 = vpack.c.bf16 %v2832, %v2830
        %v2889 = vpack.c.bf16 %v2835, %v2833
        %v2890 = vpack.c.bf16 %v2836, %v2834
        %v2891 = vpack.c.bf16 %v2839, %v2837
        %v2892 = vpack.c.bf16 %v2840, %v2838
        %v2893 = vpack.c.bf16 %v2843, %v2841
        %v2894 = vpack.c.bf16 %v2844, %v2842
        %v2895 = vpack.c.bf16 %v2847, %v2845
        %v2896 = vpack.c.bf16 %v2848, %v2846
        %v2897 = vpack.c.bf16 %v2851, %v2849
        %v2898 = vpack.c.bf16 %v2852, %v2850
        %v2899 = vpack.c.bf16 %v2855, %v2853
        %v2900 = vpack.c.bf16 %v2856, %v2854
        %v2901 = vpack.c.bf16 %v2859, %v2857
        %v2902 = vpack.c.bf16 %v2860, %v2858
        %v2903 = vpack.c.bf16 %v2863, %v2861
        %v2904 = vpack.c.bf16 %v2864, %v2862
        %v2905 = vpack.c.bf16 %v2867, %v2865
        %v2906 = vpack.c.bf16 %v2868, %v2866
        %v2907 = vpack.c.bf16 %v2871, %v2869
        %v2908 = vpack.c.bf16 %v2872, %v2870
        %v2909 = vpack.c.bf16 %v2875, %v2873
        %v2910 = vpack.c.bf16 %v2876, %v2874
        %v2911 = vpack.c.bf16 %v2879, %v2877
        %v2912 = vpack.c.bf16 %v2880, %v2878
        %v2913 = vld [vmem:[#allocation8] sm:$0xf]
        %v2914 = vld [vmem:[#allocation8 + $0x4] sm:$0xf]
        %v2915 = vld [vmem:[#allocation8 + $0x8] sm:$0xf]
        %v2916 = vld [vmem:[#allocation8 + $0xc] sm:$0xf]
        %v2917 = vld [vmem:[#allocation8 + $0x10] sm:$0xf]
        %v2918 = vld [vmem:[#allocation8 + $0x14] sm:$0xf]
        %v2919 = vld [vmem:[#allocation8 + $0x18] sm:$0xf]
        %v2920 = vld [vmem:[#allocation8 + $0x1c] sm:$0xf]
        %v2921 = vld [vmem:[#allocation8 + $0x20] sm:$0xf]
        %v2922 = vld [vmem:[#allocation8 + $0x24] sm:$0xf]
        %v2923 = vld [vmem:[#allocation8 + $0x28] sm:$0xf]
        %v2924 = vld [vmem:[#allocation8 + $0x2c] sm:$0xf]
        %v2925 = vld [vmem:[#allocation8 + $0x30] sm:$0xf]
        %v2926 = vld [vmem:[#allocation8 + $0x34] sm:$0xf]
        %v2927 = vld [vmem:[#allocation8 + $0x38] sm:$0xf]
        %v2928 = vld [vmem:[#allocation8 + $0x3c] sm:$0xf]
        %v2929 = vld [vmem:[#allocation8 + $0x40] sm:$0xf]
        %v2930 = vld [vmem:[#allocation8 + $0x44] sm:$0xf]
        %v2931 = vld [vmem:[#allocation8 + $0x48] sm:$0xf]
        %v2932 = vld [vmem:[#allocation8 + $0x4c] sm:$0xf]
        %v2933 = vld [vmem:[#allocation8 + $0x50] sm:$0xf]
        %v2934 = vld [vmem:[#allocation8 + $0x54] sm:$0xf]
        %v2935 = vld [vmem:[#allocation8 + $0x58] sm:$0xf]
        %v2936 = vld [vmem:[#allocation8 + $0x5c] sm:$0xf]
        %v2937 = vld [vmem:[#allocation8 + $0x60] sm:$0xf]
        %v2938 = vld [vmem:[#allocation8 + $0x64] sm:$0xf]
        %v2939 = vld [vmem:[#allocation8 + $0x68] sm:$0xf]
        %v2940 = vld [vmem:[#allocation8 + $0x6c] sm:$0xf]
        %v2941 = vld [vmem:[#allocation8 + $0x70] sm:$0xf]
        %v2942 = vld [vmem:[#allocation8 + $0x74] sm:$0xf]
        %v2943 = vld [vmem:[#allocation8 + $0x78] sm:$0xf]
        %v2944 = vld [vmem:[#allocation8 + $0x7c] sm:$0xf]
        %v2945 = vld [vmem:[%s5] sm:$0x1]
        %v2947 = vlaneseq
        %v2948 = vshrl.u32 %v2947, 7
        %v2949 = vsub.s32 0, %v2948
        %v2950 = vrot.slane %v2945, %v2949
        %v2984 = vunpack.c.l.b16 %v2913
        %v2985 = vunpack.c.l.b16 %v2914
        %v2986 = vunpack.c.l.b16 %v2915
        %v2987 = vunpack.c.l.b16 %v2916
        %v2988 = vunpack.c.l.b16 %v2917
        %v2989 = vunpack.c.l.b16 %v2918
        %v2990 = vunpack.c.l.b16 %v2919
        %v2991 = vunpack.c.l.b16 %v2920
        %v2992 = vunpack.c.l.b16 %v2921
        %v2993 = vunpack.c.l.b16 %v2922
        %v2994 = vunpack.c.l.b16 %v2923
        %v2995 = vunpack.c.l.b16 %v2924
        %v2996 = vunpack.c.l.b16 %v2925
        %v2997 = vunpack.c.l.b16 %v2926
        %v2998 = vunpack.c.l.b16 %v2927
        %v2999 = vunpack.c.l.b16 %v2928
        %v3000 = vunpack.c.l.b16 %v2929
        %v3001 = vunpack.c.l.b16 %v2930
        %v3002 = vunpack.c.l.b16 %v2931
        %v3003 = vunpack.c.l.b16 %v2932
        %v3004 = vunpack.c.l.b16 %v2933
        %v3005 = vunpack.c.l.b16 %v2934
        %v3006 = vunpack.c.l.b16 %v2935
        %v3007 = vunpack.c.l.b16 %v2936
        %v3008 = vunpack.c.l.b16 %v2937
        %v3009 = vunpack.c.l.b16 %v2938
        %v3010 = vunpack.c.l.b16 %v2939
        %v3011 = vunpack.c.l.b16 %v2940
        %v3012 = vunpack.c.l.b16 %v2941
        %v3013 = vunpack.c.l.b16 %v2942
        %v3014 = vunpack.c.l.b16 %v2943
        %v3015 = vunpack.c.l.b16 %v2944
        %v3016 = vpack.c.b16 %v2985, %v2984
        %v3017 = vpack.c.b16 %v2987, %v2986
        %v3018 = vpack.c.b16 %v2989, %v2988
        %v3019 = vpack.c.b16 %v2991, %v2990
        %v3020 = vpack.c.b16 %v2993, %v2992
        %v3021 = vpack.c.b16 %v2995, %v2994
        %v3022 = vpack.c.b16 %v2997, %v2996
        %v3023 = vpack.c.b16 %v2999, %v2998
        %v3024 = vpack.c.b16 %v3001, %v3000
        %v3025 = vpack.c.b16 %v3003, %v3002
        %v3026 = vpack.c.b16 %v3005, %v3004
        %v3027 = vpack.c.b16 %v3007, %v3006
        %v3028 = vpack.c.b16 %v3009, %v3008
        %v3029 = vpack.c.b16 %v3011, %v3010
        %v3030 = vpack.c.b16 %v3013, %v3012
        %v3031 = vpack.c.b16 %v3015, %v3014
        %3048 = vmatprep.subr.bf16.mxu0 0
        %3049 = vmatpush1.bf16.msra.mxu0 %v3023
        %3050 = vmatprep.subr.bf16.mxu0 0
        %3051 = vmatpush1.bf16.msra.mxu0 %v3022
        %3052 = vmatprep.subr.bf16.mxu0 0
        %3053 = vmatpush1.bf16.msra.mxu0 %v3021
        %3054 = vmatprep.subr.bf16.mxu0 0
        %3055 = vmatpush1.bf16.msra.mxu0 %v3020
        %3056 = vmatprep.subr.bf16.mxu0 0
        %3057 = vmatpush1.bf16.msra.mxu0 %v3019
        %3058 = vmatprep.subr.bf16.mxu0 0
        %3059 = vmatpush1.bf16.msra.mxu0 %v3018
        %3060 = vmatprep.subr.bf16.mxu0 0
        %3061 = vmatpush1.bf16.msra.mxu0 %v3017
        %3062 = vmatprep.subr.bf16.mxu0 0
        %3063 = vmatpush1.bf16.msra.mxu0 %v3016
        %3064 = vmatprep.subr.bf16.mxu0 0
        %3065 = vmatpush2.bf16.msra.mxu0 %v3031
        %3066 = vmatprep.subr.bf16.mxu0 0
        %3067 = vmatpush2.bf16.msra.mxu0 %v3030
        %3068 = vmatprep.subr.bf16.mxu0 0
        %3069 = vmatpush2.bf16.msra.mxu0 %v3029
        %3070 = vmatprep.subr.bf16.mxu0 0
        %3071 = vmatpush2.bf16.msra.mxu0 %v3028
        %3072 = vmatprep.subr.bf16.mxu0 0
        %3073 = vmatpush2.bf16.msra.mxu0 %v3027
        %3074 = vmatprep.subr.bf16.mxu0 0
        %3075 = vmatpush2.bf16.msra.mxu0 %v3026
        %3076 = vmatprep.subr.bf16.mxu0 0
        %3077 = vmatpush2.bf16.msra.mxu0 %v3025
        %3078 = vmatprep.subr.bf16.mxu0 0
        %3079 = vmatpush2.bf16.msra.mxu0 %v3024
        %3080 = vmatprep.mubr.bf16.mxu0 %v2882
        %3081 = vmatmul.mubr.bf16.gmra.mxu0 %v2881
        %v3082 = vpop.f32.mrf.mxu0
        %v3083 = vadd.f32 %v2950, %v3082
        %v3084 = vpop.f32.mrf.mxu0
        %v3085 = vpop.f32.mrf.mxu0
        %v3086 = vadd.f32 %v2950, %v3085
        %v3087 = vpop.f32.mrf.mxu0
        %3088 = vmatprep.mubr.bf16.mxu0 %v2884
        %3089 = vmatmul.mubr.bf16.gmra.mxu0 %v2883
        %v3090 = vpop.f32.mrf.mxu0
        %v3091 = vadd.f32 %v2950, %v3090
        %v3092 = vpop.f32.mrf.mxu0
        %v3093 = vpop.f32.mrf.mxu0
        %v3094 = vadd.f32 %v2950, %v3093
        %v3095 = vpop.f32.mrf.mxu0
        %3096 = vmatprep.mubr.bf16.mxu0 %v2886
        %3097 = vmatmul.mubr.bf16.gmra.mxu0 %v2885
        %v3098 = vpop.f32.mrf.mxu0
        %v3099 = vadd.f32 %v2950, %v3098
        %v3100 = vpop.f32.mrf.mxu0
        %v3101 = vpop.f32.mrf.mxu0
        %v3102 = vadd.f32 %v2950, %v3101
        %v3103 = vpop.f32.mrf.mxu0
        %3104 = vmatprep.mubr.bf16.mxu0 %v2888
        %3105 = vmatmul.mubr.bf16.gmra.mxu0 %v2887
        %v3106 = vpop.f32.mrf.mxu0
        %v3107 = vadd.f32 %v2950, %v3106
        %v3108 = vpop.f32.mrf.mxu0
        %v3109 = vpop.f32.mrf.mxu0
        %v3110 = vadd.f32 %v2950, %v3109
        %v3111 = vpop.f32.mrf.mxu0
        %3112 = vmatprep.mubr.bf16.mxu0 %v2890
        %3113 = vmatmul.mubr.bf16.gmra.mxu0 %v2889
        %v3114 = vpop.f32.mrf.mxu0
        %v3115 = vadd.f32 %v2950, %v3114
        %v3116 = vpop.f32.mrf.mxu0
        %v3117 = vpop.f32.mrf.mxu0
        %v3118 = vadd.f32 %v2950, %v3117
        %v3119 = vpop.f32.mrf.mxu0
        %3120 = vmatprep.mubr.bf16.mxu0 %v2892
        %3121 = vmatmul.mubr.bf16.gmra.mxu0 %v2891
        %v3122 = vpop.f32.mrf.mxu0
        %v3123 = vadd.f32 %v2950, %v3122
        %v3124 = vpop.f32.mrf.mxu0
        %v3125 = vpop.f32.mrf.mxu0
        %v3126 = vadd.f32 %v2950, %v3125
        %v3127 = vpop.f32.mrf.mxu0
        %3128 = vmatprep.mubr.bf16.mxu0 %v2894
        %3129 = vmatmul.mubr.bf16.gmra.mxu0 %v2893
        %v3130 = vpop.f32.mrf.mxu0
        %v3131 = vadd.f32 %v2950, %v3130
        %v3132 = vpop.f32.mrf.mxu0
        %v3133 = vpop.f32.mrf.mxu0
        %v3134 = vadd.f32 %v2950, %v3133
        %v3135 = vpop.f32.mrf.mxu0
        %3136 = vmatprep.mubr.bf16.mxu0 %v2896
        %3137 = vmatmul.mubr.bf16.gmra.mxu0 %v2895
        %v3138 = vpop.f32.mrf.mxu0
        %v3139 = vadd.f32 %v2950, %v3138
        %v3140 = vpop.f32.mrf.mxu0
        %v3141 = vpop.f32.mrf.mxu0
        %v3142 = vadd.f32 %v2950, %v3141
        %v3143 = vpop.f32.mrf.mxu0
        %3144 = vmatprep.mubr.bf16.mxu0 %v2898
        %3145 = vmatmul.mubr.bf16.gmra.mxu0 %v2897
        %v3146 = vpop.f32.mrf.mxu0
        %v3147 = vadd.f32 %v2950, %v3146
        %v3148 = vpop.f32.mrf.mxu0
        %v3149 = vpop.f32.mrf.mxu0
        %v3150 = vadd.f32 %v2950, %v3149
        %v3151 = vpop.f32.mrf.mxu0
        %3152 = vmatprep.mubr.bf16.mxu0 %v2900
        %3153 = vmatmul.mubr.bf16.gmra.mxu0 %v2899
        %v3154 = vpop.f32.mrf.mxu0
        %v3155 = vadd.f32 %v2950, %v3154
        %v3156 = vpop.f32.mrf.mxu0
        %v3157 = vpop.f32.mrf.mxu0
        %v3158 = vadd.f32 %v2950, %v3157
        %v3159 = vpop.f32.mrf.mxu0
        %3160 = vmatprep.mubr.bf16.mxu0 %v2902
        %3161 = vmatmul.mubr.bf16.gmra.mxu0 %v2901
        %v3162 = vpop.f32.mrf.mxu0
        %v3163 = vadd.f32 %v2950, %v3162
        %v3164 = vpop.f32.mrf.mxu0
        %v3165 = vpop.f32.mrf.mxu0
        %v3166 = vadd.f32 %v2950, %v3165
        %v3167 = vpop.f32.mrf.mxu0
        %3168 = vmatprep.mubr.bf16.mxu0 %v2904
        %3169 = vmatmul.mubr.bf16.gmra.mxu0 %v2903
        %v3170 = vpop.f32.mrf.mxu0
        %v3171 = vadd.f32 %v2950, %v3170
        %v3172 = vpop.f32.mrf.mxu0
        %v3173 = vpop.f32.mrf.mxu0
        %v3174 = vadd.f32 %v2950, %v3173
        %v3175 = vpop.f32.mrf.mxu0
        %3176 = vmatprep.mubr.bf16.mxu0 %v2906
        %3177 = vmatmul.mubr.bf16.gmra.mxu0 %v2905
        %v3178 = vpop.f32.mrf.mxu0
        %v3179 = vadd.f32 %v2950, %v3178
        %v3180 = vpop.f32.mrf.mxu0
        %v3181 = vpop.f32.mrf.mxu0
        %v3182 = vadd.f32 %v2950, %v3181
        %v3183 = vpop.f32.mrf.mxu0
        %3184 = vmatprep.mubr.bf16.mxu0 %v2908
        %3185 = vmatmul.mubr.bf16.gmra.mxu0 %v2907
        %v3186 = vpop.f32.mrf.mxu0
        %v3187 = vadd.f32 %v2950, %v3186
        %v3188 = vpop.f32.mrf.mxu0
        %v3189 = vpop.f32.mrf.mxu0
        %v3190 = vadd.f32 %v2950, %v3189
        %v3191 = vpop.f32.mrf.mxu0
        %3192 = vmatprep.mubr.bf16.mxu0 %v2910
        %3193 = vmatmul.mubr.bf16.gmra.mxu0 %v2909
        %v3194 = vpop.f32.mrf.mxu0
        %v3195 = vadd.f32 %v2950, %v3194
        %v3196 = vpop.f32.mrf.mxu0
        %v3197 = vpop.f32.mrf.mxu0
        %v3198 = vadd.f32 %v2950, %v3197
        %v3199 = vpop.f32.mrf.mxu0
        %3200 = vmatprep.mubr.bf16.mxu0 %v2912
        %3201 = vmatmul.mubr.bf16.gmra.mxu0 %v2911
        %v3202 = vpop.f32.mrf.mxu0
        %v3203 = vadd.f32 %v2950, %v3202
        %v3204 = vpop.f32.mrf.mxu0
        %v3205 = vpop.f32.mrf.mxu0
        %v3206 = vadd.f32 %v2950, %v3205
        %v3207 = vpop.f32.mrf.mxu0
        %3208 = vdwg.mxu0
        %v3209 = vmax.f32 %v3083, 0.0
        %v3210 = vmax.f32 %v3086, 0.0
        %v3211 = vmax.f32 %v3091, 0.0
        %v3212 = vmax.f32 %v3094, 0.0
        %v3213 = vmax.f32 %v3099, 0.0
        %v3214 = vmax.f32 %v3102, 0.0
        %v3215 = vmax.f32 %v3107, 0.0
        %v3216 = vmax.f32 %v3110, 0.0
        %v3217 = vmax.f32 %v3115, 0.0
        %v3218 = vmax.f32 %v3118, 0.0
        %v3219 = vmax.f32 %v3123, 0.0
        %v3220 = vmax.f32 %v3126, 0.0
        %v3221 = vmax.f32 %v3131, 0.0
        %v3222 = vmax.f32 %v3134, 0.0
        %v3223 = vmax.f32 %v3139, 0.0
        %v3224 = vmax.f32 %v3142, 0.0
        %v3225 = vmax.f32 %v3147, 0.0
        %v3226 = vmax.f32 %v3150, 0.0
        %v3227 = vmax.f32 %v3155, 0.0
        %v3228 = vmax.f32 %v3158, 0.0
        %v3229 = vmax.f32 %v3163, 0.0
        %v3230 = vmax.f32 %v3166, 0.0
        %v3231 = vmax.f32 %v3171, 0.0
        %v3232 = vmax.f32 %v3174, 0.0
        %v3233 = vmax.f32 %v3179, 0.0
        %v3234 = vmax.f32 %v3182, 0.0
        %v3235 = vmax.f32 %v3187, 0.0
        %v3236 = vmax.f32 %v3190, 0.0
        %v3237 = vmax.f32 %v3195, 0.0
        %v3238 = vmax.f32 %v3198, 0.0
        %v3239 = vmax.f32 %v3203, 0.0
        %v3240 = vmax.f32 %v3206, 0.0
        %v3241 = vpack.c.bf16 %v3210, %v3209
        %v3242 = vpack.c.bf16 %v3212, %v3211
        %v3243 = vpack.c.bf16 %v3214, %v3213
        %v3244 = vpack.c.bf16 %v3216, %v3215
        %v3245 = vpack.c.bf16 %v3218, %v3217
        %v3246 = vpack.c.bf16 %v3220, %v3219
        %v3247 = vpack.c.bf16 %v3222, %v3221
        %v3248 = vpack.c.bf16 %v3224, %v3223
        %v3249 = vpack.c.bf16 %v3226, %v3225
        %v3250 = vpack.c.bf16 %v3228, %v3227
        %v3251 = vpack.c.bf16 %v3230, %v3229
        %v3252 = vpack.c.bf16 %v3232, %v3231
        %v3253 = vpack.c.bf16 %v3234, %v3233
        %v3254 = vpack.c.bf16 %v3236, %v3235
        %v3255 = vpack.c.bf16 %v3238, %v3237
        %v3256 = vpack.c.bf16 %v3240, %v3239
        %v3257 = vld [vmem:[#allocation10] sm:$0xf]
        %v3258 = vld [vmem:[#allocation10 + $0x4] sm:$0xf]
        %v3259 = vld [vmem:[#allocation10 + $0x8] sm:$0xf]
        %v3260 = vld [vmem:[#allocation10 + $0xc] sm:$0xf]
        %v3261 = vld [vmem:[#allocation10 + $0x10] sm:$0xf]
        %v3262 = vld [vmem:[#allocation10 + $0x14] sm:$0xf]
        %v3263 = vld [vmem:[#allocation10 + $0x18] sm:$0xf]
        %v3264 = vld [vmem:[#allocation10 + $0x1c] sm:$0xf]
        %v3265 = vld [vmem:[#allocation10 + $0x20] sm:$0xf]
        %v3266 = vld [vmem:[#allocation10 + $0x24] sm:$0xf]
        %v3267 = vld [vmem:[#allocation10 + $0x28] sm:$0xf]
        %v3268 = vld [vmem:[#allocation10 + $0x2c] sm:$0xf]
        %v3269 = vld [vmem:[#allocation10 + $0x30] sm:$0xf]
        %v3270 = vld [vmem:[#allocation10 + $0x34] sm:$0xf]
        %v3271 = vld [vmem:[#allocation10 + $0x38] sm:$0xf]
        %v3272 = vld [vmem:[#allocation10 + $0x3c] sm:$0xf]
        %v3273 = vld [vmem:[%s7] sm:$0x1]
        %v3275 = vlaneseq
        %v3276 = vshrl.u32 %v3275, 7
        %v3277 = vsub.s32 0, %v3276
        %v3278 = vrot.slane %v3273, %v3277
        %v3296 = vunpack.c.l.b16 %v3257
        %v3297 = vunpack.c.l.b16 %v3258
        %v3298 = vunpack.c.l.b16 %v3259
        %v3299 = vunpack.c.l.b16 %v3260
        %v3300 = vunpack.c.l.b16 %v3261
        %v3301 = vunpack.c.l.b16 %v3262
        %v3302 = vunpack.c.l.b16 %v3263
        %v3303 = vunpack.c.l.b16 %v3264
        %v3304 = vunpack.c.l.b16 %v3265
        %v3305 = vunpack.c.l.b16 %v3266
        %v3306 = vunpack.c.l.b16 %v3267
        %v3307 = vunpack.c.l.b16 %v3268
        %v3308 = vunpack.c.l.b16 %v3269
        %v3309 = vunpack.c.l.b16 %v3270
        %v3310 = vunpack.c.l.b16 %v3271
        %v3311 = vunpack.c.l.b16 %v3272
        %v3312 = vpack.c.b16 %v3297, %v3296
        %v3313 = vpack.c.b16 %v3299, %v3298
        %v3314 = vpack.c.b16 %v3301, %v3300
        %v3315 = vpack.c.b16 %v3303, %v3302
        %v3316 = vpack.c.b16 %v3305, %v3304
        %v3317 = vpack.c.b16 %v3307, %v3306
        %v3318 = vpack.c.b16 %v3309, %v3308
        %v3319 = vpack.c.b16 %v3311, %v3310
        %3328 = vmatprep.subr.bf16.mxu0 0
        %3329 = vmatpush1.bf16.msra.mxu0 %v3319
        %3330 = vmatprep.subr.bf16.mxu0 0
        %3331 = vmatpush1.bf16.msra.mxu0 %v3318
        %3332 = vmatprep.subr.bf16.mxu0 0
        %3333 = vmatpush1.bf16.msra.mxu0 %v3317
        %3334 = vmatprep.subr.bf16.mxu0 0
        %3335 = vmatpush1.bf16.msra.mxu0 %v3316
        %3336 = vmatprep.subr.bf16.mxu0 0
        %3337 = vmatpush1.bf16.msra.mxu0 %v3315
        %3338 = vmatprep.subr.bf16.mxu0 0
        %3339 = vmatpush1.bf16.msra.mxu0 %v3314
        %3340 = vmatprep.subr.bf16.mxu0 0
        %3341 = vmatpush1.bf16.msra.mxu0 %v3313
        %3342 = vmatprep.subr.bf16.mxu0 0
        %3343 = vmatpush1.bf16.msra.mxu0 %v3312
        %3344 = vmatprep.subr.bf16.mxu0 0
        %3345 = vmatpush2.bf16.msra.mxu0 0
        %3346 = vmatprep.subr.bf16.mxu0 0
        %3347 = vmatpush2.bf16.msra.mxu0 0
        %3348 = vmatprep.subr.bf16.mxu0 0
        %3349 = vmatpush2.bf16.msra.mxu0 0
        %3350 = vmatprep.subr.bf16.mxu0 0
        %3351 = vmatpush2.bf16.msra.mxu0 0
        %3352 = vmatprep.subr.bf16.mxu0 0
        %3353 = vmatpush2.bf16.msra.mxu0 0
        %3354 = vmatprep.subr.bf16.mxu0 0
        %3355 = vmatpush2.bf16.msra.mxu0 0
        %3356 = vmatprep.subr.bf16.mxu0 0
        %3357 = vmatpush2.bf16.msra.mxu0 0
        %3358 = vmatprep.subr.bf16.mxu0 0
        %3359 = vmatpush2.bf16.msra.mxu0 0
        %3360 = vmatprep.mubr.bf16.mxu0 0
        %3361 = vmatmul.mubr.bf16.gmra.mxu0 %v3241
        %v3362 = vpop.f32.mrf.mxu0
        %v3363 = vadd.f32 %v3278, %v3362
        %v3364 = vpop.f32.mrf.mxu0
        %v3365 = vpop.f32.mrf.mxu0
        %v3366 = vadd.f32 %v3278, %v3365
        %v3367 = vpop.f32.mrf.mxu0
        %3368 = vmatprep.mubr.bf16.mxu0 0
        %3369 = vmatmul.mubr.bf16.gmra.mxu0 %v3242
        %v3370 = vpop.f32.mrf.mxu0
        %v3371 = vadd.f32 %v3278, %v3370
        %v3372 = vpop.f32.mrf.mxu0
        %v3373 = vpop.f32.mrf.mxu0
        %v3374 = vadd.f32 %v3278, %v3373
        %v3375 = vpop.f32.mrf.mxu0
        %3376 = vmatprep.mubr.bf16.mxu0 0
        %3377 = vmatmul.mubr.bf16.gmra.mxu0 %v3243
        %v3378 = vpop.f32.mrf.mxu0
        %v3379 = vadd.f32 %v3278, %v3378
        %v3380 = vpop.f32.mrf.mxu0
        %v3381 = vpop.f32.mrf.mxu0
        %v3382 = vadd.f32 %v3278, %v3381
        %v3383 = vpop.f32.mrf.mxu0
        %3384 = vmatprep.mubr.bf16.mxu0 0
        %3385 = vmatmul.mubr.bf16.gmra.mxu0 %v3244
        %v3386 = vpop.f32.mrf.mxu0
        %v3387 = vadd.f32 %v3278, %v3386
        %v3388 = vpop.f32.mrf.mxu0
        %v3389 = vpop.f32.mrf.mxu0
        %v3390 = vadd.f32 %v3278, %v3389
        %v3391 = vpop.f32.mrf.mxu0
        %3392 = vmatprep.mubr.bf16.mxu0 0
        %3393 = vmatmul.mubr.bf16.gmra.mxu0 %v3245
        %v3394 = vpop.f32.mrf.mxu0
        %v3395 = vadd.f32 %v3278, %v3394
        %v3396 = vpop.f32.mrf.mxu0
        %v3397 = vpop.f32.mrf.mxu0
        %v3398 = vadd.f32 %v3278, %v3397
        %v3399 = vpop.f32.mrf.mxu0
        %3400 = vmatprep.mubr.bf16.mxu0 0
        %3401 = vmatmul.mubr.bf16.gmra.mxu0 %v3246
        %v3402 = vpop.f32.mrf.mxu0
        %v3403 = vadd.f32 %v3278, %v3402
        %v3404 = vpop.f32.mrf.mxu0
        %v3405 = vpop.f32.mrf.mxu0
        %v3406 = vadd.f32 %v3278, %v3405
        %v3407 = vpop.f32.mrf.mxu0
        %3408 = vmatprep.mubr.bf16.mxu0 0
        %3409 = vmatmul.mubr.bf16.gmra.mxu0 %v3247
        %v3410 = vpop.f32.mrf.mxu0
        %v3411 = vadd.f32 %v3278, %v3410
        %v3412 = vpop.f32.mrf.mxu0
        %v3413 = vpop.f32.mrf.mxu0
        %v3414 = vadd.f32 %v3278, %v3413
        %v3415 = vpop.f32.mrf.mxu0
        %3416 = vmatprep.mubr.bf16.mxu0 0
        %3417 = vmatmul.mubr.bf16.gmra.mxu0 %v3248
        %v3418 = vpop.f32.mrf.mxu0
        %v3419 = vadd.f32 %v3278, %v3418
        %v3420 = vpop.f32.mrf.mxu0
        %v3421 = vpop.f32.mrf.mxu0
        %v3422 = vadd.f32 %v3278, %v3421
        %v3423 = vpop.f32.mrf.mxu0
        %3424 = vmatprep.mubr.bf16.mxu0 0
        %3425 = vmatmul.mubr.bf16.gmra.mxu0 %v3249
        %v3426 = vpop.f32.mrf.mxu0
        %v3427 = vadd.f32 %v3278, %v3426
        %v3428 = vpop.f32.mrf.mxu0
        %v3429 = vpop.f32.mrf.mxu0
        %v3430 = vadd.f32 %v3278, %v3429
        %v3431 = vpop.f32.mrf.mxu0
        %3432 = vmatprep.mubr.bf16.mxu0 0
        %3433 = vmatmul.mubr.bf16.gmra.mxu0 %v3250
        %v3434 = vpop.f32.mrf.mxu0
        %v3435 = vadd.f32 %v3278, %v3434
        %v3436 = vpop.f32.mrf.mxu0
        %v3437 = vpop.f32.mrf.mxu0
        %v3438 = vadd.f32 %v3278, %v3437
        %v3439 = vpop.f32.mrf.mxu0
        %3440 = vmatprep.mubr.bf16.mxu0 0
        %3441 = vmatmul.mubr.bf16.gmra.mxu0 %v3251
        %v3442 = vpop.f32.mrf.mxu0
        %v3443 = vadd.f32 %v3278, %v3442
        %v3444 = vpop.f32.mrf.mxu0
        %v3445 = vpop.f32.mrf.mxu0
        %v3446 = vadd.f32 %v3278, %v3445
        %v3447 = vpop.f32.mrf.mxu0
        %3448 = vmatprep.mubr.bf16.mxu0 0
        %3449 = vmatmul.mubr.bf16.gmra.mxu0 %v3252
        %v3450 = vpop.f32.mrf.mxu0
        %v3451 = vadd.f32 %v3278, %v3450
        %v3452 = vpop.f32.mrf.mxu0
        %v3453 = vpop.f32.mrf.mxu0
        %v3454 = vadd.f32 %v3278, %v3453
        %v3455 = vpop.f32.mrf.mxu0
        %3456 = vmatprep.mubr.bf16.mxu0 0
        %3457 = vmatmul.mubr.bf16.gmra.mxu0 %v3253
        %v3458 = vpop.f32.mrf.mxu0
        %v3459 = vadd.f32 %v3278, %v3458
        %v3460 = vpop.f32.mrf.mxu0
        %v3461 = vpop.f32.mrf.mxu0
        %v3462 = vadd.f32 %v3278, %v3461
        %v3463 = vpop.f32.mrf.mxu0
        %3464 = vmatprep.mubr.bf16.mxu0 0
        %3465 = vmatmul.mubr.bf16.gmra.mxu0 %v3254
        %v3466 = vpop.f32.mrf.mxu0
        %v3467 = vadd.f32 %v3278, %v3466
        %v3468 = vpop.f32.mrf.mxu0
        %v3469 = vpop.f32.mrf.mxu0
        %v3470 = vadd.f32 %v3278, %v3469
        %v3471 = vpop.f32.mrf.mxu0
        %3472 = vmatprep.mubr.bf16.mxu0 0
        %3473 = vmatmul.mubr.bf16.gmra.mxu0 %v3255
        %v3474 = vpop.f32.mrf.mxu0
        %v3475 = vadd.f32 %v3278, %v3474
        %v3476 = vpop.f32.mrf.mxu0
        %v3477 = vpop.f32.mrf.mxu0
        %v3478 = vadd.f32 %v3278, %v3477
        %v3479 = vpop.f32.mrf.mxu0
        %3480 = vmatprep.mubr.bf16.mxu0 0
        %3481 = vmatmul.mubr.bf16.gmra.mxu0 %v3256
        %v3482 = vpop.f32.mrf.mxu0
        %v3483 = vadd.f32 %v3278, %v3482
        %v3484 = vpop.f32.mrf.mxu0
        %v3485 = vpop.f32.mrf.mxu0
        %v3486 = vadd.f32 %v3278, %v3485
        %v3487 = vpop.f32.mrf.mxu0
        %3488 = vdwg.mxu0
        %3489 = vst [vmem:[%s651] sm:$0xff] %v3363
        %3490 = vst [vmem:[%s651 + $0x8] sm:$0xff] %v3366
        %3491 = vst [vmem:[%s651 + $0x10] sm:$0xff] %v3371
        %3492 = vst [vmem:[%s651 + $0x18] sm:$0xff] %v3374
        %3493 = vst [vmem:[%s651 + $0x20] sm:$0xff] %v3379
        %3494 = vst [vmem:[%s651 + $0x28] sm:$0xff] %v3382
        %3495 = vst [vmem:[%s651 + $0x30] sm:$0xff] %v3387
        %3496 = vst [vmem:[%s651 + $0x38] sm:$0xff] %v3390
        %3497 = vst [vmem:[%s651 + $0x40] sm:$0xff] %v3395
        %3498 = vst [vmem:[%s651 + $0x48] sm:$0xff] %v3398
        %3499 = vst [vmem:[%s651 + $0x50] sm:$0xff] %v3403
        %3500 = vst [vmem:[%s651 + $0x58] sm:$0xff] %v3406
        %3501 = vst [vmem:[%s651 + $0x60] sm:$0xff] %v3411
        %3502 = vst [vmem:[%s651 + $0x68] sm:$0xff] %v3414
        %3503 = vst [vmem:[%s651 + $0x70] sm:$0xff] %v3419
        %3504 = vst [vmem:[%s651 + $0x78] sm:$0xff] %v3422
        %3505 = vst [vmem:[%s651 + $0x80] sm:$0xff] %v3427
        %3506 = vst [vmem:[%s651 + $0x88] sm:$0xff] %v3430
        %3507 = vst [vmem:[%s651 + $0x90] sm:$0xff] %v3435
        %3508 = vst [vmem:[%s651 + $0x98] sm:$0xff] %v3438
        %3509 = vst [vmem:[%s651 + $0xa0] sm:$0xff] %v3443
        %3510 = vst [vmem:[%s651 + $0xa8] sm:$0xff] %v3446
        %3511 = vst [vmem:[%s651 + $0xb0] sm:$0xff] %v3451
        %3512 = vst [vmem:[%s651 + $0xb8] sm:$0xff] %v3454
        %3513 = vst [vmem:[%s651 + $0xc0] sm:$0xff] %v3459
        %3514 = vst [vmem:[%s651 + $0xc8] sm:$0xff] %v3462
        %3515 = vst [vmem:[%s651 + $0xd0] sm:$0xff] %v3467
        %3516 = vst [vmem:[%s651 + $0xd8] sm:$0xff] %v3470
        %3517 = vst [vmem:[%s651 + $0xe0] sm:$0xff] %v3475
        %3518 = vst [vmem:[%s651 + $0xe8] sm:$0xff] %v3478
        %3519 = vst [vmem:[%s651 + $0xf0] sm:$0xff] %v3483
        %3520 = vst [vmem:[%s651 + $0xf8] sm:$0xff] %v3486
        %3521 = vrot.lane.b32.xlu0 %v3363, 64
        %v3522 = vpop.permute.xlu0 %3521
        %3523 = vrot.lane.b32.xlu0 %v3366, 64
        %v3524 = vpop.permute.xlu0 %3523
        %3525 = vrot.lane.b32.xlu0 %v3371, 64
        %v3526 = vpop.permute.xlu0 %3525
        %3527 = vrot.lane.b32.xlu0 %v3374, 64
        %v3528 = vpop.permute.xlu0 %3527
        %3529 = vrot.lane.b32.xlu0 %v3379, 64
        %v3530 = vpop.permute.xlu0 %3529
        %3531 = vrot.lane.b32.xlu0 %v3382, 64
        %v3532 = vpop.permute.xlu0 %3531
        %3533 = vrot.lane.b32.xlu0 %v3387, 64
        %v3534 = vpop.permute.xlu0 %3533
        %3535 = vrot.lane.b32.xlu0 %v3390, 64
        %v3536 = vpop.permute.xlu0 %3535
        %3537 = vrot.lane.b32.xlu0 %v3395, 64
        %v3538 = vpop.permute.xlu0 %3537
        %3539 = vrot.lane.b32.xlu0 %v3398, 64
        %v3540 = vpop.permute.xlu0 %3539
        %3541 = vrot.lane.b32.xlu0 %v3403, 64
        %v3542 = vpop.permute.xlu0 %3541
        %3543 = vrot.lane.b32.xlu0 %v3406, 64
        %v3544 = vpop.permute.xlu0 %3543
        %3545 = vrot.lane.b32.xlu0 %v3411, 64
        %v3546 = vpop.permute.xlu0 %3545
        %3547 = vrot.lane.b32.xlu0 %v3414, 64
        %v3548 = vpop.permute.xlu0 %3547
        %3549 = vrot.lane.b32.xlu0 %v3419, 64
        %v3550 = vpop.permute.xlu0 %3549
        %3551 = vrot.lane.b32.xlu0 %v3422, 64
        %v3552 = vpop.permute.xlu0 %3551
        %3553 = vrot.lane.b32.xlu0 %v3427, 64
        %v3554 = vpop.permute.xlu0 %3553
        %3555 = vrot.lane.b32.xlu0 %v3430, 64
        %v3556 = vpop.permute.xlu0 %3555
        %3557 = vrot.lane.b32.xlu0 %v3435, 64
        %v3558 = vpop.permute.xlu0 %3557
        %3559 = vrot.lane.b32.xlu0 %v3438, 64
        %v3560 = vpop.permute.xlu0 %3559
        %3561 = vrot.lane.b32.xlu0 %v3443, 64
        %v3562 = vpop.permute.xlu0 %3561
        %3563 = vrot.lane.b32.xlu0 %v3446, 64
        %v3564 = vpop.permute.xlu0 %3563
        %3565 = vrot.lane.b32.xlu0 %v3451, 64
        %v3566 = vpop.permute.xlu0 %3565
        %3567 = vrot.lane.b32.xlu0 %v3454, 64
        %v3568 = vpop.permute.xlu0 %3567
        %3569 = vrot.lane.b32.xlu0 %v3459, 64
        %v3570 = vpop.permute.xlu0 %3569
        %3571 = vrot.lane.b32.xlu0 %v3462, 64
        %v3572 = vpop.permute.xlu0 %3571
        %3573 = vrot.lane.b32.xlu0 %v3467, 64
        %v3574 = vpop.permute.xlu0 %3573
        %3575 = vrot.lane.b32.xlu0 %v3470, 64
        %v3576 = vpop.permute.xlu0 %3575
        %3577 = vrot.lane.b32.xlu0 %v3475, 64
        %v3578 = vpop.permute.xlu0 %3577
        %3579 = vrot.lane.b32.xlu0 %v3478, 64
        %v3580 = vpop.permute.xlu0 %3579
        %3581 = vrot.lane.b32.xlu0 %v3483, 64
        %v3582 = vpop.permute.xlu0 %3581
        %3583 = vrot.lane.b32.xlu0 %v3486, 64
        %v3584 = vpop.permute.xlu0 %3583
        %v3585 = vlaneseq
        %v3586 = vand.u32 %v3585, 127
        %vm3587 = vcmp.lt.s32.totalorder %v3586, 64
        %v3588 = vmul.f32 %v3522, 0.5
        %v3589 = vmul.f32 %v3524, 0.5
        %v3590 = vmul.f32 %v3526, 0.5
        %v3591 = vmul.f32 %v3528, 0.5
        %v3592 = vmul.f32 %v3530, 0.5
        %v3593 = vmul.f32 %v3532, 0.5
        %v3594 = vmul.f32 %v3534, 0.5
        %v3595 = vmul.f32 %v3536, 0.5
        %v3596 = vmul.f32 %v3538, 0.5
        %v3597 = vmul.f32 %v3540, 0.5
        %v3598 = vmul.f32 %v3542, 0.5
        %v3599 = vmul.f32 %v3544, 0.5
        %v3600 = vmul.f32 %v3546, 0.5
        %v3601 = vmul.f32 %v3548, 0.5
        %v3602 = vmul.f32 %v3550, 0.5
        %v3603 = vmul.f32 %v3552, 0.5
        %v3604 = vmul.f32 %v3554, 0.5
        %v3605 = vmul.f32 %v3556, 0.5
        %v3606 = vmul.f32 %v3558, 0.5
        %v3607 = vmul.f32 %v3560, 0.5
        %v3608 = vmul.f32 %v3562, 0.5
        %v3609 = vmul.f32 %v3564, 0.5
        %v3610 = vmul.f32 %v3566, 0.5
        %v3611 = vmul.f32 %v3568, 0.5
        %v3612 = vmul.f32 %v3570, 0.5
        %v3613 = vmul.f32 %v3572, 0.5
        %v3614 = vmul.f32 %v3574, 0.5
        %v3615 = vmul.f32 %v3576, 0.5
        %v3616 = vmul.f32 %v3578, 0.5
        %v3617 = vmul.f32 %v3580, 0.5
        %v3618 = vmul.f32 %v3582, 0.5
        %v3619 = vmul.f32 %v3584, 0.5
        %v3620 = vsel %vm3587, %v3588, 0.0
        %v3621 = vsel %vm3587, %v3589, 0.0
        %v3622 = vsel %vm3587, %v3590, 0.0
        %v3623 = vsel %vm3587, %v3591, 0.0
        %v3624 = vsel %vm3587, %v3592, 0.0
        %v3625 = vsel %vm3587, %v3593, 0.0
        %v3626 = vsel %vm3587, %v3594, 0.0
        %v3627 = vsel %vm3587, %v3595, 0.0
        %v3628 = vsel %vm3587, %v3596, 0.0
        %v3629 = vsel %vm3587, %v3597, 0.0
        %v3630 = vsel %vm3587, %v3598, 0.0
        %v3631 = vsel %vm3587, %v3599, 0.0
        %v3632 = vsel %vm3587, %v3600, 0.0
        %v3633 = vsel %vm3587, %v3601, 0.0
        %v3634 = vsel %vm3587, %v3602, 0.0
        %v3635 = vsel %vm3587, %v3603, 0.0
        %v3636 = vsel %vm3587, %v3604, 0.0
        %v3637 = vsel %vm3587, %v3605, 0.0
        %v3638 = vsel %vm3587, %v3606, 0.0
        %v3639 = vsel %vm3587, %v3607, 0.0
        %v3640 = vsel %vm3587, %v3608, 0.0
        %v3641 = vsel %vm3587, %v3609, 0.0
        %v3642 = vsel %vm3587, %v3610, 0.0
        %v3643 = vsel %vm3587, %v3611, 0.0
        %v3644 = vsel %vm3587, %v3612, 0.0
        %v3645 = vsel %vm3587, %v3613, 0.0
        %v3646 = vsel %vm3587, %v3614, 0.0
        %v3647 = vsel %vm3587, %v3615, 0.0
        %v3648 = vsel %vm3587, %v3616, 0.0
        %v3649 = vsel %vm3587, %v3617, 0.0
        %v3650 = vsel %vm3587, %v3618, 0.0
        %v3651 = vsel %vm3587, %v3619, 0.0
        %v3652 = vmul.f32 %v3620, 1.442695
        %v3653 = vpow.pop %v3652
        %v3654 = vmul.f32 %v3621, 1.442695
        %v3655 = vpow.pop %v3654
        %v3656 = vmul.f32 %v3622, 1.442695
        %v3657 = vpow.pop %v3656
        %v3658 = vmul.f32 %v3623, 1.442695
        %v3659 = vpow.pop %v3658
        %v3660 = vmul.f32 %v3624, 1.442695
        %v3661 = vpow.pop %v3660
        %v3662 = vmul.f32 %v3625, 1.442695
        %v3663 = vpow.pop %v3662
        %v3664 = vmul.f32 %v3626, 1.442695
        %v3665 = vpow.pop %v3664
        %v3666 = vmul.f32 %v3627, 1.442695
        %v3667 = vpow.pop %v3666
        %v3668 = vmul.f32 %v3628, 1.442695
        %v3669 = vpow.pop %v3668
        %v3670 = vmul.f32 %v3629, 1.442695
        %v3671 = vpow.pop %v3670
        %v3672 = vmul.f32 %v3630, 1.442695
        %v3673 = vpow.pop %v3672
        %v3674 = vmul.f32 %v3631, 1.442695
        %v3675 = vpow.pop %v3674
        %v3676 = vmul.f32 %v3632, 1.442695
        %v3677 = vpow.pop %v3676
        %v3678 = vmul.f32 %v3633, 1.442695
        %v3679 = vpow.pop %v3678
        %v3680 = vmul.f32 %v3634, 1.442695
        %v3681 = vpow.pop %v3680
        %v3682 = vmul.f32 %v3635, 1.442695
        %v3683 = vpow.pop %v3682
        %v3684 = vmul.f32 %v3636, 1.442695
        %v3685 = vpow.pop %v3684
        %v3686 = vmul.f32 %v3637, 1.442695
        %v3687 = vpow.pop %v3686
        %v3688 = vmul.f32 %v3638, 1.442695
        %v3689 = vpow.pop %v3688
        %v3690 = vmul.f32 %v3639, 1.442695
        %v3691 = vpow.pop %v3690
        %v3692 = vmul.f32 %v3640, 1.442695
        %v3693 = vpow.pop %v3692
        %v3694 = vmul.f32 %v3641, 1.442695
        %v3695 = vpow.pop %v3694
        %v3696 = vmul.f32 %v3642, 1.442695
        %v3697 = vpow.pop %v3696
        %v3698 = vmul.f32 %v3643, 1.442695
        %v3699 = vpow.pop %v3698
        %v3700 = vmul.f32 %v3644, 1.442695
        %v3701 = vpow.pop %v3700
        %v3702 = vmul.f32 %v3645, 1.442695
        %v3703 = vpow.pop %v3702
        %v3704 = vmul.f32 %v3646, 1.442695
        %v3705 = vpow.pop %v3704
        %v3706 = vmul.f32 %v3647, 1.442695
        %v3707 = vpow.pop %v3706
        %v3708 = vmul.f32 %v3648, 1.442695
        %v3709 = vpow.pop %v3708
        %v3710 = vmul.f32 %v3649, 1.442695
        %v3711 = vpow.pop %v3710
        %v3712 = vmul.f32 %v3650, 1.442695
        %v3713 = vpow.pop %v3712
        %v3714 = vmul.f32 %v3651, 1.442695
        %v3715 = vpow.pop %v3714
        %v3716 = vld [vmem:[%s571] sm:$0xff]
        %v3717 = vld [vmem:[%s571 + $0x8] sm:$0xff]
        %v3718 = vld [vmem:[%s571 + $0x10] sm:$0xff]
        %v3719 = vld [vmem:[%s571 + $0x18] sm:$0xff]
        %v3720 = vld [vmem:[%s571 + $0x20] sm:$0xff]
        %v3721 = vld [vmem:[%s571 + $0x28] sm:$0xff]
        %v3722 = vld [vmem:[%s571 + $0x30] sm:$0xff]
        %v3723 = vld [vmem:[%s571 + $0x38] sm:$0xff]
        %v3724 = vld [vmem:[%s571 + $0x40] sm:$0xff]
        %v3725 = vld [vmem:[%s571 + $0x48] sm:$0xff]
        %v3726 = vld [vmem:[%s571 + $0x50] sm:$0xff]
        %v3727 = vld [vmem:[%s571 + $0x58] sm:$0xff]
        %v3728 = vld [vmem:[%s571 + $0x60] sm:$0xff]
        %v3729 = vld [vmem:[%s571 + $0x68] sm:$0xff]
        %v3730 = vld [vmem:[%s571 + $0x70] sm:$0xff]
        %v3731 = vld [vmem:[%s571 + $0x78] sm:$0xff]
        %v3732 = vld [vmem:[%s571 + $0x80] sm:$0xff]
        %v3733 = vld [vmem:[%s571 + $0x88] sm:$0xff]
        %v3734 = vld [vmem:[%s571 + $0x90] sm:$0xff]
        %v3735 = vld [vmem:[%s571 + $0x98] sm:$0xff]
        %v3736 = vld [vmem:[%s571 + $0xa0] sm:$0xff]
        %v3737 = vld [vmem:[%s571 + $0xa8] sm:$0xff]
        %v3738 = vld [vmem:[%s571 + $0xb0] sm:$0xff]
        %v3739 = vld [vmem:[%s571 + $0xb8] sm:$0xff]
        %v3740 = vld [vmem:[%s571 + $0xc0] sm:$0xff]
        %v3741 = vld [vmem:[%s571 + $0xc8] sm:$0xff]
        %v3742 = vld [vmem:[%s571 + $0xd0] sm:$0xff]
        %v3743 = vld [vmem:[%s571 + $0xd8] sm:$0xff]
        %v3744 = vld [vmem:[%s571 + $0xe0] sm:$0xff]
        %v3745 = vld [vmem:[%s571 + $0xe8] sm:$0xff]
        %v3746 = vld [vmem:[%s571 + $0xf0] sm:$0xff]
        %v3747 = vld [vmem:[%s571 + $0xf8] sm:$0xff]
        %v3748 = vmul.f32 %v3716, %v3653
        %v3749 = vmul.f32 %v3717, %v3655
        %v3750 = vmul.f32 %v3718, %v3657
        %v3751 = vmul.f32 %v3719, %v3659
        %v3752 = vmul.f32 %v3720, %v3661
        %v3753 = vmul.f32 %v3721, %v3663
        %v3754 = vmul.f32 %v3722, %v3665
        %v3755 = vmul.f32 %v3723, %v3667
        %v3756 = vmul.f32 %v3724, %v3669
        %v3757 = vmul.f32 %v3725, %v3671
        %v3758 = vmul.f32 %v3726, %v3673
        %v3759 = vmul.f32 %v3727, %v3675
        %v3760 = vmul.f32 %v3728, %v3677
        %v3761 = vmul.f32 %v3729, %v3679
        %v3762 = vmul.f32 %v3730, %v3681
        %v3763 = vmul.f32 %v3731, %v3683
        %v3764 = vmul.f32 %v3732, %v3685
        %v3765 = vmul.f32 %v3733, %v3687
        %v3766 = vmul.f32 %v3734, %v3689
        %v3767 = vmul.f32 %v3735, %v3691
        %v3768 = vmul.f32 %v3736, %v3693
        %v3769 = vmul.f32 %v3737, %v3695
        %v3770 = vmul.f32 %v3738, %v3697
        %v3771 = vmul.f32 %v3739, %v3699
        %v3772 = vmul.f32 %v3740, %v3701
        %v3773 = vmul.f32 %v3741, %v3703
        %v3774 = vmul.f32 %v3742, %v3705
        %v3775 = vmul.f32 %v3743, %v3707
        %v3776 = vmul.f32 %v3744, %v3709
        %v3777 = vmul.f32 %v3745, %v3711
        %v3778 = vmul.f32 %v3746, %v3713
        %v3779 = vmul.f32 %v3747, %v3715
        %v3780 = vadd.f32 %v3363, %v3748
        %v3781 = vadd.f32 %v3366, %v3749
        %v3782 = vadd.f32 %v3371, %v3750
        %v3783 = vadd.f32 %v3374, %v3751
        %v3784 = vadd.f32 %v3379, %v3752
        %v3785 = vadd.f32 %v3382, %v3753
        %v3786 = vadd.f32 %v3387, %v3754
        %v3787 = vadd.f32 %v3390, %v3755
        %v3788 = vadd.f32 %v3395, %v3756
        %v3789 = vadd.f32 %v3398, %v3757
        %v3790 = vadd.f32 %v3403, %v3758
        %v3791 = vadd.f32 %v3406, %v3759
        %v3792 = vadd.f32 %v3411, %v3760
        %v3793 = vadd.f32 %v3414, %v3761
        %v3794 = vadd.f32 %v3419, %v3762
        %v3795 = vadd.f32 %v3422, %v3763
        %v3796 = vadd.f32 %v3427, %v3764
        %v3797 = vadd.f32 %v3430, %v3765
        %v3798 = vadd.f32 %v3435, %v3766
        %v3799 = vadd.f32 %v3438, %v3767
        %v3800 = vadd.f32 %v3443, %v3768
        %v3801 = vadd.f32 %v3446, %v3769
        %v3802 = vadd.f32 %v3451, %v3770
        %v3803 = vadd.f32 %v3454, %v3771
        %v3804 = vadd.f32 %v3459, %v3772
        %v3805 = vadd.f32 %v3462, %v3773
        %v3806 = vadd.f32 %v3467, %v3774
        %v3807 = vadd.f32 %v3470, %v3775
        %v3808 = vadd.f32 %v3475, %v3776
        %v3809 = vadd.f32 %v3478, %v3777
        %v3810 = vadd.f32 %v3483, %v3778
        %v3811 = vadd.f32 %v3486, %v3779
        %v3812 = vpack.c.bf16 %v3781, %v3780
        %v3813 = vpack.c.bf16 %v3783, %v3782
        %v3814 = vpack.c.bf16 %v3785, %v3784
        %v3815 = vpack.c.bf16 %v3787, %v3786
        %v3816 = vpack.c.bf16 %v3789, %v3788
        %v3817 = vpack.c.bf16 %v3791, %v3790
        %v3818 = vpack.c.bf16 %v3793, %v3792
        %v3819 = vpack.c.bf16 %v3795, %v3794
        %v3820 = vpack.c.bf16 %v3797, %v3796
        %v3821 = vpack.c.bf16 %v3799, %v3798
        %v3822 = vpack.c.bf16 %v3801, %v3800
        %v3823 = vpack.c.bf16 %v3803, %v3802
        %v3824 = vpack.c.bf16 %v3805, %v3804
        %v3825 = vpack.c.bf16 %v3807, %v3806
        %v3826 = vpack.c.bf16 %v3809, %v3808
        %v3827 = vpack.c.bf16 %v3811, %v3810
        %v3828 = vld [vmem:[#allocation11] sm:$0xf]
        %v3829 = vld [vmem:[#allocation11 + $0x4] sm:$0xf]
        %v3830 = vld [vmem:[#allocation11 + $0x8] sm:$0xf]
        %v3831 = vld [vmem:[#allocation11 + $0xc] sm:$0xf]
        %v3832 = vld [vmem:[#allocation11 + $0x10] sm:$0xf]
        %v3833 = vld [vmem:[#allocation11 + $0x14] sm:$0xf]
        %v3834 = vld [vmem:[#allocation11 + $0x18] sm:$0xf]
        %v3835 = vld [vmem:[#allocation11 + $0x1c] sm:$0xf]
        %v3836 = vld [vmem:[#allocation11 + $0x20] sm:$0xf]
        %v3837 = vld [vmem:[#allocation11 + $0x24] sm:$0xf]
        %v3838 = vld [vmem:[#allocation11 + $0x28] sm:$0xf]
        %v3839 = vld [vmem:[#allocation11 + $0x2c] sm:$0xf]
        %v3840 = vld [vmem:[#allocation11 + $0x30] sm:$0xf]
        %v3841 = vld [vmem:[#allocation11 + $0x34] sm:$0xf]
        %v3842 = vld [vmem:[#allocation11 + $0x38] sm:$0xf]
        %v3843 = vld [vmem:[#allocation11 + $0x3c] sm:$0xf]
        %v3844 = vld [vmem:[%s9] sm:$0x1]
        %v3846 = vlaneseq
        %v3847 = vshrl.u32 %v3846, 7
        %v3848 = vsub.s32 0, %v3847
        %v3849 = vrot.slane %v3844, %v3848
        %v3867 = vunpack.c.l.b16 %v3828
        %v3868 = vunpack.c.l.b16 %v3829
        %v3869 = vunpack.c.l.b16 %v3830
        %v3870 = vunpack.c.l.b16 %v3831
        %v3871 = vunpack.c.l.b16 %v3832
        %v3872 = vunpack.c.l.b16 %v3833
        %v3873 = vunpack.c.l.b16 %v3834
        %v3874 = vunpack.c.l.b16 %v3835
        %v3875 = vunpack.c.l.b16 %v3836
        %v3876 = vunpack.c.l.b16 %v3837
        %v3877 = vunpack.c.l.b16 %v3838
        %v3878 = vunpack.c.l.b16 %v3839
        %v3879 = vunpack.c.l.b16 %v3840
        %v3880 = vunpack.c.l.b16 %v3841
        %v3881 = vunpack.c.l.b16 %v3842
        %v3882 = vunpack.c.l.b16 %v3843
        %v3883 = vpack.c.b16 %v3868, %v3867
        %v3884 = vpack.c.b16 %v3870, %v3869
        %v3885 = vpack.c.b16 %v3872, %v3871
        %v3886 = vpack.c.b16 %v3874, %v3873
        %v3887 = vpack.c.b16 %v3876, %v3875
        %v3888 = vpack.c.b16 %v3878, %v3877
        %v3889 = vpack.c.b16 %v3880, %v3879
        %v3890 = vpack.c.b16 %v3882, %v3881
        %3899 = vmatprep.subr.bf16.mxu0 0
        %3900 = vmatpush1.bf16.msra.mxu0 %v3890
        %3901 = vmatprep.subr.bf16.mxu0 0
        %3902 = vmatpush1.bf16.msra.mxu0 %v3889
        %3903 = vmatprep.subr.bf16.mxu0 0
        %3904 = vmatpush1.bf16.msra.mxu0 %v3888
        %3905 = vmatprep.subr.bf16.mxu0 0
        %3906 = vmatpush1.bf16.msra.mxu0 %v3887
        %3907 = vmatprep.subr.bf16.mxu0 0
        %3908 = vmatpush1.bf16.msra.mxu0 %v3886
        %3909 = vmatprep.subr.bf16.mxu0 0
        %3910 = vmatpush1.bf16.msra.mxu0 %v3885
        %3911 = vmatprep.subr.bf16.mxu0 0
        %3912 = vmatpush1.bf16.msra.mxu0 %v3884
        %3913 = vmatprep.subr.bf16.mxu0 0
        %3914 = vmatpush1.bf16.msra.mxu0 %v3883
        %3915 = vmatprep.subr.bf16.mxu0 0
        %3916 = vmatpush2.bf16.msra.mxu0 0
        %3917 = vmatprep.subr.bf16.mxu0 0
        %3918 = vmatpush2.bf16.msra.mxu0 0
        %3919 = vmatprep.subr.bf16.mxu0 0
        %3920 = vmatpush2.bf16.msra.mxu0 0
        %3921 = vmatprep.subr.bf16.mxu0 0
        %3922 = vmatpush2.bf16.msra.mxu0 0
        %3923 = vmatprep.subr.bf16.mxu0 0
        %3924 = vmatpush2.bf16.msra.mxu0 0
        %3925 = vmatprep.subr.bf16.mxu0 0
        %3926 = vmatpush2.bf16.msra.mxu0 0
        %3927 = vmatprep.subr.bf16.mxu0 0
        %3928 = vmatpush2.bf16.msra.mxu0 0
        %3929 = vmatprep.subr.bf16.mxu0 0
        %3930 = vmatpush2.bf16.msra.mxu0 0
        %3931 = vmatprep.mubr.bf16.mxu0 0
        %3932 = vmatmul.mubr.bf16.gmra.mxu0 %v3812
        %v3933 = vpop.f32.mrf.mxu0
        %v3934 = vadd.f32 %v3849, %v3933
        %v3935 = vpop.f32.mrf.mxu0
        %v3936 = vpop.f32.mrf.mxu0
        %v3937 = vadd.f32 %v3849, %v3936
        %v3938 = vpop.f32.mrf.mxu0
        %3939 = vmatprep.mubr.bf16.mxu0 0
        %3940 = vmatmul.mubr.bf16.gmra.mxu0 %v3813
        %v3941 = vpop.f32.mrf.mxu0
        %v3942 = vadd.f32 %v3849, %v3941
        %v3943 = vpop.f32.mrf.mxu0
        %v3944 = vpop.f32.mrf.mxu0
        %v3945 = vadd.f32 %v3849, %v3944
        %v3946 = vpop.f32.mrf.mxu0
        %3947 = vmatprep.mubr.bf16.mxu0 0
        %3948 = vmatmul.mubr.bf16.gmra.mxu0 %v3814
        %v3949 = vpop.f32.mrf.mxu0
        %v3950 = vadd.f32 %v3849, %v3949
        %v3951 = vpop.f32.mrf.mxu0
        %v3952 = vpop.f32.mrf.mxu0
        %v3953 = vadd.f32 %v3849, %v3952
        %v3954 = vpop.f32.mrf.mxu0
        %3955 = vmatprep.mubr.bf16.mxu0 0
        %3956 = vmatmul.mubr.bf16.gmra.mxu0 %v3815
        %v3957 = vpop.f32.mrf.mxu0
        %v3958 = vadd.f32 %v3849, %v3957
        %v3959 = vpop.f32.mrf.mxu0
        %v3960 = vpop.f32.mrf.mxu0
        %v3961 = vadd.f32 %v3849, %v3960
        %v3962 = vpop.f32.mrf.mxu0
        %3963 = vmatprep.mubr.bf16.mxu0 0
        %3964 = vmatmul.mubr.bf16.gmra.mxu0 %v3816
        %v3965 = vpop.f32.mrf.mxu0
        %v3966 = vadd.f32 %v3849, %v3965
        %v3967 = vpop.f32.mrf.mxu0
        %v3968 = vpop.f32.mrf.mxu0
        %v3969 = vadd.f32 %v3849, %v3968
        %v3970 = vpop.f32.mrf.mxu0
        %3971 = vmatprep.mubr.bf16.mxu0 0
        %3972 = vmatmul.mubr.bf16.gmra.mxu0 %v3817
        %v3973 = vpop.f32.mrf.mxu0
        %v3974 = vadd.f32 %v3849, %v3973
        %v3975 = vpop.f32.mrf.mxu0
        %v3976 = vpop.f32.mrf.mxu0
        %v3977 = vadd.f32 %v3849, %v3976
        %v3978 = vpop.f32.mrf.mxu0
        %3979 = vmatprep.mubr.bf16.mxu0 0
        %3980 = vmatmul.mubr.bf16.gmra.mxu0 %v3818
        %v3981 = vpop.f32.mrf.mxu0
        %v3982 = vadd.f32 %v3849, %v3981
        %v3983 = vpop.f32.mrf.mxu0
        %v3984 = vpop.f32.mrf.mxu0
        %v3985 = vadd.f32 %v3849, %v3984
        %v3986 = vpop.f32.mrf.mxu0
        %3987 = vmatprep.mubr.bf16.mxu0 0
        %3988 = vmatmul.mubr.bf16.gmra.mxu0 %v3819
        %v3989 = vpop.f32.mrf.mxu0
        %v3990 = vadd.f32 %v3849, %v3989
        %v3991 = vpop.f32.mrf.mxu0
        %v3992 = vpop.f32.mrf.mxu0
        %v3993 = vadd.f32 %v3849, %v3992
        %v3994 = vpop.f32.mrf.mxu0
        %3995 = vmatprep.mubr.bf16.mxu0 0
        %3996 = vmatmul.mubr.bf16.gmra.mxu0 %v3820
        %v3997 = vpop.f32.mrf.mxu0
        %v3998 = vadd.f32 %v3849, %v3997
        %v3999 = vpop.f32.mrf.mxu0
        %v4000 = vpop.f32.mrf.mxu0
        %v4001 = vadd.f32 %v3849, %v4000
        %v4002 = vpop.f32.mrf.mxu0
        %4003 = vmatprep.mubr.bf16.mxu0 0
        %4004 = vmatmul.mubr.bf16.gmra.mxu0 %v3821
        %v4005 = vpop.f32.mrf.mxu0
        %v4006 = vadd.f32 %v3849, %v4005
        %v4007 = vpop.f32.mrf.mxu0
        %v4008 = vpop.f32.mrf.mxu0
        %v4009 = vadd.f32 %v3849, %v4008
        %v4010 = vpop.f32.mrf.mxu0
        %4011 = vmatprep.mubr.bf16.mxu0 0
        %4012 = vmatmul.mubr.bf16.gmra.mxu0 %v3822
        %v4013 = vpop.f32.mrf.mxu0
        %v4014 = vadd.f32 %v3849, %v4013
        %v4015 = vpop.f32.mrf.mxu0
        %v4016 = vpop.f32.mrf.mxu0
        %v4017 = vadd.f32 %v3849, %v4016
        %v4018 = vpop.f32.mrf.mxu0
        %4019 = vmatprep.mubr.bf16.mxu0 0
        %4020 = vmatmul.mubr.bf16.gmra.mxu0 %v3823
        %v4021 = vpop.f32.mrf.mxu0
        %v4022 = vadd.f32 %v3849, %v4021
        %v4023 = vpop.f32.mrf.mxu0
        %v4024 = vpop.f32.mrf.mxu0
        %v4025 = vadd.f32 %v3849, %v4024
        %v4026 = vpop.f32.mrf.mxu0
        %4027 = vmatprep.mubr.bf16.mxu0 0
        %4028 = vmatmul.mubr.bf16.gmra.mxu0 %v3824
        %v4029 = vpop.f32.mrf.mxu0
        %v4030 = vadd.f32 %v3849, %v4029
        %v4031 = vpop.f32.mrf.mxu0
        %v4032 = vpop.f32.mrf.mxu0
        %v4033 = vadd.f32 %v3849, %v4032
        %v4034 = vpop.f32.mrf.mxu0
        %4035 = vmatprep.mubr.bf16.mxu0 0
        %4036 = vmatmul.mubr.bf16.gmra.mxu0 %v3825
        %v4037 = vpop.f32.mrf.mxu0
        %v4038 = vadd.f32 %v3849, %v4037
        %v4039 = vpop.f32.mrf.mxu0
        %v4040 = vpop.f32.mrf.mxu0
        %v4041 = vadd.f32 %v3849, %v4040
        %v4042 = vpop.f32.mrf.mxu0
        %4043 = vmatprep.mubr.bf16.mxu0 0
        %4044 = vmatmul.mubr.bf16.gmra.mxu0 %v3826
        %v4045 = vpop.f32.mrf.mxu0
        %v4046 = vadd.f32 %v3849, %v4045
        %v4047 = vpop.f32.mrf.mxu0
        %v4048 = vpop.f32.mrf.mxu0
        %v4049 = vadd.f32 %v3849, %v4048
        %v4050 = vpop.f32.mrf.mxu0
        %4051 = vmatprep.mubr.bf16.mxu0 0
        %4052 = vmatmul.mubr.bf16.gmra.mxu0 %v3827
        %v4053 = vpop.f32.mrf.mxu0
        %v4054 = vadd.f32 %v3849, %v4053
        %v4055 = vpop.f32.mrf.mxu0
        %v4056 = vpop.f32.mrf.mxu0
        %v4057 = vadd.f32 %v3849, %v4056
        %v4058 = vpop.f32.mrf.mxu0
        %4059 = vdwg.mxu0
        %v4060 = vmax.f32 %v3934, 0.0
        %v4061 = vmax.f32 %v3937, 0.0
        %v4062 = vmax.f32 %v3942, 0.0
        %v4063 = vmax.f32 %v3945, 0.0
        %v4064 = vmax.f32 %v3950, 0.0
        %v4065 = vmax.f32 %v3953, 0.0
        %v4066 = vmax.f32 %v3958, 0.0
        %v4067 = vmax.f32 %v3961, 0.0
        %v4068 = vmax.f32 %v3966, 0.0
        %v4069 = vmax.f32 %v3969, 0.0
        %v4070 = vmax.f32 %v3974, 0.0
        %v4071 = vmax.f32 %v3977, 0.0
        %v4072 = vmax.f32 %v3982, 0.0
        %v4073 = vmax.f32 %v3985, 0.0
        %v4074 = vmax.f32 %v3990, 0.0
        %v4075 = vmax.f32 %v3993, 0.0
        %v4076 = vmax.f32 %v3998, 0.0
        %v4077 = vmax.f32 %v4001, 0.0
        %v4078 = vmax.f32 %v4006, 0.0
        %v4079 = vmax.f32 %v4009, 0.0
        %v4080 = vmax.f32 %v4014, 0.0
        %v4081 = vmax.f32 %v4017, 0.0
        %v4082 = vmax.f32 %v4022, 0.0
        %v4083 = vmax.f32 %v4025, 0.0
        %v4084 = vmax.f32 %v4030, 0.0
        %v4085 = vmax.f32 %v4033, 0.0
        %v4086 = vmax.f32 %v4038, 0.0
        %v4087 = vmax.f32 %v4041, 0.0
        %v4088 = vmax.f32 %v4046, 0.0
        %v4089 = vmax.f32 %v4049, 0.0
        %v4090 = vmax.f32 %v4054, 0.0
        %v4091 = vmax.f32 %v4057, 0.0
        %v4092 = vpack.c.bf16 %v4061, %v4060
        %v4093 = vpack.c.bf16 %v4063, %v4062
        %v4094 = vpack.c.bf16 %v4065, %v4064
        %v4095 = vpack.c.bf16 %v4067, %v4066
        %v4096 = vpack.c.bf16 %v4069, %v4068
        %v4097 = vpack.c.bf16 %v4071, %v4070
        %v4098 = vpack.c.bf16 %v4073, %v4072
        %v4099 = vpack.c.bf16 %v4075, %v4074
        %v4100 = vpack.c.bf16 %v4077, %v4076
        %v4101 = vpack.c.bf16 %v4079, %v4078
        %v4102 = vpack.c.bf16 %v4081, %v4080
        %v4103 = vpack.c.bf16 %v4083, %v4082
        %v4104 = vpack.c.bf16 %v4085, %v4084
        %v4105 = vpack.c.bf16 %v4087, %v4086
        %v4106 = vpack.c.bf16 %v4089, %v4088
        %v4107 = vpack.c.bf16 %v4091, %v4090
        %v4108 = vld [vmem:[#allocation13] sm:$0xff]
        %v4109 = vld [vmem:[#allocation13 + $0x8] sm:$0xff]
        %v4110 = vld [vmem:[#allocation13 + $0x10] sm:$0xff]
        %v4111 = vld [vmem:[#allocation13 + $0x18] sm:$0xff]
        %v4112 = vld [vmem:[#allocation13 + $0x20] sm:$0xff]
        %v4113 = vld [vmem:[#allocation13 + $0x28] sm:$0xff]
        %v4114 = vld [vmem:[#allocation13 + $0x30] sm:$0xff]
        %v4115 = vld [vmem:[#allocation13 + $0x38] sm:$0xff]
        %v4116 = vld [vmem:[#allocation13 + $0x40] sm:$0xff]
        %v4117 = vld [vmem:[#allocation13 + $0x48] sm:$0xff]
        %v4118 = vld [vmem:[#allocation13 + $0x50] sm:$0xff]
        %v4119 = vld [vmem:[#allocation13 + $0x58] sm:$0xff]
        %v4120 = vld [vmem:[#allocation13 + $0x60] sm:$0xff]
        %v4121 = vld [vmem:[#allocation13 + $0x68] sm:$0xff]
        %v4122 = vld [vmem:[#allocation13 + $0x70] sm:$0xff]
        %v4123 = vld [vmem:[#allocation13 + $0x78] sm:$0xff]
        %v4124 = vld [vmem:[%s11] sm:$0x3]
        %v4126 = vlaneseq
        %v4127 = vshrl.u32 %v4126, 7
        %v4128 = vsub.s32 0, %v4127
        %v4129 = vrot.slane %v4124, %v4128
        %v4130 = vlaneseq
        %v4131 = vshrl.u32 %v4130, 7
        %v4132 = vsub.s32 1, %v4131
        %v4133 = vrot.slane %v4124, %v4132
        %v4152 = vunpack.c.l.b16 %v4108
        %v4153 = vunpack.c.h.b16 %v4108
        %v4154 = vunpack.c.l.b16 %v4109
        %v4155 = vunpack.c.h.b16 %v4109
        %v4156 = vunpack.c.l.b16 %v4110
        %v4157 = vunpack.c.h.b16 %v4110
        %v4158 = vunpack.c.l.b16 %v4111
        %v4159 = vunpack.c.h.b16 %v4111
        %v4160 = vunpack.c.l.b16 %v4112
        %v4161 = vunpack.c.h.b16 %v4112
        %v4162 = vunpack.c.l.b16 %v4113
        %v4163 = vunpack.c.h.b16 %v4113
        %v4164 = vunpack.c.l.b16 %v4114
        %v4165 = vunpack.c.h.b16 %v4114
        %v4166 = vunpack.c.l.b16 %v4115
        %v4167 = vunpack.c.h.b16 %v4115
        %v4168 = vunpack.c.l.b16 %v4116
        %v4169 = vunpack.c.h.b16 %v4116
        %v4170 = vunpack.c.l.b16 %v4117
        %v4171 = vunpack.c.h.b16 %v4117
        %v4172 = vunpack.c.l.b16 %v4118
        %v4173 = vunpack.c.h.b16 %v4118
        %v4174 = vunpack.c.l.b16 %v4119
        %v4175 = vunpack.c.h.b16 %v4119
        %v4176 = vunpack.c.l.b16 %v4120
        %v4177 = vunpack.c.h.b16 %v4120
        %v4178 = vunpack.c.l.b16 %v4121
        %v4179 = vunpack.c.h.b16 %v4121
        %v4180 = vunpack.c.l.b16 %v4122
        %v4181 = vunpack.c.h.b16 %v4122
        %v4182 = vunpack.c.l.b16 %v4123
        %v4183 = vunpack.c.h.b16 %v4123
        %v4184 = vpack.c.b16 %v4154, %v4152
        %v4185 = vpack.c.b16 %v4155, %v4153
        %v4186 = vpack.c.b16 %v4158, %v4156
        %v4187 = vpack.c.b16 %v4159, %v4157
        %v4188 = vpack.c.b16 %v4162, %v4160
        %v4189 = vpack.c.b16 %v4163, %v4161
        %v4190 = vpack.c.b16 %v4166, %v4164
        %v4191 = vpack.c.b16 %v4167, %v4165
        %v4192 = vpack.c.b16 %v4170, %v4168
        %v4193 = vpack.c.b16 %v4171, %v4169
        %v4194 = vpack.c.b16 %v4174, %v4172
        %v4195 = vpack.c.b16 %v4175, %v4173
        %v4196 = vpack.c.b16 %v4178, %v4176
        %v4197 = vpack.c.b16 %v4179, %v4177
        %v4198 = vpack.c.b16 %v4182, %v4180
        %v4199 = vpack.c.b16 %v4183, %v4181
        %4216 = vmatprep.subr.bf16.mxu0 %v4199
        %4217 = vmatpush1.bf16.msra.mxu0 %v4198
        %4218 = vmatprep.subr.bf16.mxu0 %v4197
        %4219 = vmatpush1.bf16.msra.mxu0 %v4196
        %4220 = vmatprep.subr.bf16.mxu0 %v4195
        %4221 = vmatpush1.bf16.msra.mxu0 %v4194
        %4222 = vmatprep.subr.bf16.mxu0 %v4193
        %4223 = vmatpush1.bf16.msra.mxu0 %v4192
        %4224 = vmatprep.subr.bf16.mxu0 %v4191
        %4225 = vmatpush1.bf16.msra.mxu0 %v4190
        %4226 = vmatprep.subr.bf16.mxu0 %v4189
        %4227 = vmatpush1.bf16.msra.mxu0 %v4188
        %4228 = vmatprep.subr.bf16.mxu0 %v4187
        %4229 = vmatpush1.bf16.msra.mxu0 %v4186
        %4230 = vmatprep.subr.bf16.mxu0 %v4185
        %4231 = vmatpush1.bf16.msra.mxu0 %v4184
        %4232 = vmatprep.subr.bf16.mxu0 0
        %4233 = vmatpush2.bf16.msra.mxu0 0
        %4234 = vmatprep.subr.bf16.mxu0 0
        %4235 = vmatpush2.bf16.msra.mxu0 0
        %4236 = vmatprep.subr.bf16.mxu0 0
        %4237 = vmatpush2.bf16.msra.mxu0 0
        %4238 = vmatprep.subr.bf16.mxu0 0
        %4239 = vmatpush2.bf16.msra.mxu0 0
        %4240 = vmatprep.subr.bf16.mxu0 0
        %4241 = vmatpush2.bf16.msra.mxu0 0
        %4242 = vmatprep.subr.bf16.mxu0 0
        %4243 = vmatpush2.bf16.msra.mxu0 0
        %4244 = vmatprep.subr.bf16.mxu0 0
        %4245 = vmatpush2.bf16.msra.mxu0 0
        %4246 = vmatprep.subr.bf16.mxu0 0
        %4247 = vmatpush2.bf16.msra.mxu0 0
        %4248 = vmatprep.mubr.bf16.mxu0 0
        %4249 = vmatmul.mubr.bf16.gmra.mxu0 %v4092
        %v4250 = vpop.f32.mrf.mxu0
        %v4251 = vadd.f32 %v4129, %v4250
        %v4252 = vpop.f32.mrf.mxu0
        %v4253 = vadd.f32 %v4133, %v4252
        %v4254 = vpop.f32.mrf.mxu0
        %v4255 = vadd.f32 %v4129, %v4254
        %v4256 = vpop.f32.mrf.mxu0
        %v4257 = vadd.f32 %v4133, %v4256
        %4258 = vmatprep.mubr.bf16.mxu0 0
        %4259 = vmatmul.mubr.bf16.gmra.mxu0 %v4093
        %v4260 = vpop.f32.mrf.mxu0
        %v4261 = vadd.f32 %v4129, %v4260
        %v4262 = vpop.f32.mrf.mxu0
        %v4263 = vadd.f32 %v4133, %v4262
        %v4264 = vpop.f32.mrf.mxu0
        %v4265 = vadd.f32 %v4129, %v4264
        %v4266 = vpop.f32.mrf.mxu0
        %v4267 = vadd.f32 %v4133, %v4266
        %4268 = vmatprep.mubr.bf16.mxu0 0
        %4269 = vmatmul.mubr.bf16.gmra.mxu0 %v4094
        %v4270 = vpop.f32.mrf.mxu0
        %v4271 = vadd.f32 %v4129, %v4270
        %v4272 = vpop.f32.mrf.mxu0
        %v4273 = vadd.f32 %v4133, %v4272
        %v4274 = vpop.f32.mrf.mxu0
        %v4275 = vadd.f32 %v4129, %v4274
        %v4276 = vpop.f32.mrf.mxu0
        %v4277 = vadd.f32 %v4133, %v4276
        %4278 = vmatprep.mubr.bf16.mxu0 0
        %4279 = vmatmul.mubr.bf16.gmra.mxu0 %v4095
        %v4280 = vpop.f32.mrf.mxu0
        %v4281 = vadd.f32 %v4129, %v4280
        %v4282 = vpop.f32.mrf.mxu0
        %v4283 = vadd.f32 %v4133, %v4282
        %v4284 = vpop.f32.mrf.mxu0
        %v4285 = vadd.f32 %v4129, %v4284
        %v4286 = vpop.f32.mrf.mxu0
        %v4287 = vadd.f32 %v4133, %v4286
        %4288 = vmatprep.mubr.bf16.mxu0 0
        %4289 = vmatmul.mubr.bf16.gmra.mxu0 %v4096
        %v4290 = vpop.f32.mrf.mxu0
        %v4291 = vadd.f32 %v4129, %v4290
        %v4292 = vpop.f32.mrf.mxu0
        %v4293 = vadd.f32 %v4133, %v4292
        %v4294 = vpop.f32.mrf.mxu0
        %v4295 = vadd.f32 %v4129, %v4294
        %v4296 = vpop.f32.mrf.mxu0
        %v4297 = vadd.f32 %v4133, %v4296
        %4298 = vmatprep.mubr.bf16.mxu0 0
        %4299 = vmatmul.mubr.bf16.gmra.mxu0 %v4097
        %v4300 = vpop.f32.mrf.mxu0
        %v4301 = vadd.f32 %v4129, %v4300
        %v4302 = vpop.f32.mrf.mxu0
        %v4303 = vadd.f32 %v4133, %v4302
        %v4304 = vpop.f32.mrf.mxu0
        %v4305 = vadd.f32 %v4129, %v4304
        %v4306 = vpop.f32.mrf.mxu0
        %v4307 = vadd.f32 %v4133, %v4306
        %4308 = vmatprep.mubr.bf16.mxu0 0
        %4309 = vmatmul.mubr.bf16.gmra.mxu0 %v4098
        %v4310 = vpop.f32.mrf.mxu0
        %v4311 = vadd.f32 %v4129, %v4310
        %v4312 = vpop.f32.mrf.mxu0
        %v4313 = vadd.f32 %v4133, %v4312
        %v4314 = vpop.f32.mrf.mxu0
        %v4315 = vadd.f32 %v4129, %v4314
        %v4316 = vpop.f32.mrf.mxu0
        %v4317 = vadd.f32 %v4133, %v4316
        %4318 = vmatprep.mubr.bf16.mxu0 0
        %4319 = vmatmul.mubr.bf16.gmra.mxu0 %v4099
        %v4320 = vpop.f32.mrf.mxu0
        %v4321 = vadd.f32 %v4129, %v4320
        %v4322 = vpop.f32.mrf.mxu0
        %v4323 = vadd.f32 %v4133, %v4322
        %v4324 = vpop.f32.mrf.mxu0
        %v4325 = vadd.f32 %v4129, %v4324
        %v4326 = vpop.f32.mrf.mxu0
        %v4327 = vadd.f32 %v4133, %v4326
        %4328 = vmatprep.mubr.bf16.mxu0 0
        %4329 = vmatmul.mubr.bf16.gmra.mxu0 %v4100
        %v4330 = vpop.f32.mrf.mxu0
        %v4331 = vadd.f32 %v4129, %v4330
        %v4332 = vpop.f32.mrf.mxu0
        %v4333 = vadd.f32 %v4133, %v4332
        %v4334 = vpop.f32.mrf.mxu0
        %v4335 = vadd.f32 %v4129, %v4334
        %v4336 = vpop.f32.mrf.mxu0
        %v4337 = vadd.f32 %v4133, %v4336
        %4338 = vmatprep.mubr.bf16.mxu0 0
        %4339 = vmatmul.mubr.bf16.gmra.mxu0 %v4101
        %v4340 = vpop.f32.mrf.mxu0
        %v4341 = vadd.f32 %v4129, %v4340
        %v4342 = vpop.f32.mrf.mxu0
        %v4343 = vadd.f32 %v4133, %v4342
        %v4344 = vpop.f32.mrf.mxu0
        %v4345 = vadd.f32 %v4129, %v4344
        %v4346 = vpop.f32.mrf.mxu0
        %v4347 = vadd.f32 %v4133, %v4346
        %4348 = vmatprep.mubr.bf16.mxu0 0
        %4349 = vmatmul.mubr.bf16.gmra.mxu0 %v4102
        %v4350 = vpop.f32.mrf.mxu0
        %v4351 = vadd.f32 %v4129, %v4350
        %v4352 = vpop.f32.mrf.mxu0
        %v4353 = vadd.f32 %v4133, %v4352
        %v4354 = vpop.f32.mrf.mxu0
        %v4355 = vadd.f32 %v4129, %v4354
        %v4356 = vpop.f32.mrf.mxu0
        %v4357 = vadd.f32 %v4133, %v4356
        %4358 = vmatprep.mubr.bf16.mxu0 0
        %4359 = vmatmul.mubr.bf16.gmra.mxu0 %v4103
        %v4360 = vpop.f32.mrf.mxu0
        %v4361 = vadd.f32 %v4129, %v4360
        %v4362 = vpop.f32.mrf.mxu0
        %v4363 = vadd.f32 %v4133, %v4362
        %v4364 = vpop.f32.mrf.mxu0
        %v4365 = vadd.f32 %v4129, %v4364
        %v4366 = vpop.f32.mrf.mxu0
        %v4367 = vadd.f32 %v4133, %v4366
        %4368 = vmatprep.mubr.bf16.mxu0 0
        %4369 = vmatmul.mubr.bf16.gmra.mxu0 %v4104
        %v4370 = vpop.f32.mrf.mxu0
        %v4371 = vadd.f32 %v4129, %v4370
        %v4372 = vpop.f32.mrf.mxu0
        %v4373 = vadd.f32 %v4133, %v4372
        %v4374 = vpop.f32.mrf.mxu0
        %v4375 = vadd.f32 %v4129, %v4374
        %v4376 = vpop.f32.mrf.mxu0
        %v4377 = vadd.f32 %v4133, %v4376
        %4378 = vmatprep.mubr.bf16.mxu0 0
        %4379 = vmatmul.mubr.bf16.gmra.mxu0 %v4105
        %v4380 = vpop.f32.mrf.mxu0
        %v4381 = vadd.f32 %v4129, %v4380
        %v4382 = vpop.f32.mrf.mxu0
        %v4383 = vadd.f32 %v4133, %v4382
        %v4384 = vpop.f32.mrf.mxu0
        %v4385 = vadd.f32 %v4129, %v4384
        %v4386 = vpop.f32.mrf.mxu0
        %v4387 = vadd.f32 %v4133, %v4386
        %4388 = vmatprep.mubr.bf16.mxu0 0
        %4389 = vmatmul.mubr.bf16.gmra.mxu0 %v4106
        %v4390 = vpop.f32.mrf.mxu0
        %v4391 = vadd.f32 %v4129, %v4390
        %v4392 = vpop.f32.mrf.mxu0
        %v4393 = vadd.f32 %v4133, %v4392
        %v4394 = vpop.f32.mrf.mxu0
        %v4395 = vadd.f32 %v4129, %v4394
        %v4396 = vpop.f32.mrf.mxu0
        %v4397 = vadd.f32 %v4133, %v4396
        %4398 = vmatprep.mubr.bf16.mxu0 0
        %4399 = vmatmul.mubr.bf16.gmra.mxu0 %v4107
        %v4400 = vpop.f32.mrf.mxu0
        %v4401 = vadd.f32 %v4129, %v4400
        %v4402 = vpop.f32.mrf.mxu0
        %v4403 = vadd.f32 %v4133, %v4402
        %v4404 = vpop.f32.mrf.mxu0
        %v4405 = vadd.f32 %v4129, %v4404
        %v4406 = vpop.f32.mrf.mxu0
        %v4407 = vadd.f32 %v4133, %v4406
        %4408 = vdwg.mxu0
        %v4409 = vmax.f32 %v4251, 0.0
        %v4410 = vmax.f32 %v4253, 0.0
        %v4411 = vmax.f32 %v4255, 0.0
        %v4412 = vmax.f32 %v4257, 0.0
        %v4413 = vmax.f32 %v4261, 0.0
        %v4414 = vmax.f32 %v4263, 0.0
        %v4415 = vmax.f32 %v4265, 0.0
        %v4416 = vmax.f32 %v4267, 0.0
        %v4417 = vmax.f32 %v4271, 0.0
        %v4418 = vmax.f32 %v4273, 0.0
        %v4419 = vmax.f32 %v4275, 0.0
        %v4420 = vmax.f32 %v4277, 0.0
        %v4421 = vmax.f32 %v4281, 0.0
        %v4422 = vmax.f32 %v4283, 0.0
        %v4423 = vmax.f32 %v4285, 0.0
        %v4424 = vmax.f32 %v4287, 0.0
        %v4425 = vmax.f32 %v4291, 0.0
        %v4426 = vmax.f32 %v4293, 0.0
        %v4427 = vmax.f32 %v4295, 0.0
        %v4428 = vmax.f32 %v4297, 0.0
        %v4429 = vmax.f32 %v4301, 0.0
        %v4430 = vmax.f32 %v4303, 0.0
        %v4431 = vmax.f32 %v4305, 0.0
        %v4432 = vmax.f32 %v4307, 0.0
        %v4433 = vmax.f32 %v4311, 0.0
        %v4434 = vmax.f32 %v4313, 0.0
        %v4435 = vmax.f32 %v4315, 0.0
        %v4436 = vmax.f32 %v4317, 0.0
        %v4437 = vmax.f32 %v4321, 0.0
        %v4438 = vmax.f32 %v4323, 0.0
        %v4439 = vmax.f32 %v4325, 0.0
        %v4440 = vmax.f32 %v4327, 0.0
        %v4441 = vmax.f32 %v4331, 0.0
        %v4442 = vmax.f32 %v4333, 0.0
        %v4443 = vmax.f32 %v4335, 0.0
        %v4444 = vmax.f32 %v4337, 0.0
        %v4445 = vmax.f32 %v4341, 0.0
        %v4446 = vmax.f32 %v4343, 0.0
        %v4447 = vmax.f32 %v4345, 0.0
        %v4448 = vmax.f32 %v4347, 0.0
        %v4449 = vmax.f32 %v4351, 0.0
        %v4450 = vmax.f32 %v4353, 0.0
        %v4451 = vmax.f32 %v4355, 0.0
        %v4452 = vmax.f32 %v4357, 0.0
        %v4453 = vmax.f32 %v4361, 0.0
        %v4454 = vmax.f32 %v4363, 0.0
        %v4455 = vmax.f32 %v4365, 0.0
        %v4456 = vmax.f32 %v4367, 0.0
        %v4457 = vmax.f32 %v4371, 0.0
        %v4458 = vmax.f32 %v4373, 0.0
        %v4459 = vmax.f32 %v4375, 0.0
        %v4460 = vmax.f32 %v4377, 0.0
        %v4461 = vmax.f32 %v4381, 0.0
        %v4462 = vmax.f32 %v4383, 0.0
        %v4463 = vmax.f32 %v4385, 0.0
        %v4464 = vmax.f32 %v4387, 0.0
        %v4465 = vmax.f32 %v4391, 0.0
        %v4466 = vmax.f32 %v4393, 0.0
        %v4467 = vmax.f32 %v4395, 0.0
        %v4468 = vmax.f32 %v4397, 0.0
        %v4469 = vmax.f32 %v4401, 0.0
        %v4470 = vmax.f32 %v4403, 0.0
        %v4471 = vmax.f32 %v4405, 0.0
        %v4472 = vmax.f32 %v4407, 0.0
        %v4473 = vpack.c.bf16 %v4411, %v4409
        %v4474 = vpack.c.bf16 %v4412, %v4410
        %v4475 = vpack.c.bf16 %v4415, %v4413
        %v4476 = vpack.c.bf16 %v4416, %v4414
        %v4477 = vpack.c.bf16 %v4419, %v4417
        %v4478 = vpack.c.bf16 %v4420, %v4418
        %v4479 = vpack.c.bf16 %v4423, %v4421
        %v4480 = vpack.c.bf16 %v4424, %v4422
        %v4481 = vpack.c.bf16 %v4427, %v4425
        %v4482 = vpack.c.bf16 %v4428, %v4426
        %v4483 = vpack.c.bf16 %v4431, %v4429
        %v4484 = vpack.c.bf16 %v4432, %v4430
        %v4485 = vpack.c.bf16 %v4435, %v4433
        %v4486 = vpack.c.bf16 %v4436, %v4434
        %v4487 = vpack.c.bf16 %v4439, %v4437
        %v4488 = vpack.c.bf16 %v4440, %v4438
        %v4489 = vpack.c.bf16 %v4443, %v4441
        %v4490 = vpack.c.bf16 %v4444, %v4442
        %v4491 = vpack.c.bf16 %v4447, %v4445
        %v4492 = vpack.c.bf16 %v4448, %v4446
        %v4493 = vpack.c.bf16 %v4451, %v4449
        %v4494 = vpack.c.bf16 %v4452, %v4450
        %v4495 = vpack.c.bf16 %v4455, %v4453
        %v4496 = vpack.c.bf16 %v4456, %v4454
        %v4497 = vpack.c.bf16 %v4459, %v4457
        %v4498 = vpack.c.bf16 %v4460, %v4458
        %v4499 = vpack.c.bf16 %v4463, %v4461
        %v4500 = vpack.c.bf16 %v4464, %v4462
        %v4501 = vpack.c.bf16 %v4467, %v4465
        %v4502 = vpack.c.bf16 %v4468, %v4466
        %v4503 = vpack.c.bf16 %v4471, %v4469
        %v4504 = vpack.c.bf16 %v4472, %v4470
        %v4505 = vld [vmem:[#allocation14] sm:$0xff]
        %v4506 = vld [vmem:[#allocation14 + $0x8] sm:$0xff]
        %v4507 = vld [vmem:[#allocation14 + $0x10] sm:$0xff]
        %v4508 = vld [vmem:[#allocation14 + $0x18] sm:$0xf]
        %v4509 = vld [vmem:[#allocation14 + $0x1c] sm:$0xff]
        %v4510 = vld [vmem:[#allocation14 + $0x24] sm:$0xff]
        %v4511 = vld [vmem:[#allocation14 + $0x2c] sm:$0xff]
        %v4512 = vld [vmem:[#allocation14 + $0x34] sm:$0xf]
        %v4513 = vld [vmem:[#allocation14 + $0x38] sm:$0xff]
        %v4514 = vld [vmem:[#allocation14 + $0x40] sm:$0xff]
        %v4515 = vld [vmem:[#allocation14 + $0x48] sm:$0xff]
        %v4516 = vld [vmem:[#allocation14 + $0x50] sm:$0xf]
        %v4517 = vld [vmem:[#allocation14 + $0x54] sm:$0xff]
        %v4518 = vld [vmem:[#allocation14 + $0x5c] sm:$0xff]
        %v4519 = vld [vmem:[#allocation14 + $0x64] sm:$0xff]
        %v4520 = vld [vmem:[#allocation14 + $0x6c] sm:$0xf]
        %v4521 = vld [vmem:[#allocation14 + $0x70] sm:$0xff]
        %v4522 = vld [vmem:[#allocation14 + $0x78] sm:$0xff]
        %v4523 = vld [vmem:[#allocation14 + $0x80] sm:$0xff]
        %v4524 = vld [vmem:[#allocation14 + $0x88] sm:$0xf]
        %v4525 = vld [vmem:[#allocation14 + $0x8c] sm:$0xff]
        %v4526 = vld [vmem:[#allocation14 + $0x94] sm:$0xff]
        %v4527 = vld [vmem:[#allocation14 + $0x9c] sm:$0xff]
        %v4528 = vld [vmem:[#allocation14 + $0xa4] sm:$0xf]
        %v4529 = vld [vmem:[#allocation14 + $0xa8] sm:$0xff]
        %v4530 = vld [vmem:[#allocation14 + $0xb0] sm:$0xff]
        %v4531 = vld [vmem:[#allocation14 + $0xb8] sm:$0xff]
        %v4532 = vld [vmem:[#allocation14 + $0xc0] sm:$0xf]
        %v4533 = vld [vmem:[#allocation14 + $0xc4] sm:$0xff]
        %v4534 = vld [vmem:[#allocation14 + $0xcc] sm:$0xff]
        %v4535 = vld [vmem:[#allocation14 + $0xd4] sm:$0xff]
        %v4536 = vld [vmem:[#allocation14 + $0xdc] sm:$0xf]
        %v4537 = vld [vmem:[#allocation14 + $0xe0] sm:$0xff]
        %v4538 = vld [vmem:[#allocation14 + $0xe8] sm:$0xff]
        %v4539 = vld [vmem:[#allocation14 + $0xf0] sm:$0xff]
        %v4540 = vld [vmem:[#allocation14 + $0xf8] sm:$0xf]
        %v4541 = vld [vmem:[#allocation14 + $0xfc] sm:$0xff]
        %v4542 = vld [vmem:[#allocation14 + $0x104] sm:$0xff]
        %v4543 = vld [vmem:[#allocation14 + $0x10c] sm:$0xff]
        %v4544 = vld [vmem:[#allocation14 + $0x114] sm:$0xf]
        %v4545 = vld [vmem:[#allocation14 + $0x118] sm:$0xff]
        %v4546 = vld [vmem:[#allocation14 + $0x120] sm:$0xff]
        %v4547 = vld [vmem:[#allocation14 + $0x128] sm:$0xff]
        %v4548 = vld [vmem:[#allocation14 + $0x130] sm:$0xf]
        %v4549 = vld [vmem:[#allocation14 + $0x134] sm:$0xff]
        %v4550 = vld [vmem:[#allocation14 + $0x13c] sm:$0xff]
        %v4551 = vld [vmem:[#allocation14 + $0x144] sm:$0xff]
        %v4552 = vld [vmem:[#allocation14 + $0x14c] sm:$0xf]
        %v4553 = vld [vmem:[#allocation14 + $0x150] sm:$0xff]
        %v4554 = vld [vmem:[#allocation14 + $0x158] sm:$0xff]
        %v4555 = vld [vmem:[#allocation14 + $0x160] sm:$0xff]
        %v4556 = vld [vmem:[#allocation14 + $0x168] sm:$0xf]
        %v4557 = vld [vmem:[#allocation14 + $0x16c] sm:$0xff]
        %v4558 = vld [vmem:[#allocation14 + $0x174] sm:$0xff]
        %v4559 = vld [vmem:[#allocation14 + $0x17c] sm:$0xff]
        %v4560 = vld [vmem:[#allocation14 + $0x184] sm:$0xf]
        %v4561 = vld [vmem:[#allocation14 + $0x188] sm:$0xff]
        %v4562 = vld [vmem:[#allocation14 + $0x190] sm:$0xff]
        %v4563 = vld [vmem:[#allocation14 + $0x198] sm:$0xff]
        %v4564 = vld [vmem:[#allocation14 + $0x1a0] sm:$0xf]
        %v4565 = vld [vmem:[#allocation14 + $0x1a4] sm:$0xff]
        %v4566 = vld [vmem:[#allocation14 + $0x1ac] sm:$0xff]
        %v4567 = vld [vmem:[#allocation14 + $0x1b4] sm:$0xff]
        %v4568 = vld [vmem:[#allocation14 + $0x1bc] sm:$0xf]
        %v4569 = vld [vmem:[#allocation14 + $0x1c0] sm:$0xff]
        %v4570 = vld [vmem:[#allocation14 + $0x1c8] sm:$0xff]
        %v4571 = vld [vmem:[#allocation14 + $0x1d0] sm:$0xff]
        %v4572 = vld [vmem:[#allocation14 + $0x1d8] sm:$0xf]
        %v4573 = vld [vmem:[#allocation14 + $0x1dc] sm:$0xff]
        %v4574 = vld [vmem:[#allocation14 + $0x1e4] sm:$0xff]
        %v4575 = vld [vmem:[#allocation14 + $0x1ec] sm:$0xff]
        %v4576 = vld [vmem:[#allocation14 + $0x1f4] sm:$0xf]
        %v4577 = vld [vmem:[#allocation14 + $0x1f8] sm:$0xff]
        %v4578 = vld [vmem:[#allocation14 + $0x200] sm:$0xff]
        %v4579 = vld [vmem:[#allocation14 + $0x208] sm:$0xff]
        %v4580 = vld [vmem:[#allocation14 + $0x210] sm:$0xf]
        %v4581 = vld [vmem:[#allocation14 + $0x214] sm:$0xff]
        %v4582 = vld [vmem:[#allocation14 + $0x21c] sm:$0xff]
        %v4583 = vld [vmem:[#allocation14 + $0x224] sm:$0xff]
        %v4584 = vld [vmem:[#allocation14 + $0x22c] sm:$0xf]
        %v4585 = vld [vmem:[#allocation14 + $0x230] sm:$0xff]
        %v4586 = vld [vmem:[#allocation14 + $0x238] sm:$0xff]
        %v4587 = vld [vmem:[#allocation14 + $0x240] sm:$0xff]
        %v4588 = vld [vmem:[#allocation14 + $0x248] sm:$0xf]
        %v4589 = vld [vmem:[#allocation14 + $0x24c] sm:$0xff]
        %v4590 = vld [vmem:[#allocation14 + $0x254] sm:$0xff]
        %v4591 = vld [vmem:[#allocation14 + $0x25c] sm:$0xff]
        %v4592 = vld [vmem:[#allocation14 + $0x264] sm:$0xf]
        %v4593 = vld [vmem:[#allocation14 + $0x268] sm:$0xff]
        %v4594 = vld [vmem:[#allocation14 + $0x270] sm:$0xff]
        %v4595 = vld [vmem:[#allocation14 + $0x278] sm:$0xff]
        %v4596 = vld [vmem:[#allocation14 + $0x280] sm:$0xf]
        %v4597 = vld [vmem:[#allocation14 + $0x284] sm:$0xff]
        %v4598 = vld [vmem:[#allocation14 + $0x28c] sm:$0xff]
        %v4599 = vld [vmem:[#allocation14 + $0x294] sm:$0xff]
        %v4600 = vld [vmem:[#allocation14 + $0x29c] sm:$0xf]
        %v4601 = vld [vmem:[#allocation14 + $0x2a0] sm:$0xff]
        %v4602 = vld [vmem:[#allocation14 + $0x2a8] sm:$0xff]
        %v4603 = vld [vmem:[#allocation14 + $0x2b0] sm:$0xff]
        %v4604 = vld [vmem:[#allocation14 + $0x2b8] sm:$0xf]
        %v4605 = vld [vmem:[#allocation14 + $0x2bc] sm:$0xff]
        %v4606 = vld [vmem:[#allocation14 + $0x2c4] sm:$0xff]
        %v4607 = vld [vmem:[#allocation14 + $0x2cc] sm:$0xff]
        %v4608 = vld [vmem:[#allocation14 + $0x2d4] sm:$0xf]
        %v4609 = vld [vmem:[#allocation14 + $0x2d8] sm:$0xff]
        %v4610 = vld [vmem:[#allocation14 + $0x2e0] sm:$0xff]
        %v4611 = vld [vmem:[#allocation14 + $0x2e8] sm:$0xff]
        %v4612 = vld [vmem:[#allocation14 + $0x2f0] sm:$0xf]
        %v4613 = vld [vmem:[#allocation14 + $0x2f4] sm:$0xff]
        %v4614 = vld [vmem:[#allocation14 + $0x2fc] sm:$0xff]
        %v4615 = vld [vmem:[#allocation14 + $0x304] sm:$0xff]
        %v4616 = vld [vmem:[#allocation14 + $0x30c] sm:$0xf]
        %v4617 = vld [vmem:[#allocation14 + $0x310] sm:$0xff]
        %v4618 = vld [vmem:[#allocation14 + $0x318] sm:$0xff]
        %v4619 = vld [vmem:[#allocation14 + $0x320] sm:$0xff]
        %v4620 = vld [vmem:[#allocation14 + $0x328] sm:$0xf]
        %v4621 = vld [vmem:[#allocation14 + $0x32c] sm:$0xff]
        %v4622 = vld [vmem:[#allocation14 + $0x334] sm:$0xff]
        %v4623 = vld [vmem:[#allocation14 + $0x33c] sm:$0xff]
        %v4624 = vld [vmem:[#allocation14 + $0x344] sm:$0xf]
        %v4625 = vld [vmem:[#allocation14 + $0x348] sm:$0xff]
        %v4626 = vld [vmem:[#allocation14 + $0x350] sm:$0xff]
        %v4627 = vld [vmem:[#allocation14 + $0x358] sm:$0xff]
        %v4628 = vld [vmem:[#allocation14 + $0x360] sm:$0xf]
        %v4629 = vld [vmem:[#allocation14 + $0x364] sm:$0xff]
        %v4630 = vld [vmem:[#allocation14 + $0x36c] sm:$0xff]
        %v4631 = vld [vmem:[#allocation14 + $0x374] sm:$0xff]
        %v4632 = vld [vmem:[#allocation14 + $0x37c] sm:$0xf]
        %v4633 = vld [vmem:[%s13] sm:$0xff]
        %v4635 = vlaneseq
        %v4636 = vshrl.u32 %v4635, 7
        %v4637 = vsub.s32 0, %v4636
        %v4638 = vrot.slane %v4633, %v4637
        %v4639 = vlaneseq
        %v4640 = vshrl.u32 %v4639, 7
        %v4641 = vsub.s32 1, %v4640
        %v4642 = vrot.slane %v4633, %v4641
        %v4643 = vlaneseq
        %v4644 = vshrl.u32 %v4643, 7
        %v4645 = vsub.s32 2, %v4644
        %v4646 = vrot.slane %v4633, %v4645
        %v4647 = vlaneseq
        %v4648 = vshrl.u32 %v4647, 7
        %v4649 = vsub.s32 3, %v4648
        %v4650 = vrot.slane %v4633, %v4649
        %v4651 = vlaneseq
        %v4652 = vshrl.u32 %v4651, 7
        %v4653 = vsub.s32 4, %v4652
        %v4654 = vrot.slane %v4633, %v4653
        %v4655 = vlaneseq
        %v4656 = vshrl.u32 %v4655, 7
        %v4657 = vsub.s32 5, %v4656
        %v4658 = vrot.slane %v4633, %v4657
        %v4659 = vlaneseq
        %v4660 = vshrl.u32 %v4659, 7
        %v4661 = vsub.s32 6, %v4660
        %v4662 = vrot.slane %v4633, %v4661
        %v4798 = vunpack.c.l.b16 %v4505
        %v4799 = vunpack.c.h.b16 %v4505
        %v4800 = vunpack.c.l.b16 %v4506
        %v4801 = vunpack.c.h.b16 %v4506
        %v4802 = vunpack.c.l.b16 %v4507
        %v4803 = vunpack.c.h.b16 %v4507
        %v4804 = vunpack.c.l.b16 %v4508
        %v4805 = vunpack.c.l.b16 %v4509
        %v4806 = vunpack.c.h.b16 %v4509
        %v4807 = vunpack.c.l.b16 %v4510
        %v4808 = vunpack.c.h.b16 %v4510
        %v4809 = vunpack.c.l.b16 %v4511
        %v4810 = vunpack.c.h.b16 %v4511
        %v4811 = vunpack.c.l.b16 %v4512
        %v4812 = vunpack.c.l.b16 %v4513
        %v4813 = vunpack.c.h.b16 %v4513
        %v4814 = vunpack.c.l.b16 %v4514
        %v4815 = vunpack.c.h.b16 %v4514
        %v4816 = vunpack.c.l.b16 %v4515
        %v4817 = vunpack.c.h.b16 %v4515
        %v4818 = vunpack.c.l.b16 %v4516
        %v4819 = vunpack.c.l.b16 %v4517
        %v4820 = vunpack.c.h.b16 %v4517
        %v4821 = vunpack.c.l.b16 %v4518
        %v4822 = vunpack.c.h.b16 %v4518
        %v4823 = vunpack.c.l.b16 %v4519
        %v4824 = vunpack.c.h.b16 %v4519
        %v4825 = vunpack.c.l.b16 %v4520
        %v4826 = vunpack.c.l.b16 %v4521
        %v4827 = vunpack.c.h.b16 %v4521
        %v4828 = vunpack.c.l.b16 %v4522
        %v4829 = vunpack.c.h.b16 %v4522
        %v4830 = vunpack.c.l.b16 %v4523
        %v4831 = vunpack.c.h.b16 %v4523
        %v4832 = vunpack.c.l.b16 %v4524
        %v4833 = vunpack.c.l.b16 %v4525
        %v4834 = vunpack.c.h.b16 %v4525
        %v4835 = vunpack.c.l.b16 %v4526
        %v4836 = vunpack.c.h.b16 %v4526
        %v4837 = vunpack.c.l.b16 %v4527
        %v4838 = vunpack.c.h.b16 %v4527
        %v4839 = vunpack.c.l.b16 %v4528
        %v4840 = vunpack.c.l.b16 %v4529
        %v4841 = vunpack.c.h.b16 %v4529
        %v4842 = vunpack.c.l.b16 %v4530
        %v4843 = vunpack.c.h.b16 %v4530
        %v4844 = vunpack.c.l.b16 %v4531
        %v4845 = vunpack.c.h.b16 %v4531
        %v4846 = vunpack.c.l.b16 %v4532
        %v4847 = vunpack.c.l.b16 %v4533
        %v4848 = vunpack.c.h.b16 %v4533
        %v4849 = vunpack.c.l.b16 %v4534
        %v4850 = vunpack.c.h.b16 %v4534
        %v4851 = vunpack.c.l.b16 %v4535
        %v4852 = vunpack.c.h.b16 %v4535
        %v4853 = vunpack.c.l.b16 %v4536
        %v4854 = vunpack.c.l.b16 %v4537
        %v4855 = vunpack.c.h.b16 %v4537
        %v4856 = vunpack.c.l.b16 %v4538
        %v4857 = vunpack.c.h.b16 %v4538
        %v4858 = vunpack.c.l.b16 %v4539
        %v4859 = vunpack.c.h.b16 %v4539
        %v4860 = vunpack.c.l.b16 %v4540
        %v4861 = vunpack.c.l.b16 %v4541
        %v4862 = vunpack.c.h.b16 %v4541
        %v4863 = vunpack.c.l.b16 %v4542
        %v4864 = vunpack.c.h.b16 %v4542
        %v4865 = vunpack.c.l.b16 %v4543
        %v4866 = vunpack.c.h.b16 %v4543
        %v4867 = vunpack.c.l.b16 %v4544
        %v4868 = vunpack.c.l.b16 %v4545
        %v4869 = vunpack.c.h.b16 %v4545
        %v4870 = vunpack.c.l.b16 %v4546
        %v4871 = vunpack.c.h.b16 %v4546
        %v4872 = vunpack.c.l.b16 %v4547
        %v4873 = vunpack.c.h.b16 %v4547
        %v4874 = vunpack.c.l.b16 %v4548
        %v4875 = vunpack.c.l.b16 %v4549
        %v4876 = vunpack.c.h.b16 %v4549
        %v4877 = vunpack.c.l.b16 %v4550
        %v4878 = vunpack.c.h.b16 %v4550
        %v4879 = vunpack.c.l.b16 %v4551
        %v4880 = vunpack.c.h.b16 %v4551
        %v4881 = vunpack.c.l.b16 %v4552
        %v4882 = vunpack.c.l.b16 %v4553
        %v4883 = vunpack.c.h.b16 %v4553
        %v4884 = vunpack.c.l.b16 %v4554
        %v4885 = vunpack.c.h.b16 %v4554
        %v4886 = vunpack.c.l.b16 %v4555
        %v4887 = vunpack.c.h.b16 %v4555
        %v4888 = vunpack.c.l.b16 %v4556
        %v4889 = vunpack.c.l.b16 %v4557
        %v4890 = vunpack.c.h.b16 %v4557
        %v4891 = vunpack.c.l.b16 %v4558
        %v4892 = vunpack.c.h.b16 %v4558
        %v4893 = vunpack.c.l.b16 %v4559
        %v4894 = vunpack.c.h.b16 %v4559
        %v4895 = vunpack.c.l.b16 %v4560
        %v4896 = vunpack.c.l.b16 %v4561
        %v4897 = vunpack.c.h.b16 %v4561
        %v4898 = vunpack.c.l.b16 %v4562
        %v4899 = vunpack.c.h.b16 %v4562
        %v4900 = vunpack.c.l.b16 %v4563
        %v4901 = vunpack.c.h.b16 %v4563
        %v4902 = vunpack.c.l.b16 %v4564
        %v4903 = vunpack.c.l.b16 %v4565
        %v4904 = vunpack.c.h.b16 %v4565
        %v4905 = vunpack.c.l.b16 %v4566
        %v4906 = vunpack.c.h.b16 %v4566
        %v4907 = vunpack.c.l.b16 %v4567
        %v4908 = vunpack.c.h.b16 %v4567
        %v4909 = vunpack.c.l.b16 %v4568
        %v4910 = vunpack.c.l.b16 %v4569
        %v4911 = vunpack.c.h.b16 %v4569
        %v4912 = vunpack.c.l.b16 %v4570
        %v4913 = vunpack.c.h.b16 %v4570
        %v4914 = vunpack.c.l.b16 %v4571
        %v4915 = vunpack.c.h.b16 %v4571
        %v4916 = vunpack.c.l.b16 %v4572
        %v4917 = vunpack.c.l.b16 %v4573
        %v4918 = vunpack.c.h.b16 %v4573
        %v4919 = vunpack.c.l.b16 %v4574
        %v4920 = vunpack.c.h.b16 %v4574
        %v4921 = vunpack.c.l.b16 %v4575
        %v4922 = vunpack.c.h.b16 %v4575
        %v4923 = vunpack.c.l.b16 %v4576
        %v4924 = vunpack.c.l.b16 %v4577
        %v4925 = vunpack.c.h.b16 %v4577
        %v4926 = vunpack.c.l.b16 %v4578
        %v4927 = vunpack.c.h.b16 %v4578
        %v4928 = vunpack.c.l.b16 %v4579
        %v4929 = vunpack.c.h.b16 %v4579
        %v4930 = vunpack.c.l.b16 %v4580
        %v4931 = vunpack.c.l.b16 %v4581
        %v4932 = vunpack.c.h.b16 %v4581
        %v4933 = vunpack.c.l.b16 %v4582
        %v4934 = vunpack.c.h.b16 %v4582
        %v4935 = vunpack.c.l.b16 %v4583
        %v4936 = vunpack.c.h.b16 %v4583
        %v4937 = vunpack.c.l.b16 %v4584
        %v4938 = vunpack.c.l.b16 %v4585
        %v4939 = vunpack.c.h.b16 %v4585
        %v4940 = vunpack.c.l.b16 %v4586
        %v4941 = vunpack.c.h.b16 %v4586
        %v4942 = vunpack.c.l.b16 %v4587
        %v4943 = vunpack.c.h.b16 %v4587
        %v4944 = vunpack.c.l.b16 %v4588
        %v4945 = vunpack.c.l.b16 %v4589
        %v4946 = vunpack.c.h.b16 %v4589
        %v4947 = vunpack.c.l.b16 %v4590
        %v4948 = vunpack.c.h.b16 %v4590
        %v4949 = vunpack.c.l.b16 %v4591
        %v4950 = vunpack.c.h.b16 %v4591
        %v4951 = vunpack.c.l.b16 %v4592
        %v4952 = vunpack.c.l.b16 %v4593
        %v4953 = vunpack.c.h.b16 %v4593
        %v4954 = vunpack.c.l.b16 %v4594
        %v4955 = vunpack.c.h.b16 %v4594
        %v4956 = vunpack.c.l.b16 %v4595
        %v4957 = vunpack.c.h.b16 %v4595
        %v4958 = vunpack.c.l.b16 %v4596
        %v4959 = vunpack.c.l.b16 %v4597
        %v4960 = vunpack.c.h.b16 %v4597
        %v4961 = vunpack.c.l.b16 %v4598
        %v4962 = vunpack.c.h.b16 %v4598
        %v4963 = vunpack.c.l.b16 %v4599
        %v4964 = vunpack.c.h.b16 %v4599
        %v4965 = vunpack.c.l.b16 %v4600
        %v4966 = vunpack.c.l.b16 %v4601
        %v4967 = vunpack.c.h.b16 %v4601
        %v4968 = vunpack.c.l.b16 %v4602
        %v4969 = vunpack.c.h.b16 %v4602
        %v4970 = vunpack.c.l.b16 %v4603
        %v4971 = vunpack.c.h.b16 %v4603
        %v4972 = vunpack.c.l.b16 %v4604
        %v4973 = vunpack.c.l.b16 %v4605
        %v4974 = vunpack.c.h.b16 %v4605
        %v4975 = vunpack.c.l.b16 %v4606
        %v4976 = vunpack.c.h.b16 %v4606
        %v4977 = vunpack.c.l.b16 %v4607
        %v4978 = vunpack.c.h.b16 %v4607
        %v4979 = vunpack.c.l.b16 %v4608
        %v4980 = vunpack.c.l.b16 %v4609
        %v4981 = vunpack.c.h.b16 %v4609
        %v4982 = vunpack.c.l.b16 %v4610
        %v4983 = vunpack.c.h.b16 %v4610
        %v4984 = vunpack.c.l.b16 %v4611
        %v4985 = vunpack.c.h.b16 %v4611
        %v4986 = vunpack.c.l.b16 %v4612
        %v4987 = vunpack.c.l.b16 %v4613
        %v4988 = vunpack.c.h.b16 %v4613
        %v4989 = vunpack.c.l.b16 %v4614
        %v4990 = vunpack.c.h.b16 %v4614
        %v4991 = vunpack.c.l.b16 %v4615
        %v4992 = vunpack.c.h.b16 %v4615
        %v4993 = vunpack.c.l.b16 %v4616
        %v4994 = vunpack.c.l.b16 %v4617
        %v4995 = vunpack.c.h.b16 %v4617
        %v4996 = vunpack.c.l.b16 %v4618
        %v4997 = vunpack.c.h.b16 %v4618
        %v4998 = vunpack.c.l.b16 %v4619
        %v4999 = vunpack.c.h.b16 %v4619
        %v5000 = vunpack.c.l.b16 %v4620
        %v5001 = vunpack.c.l.b16 %v4621
        %v5002 = vunpack.c.h.b16 %v4621
        %v5003 = vunpack.c.l.b16 %v4622
        %v5004 = vunpack.c.h.b16 %v4622
        %v5005 = vunpack.c.l.b16 %v4623
        %v5006 = vunpack.c.h.b16 %v4623
        %v5007 = vunpack.c.l.b16 %v4624
        %v5008 = vunpack.c.l.b16 %v4625
        %v5009 = vunpack.c.h.b16 %v4625
        %v5010 = vunpack.c.l.b16 %v4626
        %v5011 = vunpack.c.h.b16 %v4626
        %v5012 = vunpack.c.l.b16 %v4627
        %v5013 = vunpack.c.h.b16 %v4627
        %v5014 = vunpack.c.l.b16 %v4628
        %v5015 = vunpack.c.l.b16 %v4629
        %v5016 = vunpack.c.h.b16 %v4629
        %v5017 = vunpack.c.l.b16 %v4630
        %v5018 = vunpack.c.h.b16 %v4630
        %v5019 = vunpack.c.l.b16 %v4631
        %v5020 = vunpack.c.h.b16 %v4631
        %v5021 = vunpack.c.l.b16 %v4632
        %v5022 = vpack.c.b16 %v4805, %v4798
        %v5023 = vpack.c.b16 %v4806, %v4799
        %v5024 = vpack.c.b16 %v4807, %v4800
        %v5025 = vpack.c.b16 %v4808, %v4801
        %v5026 = vpack.c.b16 %v4809, %v4802
        %v5027 = vpack.c.b16 %v4810, %v4803
        %v5028 = vpack.c.b16 %v4811, %v4804
        %v5029 = vpack.c.b16 %v4819, %v4812
        %v5030 = vpack.c.b16 %v4820, %v4813
        %v5031 = vpack.c.b16 %v4821, %v4814
        %v5032 = vpack.c.b16 %v4822, %v4815
        %v5033 = vpack.c.b16 %v4823, %v4816
        %v5034 = vpack.c.b16 %v4824, %v4817
        %v5035 = vpack.c.b16 %v4825, %v4818
        %v5036 = vpack.c.b16 %v4833, %v4826
        %v5037 = vpack.c.b16 %v4834, %v4827
        %v5038 = vpack.c.b16 %v4835, %v4828
        %v5039 = vpack.c.b16 %v4836, %v4829
        %v5040 = vpack.c.b16 %v4837, %v4830
        %v5041 = vpack.c.b16 %v4838, %v4831
        %v5042 = vpack.c.b16 %v4839, %v4832
        %v5043 = vpack.c.b16 %v4847, %v4840
        %v5044 = vpack.c.b16 %v4848, %v4841
        %v5045 = vpack.c.b16 %v4849, %v4842
        %v5046 = vpack.c.b16 %v4850, %v4843
        %v5047 = vpack.c.b16 %v4851, %v4844
        %v5048 = vpack.c.b16 %v4852, %v4845
        %v5049 = vpack.c.b16 %v4853, %v4846
        %v5050 = vpack.c.b16 %v4861, %v4854
        %v5051 = vpack.c.b16 %v4862, %v4855
        %v5052 = vpack.c.b16 %v4863, %v4856
        %v5053 = vpack.c.b16 %v4864, %v4857
        %v5054 = vpack.c.b16 %v4865, %v4858
        %v5055 = vpack.c.b16 %v4866, %v4859
        %v5056 = vpack.c.b16 %v4867, %v4860
        %v5057 = vpack.c.b16 %v4875, %v4868
        %v5058 = vpack.c.b16 %v4876, %v4869
        %v5059 = vpack.c.b16 %v4877, %v4870
        %v5060 = vpack.c.b16 %v4878, %v4871
        %v5061 = vpack.c.b16 %v4879, %v4872
        %v5062 = vpack.c.b16 %v4880, %v4873
        %v5063 = vpack.c.b16 %v4881, %v4874
        %v5064 = vpack.c.b16 %v4889, %v4882
        %v5065 = vpack.c.b16 %v4890, %v4883
        %v5066 = vpack.c.b16 %v4891, %v4884
        %v5067 = vpack.c.b16 %v4892, %v4885
        %v5068 = vpack.c.b16 %v4893, %v4886
        %v5069 = vpack.c.b16 %v4894, %v4887
        %v5070 = vpack.c.b16 %v4895, %v4888
        %v5071 = vpack.c.b16 %v4903, %v4896
        %v5072 = vpack.c.b16 %v4904, %v4897
        %v5073 = vpack.c.b16 %v4905, %v4898
        %v5074 = vpack.c.b16 %v4906, %v4899
        %v5075 = vpack.c.b16 %v4907, %v4900
        %v5076 = vpack.c.b16 %v4908, %v4901
        %v5077 = vpack.c.b16 %v4909, %v4902
        %v5078 = vpack.c.b16 %v4917, %v4910
        %v5079 = vpack.c.b16 %v4918, %v4911
        %v5080 = vpack.c.b16 %v4919, %v4912
        %v5081 = vpack.c.b16 %v4920, %v4913
        %v5082 = vpack.c.b16 %v4921, %v4914
        %v5083 = vpack.c.b16 %v4922, %v4915
        %v5084 = vpack.c.b16 %v4923, %v4916
        %v5085 = vpack.c.b16 %v4931, %v4924
        %v5086 = vpack.c.b16 %v4932, %v4925
        %v5087 = vpack.c.b16 %v4933, %v4926
        %v5088 = vpack.c.b16 %v4934, %v4927
        %v5089 = vpack.c.b16 %v4935, %v4928
        %v5090 = vpack.c.b16 %v4936, %v4929
        %v5091 = vpack.c.b16 %v4937, %v4930
        %v5092 = vpack.c.b16 %v4945, %v4938
        %v5093 = vpack.c.b16 %v4946, %v4939
        %v5094 = vpack.c.b16 %v4947, %v4940
        %v5095 = vpack.c.b16 %v4948, %v4941
        %v5096 = vpack.c.b16 %v4949, %v4942
        %v5097 = vpack.c.b16 %v4950, %v4943
        %v5098 = vpack.c.b16 %v4951, %v4944
        %v5099 = vpack.c.b16 %v4959, %v4952
        %v5100 = vpack.c.b16 %v4960, %v4953
        %v5101 = vpack.c.b16 %v4961, %v4954
        %v5102 = vpack.c.b16 %v4962, %v4955
        %v5103 = vpack.c.b16 %v4963, %v4956
        %v5104 = vpack.c.b16 %v4964, %v4957
        %v5105 = vpack.c.b16 %v4965, %v4958
        %v5106 = vpack.c.b16 %v4973, %v4966
        %v5107 = vpack.c.b16 %v4974, %v4967
        %v5108 = vpack.c.b16 %v4975, %v4968
        %v5109 = vpack.c.b16 %v4976, %v4969
        %v5110 = vpack.c.b16 %v4977, %v4970
        %v5111 = vpack.c.b16 %v4978, %v4971
        %v5112 = vpack.c.b16 %v4979, %v4972
        %v5113 = vpack.c.b16 %v4987, %v4980
        %v5114 = vpack.c.b16 %v4988, %v4981
        %v5115 = vpack.c.b16 %v4989, %v4982
        %v5116 = vpack.c.b16 %v4990, %v4983
        %v5117 = vpack.c.b16 %v4991, %v4984
        %v5118 = vpack.c.b16 %v4992, %v4985
        %v5119 = vpack.c.b16 %v4993, %v4986
        %v5120 = vpack.c.b16 %v5001, %v4994
        %v5121 = vpack.c.b16 %v5002, %v4995
        %v5122 = vpack.c.b16 %v5003, %v4996
        %v5123 = vpack.c.b16 %v5004, %v4997
        %v5124 = vpack.c.b16 %v5005, %v4998
        %v5125 = vpack.c.b16 %v5006, %v4999
        %v5126 = vpack.c.b16 %v5007, %v5000
        %v5127 = vpack.c.b16 %v5015, %v5008
        %v5128 = vpack.c.b16 %v5016, %v5009
        %v5129 = vpack.c.b16 %v5017, %v5010
        %v5130 = vpack.c.b16 %v5018, %v5011
        %v5131 = vpack.c.b16 %v5019, %v5012
        %v5132 = vpack.c.b16 %v5020, %v5013
        %v5133 = vpack.c.b16 %v5021, %v5014
        %5246 = vmatprep.subr.bf16.mxu0 %v5072
        %5247 = vmatpush1.bf16.msra.mxu0 %v5071
        %5248 = vmatprep.subr.bf16.mxu0 %v5065
        %5249 = vmatpush1.bf16.msra.mxu0 %v5064
        %5250 = vmatprep.subr.bf16.mxu0 %v5058
        %5251 = vmatpush1.bf16.msra.mxu0 %v5057
        %5252 = vmatprep.subr.bf16.mxu0 %v5051
        %5253 = vmatpush1.bf16.msra.mxu0 %v5050
        %5254 = vmatprep.subr.bf16.mxu0 %v5044
        %5255 = vmatpush1.bf16.msra.mxu0 %v5043
        %5256 = vmatprep.subr.bf16.mxu0 %v5037
        %5257 = vmatpush1.bf16.msra.mxu0 %v5036
        %5258 = vmatprep.subr.bf16.mxu0 %v5030
        %5259 = vmatpush1.bf16.msra.mxu0 %v5029
        %5260 = vmatprep.subr.bf16.mxu0 %v5023
        %5261 = vmatpush1.bf16.msra.mxu0 %v5022
        %5262 = vmatprep.subr.bf16.mxu0 %v5128
        %5263 = vmatpush2.bf16.msra.mxu0 %v5127
        %5264 = vmatprep.subr.bf16.mxu0 %v5121
        %5265 = vmatpush2.bf16.msra.mxu0 %v5120
        %5266 = vmatprep.subr.bf16.mxu0 %v5114
        %5267 = vmatpush2.bf16.msra.mxu0 %v5113
        %5268 = vmatprep.subr.bf16.mxu0 %v5107
        %5269 = vmatpush2.bf16.msra.mxu0 %v5106
        %5270 = vmatprep.subr.bf16.mxu0 %v5100
        %5271 = vmatpush2.bf16.msra.mxu0 %v5099
        %5272 = vmatprep.subr.bf16.mxu0 %v5093
        %5273 = vmatpush2.bf16.msra.mxu0 %v5092
        %5274 = vmatprep.subr.bf16.mxu0 %v5086
        %5275 = vmatpush2.bf16.msra.mxu0 %v5085
        %5276 = vmatprep.subr.bf16.mxu0 %v5079
        %5277 = vmatpush2.bf16.msra.mxu0 %v5078
        %5278 = vmatprep.mubr.bf16.mxu0 %v4474
        %5279 = vmatmul.mubr.bf16.gmra.mxu0 %v4473
        %v5280 = vpop.f32.mrf.mxu0
        %v5281 = vadd.f32 %v4638, %v5280
        %v5282 = vpop.f32.mrf.mxu0
        %v5283 = vadd.f32 %v4642, %v5282
        %v5284 = vpop.f32.mrf.mxu0
        %v5285 = vadd.f32 %v4638, %v5284
        %v5286 = vpop.f32.mrf.mxu0
        %v5287 = vadd.f32 %v4642, %v5286
        %5288 = vmatprep.mubr.bf16.mxu0 %v4476
        %5289 = vmatmul.mubr.bf16.gmra.mxu0 %v4475
        %v5290 = vpop.f32.mrf.mxu0
        %v5291 = vadd.f32 %v4638, %v5290
        %v5292 = vpop.f32.mrf.mxu0
        %v5293 = vadd.f32 %v4642, %v5292
        %v5294 = vpop.f32.mrf.mxu0
        %v5295 = vadd.f32 %v4638, %v5294
        %v5296 = vpop.f32.mrf.mxu0
        %v5297 = vadd.f32 %v4642, %v5296
        %5298 = vmatprep.mubr.bf16.mxu0 %v4478
        %5299 = vmatmul.mubr.bf16.gmra.mxu0 %v4477
        %v5300 = vpop.f32.mrf.mxu0
        %v5301 = vadd.f32 %v4638, %v5300
        %v5302 = vpop.f32.mrf.mxu0
        %v5303 = vadd.f32 %v4642, %v5302
        %v5304 = vpop.f32.mrf.mxu0
        %v5305 = vadd.f32 %v4638, %v5304
        %v5306 = vpop.f32.mrf.mxu0
        %v5307 = vadd.f32 %v4642, %v5306
        %5308 = vmatprep.mubr.bf16.mxu0 %v4480
        %5309 = vmatmul.mubr.bf16.gmra.mxu0 %v4479
        %v5310 = vpop.f32.mrf.mxu0
        %v5311 = vadd.f32 %v4638, %v5310
        %v5312 = vpop.f32.mrf.mxu0
        %v5313 = vadd.f32 %v4642, %v5312
        %v5314 = vpop.f32.mrf.mxu0
        %v5315 = vadd.f32 %v4638, %v5314
        %v5316 = vpop.f32.mrf.mxu0
        %v5317 = vadd.f32 %v4642, %v5316
        %5318 = vmatprep.mubr.bf16.mxu0 %v4482
        %5319 = vmatmul.mubr.bf16.gmra.mxu0 %v4481
        %v5320 = vpop.f32.mrf.mxu0
        %v5321 = vadd.f32 %v4638, %v5320
        %v5322 = vpop.f32.mrf.mxu0
        %v5323 = vadd.f32 %v4642, %v5322
        %v5324 = vpop.f32.mrf.mxu0
        %v5325 = vadd.f32 %v4638, %v5324
        %v5326 = vpop.f32.mrf.mxu0
        %v5327 = vadd.f32 %v4642, %v5326
        %5328 = vmatprep.mubr.bf16.mxu0 %v4484
        %5329 = vmatmul.mubr.bf16.gmra.mxu0 %v4483
        %v5330 = vpop.f32.mrf.mxu0
        %v5331 = vadd.f32 %v4638, %v5330
        %v5332 = vpop.f32.mrf.mxu0
        %v5333 = vadd.f32 %v4642, %v5332
        %v5334 = vpop.f32.mrf.mxu0
        %v5335 = vadd.f32 %v4638, %v5334
        %v5336 = vpop.f32.mrf.mxu0
        %v5337 = vadd.f32 %v4642, %v5336
        %5338 = vmatprep.mubr.bf16.mxu0 %v4486
        %5339 = vmatmul.mubr.bf16.gmra.mxu0 %v4485
        %v5340 = vpop.f32.mrf.mxu0
        %v5341 = vadd.f32 %v4638, %v5340
        %v5342 = vpop.f32.mrf.mxu0
        %v5343 = vadd.f32 %v4642, %v5342
        %v5344 = vpop.f32.mrf.mxu0
        %v5345 = vadd.f32 %v4638, %v5344
        %v5346 = vpop.f32.mrf.mxu0
        %v5347 = vadd.f32 %v4642, %v5346
        %5348 = vmatprep.mubr.bf16.mxu0 %v4488
        %5349 = vmatmul.mubr.bf16.gmra.mxu0 %v4487
        %v5350 = vpop.f32.mrf.mxu0
        %v5351 = vadd.f32 %v4638, %v5350
        %v5352 = vpop.f32.mrf.mxu0
        %v5353 = vadd.f32 %v4642, %v5352
        %v5354 = vpop.f32.mrf.mxu0
        %v5355 = vadd.f32 %v4638, %v5354
        %v5356 = vpop.f32.mrf.mxu0
        %v5357 = vadd.f32 %v4642, %v5356
        %5358 = vmatprep.mubr.bf16.mxu0 %v4490
        %5359 = vmatmul.mubr.bf16.gmra.mxu0 %v4489
        %v5360 = vpop.f32.mrf.mxu0
        %v5361 = vadd.f32 %v4638, %v5360
        %v5362 = vpop.f32.mrf.mxu0
        %v5363 = vadd.f32 %v4642, %v5362
        %v5364 = vpop.f32.mrf.mxu0
        %v5365 = vadd.f32 %v4638, %v5364
        %v5366 = vpop.f32.mrf.mxu0
        %v5367 = vadd.f32 %v4642, %v5366
        %5368 = vmatprep.mubr.bf16.mxu0 %v4492
        %5369 = vmatmul.mubr.bf16.gmra.mxu0 %v4491
        %v5370 = vpop.f32.mrf.mxu0
        %v5371 = vadd.f32 %v4638, %v5370
        %v5372 = vpop.f32.mrf.mxu0
        %v5373 = vadd.f32 %v4642, %v5372
        %v5374 = vpop.f32.mrf.mxu0
        %v5375 = vadd.f32 %v4638, %v5374
        %v5376 = vpop.f32.mrf.mxu0
        %v5377 = vadd.f32 %v4642, %v5376
        %5378 = vmatprep.mubr.bf16.mxu0 %v4494
        %5379 = vmatmul.mubr.bf16.gmra.mxu0 %v4493
        %v5380 = vpop.f32.mrf.mxu0
        %v5381 = vadd.f32 %v4638, %v5380
        %v5382 = vpop.f32.mrf.mxu0
        %v5383 = vadd.f32 %v4642, %v5382
        %v5384 = vpop.f32.mrf.mxu0
        %v5385 = vadd.f32 %v4638, %v5384
        %v5386 = vpop.f32.mrf.mxu0
        %v5387 = vadd.f32 %v4642, %v5386
        %5388 = vmatprep.mubr.bf16.mxu0 %v4496
        %5389 = vmatmul.mubr.bf16.gmra.mxu0 %v4495
        %v5390 = vpop.f32.mrf.mxu0
        %v5391 = vadd.f32 %v4638, %v5390
        %v5392 = vpop.f32.mrf.mxu0
        %v5393 = vadd.f32 %v4642, %v5392
        %v5394 = vpop.f32.mrf.mxu0
        %v5395 = vadd.f32 %v4638, %v5394
        %v5396 = vpop.f32.mrf.mxu0
        %v5397 = vadd.f32 %v4642, %v5396
        %5398 = vmatprep.mubr.bf16.mxu0 %v4498
        %5399 = vmatmul.mubr.bf16.gmra.mxu0 %v4497
        %v5400 = vpop.f32.mrf.mxu0
        %v5401 = vadd.f32 %v4638, %v5400
        %v5402 = vpop.f32.mrf.mxu0
        %v5403 = vadd.f32 %v4642, %v5402
        %v5404 = vpop.f32.mrf.mxu0
        %v5405 = vadd.f32 %v4638, %v5404
        %v5406 = vpop.f32.mrf.mxu0
        %v5407 = vadd.f32 %v4642, %v5406
        %5408 = vmatprep.mubr.bf16.mxu0 %v4500
        %5409 = vmatmul.mubr.bf16.gmra.mxu0 %v4499
        %v5410 = vpop.f32.mrf.mxu0
        %v5411 = vadd.f32 %v4638, %v5410
        %v5412 = vpop.f32.mrf.mxu0
        %v5413 = vadd.f32 %v4642, %v5412
        %v5414 = vpop.f32.mrf.mxu0
        %v5415 = vadd.f32 %v4638, %v5414
        %v5416 = vpop.f32.mrf.mxu0
        %v5417 = vadd.f32 %v4642, %v5416
        %5418 = vmatprep.mubr.bf16.mxu0 %v4502
        %5419 = vmatmul.mubr.bf16.gmra.mxu0 %v4501
        %v5420 = vpop.f32.mrf.mxu0
        %v5421 = vadd.f32 %v4638, %v5420
        %v5422 = vpop.f32.mrf.mxu0
        %v5423 = vadd.f32 %v4642, %v5422
        %v5424 = vpop.f32.mrf.mxu0
        %v5425 = vadd.f32 %v4638, %v5424
        %v5426 = vpop.f32.mrf.mxu0
        %v5427 = vadd.f32 %v4642, %v5426
        %5428 = vmatprep.mubr.bf16.mxu0 %v4504
        %5429 = vmatmul.mubr.bf16.gmra.mxu0 %v4503
        %v5430 = vpop.f32.mrf.mxu0
        %v5431 = vadd.f32 %v4638, %v5430
        %v5432 = vpop.f32.mrf.mxu0
        %v5433 = vadd.f32 %v4642, %v5432
        %v5434 = vpop.f32.mrf.mxu0
        %v5435 = vadd.f32 %v4638, %v5434
        %v5436 = vpop.f32.mrf.mxu0
        %v5437 = vadd.f32 %v4642, %v5436
        %5438 = vdwg.mxu0
        %5439 = vmatprep.subr.bf16.mxu0 %v5074
        %5440 = vmatpush1.bf16.msra.mxu0 %v5073
        %5441 = vmatprep.subr.bf16.mxu0 %v5067
        %5442 = vmatpush1.bf16.msra.mxu0 %v5066
        %5443 = vmatprep.subr.bf16.mxu0 %v5060
        %5444 = vmatpush1.bf16.msra.mxu0 %v5059
        %5445 = vmatprep.subr.bf16.mxu0 %v5053
        %5446 = vmatpush1.bf16.msra.mxu0 %v5052
        %5447 = vmatprep.subr.bf16.mxu0 %v5046
        %5448 = vmatpush1.bf16.msra.mxu0 %v5045
        %5449 = vmatprep.subr.bf16.mxu0 %v5039
        %5450 = vmatpush1.bf16.msra.mxu0 %v5038
        %5451 = vmatprep.subr.bf16.mxu0 %v5032
        %5452 = vmatpush1.bf16.msra.mxu0 %v5031
        %5453 = vmatprep.subr.bf16.mxu0 %v5025
        %5454 = vmatpush1.bf16.msra.mxu0 %v5024
        %5455 = vmatprep.subr.bf16.mxu0 %v5130
        %5456 = vmatpush2.bf16.msra.mxu0 %v5129
        %5457 = vmatprep.subr.bf16.mxu0 %v5123
        %5458 = vmatpush2.bf16.msra.mxu0 %v5122
        %5459 = vmatprep.subr.bf16.mxu0 %v5116
        %5460 = vmatpush2.bf16.msra.mxu0 %v5115
        %5461 = vmatprep.subr.bf16.mxu0 %v5109
        %5462 = vmatpush2.bf16.msra.mxu0 %v5108
        %5463 = vmatprep.subr.bf16.mxu0 %v5102
        %5464 = vmatpush2.bf16.msra.mxu0 %v5101
        %5465 = vmatprep.subr.bf16.mxu0 %v5095
        %5466 = vmatpush2.bf16.msra.mxu0 %v5094
        %5467 = vmatprep.subr.bf16.mxu0 %v5088
        %5468 = vmatpush2.bf16.msra.mxu0 %v5087
        %5469 = vmatprep.subr.bf16.mxu0 %v5081
        %5470 = vmatpush2.bf16.msra.mxu0 %v5080
        %5471 = vmatprep.mubr.bf16.mxu0 %v4474
        %5472 = vmatmul.mubr.bf16.gmra.mxu0 %v4473
        %v5473 = vpop.f32.mrf.mxu0
        %v5474 = vadd.f32 %v4646, %v5473
        %v5475 = vpop.f32.mrf.mxu0
        %v5476 = vadd.f32 %v4650, %v5475
        %v5477 = vpop.f32.mrf.mxu0
        %v5478 = vadd.f32 %v4646, %v5477
        %v5479 = vpop.f32.mrf.mxu0
        %v5480 = vadd.f32 %v4650, %v5479
        %5481 = vmatprep.mubr.bf16.mxu0 %v4476
        %5482 = vmatmul.mubr.bf16.gmra.mxu0 %v4475
        %v5483 = vpop.f32.mrf.mxu0
        %v5484 = vadd.f32 %v4646, %v5483
        %v5485 = vpop.f32.mrf.mxu0
        %v5486 = vadd.f32 %v4650, %v5485
        %v5487 = vpop.f32.mrf.mxu0
        %v5488 = vadd.f32 %v4646, %v5487
        %v5489 = vpop.f32.mrf.mxu0
        %v5490 = vadd.f32 %v4650, %v5489
        %5491 = vmatprep.mubr.bf16.mxu0 %v4478
        %5492 = vmatmul.mubr.bf16.gmra.mxu0 %v4477
        %v5493 = vpop.f32.mrf.mxu0
        %v5494 = vadd.f32 %v4646, %v5493
        %v5495 = vpop.f32.mrf.mxu0
        %v5496 = vadd.f32 %v4650, %v5495
        %v5497 = vpop.f32.mrf.mxu0
        %v5498 = vadd.f32 %v4646, %v5497
        %v5499 = vpop.f32.mrf.mxu0
        %v5500 = vadd.f32 %v4650, %v5499
        %5501 = vmatprep.mubr.bf16.mxu0 %v4480
        %5502 = vmatmul.mubr.bf16.gmra.mxu0 %v4479
        %v5503 = vpop.f32.mrf.mxu0
        %v5504 = vadd.f32 %v4646, %v5503
        %v5505 = vpop.f32.mrf.mxu0
        %v5506 = vadd.f32 %v4650, %v5505
        %v5507 = vpop.f32.mrf.mxu0
        %v5508 = vadd.f32 %v4646, %v5507
        %v5509 = vpop.f32.mrf.mxu0
        %v5510 = vadd.f32 %v4650, %v5509
        %5511 = vmatprep.mubr.bf16.mxu0 %v4482
        %5512 = vmatmul.mubr.bf16.gmra.mxu0 %v4481
        %v5513 = vpop.f32.mrf.mxu0
        %v5514 = vadd.f32 %v4646, %v5513
        %v5515 = vpop.f32.mrf.mxu0
        %v5516 = vadd.f32 %v4650, %v5515
        %v5517 = vpop.f32.mrf.mxu0
        %v5518 = vadd.f32 %v4646, %v5517
        %v5519 = vpop.f32.mrf.mxu0
        %v5520 = vadd.f32 %v4650, %v5519
        %5521 = vmatprep.mubr.bf16.mxu0 %v4484
        %5522 = vmatmul.mubr.bf16.gmra.mxu0 %v4483
        %v5523 = vpop.f32.mrf.mxu0
        %v5524 = vadd.f32 %v4646, %v5523
        %v5525 = vpop.f32.mrf.mxu0
        %v5526 = vadd.f32 %v4650, %v5525
        %v5527 = vpop.f32.mrf.mxu0
        %v5528 = vadd.f32 %v4646, %v5527
        %v5529 = vpop.f32.mrf.mxu0
        %v5530 = vadd.f32 %v4650, %v5529
        %5531 = vmatprep.mubr.bf16.mxu0 %v4486
        %5532 = vmatmul.mubr.bf16.gmra.mxu0 %v4485
        %v5533 = vpop.f32.mrf.mxu0
        %v5534 = vadd.f32 %v4646, %v5533
        %v5535 = vpop.f32.mrf.mxu0
        %v5536 = vadd.f32 %v4650, %v5535
        %v5537 = vpop.f32.mrf.mxu0
        %v5538 = vadd.f32 %v4646, %v5537
        %v5539 = vpop.f32.mrf.mxu0
        %v5540 = vadd.f32 %v4650, %v5539
        %5541 = vmatprep.mubr.bf16.mxu0 %v4488
        %5542 = vmatmul.mubr.bf16.gmra.mxu0 %v4487
        %v5543 = vpop.f32.mrf.mxu0
        %v5544 = vadd.f32 %v4646, %v5543
        %v5545 = vpop.f32.mrf.mxu0
        %v5546 = vadd.f32 %v4650, %v5545
        %v5547 = vpop.f32.mrf.mxu0
        %v5548 = vadd.f32 %v4646, %v5547
        %v5549 = vpop.f32.mrf.mxu0
        %v5550 = vadd.f32 %v4650, %v5549
        %5551 = vmatprep.mubr.bf16.mxu0 %v4490
        %5552 = vmatmul.mubr.bf16.gmra.mxu0 %v4489
        %v5553 = vpop.f32.mrf.mxu0
        %v5554 = vadd.f32 %v4646, %v5553
        %v5555 = vpop.f32.mrf.mxu0
        %v5556 = vadd.f32 %v4650, %v5555
        %v5557 = vpop.f32.mrf.mxu0
        %v5558 = vadd.f32 %v4646, %v5557
        %v5559 = vpop.f32.mrf.mxu0
        %v5560 = vadd.f32 %v4650, %v5559
        %5561 = vmatprep.mubr.bf16.mxu0 %v4492
        %5562 = vmatmul.mubr.bf16.gmra.mxu0 %v4491
        %v5563 = vpop.f32.mrf.mxu0
        %v5564 = vadd.f32 %v4646, %v5563
        %v5565 = vpop.f32.mrf.mxu0
        %v5566 = vadd.f32 %v4650, %v5565
        %v5567 = vpop.f32.mrf.mxu0
        %v5568 = vadd.f32 %v4646, %v5567
        %v5569 = vpop.f32.mrf.mxu0
        %v5570 = vadd.f32 %v4650, %v5569
        %5571 = vmatprep.mubr.bf16.mxu0 %v4494
        %5572 = vmatmul.mubr.bf16.gmra.mxu0 %v4493
        %v5573 = vpop.f32.mrf.mxu0
        %v5574 = vadd.f32 %v4646, %v5573
        %v5575 = vpop.f32.mrf.mxu0
        %v5576 = vadd.f32 %v4650, %v5575
        %v5577 = vpop.f32.mrf.mxu0
        %v5578 = vadd.f32 %v4646, %v5577
        %v5579 = vpop.f32.mrf.mxu0
        %v5580 = vadd.f32 %v4650, %v5579
        %5581 = vmatprep.mubr.bf16.mxu0 %v4496
        %5582 = vmatmul.mubr.bf16.gmra.mxu0 %v4495
        %v5583 = vpop.f32.mrf.mxu0
        %v5584 = vadd.f32 %v4646, %v5583
        %v5585 = vpop.f32.mrf.mxu0
        %v5586 = vadd.f32 %v4650, %v5585
        %v5587 = vpop.f32.mrf.mxu0
        %v5588 = vadd.f32 %v4646, %v5587
        %v5589 = vpop.f32.mrf.mxu0
        %v5590 = vadd.f32 %v4650, %v5589
        %5591 = vmatprep.mubr.bf16.mxu0 %v4498
        %5592 = vmatmul.mubr.bf16.gmra.mxu0 %v4497
        %v5593 = vpop.f32.mrf.mxu0
        %v5594 = vadd.f32 %v4646, %v5593
        %v5595 = vpop.f32.mrf.mxu0
        %v5596 = vadd.f32 %v4650, %v5595
        %v5597 = vpop.f32.mrf.mxu0
        %v5598 = vadd.f32 %v4646, %v5597
        %v5599 = vpop.f32.mrf.mxu0
        %v5600 = vadd.f32 %v4650, %v5599
        %5601 = vmatprep.mubr.bf16.mxu0 %v4500
        %5602 = vmatmul.mubr.bf16.gmra.mxu0 %v4499
        %v5603 = vpop.f32.mrf.mxu0
        %v5604 = vadd.f32 %v4646, %v5603
        %v5605 = vpop.f32.mrf.mxu0
        %v5606 = vadd.f32 %v4650, %v5605
        %v5607 = vpop.f32.mrf.mxu0
        %v5608 = vadd.f32 %v4646, %v5607
        %v5609 = vpop.f32.mrf.mxu0
        %v5610 = vadd.f32 %v4650, %v5609
        %5611 = vmatprep.mubr.bf16.mxu0 %v4502
        %5612 = vmatmul.mubr.bf16.gmra.mxu0 %v4501
        %v5613 = vpop.f32.mrf.mxu0
        %v5614 = vadd.f32 %v4646, %v5613
        %v5615 = vpop.f32.mrf.mxu0
        %v5616 = vadd.f32 %v4650, %v5615
        %v5617 = vpop.f32.mrf.mxu0
        %v5618 = vadd.f32 %v4646, %v5617
        %v5619 = vpop.f32.mrf.mxu0
        %v5620 = vadd.f32 %v4650, %v5619
        %5621 = vmatprep.mubr.bf16.mxu0 %v4504
        %5622 = vmatmul.mubr.bf16.gmra.mxu0 %v4503
        %v5623 = vpop.f32.mrf.mxu0
        %v5624 = vadd.f32 %v4646, %v5623
        %v5625 = vpop.f32.mrf.mxu0
        %v5626 = vadd.f32 %v4650, %v5625
        %v5627 = vpop.f32.mrf.mxu0
        %v5628 = vadd.f32 %v4646, %v5627
        %v5629 = vpop.f32.mrf.mxu0
        %v5630 = vadd.f32 %v4650, %v5629
        %5631 = vdwg.mxu0
        %5632 = vmatprep.subr.bf16.mxu0 %v5076
        %5633 = vmatpush1.bf16.msra.mxu0 %v5075
        %5634 = vmatprep.subr.bf16.mxu0 %v5069
        %5635 = vmatpush1.bf16.msra.mxu0 %v5068
        %5636 = vmatprep.subr.bf16.mxu0 %v5062
        %5637 = vmatpush1.bf16.msra.mxu0 %v5061
        %5638 = vmatprep.subr.bf16.mxu0 %v5055
        %5639 = vmatpush1.bf16.msra.mxu0 %v5054
        %5640 = vmatprep.subr.bf16.mxu0 %v5048
        %5641 = vmatpush1.bf16.msra.mxu0 %v5047
        %5642 = vmatprep.subr.bf16.mxu0 %v5041
        %5643 = vmatpush1.bf16.msra.mxu0 %v5040
        %5644 = vmatprep.subr.bf16.mxu0 %v5034
        %5645 = vmatpush1.bf16.msra.mxu0 %v5033
        %5646 = vmatprep.subr.bf16.mxu0 %v5027
        %5647 = vmatpush1.bf16.msra.mxu0 %v5026
        %5648 = vmatprep.subr.bf16.mxu0 %v5132
        %5649 = vmatpush2.bf16.msra.mxu0 %v5131
        %5650 = vmatprep.subr.bf16.mxu0 %v5125
        %5651 = vmatpush2.bf16.msra.mxu0 %v5124
        %5652 = vmatprep.subr.bf16.mxu0 %v5118
        %5653 = vmatpush2.bf16.msra.mxu0 %v5117
        %5654 = vmatprep.subr.bf16.mxu0 %v5111
        %5655 = vmatpush2.bf16.msra.mxu0 %v5110
        %5656 = vmatprep.subr.bf16.mxu0 %v5104
        %5657 = vmatpush2.bf16.msra.mxu0 %v5103
        %5658 = vmatprep.subr.bf16.mxu0 %v5097
        %5659 = vmatpush2.bf16.msra.mxu0 %v5096
        %5660 = vmatprep.subr.bf16.mxu0 %v5090
        %5661 = vmatpush2.bf16.msra.mxu0 %v5089
        %5662 = vmatprep.subr.bf16.mxu0 %v5083
        %5663 = vmatpush2.bf16.msra.mxu0 %v5082
        %5664 = vmatprep.mubr.bf16.mxu0 %v4474
        %5665 = vmatmul.mubr.bf16.gmra.mxu0 %v4473
        %v5666 = vpop.f32.mrf.mxu0
        %v5667 = vadd.f32 %v4654, %v5666
        %v5668 = vpop.f32.mrf.mxu0
        %v5669 = vadd.f32 %v4658, %v5668
        %v5670 = vpop.f32.mrf.mxu0
        %v5671 = vadd.f32 %v4654, %v5670
        %v5672 = vpop.f32.mrf.mxu0
        %v5673 = vadd.f32 %v4658, %v5672
        %5674 = vmatprep.mubr.bf16.mxu0 %v4476
        %5675 = vmatmul.mubr.bf16.gmra.mxu0 %v4475
        %v5676 = vpop.f32.mrf.mxu0
        %v5677 = vadd.f32 %v4654, %v5676
        %v5678 = vpop.f32.mrf.mxu0
        %v5679 = vadd.f32 %v4658, %v5678
        %v5680 = vpop.f32.mrf.mxu0
        %v5681 = vadd.f32 %v4654, %v5680
        %v5682 = vpop.f32.mrf.mxu0
        %v5683 = vadd.f32 %v4658, %v5682
        %5684 = vmatprep.mubr.bf16.mxu0 %v4478
        %5685 = vmatmul.mubr.bf16.gmra.mxu0 %v4477
        %v5686 = vpop.f32.mrf.mxu0
        %v5687 = vadd.f32 %v4654, %v5686
        %v5688 = vpop.f32.mrf.mxu0
        %v5689 = vadd.f32 %v4658, %v5688
        %v5690 = vpop.f32.mrf.mxu0
        %v5691 = vadd.f32 %v4654, %v5690
        %v5692 = vpop.f32.mrf.mxu0
        %v5693 = vadd.f32 %v4658, %v5692
        %5694 = vmatprep.mubr.bf16.mxu0 %v4480
        %5695 = vmatmul.mubr.bf16.gmra.mxu0 %v4479
        %v5696 = vpop.f32.mrf.mxu0
        %v5697 = vadd.f32 %v4654, %v5696
        %v5698 = vpop.f32.mrf.mxu0
        %v5699 = vadd.f32 %v4658, %v5698
        %v5700 = vpop.f32.mrf.mxu0
        %v5701 = vadd.f32 %v4654, %v5700
        %v5702 = vpop.f32.mrf.mxu0
        %v5703 = vadd.f32 %v4658, %v5702
        %5704 = vmatprep.mubr.bf16.mxu0 %v4482
        %5705 = vmatmul.mubr.bf16.gmra.mxu0 %v4481
        %v5706 = vpop.f32.mrf.mxu0
        %v5707 = vadd.f32 %v4654, %v5706
        %v5708 = vpop.f32.mrf.mxu0
        %v5709 = vadd.f32 %v4658, %v5708
        %v5710 = vpop.f32.mrf.mxu0
        %v5711 = vadd.f32 %v4654, %v5710
        %v5712 = vpop.f32.mrf.mxu0
        %v5713 = vadd.f32 %v4658, %v5712
        %5714 = vmatprep.mubr.bf16.mxu0 %v4484
        %5715 = vmatmul.mubr.bf16.gmra.mxu0 %v4483
        %v5716 = vpop.f32.mrf.mxu0
        %v5717 = vadd.f32 %v4654, %v5716
        %v5718 = vpop.f32.mrf.mxu0
        %v5719 = vadd.f32 %v4658, %v5718
        %v5720 = vpop.f32.mrf.mxu0
        %v5721 = vadd.f32 %v4654, %v5720
        %v5722 = vpop.f32.mrf.mxu0
        %v5723 = vadd.f32 %v4658, %v5722
        %5724 = vmatprep.mubr.bf16.mxu0 %v4486
        %5725 = vmatmul.mubr.bf16.gmra.mxu0 %v4485
        %v5726 = vpop.f32.mrf.mxu0
        %v5727 = vadd.f32 %v4654, %v5726
        %v5728 = vpop.f32.mrf.mxu0
        %v5729 = vadd.f32 %v4658, %v5728
        %v5730 = vpop.f32.mrf.mxu0
        %v5731 = vadd.f32 %v4654, %v5730
        %v5732 = vpop.f32.mrf.mxu0
        %v5733 = vadd.f32 %v4658, %v5732
        %5734 = vmatprep.mubr.bf16.mxu0 %v4488
        %5735 = vmatmul.mubr.bf16.gmra.mxu0 %v4487
        %v5736 = vpop.f32.mrf.mxu0
        %v5737 = vadd.f32 %v4654, %v5736
        %v5738 = vpop.f32.mrf.mxu0
        %v5739 = vadd.f32 %v4658, %v5738
        %v5740 = vpop.f32.mrf.mxu0
        %v5741 = vadd.f32 %v4654, %v5740
        %v5742 = vpop.f32.mrf.mxu0
        %v5743 = vadd.f32 %v4658, %v5742
        %5744 = vmatprep.mubr.bf16.mxu0 %v4490
        %5745 = vmatmul.mubr.bf16.gmra.mxu0 %v4489
        %v5746 = vpop.f32.mrf.mxu0
        %v5747 = vadd.f32 %v4654, %v5746
        %v5748 = vpop.f32.mrf.mxu0
        %v5749 = vadd.f32 %v4658, %v5748
        %v5750 = vpop.f32.mrf.mxu0
        %v5751 = vadd.f32 %v4654, %v5750
        %v5752 = vpop.f32.mrf.mxu0
        %v5753 = vadd.f32 %v4658, %v5752
        %5754 = vmatprep.mubr.bf16.mxu0 %v4492
        %5755 = vmatmul.mubr.bf16.gmra.mxu0 %v4491
        %v5756 = vpop.f32.mrf.mxu0
        %v5757 = vadd.f32 %v4654, %v5756
        %v5758 = vpop.f32.mrf.mxu0
        %v5759 = vadd.f32 %v4658, %v5758
        %v5760 = vpop.f32.mrf.mxu0
        %v5761 = vadd.f32 %v4654, %v5760
        %v5762 = vpop.f32.mrf.mxu0
        %v5763 = vadd.f32 %v4658, %v5762
        %5764 = vmatprep.mubr.bf16.mxu0 %v4494
        %5765 = vmatmul.mubr.bf16.gmra.mxu0 %v4493
        %v5766 = vpop.f32.mrf.mxu0
        %v5767 = vadd.f32 %v4654, %v5766
        %v5768 = vpop.f32.mrf.mxu0
        %v5769 = vadd.f32 %v4658, %v5768
        %v5770 = vpop.f32.mrf.mxu0
        %v5771 = vadd.f32 %v4654, %v5770
        %v5772 = vpop.f32.mrf.mxu0
        %v5773 = vadd.f32 %v4658, %v5772
        %5774 = vmatprep.mubr.bf16.mxu0 %v4496
        %5775 = vmatmul.mubr.bf16.gmra.mxu0 %v4495
        %v5776 = vpop.f32.mrf.mxu0
        %v5777 = vadd.f32 %v4654, %v5776
        %v5778 = vpop.f32.mrf.mxu0
        %v5779 = vadd.f32 %v4658, %v5778
        %v5780 = vpop.f32.mrf.mxu0
        %v5781 = vadd.f32 %v4654, %v5780
        %v5782 = vpop.f32.mrf.mxu0
        %v5783 = vadd.f32 %v4658, %v5782
        %5784 = vmatprep.mubr.bf16.mxu0 %v4498
        %5785 = vmatmul.mubr.bf16.gmra.mxu0 %v4497
        %v5786 = vpop.f32.mrf.mxu0
        %v5787 = vadd.f32 %v4654, %v5786
        %v5788 = vpop.f32.mrf.mxu0
        %v5789 = vadd.f32 %v4658, %v5788
        %v5790 = vpop.f32.mrf.mxu0
        %v5791 = vadd.f32 %v4654, %v5790
        %v5792 = vpop.f32.mrf.mxu0
        %v5793 = vadd.f32 %v4658, %v5792
        %5794 = vmatprep.mubr.bf16.mxu0 %v4500
        %5795 = vmatmul.mubr.bf16.gmra.mxu0 %v4499
        %v5796 = vpop.f32.mrf.mxu0
        %v5797 = vadd.f32 %v4654, %v5796
        %v5798 = vpop.f32.mrf.mxu0
        %v5799 = vadd.f32 %v4658, %v5798
        %v5800 = vpop.f32.mrf.mxu0
        %v5801 = vadd.f32 %v4654, %v5800
        %v5802 = vpop.f32.mrf.mxu0
        %v5803 = vadd.f32 %v4658, %v5802
        %5804 = vmatprep.mubr.bf16.mxu0 %v4502
        %5805 = vmatmul.mubr.bf16.gmra.mxu0 %v4501
        %v5806 = vpop.f32.mrf.mxu0
        %v5807 = vadd.f32 %v4654, %v5806
        %v5808 = vpop.f32.mrf.mxu0
        %v5809 = vadd.f32 %v4658, %v5808
        %v5810 = vpop.f32.mrf.mxu0
        %v5811 = vadd.f32 %v4654, %v5810
        %v5812 = vpop.f32.mrf.mxu0
        %v5813 = vadd.f32 %v4658, %v5812
        %5814 = vmatprep.mubr.bf16.mxu0 %v4504
        %5815 = vmatmul.mubr.bf16.gmra.mxu0 %v4503
        %v5816 = vpop.f32.mrf.mxu0
        %v5817 = vadd.f32 %v4654, %v5816
        %v5818 = vpop.f32.mrf.mxu0
        %v5819 = vadd.f32 %v4658, %v5818
        %v5820 = vpop.f32.mrf.mxu0
        %v5821 = vadd.f32 %v4654, %v5820
        %v5822 = vpop.f32.mrf.mxu0
        %v5823 = vadd.f32 %v4658, %v5822
        %5824 = vdwg.mxu0
        %5825 = vmatprep.subr.bf16.mxu0 0
        %5826 = vmatpush1.bf16.msra.mxu0 %v5077
        %5827 = vmatprep.subr.bf16.mxu0 0
        %5828 = vmatpush1.bf16.msra.mxu0 %v5070
        %5829 = vmatprep.subr.bf16.mxu0 0
        %5830 = vmatpush1.bf16.msra.mxu0 %v5063
        %5831 = vmatprep.subr.bf16.mxu0 0
        %5832 = vmatpush1.bf16.msra.mxu0 %v5056
        %5833 = vmatprep.subr.bf16.mxu0 0
        %5834 = vmatpush1.bf16.msra.mxu0 %v5049
        %5835 = vmatprep.subr.bf16.mxu0 0
        %5836 = vmatpush1.bf16.msra.mxu0 %v5042
        %5837 = vmatprep.subr.bf16.mxu0 0
        %5838 = vmatpush1.bf16.msra.mxu0 %v5035
        %5839 = vmatprep.subr.bf16.mxu0 0
        %5840 = vmatpush1.bf16.msra.mxu0 %v5028
        %5841 = vmatprep.subr.bf16.mxu0 0
        %5842 = vmatpush2.bf16.msra.mxu0 %v5133
        %5843 = vmatprep.subr.bf16.mxu0 0
        %5844 = vmatpush2.bf16.msra.mxu0 %v5126
        %5845 = vmatprep.subr.bf16.mxu0 0
        %5846 = vmatpush2.bf16.msra.mxu0 %v5119
        %5847 = vmatprep.subr.bf16.mxu0 0
        %5848 = vmatpush2.bf16.msra.mxu0 %v5112
        %5849 = vmatprep.subr.bf16.mxu0 0
        %5850 = vmatpush2.bf16.msra.mxu0 %v5105
        %5851 = vmatprep.subr.bf16.mxu0 0
        %5852 = vmatpush2.bf16.msra.mxu0 %v5098
        %5853 = vmatprep.subr.bf16.mxu0 0
        %5854 = vmatpush2.bf16.msra.mxu0 %v5091
        %5855 = vmatprep.subr.bf16.mxu0 0
        %5856 = vmatpush2.bf16.msra.mxu0 %v5084
        %5857 = vmatprep.mubr.bf16.mxu0 %v4474
        %5858 = vmatmul.mubr.bf16.gmra.mxu0 %v4473
        %v5859 = vpop.f32.mrf.mxu0
        %v5860 = vadd.f32 %v4662, %v5859
        %v5861 = vpop.f32.mrf.mxu0
        %v5862 = vpop.f32.mrf.mxu0
        %v5863 = vadd.f32 %v4662, %v5862
        %v5864 = vpop.f32.mrf.mxu0
        %5865 = vmatprep.mubr.bf16.mxu0 %v4476
        %5866 = vmatmul.mubr.bf16.gmra.mxu0 %v4475
        %v5867 = vpop.f32.mrf.mxu0
        %v5868 = vadd.f32 %v4662, %v5867
        %v5869 = vpop.f32.mrf.mxu0
        %v5870 = vpop.f32.mrf.mxu0
        %v5871 = vadd.f32 %v4662, %v5870
        %v5872 = vpop.f32.mrf.mxu0
        %5873 = vmatprep.mubr.bf16.mxu0 %v4478
        %5874 = vmatmul.mubr.bf16.gmra.mxu0 %v4477
        %v5875 = vpop.f32.mrf.mxu0
        %v5876 = vadd.f32 %v4662, %v5875
        %v5877 = vpop.f32.mrf.mxu0
        %v5878 = vpop.f32.mrf.mxu0
        %v5879 = vadd.f32 %v4662, %v5878
        %v5880 = vpop.f32.mrf.mxu0
        %5881 = vmatprep.mubr.bf16.mxu0 %v4480
        %5882 = vmatmul.mubr.bf16.gmra.mxu0 %v4479
        %v5883 = vpop.f32.mrf.mxu0
        %v5884 = vadd.f32 %v4662, %v5883
        %v5885 = vpop.f32.mrf.mxu0
        %v5886 = vpop.f32.mrf.mxu0
        %v5887 = vadd.f32 %v4662, %v5886
        %v5888 = vpop.f32.mrf.mxu0
        %5889 = vmatprep.mubr.bf16.mxu0 %v4482
        %5890 = vmatmul.mubr.bf16.gmra.mxu0 %v4481
        %v5891 = vpop.f32.mrf.mxu0
        %v5892 = vadd.f32 %v4662, %v5891
        %v5893 = vpop.f32.mrf.mxu0
        %v5894 = vpop.f32.mrf.mxu0
        %v5895 = vadd.f32 %v4662, %v5894
        %v5896 = vpop.f32.mrf.mxu0
        %5897 = vmatprep.mubr.bf16.mxu0 %v4484
        %5898 = vmatmul.mubr.bf16.gmra.mxu0 %v4483
        %v5899 = vpop.f32.mrf.mxu0
        %v5900 = vadd.f32 %v4662, %v5899
        %v5901 = vpop.f32.mrf.mxu0
        %v5902 = vpop.f32.mrf.mxu0
        %v5903 = vadd.f32 %v4662, %v5902
        %v5904 = vpop.f32.mrf.mxu0
        %5905 = vmatprep.mubr.bf16.mxu0 %v4486
        %5906 = vmatmul.mubr.bf16.gmra.mxu0 %v4485
        %v5907 = vpop.f32.mrf.mxu0
        %v5908 = vadd.f32 %v4662, %v5907
        %v5909 = vpop.f32.mrf.mxu0
        %v5910 = vpop.f32.mrf.mxu0
        %v5911 = vadd.f32 %v4662, %v5910
        %v5912 = vpop.f32.mrf.mxu0
        %5913 = vmatprep.mubr.bf16.mxu0 %v4488
        %5914 = vmatmul.mubr.bf16.gmra.mxu0 %v4487
        %v5915 = vpop.f32.mrf.mxu0
        %v5916 = vadd.f32 %v4662, %v5915
        %v5917 = vpop.f32.mrf.mxu0
        %v5918 = vpop.f32.mrf.mxu0
        %v5919 = vadd.f32 %v4662, %v5918
        %v5920 = vpop.f32.mrf.mxu0
        %5921 = vmatprep.mubr.bf16.mxu0 %v4490
        %5922 = vmatmul.mubr.bf16.gmra.mxu0 %v4489
        %v5923 = vpop.f32.mrf.mxu0
        %v5924 = vadd.f32 %v4662, %v5923
        %v5925 = vpop.f32.mrf.mxu0
        %v5926 = vpop.f32.mrf.mxu0
        %v5927 = vadd.f32 %v4662, %v5926
        %v5928 = vpop.f32.mrf.mxu0
        %5929 = vmatprep.mubr.bf16.mxu0 %v4492
        %5930 = vmatmul.mubr.bf16.gmra.mxu0 %v4491
        %v5931 = vpop.f32.mrf.mxu0
        %v5932 = vadd.f32 %v4662, %v5931
        %v5933 = vpop.f32.mrf.mxu0
        %v5934 = vpop.f32.mrf.mxu0
        %v5935 = vadd.f32 %v4662, %v5934
        %v5936 = vpop.f32.mrf.mxu0
        %5937 = vmatprep.mubr.bf16.mxu0 %v4494
        %5938 = vmatmul.mubr.bf16.gmra.mxu0 %v4493
        %v5939 = vpop.f32.mrf.mxu0
        %v5940 = vadd.f32 %v4662, %v5939
        %v5941 = vpop.f32.mrf.mxu0
        %v5942 = vpop.f32.mrf.mxu0
        %v5943 = vadd.f32 %v4662, %v5942
        %v5944 = vpop.f32.mrf.mxu0
        %5945 = vmatprep.mubr.bf16.mxu0 %v4496
        %5946 = vmatmul.mubr.bf16.gmra.mxu0 %v4495
        %v5947 = vpop.f32.mrf.mxu0
        %v5948 = vadd.f32 %v4662, %v5947
        %v5949 = vpop.f32.mrf.mxu0
        %v5950 = vpop.f32.mrf.mxu0
        %v5951 = vadd.f32 %v4662, %v5950
        %v5952 = vpop.f32.mrf.mxu0
        %5953 = vmatprep.mubr.bf16.mxu0 %v4498
        %5954 = vmatmul.mubr.bf16.gmra.mxu0 %v4497
        %v5955 = vpop.f32.mrf.mxu0
        %v5956 = vadd.f32 %v4662, %v5955
        %v5957 = vpop.f32.mrf.mxu0
        %v5958 = vpop.f32.mrf.mxu0
        %v5959 = vadd.f32 %v4662, %v5958
        %v5960 = vpop.f32.mrf.mxu0
        %5961 = vmatprep.mubr.bf16.mxu0 %v4500
        %5962 = vmatmul.mubr.bf16.gmra.mxu0 %v4499
        %v5963 = vpop.f32.mrf.mxu0
        %v5964 = vadd.f32 %v4662, %v5963
        %v5965 = vpop.f32.mrf.mxu0
        %v5966 = vpop.f32.mrf.mxu0
        %v5967 = vadd.f32 %v4662, %v5966
        %v5968 = vpop.f32.mrf.mxu0
        %5969 = vmatprep.mubr.bf16.mxu0 %v4502
        %5970 = vmatmul.mubr.bf16.gmra.mxu0 %v4501
        %v5971 = vpop.f32.mrf.mxu0
        %v5972 = vadd.f32 %v4662, %v5971
        %v5973 = vpop.f32.mrf.mxu0
        %v5974 = vpop.f32.mrf.mxu0
        %v5975 = vadd.f32 %v4662, %v5974
        %v5976 = vpop.f32.mrf.mxu0
        %5977 = vmatprep.mubr.bf16.mxu0 %v4504
        %5978 = vmatmul.mubr.bf16.gmra.mxu0 %v4503
        %v5979 = vpop.f32.mrf.mxu0
        %v5980 = vadd.f32 %v4662, %v5979
        %v5981 = vpop.f32.mrf.mxu0
        %v5982 = vpop.f32.mrf.mxu0
        %v5983 = vadd.f32 %v4662, %v5982
        %v5984 = vpop.f32.mrf.mxu0
        %5985 = vdwg.mxu0
        %v5986 = vsub.f32 0.0, %v5281
        %v5987 = vsub.f32 0.0, %v5283
        %v5988 = vsub.f32 0.0, %v5474
        %v5989 = vsub.f32 0.0, %v5476
        %v5990 = vsub.f32 0.0, %v5667
        %v5991 = vsub.f32 0.0, %v5669
        %v5992 = vsub.f32 0.0, %v5860
        %v5993 = vsub.f32 0.0, %v5285
        %v5994 = vsub.f32 0.0, %v5287
        %v5995 = vsub.f32 0.0, %v5478
        %v5996 = vsub.f32 0.0, %v5480
        %v5997 = vsub.f32 0.0, %v5671
        %v5998 = vsub.f32 0.0, %v5673
        %v5999 = vsub.f32 0.0, %v5863
        %v6000 = vsub.f32 0.0, %v5291
        %v6001 = vsub.f32 0.0, %v5293
        %v6002 = vsub.f32 0.0, %v5484
        %v6003 = vsub.f32 0.0, %v5486
        %v6004 = vsub.f32 0.0, %v5677
        %v6005 = vsub.f32 0.0, %v5679
        %v6006 = vsub.f32 0.0, %v5868
        %v6007 = vsub.f32 0.0, %v5295
        %v6008 = vsub.f32 0.0, %v5297
        %v6009 = vsub.f32 0.0, %v5488
        %v6010 = vsub.f32 0.0, %v5490
        %v6011 = vsub.f32 0.0, %v5681
        %v6012 = vsub.f32 0.0, %v5683
        %v6013 = vsub.f32 0.0, %v5871
        %v6014 = vsub.f32 0.0, %v5301
        %v6015 = vsub.f32 0.0, %v5303
        %v6016 = vsub.f32 0.0, %v5494
        %v6017 = vsub.f32 0.0, %v5496
        %v6018 = vsub.f32 0.0, %v5687
        %v6019 = vsub.f32 0.0, %v5689
        %v6020 = vsub.f32 0.0, %v5876
        %v6021 = vsub.f32 0.0, %v5305
        %v6022 = vsub.f32 0.0, %v5307
        %v6023 = vsub.f32 0.0, %v5498
        %v6024 = vsub.f32 0.0, %v5500
        %v6025 = vsub.f32 0.0, %v5691
        %v6026 = vsub.f32 0.0, %v5693
        %v6027 = vsub.f32 0.0, %v5879
        %v6028 = vsub.f32 0.0, %v5311
        %v6029 = vsub.f32 0.0, %v5313
        %v6030 = vsub.f32 0.0, %v5504
        %v6031 = vsub.f32 0.0, %v5506
        %v6032 = vsub.f32 0.0, %v5697
        %v6033 = vsub.f32 0.0, %v5699
        %v6034 = vsub.f32 0.0, %v5884
        %v6035 = vsub.f32 0.0, %v5315
        %v6036 = vsub.f32 0.0, %v5317
        %v6037 = vsub.f32 0.0, %v5508
        %v6038 = vsub.f32 0.0, %v5510
        %v6039 = vsub.f32 0.0, %v5701
        %v6040 = vsub.f32 0.0, %v5703
        %v6041 = vsub.f32 0.0, %v5887
        %v6042 = vsub.f32 0.0, %v5321
        %v6043 = vsub.f32 0.0, %v5323
        %v6044 = vsub.f32 0.0, %v5514
        %v6045 = vsub.f32 0.0, %v5516
        %v6046 = vsub.f32 0.0, %v5707
        %v6047 = vsub.f32 0.0, %v5709
        %v6048 = vsub.f32 0.0, %v5892
        %v6049 = vsub.f32 0.0, %v5325
        %v6050 = vsub.f32 0.0, %v5327
        %v6051 = vsub.f32 0.0, %v5518
        %v6052 = vsub.f32 0.0, %v5520
        %v6053 = vsub.f32 0.0, %v5711
        %v6054 = vsub.f32 0.0, %v5713
        %v6055 = vsub.f32 0.0, %v5895
        %v6056 = vsub.f32 0.0, %v5331
        %v6057 = vsub.f32 0.0, %v5333
        %v6058 = vsub.f32 0.0, %v5524
        %v6059 = vsub.f32 0.0, %v5526
        %v6060 = vsub.f32 0.0, %v5717
        %v6061 = vsub.f32 0.0, %v5719
        %v6062 = vsub.f32 0.0, %v5900
        %v6063 = vsub.f32 0.0, %v5335
        %v6064 = vsub.f32 0.0, %v5337
        %v6065 = vsub.f32 0.0, %v5528
        %v6066 = vsub.f32 0.0, %v5530
        %v6067 = vsub.f32 0.0, %v5721
        %v6068 = vsub.f32 0.0, %v5723
        %v6069 = vsub.f32 0.0, %v5903
        %v6070 = vsub.f32 0.0, %v5341
        %v6071 = vsub.f32 0.0, %v5343
        %v6072 = vsub.f32 0.0, %v5534
        %v6073 = vsub.f32 0.0, %v5536
        %v6074 = vsub.f32 0.0, %v5727
        %v6075 = vsub.f32 0.0, %v5729
        %v6076 = vsub.f32 0.0, %v5908
        %v6077 = vsub.f32 0.0, %v5345
        %v6078 = vsub.f32 0.0, %v5347
        %v6079 = vsub.f32 0.0, %v5538
        %v6080 = vsub.f32 0.0, %v5540
        %v6081 = vsub.f32 0.0, %v5731
        %v6082 = vsub.f32 0.0, %v5733
        %v6083 = vsub.f32 0.0, %v5911
        %v6084 = vsub.f32 0.0, %v5351
        %v6085 = vsub.f32 0.0, %v5353
        %v6086 = vsub.f32 0.0, %v5544
        %v6087 = vsub.f32 0.0, %v5546
        %v6088 = vsub.f32 0.0, %v5737
        %v6089 = vsub.f32 0.0, %v5739
        %v6090 = vsub.f32 0.0, %v5916
        %v6091 = vsub.f32 0.0, %v5355
        %v6092 = vsub.f32 0.0, %v5357
        %v6093 = vsub.f32 0.0, %v5548
        %v6094 = vsub.f32 0.0, %v5550
        %v6095 = vsub.f32 0.0, %v5741
        %v6096 = vsub.f32 0.0, %v5743
        %v6097 = vsub.f32 0.0, %v5919
        %v6098 = vsub.f32 0.0, %v5361
        %v6099 = vsub.f32 0.0, %v5363
        %v6100 = vsub.f32 0.0, %v5554
        %v6101 = vsub.f32 0.0, %v5556
        %v6102 = vsub.f32 0.0, %v5747
        %v6103 = vsub.f32 0.0, %v5749
        %v6104 = vsub.f32 0.0, %v5924
        %v6105 = vsub.f32 0.0, %v5365
        %v6106 = vsub.f32 0.0, %v5367
        %v6107 = vsub.f32 0.0, %v5558
        %v6108 = vsub.f32 0.0, %v5560
        %v6109 = vsub.f32 0.0, %v5751
        %v6110 = vsub.f32 0.0, %v5753
        %v6111 = vsub.f32 0.0, %v5927
        %v6112 = vsub.f32 0.0, %v5371
        %v6113 = vsub.f32 0.0, %v5373
        %v6114 = vsub.f32 0.0, %v5564
        %v6115 = vsub.f32 0.0, %v5566
        %v6116 = vsub.f32 0.0, %v5757
        %v6117 = vsub.f32 0.0, %v5759
        %v6118 = vsub.f32 0.0, %v5932
        %v6119 = vsub.f32 0.0, %v5375
        %v6120 = vsub.f32 0.0, %v5377
        %v6121 = vsub.f32 0.0, %v5568
        %v6122 = vsub.f32 0.0, %v5570
        %v6123 = vsub.f32 0.0, %v5761
        %v6124 = vsub.f32 0.0, %v5763
        %v6125 = vsub.f32 0.0, %v5935
        %v6126 = vsub.f32 0.0, %v5381
        %v6127 = vsub.f32 0.0, %v5383
        %v6128 = vsub.f32 0.0, %v5574
        %v6129 = vsub.f32 0.0, %v5576
        %v6130 = vsub.f32 0.0, %v5767
        %v6131 = vsub.f32 0.0, %v5769
        %v6132 = vsub.f32 0.0, %v5940
        %v6133 = vsub.f32 0.0, %v5385
        %v6134 = vsub.f32 0.0, %v5387
        %v6135 = vsub.f32 0.0, %v5578
        %v6136 = vsub.f32 0.0, %v5580
        %v6137 = vsub.f32 0.0, %v5771
        %v6138 = vsub.f32 0.0, %v5773
        %v6139 = vsub.f32 0.0, %v5943
        %v6140 = vsub.f32 0.0, %v5391
        %v6141 = vsub.f32 0.0, %v5393
        %v6142 = vsub.f32 0.0, %v5584
        %v6143 = vsub.f32 0.0, %v5586
        %v6144 = vsub.f32 0.0, %v5777
        %v6145 = vsub.f32 0.0, %v5779
        %v6146 = vsub.f32 0.0, %v5948
        %v6147 = vsub.f32 0.0, %v5395
        %v6148 = vsub.f32 0.0, %v5397
        %v6149 = vsub.f32 0.0, %v5588
        %v6150 = vsub.f32 0.0, %v5590
        %v6151 = vsub.f32 0.0, %v5781
        %v6152 = vsub.f32 0.0, %v5783
        %v6153 = vsub.f32 0.0, %v5951
        %v6154 = vsub.f32 0.0, %v5401
        %v6155 = vsub.f32 0.0, %v5403
        %v6156 = vsub.f32 0.0, %v5594
        %v6157 = vsub.f32 0.0, %v5596
        %v6158 = vsub.f32 0.0, %v5787
        %v6159 = vsub.f32 0.0, %v5789
        %v6160 = vsub.f32 0.0, %v5956
        %v6161 = vsub.f32 0.0, %v5405
        %v6162 = vsub.f32 0.0, %v5407
        %v6163 = vsub.f32 0.0, %v5598
        %v6164 = vsub.f32 0.0, %v5600
        %v6165 = vsub.f32 0.0, %v5791
        %v6166 = vsub.f32 0.0, %v5793
        %v6167 = vsub.f32 0.0, %v5959
        %v6168 = vsub.f32 0.0, %v5411
        %v6169 = vsub.f32 0.0, %v5413
        %v6170 = vsub.f32 0.0, %v5604
        %v6171 = vsub.f32 0.0, %v5606
        %v6172 = vsub.f32 0.0, %v5797
        %v6173 = vsub.f32 0.0, %v5799
        %v6174 = vsub.f32 0.0, %v5964
        %v6175 = vsub.f32 0.0, %v5415
        %v6176 = vsub.f32 0.0, %v5417
        %v6177 = vsub.f32 0.0, %v5608
        %v6178 = vsub.f32 0.0, %v5610
        %v6179 = vsub.f32 0.0, %v5801
        %v6180 = vsub.f32 0.0, %v5803
        %v6181 = vsub.f32 0.0, %v5967
        %v6182 = vsub.f32 0.0, %v5421
        %v6183 = vsub.f32 0.0, %v5423
        %v6184 = vsub.f32 0.0, %v5614
        %v6185 = vsub.f32 0.0, %v5616
        %v6186 = vsub.f32 0.0, %v5807
        %v6187 = vsub.f32 0.0, %v5809
        %v6188 = vsub.f32 0.0, %v5972
        %v6189 = vsub.f32 0.0, %v5425
        %v6190 = vsub.f32 0.0, %v5427
        %v6191 = vsub.f32 0.0, %v5618
        %v6192 = vsub.f32 0.0, %v5620
        %v6193 = vsub.f32 0.0, %v5811
        %v6194 = vsub.f32 0.0, %v5813
        %v6195 = vsub.f32 0.0, %v5975
        %v6196 = vsub.f32 0.0, %v5431
        %v6197 = vsub.f32 0.0, %v5433
        %v6198 = vsub.f32 0.0, %v5624
        %v6199 = vsub.f32 0.0, %v5626
        %v6200 = vsub.f32 0.0, %v5817
        %v6201 = vsub.f32 0.0, %v5819
        %v6202 = vsub.f32 0.0, %v5980
        %v6203 = vsub.f32 0.0, %v5435
        %v6204 = vsub.f32 0.0, %v5437
        %v6205 = vsub.f32 0.0, %v5628
        %v6206 = vsub.f32 0.0, %v5630
        %v6207 = vsub.f32 0.0, %v5821
        %v6208 = vsub.f32 0.0, %v5823
        %v6209 = vsub.f32 0.0, %v5983
        %v6210 = vmul.f32 %v5986, 1.442695
        %v6211 = vpow.pop %v6210
        %v6212 = vmul.f32 %v5987, 1.442695
        %v6213 = vpow.pop %v6212
        %v6214 = vmul.f32 %v5988, 1.442695
        %v6215 = vpow.pop %v6214
        %v6216 = vmul.f32 %v5989, 1.442695
        %v6217 = vpow.pop %v6216
        %v6218 = vmul.f32 %v5990, 1.442695
        %v6219 = vpow.pop %v6218
        %v6220 = vmul.f32 %v5991, 1.442695
        %v6221 = vpow.pop %v6220
        %v6222 = vmul.f32 %v5992, 1.442695
        %v6223 = vpow.pop %v6222
        %v6224 = vmul.f32 %v5993, 1.442695
        %v6225 = vpow.pop %v6224
        %v6226 = vmul.f32 %v5994, 1.442695
        %v6227 = vpow.pop %v6226
        %v6228 = vmul.f32 %v5995, 1.442695
        %v6229 = vpow.pop %v6228
        %v6230 = vmul.f32 %v5996, 1.442695
        %v6231 = vpow.pop %v6230
        %v6232 = vmul.f32 %v5997, 1.442695
        %v6233 = vpow.pop %v6232
        %v6234 = vmul.f32 %v5998, 1.442695
        %v6235 = vpow.pop %v6234
        %v6236 = vmul.f32 %v5999, 1.442695
        %v6237 = vpow.pop %v6236
        %v6238 = vmul.f32 %v6000, 1.442695
        %v6239 = vpow.pop %v6238
        %v6240 = vmul.f32 %v6001, 1.442695
        %v6241 = vpow.pop %v6240
        %v6242 = vmul.f32 %v6002, 1.442695
        %v6243 = vpow.pop %v6242
        %v6244 = vmul.f32 %v6003, 1.442695
        %v6245 = vpow.pop %v6244
        %v6246 = vmul.f32 %v6004, 1.442695
        %v6247 = vpow.pop %v6246
        %v6248 = vmul.f32 %v6005, 1.442695
        %v6249 = vpow.pop %v6248
        %v6250 = vmul.f32 %v6006, 1.442695
        %v6251 = vpow.pop %v6250
        %v6252 = vmul.f32 %v6007, 1.442695
        %v6253 = vpow.pop %v6252
        %v6254 = vmul.f32 %v6008, 1.442695
        %v6255 = vpow.pop %v6254
        %v6256 = vmul.f32 %v6009, 1.442695
        %v6257 = vpow.pop %v6256
        %v6258 = vmul.f32 %v6010, 1.442695
        %v6259 = vpow.pop %v6258
        %v6260 = vmul.f32 %v6011, 1.442695
        %v6261 = vpow.pop %v6260
        %v6262 = vmul.f32 %v6012, 1.442695
        %v6263 = vpow.pop %v6262
        %v6264 = vmul.f32 %v6013, 1.442695
        %v6265 = vpow.pop %v6264
        %v6266 = vmul.f32 %v6014, 1.442695
        %v6267 = vpow.pop %v6266
        %v6268 = vmul.f32 %v6015, 1.442695
        %v6269 = vpow.pop %v6268
        %v6270 = vmul.f32 %v6016, 1.442695
        %v6271 = vpow.pop %v6270
        %v6272 = vmul.f32 %v6017, 1.442695
        %v6273 = vpow.pop %v6272
        %v6274 = vmul.f32 %v6018, 1.442695
        %v6275 = vpow.pop %v6274
        %v6276 = vmul.f32 %v6019, 1.442695
        %v6277 = vpow.pop %v6276
        %v6278 = vmul.f32 %v6020, 1.442695
        %v6279 = vpow.pop %v6278
        %v6280 = vmul.f32 %v6021, 1.442695
        %v6281 = vpow.pop %v6280
        %v6282 = vmul.f32 %v6022, 1.442695
        %v6283 = vpow.pop %v6282
        %v6284 = vmul.f32 %v6023, 1.442695
        %v6285 = vpow.pop %v6284
        %v6286 = vmul.f32 %v6024, 1.442695
        %v6287 = vpow.pop %v6286
        %v6288 = vmul.f32 %v6025, 1.442695
        %v6289 = vpow.pop %v6288
        %v6290 = vmul.f32 %v6026, 1.442695
        %v6291 = vpow.pop %v6290
        %v6292 = vmul.f32 %v6027, 1.442695
        %v6293 = vpow.pop %v6292
        %v6294 = vmul.f32 %v6028, 1.442695
        %v6295 = vpow.pop %v6294
        %v6296 = vmul.f32 %v6029, 1.442695
        %v6297 = vpow.pop %v6296
        %v6298 = vmul.f32 %v6030, 1.442695
        %v6299 = vpow.pop %v6298
        %v6300 = vmul.f32 %v6031, 1.442695
        %v6301 = vpow.pop %v6300
        %v6302 = vmul.f32 %v6032, 1.442695
        %v6303 = vpow.pop %v6302
        %v6304 = vmul.f32 %v6033, 1.442695
        %v6305 = vpow.pop %v6304
        %v6306 = vmul.f32 %v6034, 1.442695
        %v6307 = vpow.pop %v6306
        %v6308 = vmul.f32 %v6035, 1.442695
        %v6309 = vpow.pop %v6308
        %v6310 = vmul.f32 %v6036, 1.442695
        %v6311 = vpow.pop %v6310
        %v6312 = vmul.f32 %v6037, 1.442695
        %v6313 = vpow.pop %v6312
        %v6314 = vmul.f32 %v6038, 1.442695
        %v6315 = vpow.pop %v6314
        %v6316 = vmul.f32 %v6039, 1.442695
        %v6317 = vpow.pop %v6316
        %v6318 = vmul.f32 %v6040, 1.442695
        %v6319 = vpow.pop %v6318
        %v6320 = vmul.f32 %v6041, 1.442695
        %v6321 = vpow.pop %v6320
        %v6322 = vmul.f32 %v6042, 1.442695
        %v6323 = vpow.pop %v6322
        %v6324 = vmul.f32 %v6043, 1.442695
        %v6325 = vpow.pop %v6324
        %v6326 = vmul.f32 %v6044, 1.442695
        %v6327 = vpow.pop %v6326
        %v6328 = vmul.f32 %v6045, 1.442695
        %v6329 = vpow.pop %v6328
        %v6330 = vmul.f32 %v6046, 1.442695
        %v6331 = vpow.pop %v6330
        %v6332 = vmul.f32 %v6047, 1.442695
        %v6333 = vpow.pop %v6332
        %v6334 = vmul.f32 %v6048, 1.442695
        %v6335 = vpow.pop %v6334
        %v6336 = vmul.f32 %v6049, 1.442695
        %v6337 = vpow.pop %v6336
        %v6338 = vmul.f32 %v6050, 1.442695
        %v6339 = vpow.pop %v6338
        %v6340 = vmul.f32 %v6051, 1.442695
        %v6341 = vpow.pop %v6340
        %v6342 = vmul.f32 %v6052, 1.442695
        %v6343 = vpow.pop %v6342
        %v6344 = vmul.f32 %v6053, 1.442695
        %v6345 = vpow.pop %v6344
        %v6346 = vmul.f32 %v6054, 1.442695
        %v6347 = vpow.pop %v6346
        %v6348 = vmul.f32 %v6055, 1.442695
        %v6349 = vpow.pop %v6348
        %v6350 = vmul.f32 %v6056, 1.442695
        %v6351 = vpow.pop %v6350
        %v6352 = vmul.f32 %v6057, 1.442695
        %v6353 = vpow.pop %v6352
        %v6354 = vmul.f32 %v6058, 1.442695
        %v6355 = vpow.pop %v6354
        %v6356 = vmul.f32 %v6059, 1.442695
        %v6357 = vpow.pop %v6356
        %v6358 = vmul.f32 %v6060, 1.442695
        %v6359 = vpow.pop %v6358
        %v6360 = vmul.f32 %v6061, 1.442695
        %v6361 = vpow.pop %v6360
        %v6362 = vmul.f32 %v6062, 1.442695
        %v6363 = vpow.pop %v6362
        %v6364 = vmul.f32 %v6063, 1.442695
        %v6365 = vpow.pop %v6364
        %v6366 = vmul.f32 %v6064, 1.442695
        %v6367 = vpow.pop %v6366
        %v6368 = vmul.f32 %v6065, 1.442695
        %v6369 = vpow.pop %v6368
        %v6370 = vmul.f32 %v6066, 1.442695
        %v6371 = vpow.pop %v6370
        %v6372 = vmul.f32 %v6067, 1.442695
        %v6373 = vpow.pop %v6372
        %v6374 = vmul.f32 %v6068, 1.442695
        %v6375 = vpow.pop %v6374
        %v6376 = vmul.f32 %v6069, 1.442695
        %v6377 = vpow.pop %v6376
        %v6378 = vmul.f32 %v6070, 1.442695
        %v6379 = vpow.pop %v6378
        %v6380 = vmul.f32 %v6071, 1.442695
        %v6381 = vpow.pop %v6380
        %v6382 = vmul.f32 %v6072, 1.442695
        %v6383 = vpow.pop %v6382
        %v6384 = vmul.f32 %v6073, 1.442695
        %v6385 = vpow.pop %v6384
        %v6386 = vmul.f32 %v6074, 1.442695
        %v6387 = vpow.pop %v6386
        %v6388 = vmul.f32 %v6075, 1.442695
        %v6389 = vpow.pop %v6388
        %v6390 = vmul.f32 %v6076, 1.442695
        %v6391 = vpow.pop %v6390
        %v6392 = vmul.f32 %v6077, 1.442695
        %v6393 = vpow.pop %v6392
        %v6394 = vmul.f32 %v6078, 1.442695
        %v6395 = vpow.pop %v6394
        %v6396 = vmul.f32 %v6079, 1.442695
        %v6397 = vpow.pop %v6396
        %v6398 = vmul.f32 %v6080, 1.442695
        %v6399 = vpow.pop %v6398
        %v6400 = vmul.f32 %v6081, 1.442695
        %v6401 = vpow.pop %v6400
        %v6402 = vmul.f32 %v6082, 1.442695
        %v6403 = vpow.pop %v6402
        %v6404 = vmul.f32 %v6083, 1.442695
        %v6405 = vpow.pop %v6404
        %v6406 = vmul.f32 %v6084, 1.442695
        %v6407 = vpow.pop %v6406
        %v6408 = vmul.f32 %v6085, 1.442695
        %v6409 = vpow.pop %v6408
        %v6410 = vmul.f32 %v6086, 1.442695
        %v6411 = vpow.pop %v6410
        %v6412 = vmul.f32 %v6087, 1.442695
        %v6413 = vpow.pop %v6412
        %v6414 = vmul.f32 %v6088, 1.442695
        %v6415 = vpow.pop %v6414
        %v6416 = vmul.f32 %v6089, 1.442695
        %v6417 = vpow.pop %v6416
        %v6418 = vmul.f32 %v6090, 1.442695
        %v6419 = vpow.pop %v6418
        %v6420 = vmul.f32 %v6091, 1.442695
        %v6421 = vpow.pop %v6420
        %v6422 = vmul.f32 %v6092, 1.442695
        %v6423 = vpow.pop %v6422
        %v6424 = vmul.f32 %v6093, 1.442695
        %v6425 = vpow.pop %v6424
        %v6426 = vmul.f32 %v6094, 1.442695
        %v6427 = vpow.pop %v6426
        %v6428 = vmul.f32 %v6095, 1.442695
        %v6429 = vpow.pop %v6428
        %v6430 = vmul.f32 %v6096, 1.442695
        %v6431 = vpow.pop %v6430
        %v6432 = vmul.f32 %v6097, 1.442695
        %v6433 = vpow.pop %v6432
        %v6434 = vmul.f32 %v6098, 1.442695
        %v6435 = vpow.pop %v6434
        %v6436 = vmul.f32 %v6099, 1.442695
        %v6437 = vpow.pop %v6436
        %v6438 = vmul.f32 %v6100, 1.442695
        %v6439 = vpow.pop %v6438
        %v6440 = vmul.f32 %v6101, 1.442695
        %v6441 = vpow.pop %v6440
        %v6442 = vmul.f32 %v6102, 1.442695
        %v6443 = vpow.pop %v6442
        %v6444 = vmul.f32 %v6103, 1.442695
        %v6445 = vpow.pop %v6444
        %v6446 = vmul.f32 %v6104, 1.442695
        %v6447 = vpow.pop %v6446
        %v6448 = vmul.f32 %v6105, 1.442695
        %v6449 = vpow.pop %v6448
        %v6450 = vmul.f32 %v6106, 1.442695
        %v6451 = vpow.pop %v6450
        %v6452 = vmul.f32 %v6107, 1.442695
        %v6453 = vpow.pop %v6452
        %v6454 = vmul.f32 %v6108, 1.442695
        %v6455 = vpow.pop %v6454
        %v6456 = vmul.f32 %v6109, 1.442695
        %v6457 = vpow.pop %v6456
        %v6458 = vmul.f32 %v6110, 1.442695
        %v6459 = vpow.pop %v6458
        %v6460 = vmul.f32 %v6111, 1.442695
        %v6461 = vpow.pop %v6460
        %v6462 = vmul.f32 %v6112, 1.442695
        %v6463 = vpow.pop %v6462
        %v6464 = vmul.f32 %v6113, 1.442695
        %v6465 = vpow.pop %v6464
        %v6466 = vmul.f32 %v6114, 1.442695
        %v6467 = vpow.pop %v6466
        %v6468 = vmul.f32 %v6115, 1.442695
        %v6469 = vpow.pop %v6468
        %v6470 = vmul.f32 %v6116, 1.442695
        %v6471 = vpow.pop %v6470
        %v6472 = vmul.f32 %v6117, 1.442695
        %v6473 = vpow.pop %v6472
        %v6474 = vmul.f32 %v6118, 1.442695
        %v6475 = vpow.pop %v6474
        %v6476 = vmul.f32 %v6119, 1.442695
        %v6477 = vpow.pop %v6476
        %v6478 = vmul.f32 %v6120, 1.442695
        %v6479 = vpow.pop %v6478
        %v6480 = vmul.f32 %v6121, 1.442695
        %v6481 = vpow.pop %v6480
        %v6482 = vmul.f32 %v6122, 1.442695
        %v6483 = vpow.pop %v6482
        %v6484 = vmul.f32 %v6123, 1.442695
        %v6485 = vpow.pop %v6484
        %v6486 = vmul.f32 %v6124, 1.442695
        %v6487 = vpow.pop %v6486
        %v6488 = vmul.f32 %v6125, 1.442695
        %v6489 = vpow.pop %v6488
        %v6490 = vmul.f32 %v6126, 1.442695
        %v6491 = vpow.pop %v6490
        %v6492 = vmul.f32 %v6127, 1.442695
        %v6493 = vpow.pop %v6492
        %v6494 = vmul.f32 %v6128, 1.442695
        %v6495 = vpow.pop %v6494
        %v6496 = vmul.f32 %v6129, 1.442695
        %v6497 = vpow.pop %v6496
        %v6498 = vmul.f32 %v6130, 1.442695
        %v6499 = vpow.pop %v6498
        %v6500 = vmul.f32 %v6131, 1.442695
        %v6501 = vpow.pop %v6500
        %v6502 = vmul.f32 %v6132, 1.442695
        %v6503 = vpow.pop %v6502
        %v6504 = vmul.f32 %v6133, 1.442695
        %v6505 = vpow.pop %v6504
        %v6506 = vmul.f32 %v6134, 1.442695
        %v6507 = vpow.pop %v6506
        %v6508 = vmul.f32 %v6135, 1.442695
        %v6509 = vpow.pop %v6508
        %v6510 = vmul.f32 %v6136, 1.442695
        %v6511 = vpow.pop %v6510
        %v6512 = vmul.f32 %v6137, 1.442695
        %v6513 = vpow.pop %v6512
        %v6514 = vmul.f32 %v6138, 1.442695
        %v6515 = vpow.pop %v6514
        %v6516 = vmul.f32 %v6139, 1.442695
        %v6517 = vpow.pop %v6516
        %v6518 = vmul.f32 %v6140, 1.442695
        %v6519 = vpow.pop %v6518
        %v6520 = vmul.f32 %v6141, 1.442695
        %v6521 = vpow.pop %v6520
        %v6522 = vmul.f32 %v6142, 1.442695
        %v6523 = vpow.pop %v6522
        %v6524 = vmul.f32 %v6143, 1.442695
        %v6525 = vpow.pop %v6524
        %v6526 = vmul.f32 %v6144, 1.442695
        %v6527 = vpow.pop %v6526
        %v6528 = vmul.f32 %v6145, 1.442695
        %v6529 = vpow.pop %v6528
        %v6530 = vmul.f32 %v6146, 1.442695
        %v6531 = vpow.pop %v6530
        %v6532 = vmul.f32 %v6147, 1.442695
        %v6533 = vpow.pop %v6532
        %v6534 = vmul.f32 %v6148, 1.442695
        %v6535 = vpow.pop %v6534
        %v6536 = vmul.f32 %v6149, 1.442695
        %v6537 = vpow.pop %v6536
        %v6538 = vmul.f32 %v6150, 1.442695
        %v6539 = vpow.pop %v6538
        %v6540 = vmul.f32 %v6151, 1.442695
        %v6541 = vpow.pop %v6540
        %v6542 = vmul.f32 %v6152, 1.442695
        %v6543 = vpow.pop %v6542
        %v6544 = vmul.f32 %v6153, 1.442695
        %v6545 = vpow.pop %v6544
        %v6546 = vmul.f32 %v6154, 1.442695
        %v6547 = vpow.pop %v6546
        %v6548 = vmul.f32 %v6155, 1.442695
        %v6549 = vpow.pop %v6548
        %v6550 = vmul.f32 %v6156, 1.442695
        %v6551 = vpow.pop %v6550
        %v6552 = vmul.f32 %v6157, 1.442695
        %v6553 = vpow.pop %v6552
        %v6554 = vmul.f32 %v6158, 1.442695
        %v6555 = vpow.pop %v6554
        %v6556 = vmul.f32 %v6159, 1.442695
        %v6557 = vpow.pop %v6556
        %v6558 = vmul.f32 %v6160, 1.442695
        %v6559 = vpow.pop %v6558
        %v6560 = vmul.f32 %v6161, 1.442695
        %v6561 = vpow.pop %v6560
        %v6562 = vmul.f32 %v6162, 1.442695
        %v6563 = vpow.pop %v6562
        %v6564 = vmul.f32 %v6163, 1.442695
        %v6565 = vpow.pop %v6564
        %v6566 = vmul.f32 %v6164, 1.442695
        %v6567 = vpow.pop %v6566
        %v6568 = vmul.f32 %v6165, 1.442695
        %v6569 = vpow.pop %v6568
        %v6570 = vmul.f32 %v6166, 1.442695
        %v6571 = vpow.pop %v6570
        %v6572 = vmul.f32 %v6167, 1.442695
        %v6573 = vpow.pop %v6572
        %v6574 = vmul.f32 %v6168, 1.442695
        %v6575 = vpow.pop %v6574
        %v6576 = vmul.f32 %v6169, 1.442695
        %v6577 = vpow.pop %v6576
        %v6578 = vmul.f32 %v6170, 1.442695
        %v6579 = vpow.pop %v6578
        %v6580 = vmul.f32 %v6171, 1.442695
        %v6581 = vpow.pop %v6580
        %v6582 = vmul.f32 %v6172, 1.442695
        %v6583 = vpow.pop %v6582
        %v6584 = vmul.f32 %v6173, 1.442695
        %v6585 = vpow.pop %v6584
        %v6586 = vmul.f32 %v6174, 1.442695
        %v6587 = vpow.pop %v6586
        %v6588 = vmul.f32 %v6175, 1.442695
        %v6589 = vpow.pop %v6588
        %v6590 = vmul.f32 %v6176, 1.442695
        %v6591 = vpow.pop %v6590
        %v6592 = vmul.f32 %v6177, 1.442695
        %v6593 = vpow.pop %v6592
        %v6594 = vmul.f32 %v6178, 1.442695
        %v6595 = vpow.pop %v6594
        %v6596 = vmul.f32 %v6179, 1.442695
        %v6597 = vpow.pop %v6596
        %v6598 = vmul.f32 %v6180, 1.442695
        %v6599 = vpow.pop %v6598
        %v6600 = vmul.f32 %v6181, 1.442695
        %v6601 = vpow.pop %v6600
        %v6602 = vmul.f32 %v6182, 1.442695
        %v6603 = vpow.pop %v6602
        %v6604 = vmul.f32 %v6183, 1.442695
        %v6605 = vpow.pop %v6604
        %v6606 = vmul.f32 %v6184, 1.442695
        %v6607 = vpow.pop %v6606
        %v6608 = vmul.f32 %v6185, 1.442695
        %v6609 = vpow.pop %v6608
        %v6610 = vmul.f32 %v6186, 1.442695
        %v6611 = vpow.pop %v6610
        %v6612 = vmul.f32 %v6187, 1.442695
        %v6613 = vpow.pop %v6612
        %v6614 = vmul.f32 %v6188, 1.442695
        %v6615 = vpow.pop %v6614
        %v6616 = vmul.f32 %v6189, 1.442695
        %v6617 = vpow.pop %v6616
        %v6618 = vmul.f32 %v6190, 1.442695
        %v6619 = vpow.pop %v6618
        %v6620 = vmul.f32 %v6191, 1.442695
        %v6621 = vpow.pop %v6620
        %v6622 = vmul.f32 %v6192, 1.442695
        %v6623 = vpow.pop %v6622
        %v6624 = vmul.f32 %v6193, 1.442695
        %v6625 = vpow.pop %v6624
        %v6626 = vmul.f32 %v6194, 1.442695
        %v6627 = vpow.pop %v6626
        %v6628 = vmul.f32 %v6195, 1.442695
        %v6629 = vpow.pop %v6628
        %v6630 = vmul.f32 %v6196, 1.442695
        %v6631 = vpow.pop %v6630
        %v6632 = vmul.f32 %v6197, 1.442695
        %v6633 = vpow.pop %v6632
        %v6634 = vmul.f32 %v6198, 1.442695
        %v6635 = vpow.pop %v6634
        %v6636 = vmul.f32 %v6199, 1.442695
        %v6637 = vpow.pop %v6636
        %v6638 = vmul.f32 %v6200, 1.442695
        %v6639 = vpow.pop %v6638
        %v6640 = vmul.f32 %v6201, 1.442695
        %v6641 = vpow.pop %v6640
        %v6642 = vmul.f32 %v6202, 1.442695
        %v6643 = vpow.pop %v6642
        %v6644 = vmul.f32 %v6203, 1.442695
        %v6645 = vpow.pop %v6644
        %v6646 = vmul.f32 %v6204, 1.442695
        %v6647 = vpow.pop %v6646
        %v6648 = vmul.f32 %v6205, 1.442695
        %v6649 = vpow.pop %v6648
        %v6650 = vmul.f32 %v6206, 1.442695
        %v6651 = vpow.pop %v6650
        %v6652 = vmul.f32 %v6207, 1.442695
        %v6653 = vpow.pop %v6652
        %v6654 = vmul.f32 %v6208, 1.442695
        %v6655 = vpow.pop %v6654
        %v6656 = vmul.f32 %v6209, 1.442695
        %v6657 = vpow.pop %v6656
        %v6658 = vadd.f32 %v6211, 1.0
        %v6659 = vadd.f32 %v6213, 1.0
        %v6660 = vadd.f32 %v6215, 1.0
        %v6661 = vadd.f32 %v6217, 1.0
        %v6662 = vadd.f32 %v6219, 1.0
        %v6663 = vadd.f32 %v6221, 1.0
        %v6664 = vadd.f32 %v6223, 1.0
        %v6665 = vadd.f32 %v6225, 1.0
        %v6666 = vadd.f32 %v6227, 1.0
        %v6667 = vadd.f32 %v6229, 1.0
        %v6668 = vadd.f32 %v6231, 1.0
        %v6669 = vadd.f32 %v6233, 1.0
        %v6670 = vadd.f32 %v6235, 1.0
        %v6671 = vadd.f32 %v6237, 1.0
        %v6672 = vadd.f32 %v6239, 1.0
        %v6673 = vadd.f32 %v6241, 1.0
        %v6674 = vadd.f32 %v6243, 1.0
        %v6675 = vadd.f32 %v6245, 1.0
        %v6676 = vadd.f32 %v6247, 1.0
        %v6677 = vadd.f32 %v6249, 1.0
        %v6678 = vadd.f32 %v6251, 1.0
        %v6679 = vadd.f32 %v6253, 1.0
        %v6680 = vadd.f32 %v6255, 1.0
        %v6681 = vadd.f32 %v6257, 1.0
        %v6682 = vadd.f32 %v6259, 1.0
        %v6683 = vadd.f32 %v6261, 1.0
        %v6684 = vadd.f32 %v6263, 1.0
        %v6685 = vadd.f32 %v6265, 1.0
        %v6686 = vadd.f32 %v6267, 1.0
        %v6687 = vadd.f32 %v6269, 1.0
        %v6688 = vadd.f32 %v6271, 1.0
        %v6689 = vadd.f32 %v6273, 1.0
        %v6690 = vadd.f32 %v6275, 1.0
        %v6691 = vadd.f32 %v6277, 1.0
        %v6692 = vadd.f32 %v6279, 1.0
        %v6693 = vadd.f32 %v6281, 1.0
        %v6694 = vadd.f32 %v6283, 1.0
        %v6695 = vadd.f32 %v6285, 1.0
        %v6696 = vadd.f32 %v6287, 1.0
        %v6697 = vadd.f32 %v6289, 1.0
        %v6698 = vadd.f32 %v6291, 1.0
        %v6699 = vadd.f32 %v6293, 1.0
        %v6700 = vadd.f32 %v6295, 1.0
        %v6701 = vadd.f32 %v6297, 1.0
        %v6702 = vadd.f32 %v6299, 1.0
        %v6703 = vadd.f32 %v6301, 1.0
        %v6704 = vadd.f32 %v6303, 1.0
        %v6705 = vadd.f32 %v6305, 1.0
        %v6706 = vadd.f32 %v6307, 1.0
        %v6707 = vadd.f32 %v6309, 1.0
        %v6708 = vadd.f32 %v6311, 1.0
        %v6709 = vadd.f32 %v6313, 1.0
        %v6710 = vadd.f32 %v6315, 1.0
        %v6711 = vadd.f32 %v6317, 1.0
        %v6712 = vadd.f32 %v6319, 1.0
        %v6713 = vadd.f32 %v6321, 1.0
        %v6714 = vadd.f32 %v6323, 1.0
        %v6715 = vadd.f32 %v6325, 1.0
        %v6716 = vadd.f32 %v6327, 1.0
        %v6717 = vadd.f32 %v6329, 1.0
        %v6718 = vadd.f32 %v6331, 1.0
        %v6719 = vadd.f32 %v6333, 1.0
        %v6720 = vadd.f32 %v6335, 1.0
        %v6721 = vadd.f32 %v6337, 1.0
        %v6722 = vadd.f32 %v6339, 1.0
        %v6723 = vadd.f32 %v6341, 1.0
        %v6724 = vadd.f32 %v6343, 1.0
        %v6725 = vadd.f32 %v6345, 1.0
        %v6726 = vadd.f32 %v6347, 1.0
        %v6727 = vadd.f32 %v6349, 1.0
        %v6728 = vadd.f32 %v6351, 1.0
        %v6729 = vadd.f32 %v6353, 1.0
        %v6730 = vadd.f32 %v6355, 1.0
        %v6731 = vadd.f32 %v6357, 1.0
        %v6732 = vadd.f32 %v6359, 1.0
        %v6733 = vadd.f32 %v6361, 1.0
        %v6734 = vadd.f32 %v6363, 1.0
        %v6735 = vadd.f32 %v6365, 1.0
        %v6736 = vadd.f32 %v6367, 1.0
        %v6737 = vadd.f32 %v6369, 1.0
        %v6738 = vadd.f32 %v6371, 1.0
        %v6739 = vadd.f32 %v6373, 1.0
        %v6740 = vadd.f32 %v6375, 1.0
        %v6741 = vadd.f32 %v6377, 1.0
        %v6742 = vadd.f32 %v6379, 1.0
        %v6743 = vadd.f32 %v6381, 1.0
        %v6744 = vadd.f32 %v6383, 1.0
        %v6745 = vadd.f32 %v6385, 1.0
        %v6746 = vadd.f32 %v6387, 1.0
        %v6747 = vadd.f32 %v6389, 1.0
        %v6748 = vadd.f32 %v6391, 1.0
        %v6749 = vadd.f32 %v6393, 1.0
        %v6750 = vadd.f32 %v6395, 1.0
        %v6751 = vadd.f32 %v6397, 1.0
        %v6752 = vadd.f32 %v6399, 1.0
        %v6753 = vadd.f32 %v6401, 1.0
        %v6754 = vadd.f32 %v6403, 1.0
        %v6755 = vadd.f32 %v6405, 1.0
        %v6756 = vadd.f32 %v6407, 1.0
        %v6757 = vadd.f32 %v6409, 1.0
        %v6758 = vadd.f32 %v6411, 1.0
        %v6759 = vadd.f32 %v6413, 1.0
        %v6760 = vadd.f32 %v6415, 1.0
        %v6761 = vadd.f32 %v6417, 1.0
        %v6762 = vadd.f32 %v6419, 1.0
        %v6763 = vadd.f32 %v6421, 1.0
        %v6764 = vadd.f32 %v6423, 1.0
        %v6765 = vadd.f32 %v6425, 1.0
        %v6766 = vadd.f32 %v6427, 1.0
        %v6767 = vadd.f32 %v6429, 1.0
        %v6768 = vadd.f32 %v6431, 1.0
        %v6769 = vadd.f32 %v6433, 1.0
        %v6770 = vadd.f32 %v6435, 1.0
        %v6771 = vadd.f32 %v6437, 1.0
        %v6772 = vadd.f32 %v6439, 1.0
        %v6773 = vadd.f32 %v6441, 1.0
        %v6774 = vadd.f32 %v6443, 1.0
        %v6775 = vadd.f32 %v6445, 1.0
        %v6776 = vadd.f32 %v6447, 1.0
        %v6777 = vadd.f32 %v6449, 1.0
        %v6778 = vadd.f32 %v6451, 1.0
        %v6779 = vadd.f32 %v6453, 1.0
        %v6780 = vadd.f32 %v6455, 1.0
        %v6781 = vadd.f32 %v6457, 1.0
        %v6782 = vadd.f32 %v6459, 1.0
        %v6783 = vadd.f32 %v6461, 1.0
        %v6784 = vadd.f32 %v6463, 1.0
        %v6785 = vadd.f32 %v6465, 1.0
        %v6786 = vadd.f32 %v6467, 1.0
        %v6787 = vadd.f32 %v6469, 1.0
        %v6788 = vadd.f32 %v6471, 1.0
        %v6789 = vadd.f32 %v6473, 1.0
        %v6790 = vadd.f32 %v6475, 1.0
        %v6791 = vadd.f32 %v6477, 1.0
        %v6792 = vadd.f32 %v6479, 1.0
        %v6793 = vadd.f32 %v6481, 1.0
        %v6794 = vadd.f32 %v6483, 1.0
        %v6795 = vadd.f32 %v6485, 1.0
        %v6796 = vadd.f32 %v6487, 1.0
        %v6797 = vadd.f32 %v6489, 1.0
        %v6798 = vadd.f32 %v6491, 1.0
        %v6799 = vadd.f32 %v6493, 1.0
        %v6800 = vadd.f32 %v6495, 1.0
        %v6801 = vadd.f32 %v6497, 1.0
        %v6802 = vadd.f32 %v6499, 1.0
        %v6803 = vadd.f32 %v6501, 1.0
        %v6804 = vadd.f32 %v6503, 1.0
        %v6805 = vadd.f32 %v6505, 1.0
        %v6806 = vadd.f32 %v6507, 1.0
        %v6807 = vadd.f32 %v6509, 1.0
        %v6808 = vadd.f32 %v6511, 1.0
        %v6809 = vadd.f32 %v6513, 1.0
        %v6810 = vadd.f32 %v6515, 1.0
        %v6811 = vadd.f32 %v6517, 1.0
        %v6812 = vadd.f32 %v6519, 1.0
        %v6813 = vadd.f32 %v6521, 1.0
        %v6814 = vadd.f32 %v6523, 1.0
        %v6815 = vadd.f32 %v6525, 1.0
        %v6816 = vadd.f32 %v6527, 1.0
        %v6817 = vadd.f32 %v6529, 1.0
        %v6818 = vadd.f32 %v6531, 1.0
        %v6819 = vadd.f32 %v6533, 1.0
        %v6820 = vadd.f32 %v6535, 1.0
        %v6821 = vadd.f32 %v6537, 1.0
        %v6822 = vadd.f32 %v6539, 1.0
        %v6823 = vadd.f32 %v6541, 1.0
        %v6824 = vadd.f32 %v6543, 1.0
        %v6825 = vadd.f32 %v6545, 1.0
        %v6826 = vadd.f32 %v6547, 1.0
        %v6827 = vadd.f32 %v6549, 1.0
        %v6828 = vadd.f32 %v6551, 1.0
        %v6829 = vadd.f32 %v6553, 1.0
        %v6830 = vadd.f32 %v6555, 1.0
        %v6831 = vadd.f32 %v6557, 1.0
        %v6832 = vadd.f32 %v6559, 1.0
        %v6833 = vadd.f32 %v6561, 1.0
        %v6834 = vadd.f32 %v6563, 1.0
        %v6835 = vadd.f32 %v6565, 1.0
        %v6836 = vadd.f32 %v6567, 1.0
        %v6837 = vadd.f32 %v6569, 1.0
        %v6838 = vadd.f32 %v6571, 1.0
        %v6839 = vadd.f32 %v6573, 1.0
        %v6840 = vadd.f32 %v6575, 1.0
        %v6841 = vadd.f32 %v6577, 1.0
        %v6842 = vadd.f32 %v6579, 1.0
        %v6843 = vadd.f32 %v6581, 1.0
        %v6844 = vadd.f32 %v6583, 1.0
        %v6845 = vadd.f32 %v6585, 1.0
        %v6846 = vadd.f32 %v6587, 1.0
        %v6847 = vadd.f32 %v6589, 1.0
        %v6848 = vadd.f32 %v6591, 1.0
        %v6849 = vadd.f32 %v6593, 1.0
        %v6850 = vadd.f32 %v6595, 1.0
        %v6851 = vadd.f32 %v6597, 1.0
        %v6852 = vadd.f32 %v6599, 1.0
        %v6853 = vadd.f32 %v6601, 1.0
        %v6854 = vadd.f32 %v6603, 1.0
        %v6855 = vadd.f32 %v6605, 1.0
        %v6856 = vadd.f32 %v6607, 1.0
        %v6857 = vadd.f32 %v6609, 1.0
        %v6858 = vadd.f32 %v6611, 1.0
        %v6859 = vadd.f32 %v6613, 1.0
        %v6860 = vadd.f32 %v6615, 1.0
        %v6861 = vadd.f32 %v6617, 1.0
        %v6862 = vadd.f32 %v6619, 1.0
        %v6863 = vadd.f32 %v6621, 1.0
        %v6864 = vadd.f32 %v6623, 1.0
        %v6865 = vadd.f32 %v6625, 1.0
        %v6866 = vadd.f32 %v6627, 1.0
        %v6867 = vadd.f32 %v6629, 1.0
        %v6868 = vadd.f32 %v6631, 1.0
        %v6869 = vadd.f32 %v6633, 1.0
        %v6870 = vadd.f32 %v6635, 1.0
        %v6871 = vadd.f32 %v6637, 1.0
        %v6872 = vadd.f32 %v6639, 1.0
        %v6873 = vadd.f32 %v6641, 1.0
        %v6874 = vadd.f32 %v6643, 1.0
        %v6875 = vadd.f32 %v6645, 1.0
        %v6876 = vadd.f32 %v6647, 1.0
        %v6877 = vadd.f32 %v6649, 1.0
        %v6878 = vadd.f32 %v6651, 1.0
        %v6879 = vadd.f32 %v6653, 1.0
        %v6880 = vadd.f32 %v6655, 1.0
        %v6881 = vadd.f32 %v6657, 1.0
        %v6882 = vrcp.pop %v6658
        %v6883 = vrcp.pop %v6659
        %v6884 = vrcp.pop %v6660
        %v6885 = vrcp.pop %v6661
        %v6886 = vrcp.pop %v6662
        %v6887 = vrcp.pop %v6663
        %v6888 = vrcp.pop %v6664
        %v6889 = vrcp.pop %v6665
        %v6890 = vrcp.pop %v6666
        %v6891 = vrcp.pop %v6667
        %v6892 = vrcp.pop %v6668
        %v6893 = vrcp.pop %v6669
        %v6894 = vrcp.pop %v6670
        %v6895 = vrcp.pop %v6671
        %v6896 = vrcp.pop %v6672
        %v6897 = vrcp.pop %v6673
        %v6898 = vrcp.pop %v6674
        %v6899 = vrcp.pop %v6675
        %v6900 = vrcp.pop %v6676
        %v6901 = vrcp.pop %v6677
        %v6902 = vrcp.pop %v6678
        %v6903 = vrcp.pop %v6679
        %v6904 = vrcp.pop %v6680
        %v6905 = vrcp.pop %v6681
        %v6906 = vrcp.pop %v6682
        %v6907 = vrcp.pop %v6683
        %v6908 = vrcp.pop %v6684
        %v6909 = vrcp.pop %v6685
        %v6910 = vrcp.pop %v6686
        %v6911 = vrcp.pop %v6687
        %v6912 = vrcp.pop %v6688
        %v6913 = vrcp.pop %v6689
        %v6914 = vrcp.pop %v6690
        %v6915 = vrcp.pop %v6691
        %v6916 = vrcp.pop %v6692
        %v6917 = vrcp.pop %v6693
        %v6918 = vrcp.pop %v6694
        %v6919 = vrcp.pop %v6695
        %v6920 = vrcp.pop %v6696
        %v6921 = vrcp.pop %v6697
        %v6922 = vrcp.pop %v6698
        %v6923 = vrcp.pop %v6699
        %v6924 = vrcp.pop %v6700
        %v6925 = vrcp.pop %v6701
        %v6926 = vrcp.pop %v6702
        %v6927 = vrcp.pop %v6703
        %v6928 = vrcp.pop %v6704
        %v6929 = vrcp.pop %v6705
        %v6930 = vrcp.pop %v6706
        %v6931 = vrcp.pop %v6707
        %v6932 = vrcp.pop %v6708
        %v6933 = vrcp.pop %v6709
        %v6934 = vrcp.pop %v6710
        %v6935 = vrcp.pop %v6711
        %v6936 = vrcp.pop %v6712
        %v6937 = vrcp.pop %v6713
        %v6938 = vrcp.pop %v6714
        %v6939 = vrcp.pop %v6715
        %v6940 = vrcp.pop %v6716
        %v6941 = vrcp.pop %v6717
        %v6942 = vrcp.pop %v6718
        %v6943 = vrcp.pop %v6719
        %v6944 = vrcp.pop %v6720
        %v6945 = vrcp.pop %v6721
        %v6946 = vrcp.pop %v6722
        %v6947 = vrcp.pop %v6723
        %v6948 = vrcp.pop %v6724
        %v6949 = vrcp.pop %v6725
        %v6950 = vrcp.pop %v6726
        %v6951 = vrcp.pop %v6727
        %v6952 = vrcp.pop %v6728
        %v6953 = vrcp.pop %v6729
        %v6954 = vrcp.pop %v6730
        %v6955 = vrcp.pop %v6731
        %v6956 = vrcp.pop %v6732
        %v6957 = vrcp.pop %v6733
        %v6958 = vrcp.pop %v6734
        %v6959 = vrcp.pop %v6735
        %v6960 = vrcp.pop %v6736
        %v6961 = vrcp.pop %v6737
        %v6962 = vrcp.pop %v6738
        %v6963 = vrcp.pop %v6739
        %v6964 = vrcp.pop %v6740
        %v6965 = vrcp.pop %v6741
        %v6966 = vrcp.pop %v6742
        %v6967 = vrcp.pop %v6743
        %v6968 = vrcp.pop %v6744
        %v6969 = vrcp.pop %v6745
        %v6970 = vrcp.pop %v6746
        %v6971 = vrcp.pop %v6747
        %v6972 = vrcp.pop %v6748
        %v6973 = vrcp.pop %v6749
        %v6974 = vrcp.pop %v6750
        %v6975 = vrcp.pop %v6751
        %v6976 = vrcp.pop %v6752
        %v6977 = vrcp.pop %v6753
        %v6978 = vrcp.pop %v6754
        %v6979 = vrcp.pop %v6755
        %v6980 = vrcp.pop %v6756
        %v6981 = vrcp.pop %v6757
        %v6982 = vrcp.pop %v6758
        %v6983 = vrcp.pop %v6759
        %v6984 = vrcp.pop %v6760
        %v6985 = vrcp.pop %v6761
        %v6986 = vrcp.pop %v6762
        %v6987 = vrcp.pop %v6763
        %v6988 = vrcp.pop %v6764
        %v6989 = vrcp.pop %v6765
        %v6990 = vrcp.pop %v6766
        %v6991 = vrcp.pop %v6767
        %v6992 = vrcp.pop %v6768
        %v6993 = vrcp.pop %v6769
        %v6994 = vrcp.pop %v6770
        %v6995 = vrcp.pop %v6771
        %v6996 = vrcp.pop %v6772
        %v6997 = vrcp.pop %v6773
        %v6998 = vrcp.pop %v6774
        %v6999 = vrcp.pop %v6775
        %v7000 = vrcp.pop %v6776
        %v7001 = vrcp.pop %v6777
        %v7002 = vrcp.pop %v6778
        %v7003 = vrcp.pop %v6779
        %v7004 = vrcp.pop %v6780
        %v7005 = vrcp.pop %v6781
        %v7006 = vrcp.pop %v6782
        %v7007 = vrcp.pop %v6783
        %v7008 = vrcp.pop %v6784
        %v7009 = vrcp.pop %v6785
        %v7010 = vrcp.pop %v6786
        %v7011 = vrcp.pop %v6787
        %v7012 = vrcp.pop %v6788
        %v7013 = vrcp.pop %v6789
        %v7014 = vrcp.pop %v6790
        %v7015 = vrcp.pop %v6791
        %v7016 = vrcp.pop %v6792
        %v7017 = vrcp.pop %v6793
        %v7018 = vrcp.pop %v6794
        %v7019 = vrcp.pop %v6795
        %v7020 = vrcp.pop %v6796
        %v7021 = vrcp.pop %v6797
        %v7022 = vrcp.pop %v6798
        %v7023 = vrcp.pop %v6799
        %v7024 = vrcp.pop %v6800
        %v7025 = vrcp.pop %v6801
        %v7026 = vrcp.pop %v6802
        %v7027 = vrcp.pop %v6803
        %v7028 = vrcp.pop %v6804
        %v7029 = vrcp.pop %v6805
        %v7030 = vrcp.pop %v6806
        %v7031 = vrcp.pop %v6807
        %v7032 = vrcp.pop %v6808
        %v7033 = vrcp.pop %v6809
        %v7034 = vrcp.pop %v6810
        %v7035 = vrcp.pop %v6811
        %v7036 = vrcp.pop %v6812
        %v7037 = vrcp.pop %v6813
        %v7038 = vrcp.pop %v6814
        %v7039 = vrcp.pop %v6815
        %v7040 = vrcp.pop %v6816
        %v7041 = vrcp.pop %v6817
        %v7042 = vrcp.pop %v6818
        %v7043 = vrcp.pop %v6819
        %v7044 = vrcp.pop %v6820
        %v7045 = vrcp.pop %v6821
        %v7046 = vrcp.pop %v6822
        %v7047 = vrcp.pop %v6823
        %v7048 = vrcp.pop %v6824
        %v7049 = vrcp.pop %v6825
        %v7050 = vrcp.pop %v6826
        %v7051 = vrcp.pop %v6827
        %v7052 = vrcp.pop %v6828
        %v7053 = vrcp.pop %v6829
        %v7054 = vrcp.pop %v6830
        %v7055 = vrcp.pop %v6831
        %v7056 = vrcp.pop %v6832
        %v7057 = vrcp.pop %v6833
        %v7058 = vrcp.pop %v6834
        %v7059 = vrcp.pop %v6835
        %v7060 = vrcp.pop %v6836
        %v7061 = vrcp.pop %v6837
        %v7062 = vrcp.pop %v6838
        %v7063 = vrcp.pop %v6839
        %v7064 = vrcp.pop %v6840
        %v7065 = vrcp.pop %v6841
        %v7066 = vrcp.pop %v6842
        %v7067 = vrcp.pop %v6843
        %v7068 = vrcp.pop %v6844
        %v7069 = vrcp.pop %v6845
        %v7070 = vrcp.pop %v6846
        %v7071 = vrcp.pop %v6847
        %v7072 = vrcp.pop %v6848
        %v7073 = vrcp.pop %v6849
        %v7074 = vrcp.pop %v6850
        %v7075 = vrcp.pop %v6851
        %v7076 = vrcp.pop %v6852
        %v7077 = vrcp.pop %v6853
        %v7078 = vrcp.pop %v6854
        %v7079 = vrcp.pop %v6855
        %v7080 = vrcp.pop %v6856
        %v7081 = vrcp.pop %v6857
        %v7082 = vrcp.pop %v6858
        %v7083 = vrcp.pop %v6859
        %v7084 = vrcp.pop %v6860
        %v7085 = vrcp.pop %v6861
        %v7086 = vrcp.pop %v6862
        %v7087 = vrcp.pop %v6863
        %v7088 = vrcp.pop %v6864
        %v7089 = vrcp.pop %v6865
        %v7090 = vrcp.pop %v6866
        %v7091 = vrcp.pop %v6867
        %v7092 = vrcp.pop %v6868
        %v7093 = vrcp.pop %v6869
        %v7094 = vrcp.pop %v6870
        %v7095 = vrcp.pop %v6871
        %v7096 = vrcp.pop %v6872
        %v7097 = vrcp.pop %v6873
        %v7098 = vrcp.pop %v6874
        %v7099 = vrcp.pop %v6875
        %v7100 = vrcp.pop %v6876
        %v7101 = vrcp.pop %v6877
        %v7102 = vrcp.pop %v6878
        %v7103 = vrcp.pop %v6879
        %v7104 = vrcp.pop %v6880
        %v7105 = vrcp.pop %v6881
        %v7106 = vpack.c.bf16 %v6889, %v6882
        %v7107 = vpack.c.bf16 %v6890, %v6883
        %v7108 = vpack.c.bf16 %v6891, %v6884
        %v7109 = vpack.c.bf16 %v6892, %v6885
        %v7110 = vpack.c.bf16 %v6893, %v6886
        %v7111 = vpack.c.bf16 %v6894, %v6887
        %v7112 = vpack.c.bf16 %v6895, %v6888
        %v7113 = vpack.c.bf16 %v6903, %v6896
        %v7114 = vpack.c.bf16 %v6904, %v6897
        %v7115 = vpack.c.bf16 %v6905, %v6898
        %v7116 = vpack.c.bf16 %v6906, %v6899
        %v7117 = vpack.c.bf16 %v6907, %v6900
        %v7118 = vpack.c.bf16 %v6908, %v6901
        %v7119 = vpack.c.bf16 %v6909, %v6902
        %v7120 = vpack.c.bf16 %v6917, %v6910
        %v7121 = vpack.c.bf16 %v6918, %v6911
        %v7122 = vpack.c.bf16 %v6919, %v6912
        %v7123 = vpack.c.bf16 %v6920, %v6913
        %v7124 = vpack.c.bf16 %v6921, %v6914
        %v7125 = vpack.c.bf16 %v6922, %v6915
        %v7126 = vpack.c.bf16 %v6923, %v6916
        %v7127 = vpack.c.bf16 %v6931, %v6924
        %v7128 = vpack.c.bf16 %v6932, %v6925
        %v7129 = vpack.c.bf16 %v6933, %v6926
        %v7130 = vpack.c.bf16 %v6934, %v6927
        %v7131 = vpack.c.bf16 %v6935, %v6928
        %v7132 = vpack.c.bf16 %v6936, %v6929
        %v7133 = vpack.c.bf16 %v6937, %v6930
        %v7134 = vpack.c.bf16 %v6945, %v6938
        %v7135 = vpack.c.bf16 %v6946, %v6939
        %v7136 = vpack.c.bf16 %v6947, %v6940
        %v7137 = vpack.c.bf16 %v6948, %v6941
        %v7138 = vpack.c.bf16 %v6949, %v6942
        %v7139 = vpack.c.bf16 %v6950, %v6943
        %v7140 = vpack.c.bf16 %v6951, %v6944
        %v7141 = vpack.c.bf16 %v6959, %v6952
        %v7142 = vpack.c.bf16 %v6960, %v6953
        %v7143 = vpack.c.bf16 %v6961, %v6954
        %v7144 = vpack.c.bf16 %v6962, %v6955
        %v7145 = vpack.c.bf16 %v6963, %v6956
        %v7146 = vpack.c.bf16 %v6964, %v6957
        %v7147 = vpack.c.bf16 %v6965, %v6958
        %v7148 = vpack.c.bf16 %v6973, %v6966
        %v7149 = vpack.c.bf16 %v6974, %v6967
        %v7150 = vpack.c.bf16 %v6975, %v6968
        %v7151 = vpack.c.bf16 %v6976, %v6969
        %v7152 = vpack.c.bf16 %v6977, %v6970
        %v7153 = vpack.c.bf16 %v6978, %v6971
        %v7154 = vpack.c.bf16 %v6979, %v6972
        %v7155 = vpack.c.bf16 %v6987, %v6980
        %v7156 = vpack.c.bf16 %v6988, %v6981
        %v7157 = vpack.c.bf16 %v6989, %v6982
        %v7158 = vpack.c.bf16 %v6990, %v6983
        %v7159 = vpack.c.bf16 %v6991, %v6984
        %v7160 = vpack.c.bf16 %v6992, %v6985
        %v7161 = vpack.c.bf16 %v6993, %v6986
        %v7162 = vpack.c.bf16 %v7001, %v6994
        %v7163 = vpack.c.bf16 %v7002, %v6995
        %v7164 = vpack.c.bf16 %v7003, %v6996
        %v7165 = vpack.c.bf16 %v7004, %v6997
        %v7166 = vpack.c.bf16 %v7005, %v6998
        %v7167 = vpack.c.bf16 %v7006, %v6999
        %v7168 = vpack.c.bf16 %v7007, %v7000
        %v7169 = vpack.c.bf16 %v7015, %v7008
        %v7170 = vpack.c.bf16 %v7016, %v7009
        %v7171 = vpack.c.bf16 %v7017, %v7010
        %v7172 = vpack.c.bf16 %v7018, %v7011
        %v7173 = vpack.c.bf16 %v7019, %v7012
        %v7174 = vpack.c.bf16 %v7020, %v7013
        %v7175 = vpack.c.bf16 %v7021, %v7014
        %v7176 = vpack.c.bf16 %v7029, %v7022
        %v7177 = vpack.c.bf16 %v7030, %v7023
        %v7178 = vpack.c.bf16 %v7031, %v7024
        %v7179 = vpack.c.bf16 %v7032, %v7025
        %v7180 = vpack.c.bf16 %v7033, %v7026
        %v7181 = vpack.c.bf16 %v7034, %v7027
        %v7182 = vpack.c.bf16 %v7035, %v7028
        %v7183 = vpack.c.bf16 %v7043, %v7036
        %v7184 = vpack.c.bf16 %v7044, %v7037
        %v7185 = vpack.c.bf16 %v7045, %v7038
        %v7186 = vpack.c.bf16 %v7046, %v7039
        %v7187 = vpack.c.bf16 %v7047, %v7040
        %v7188 = vpack.c.bf16 %v7048, %v7041
        %v7189 = vpack.c.bf16 %v7049, %v7042
        %v7190 = vpack.c.bf16 %v7057, %v7050
        %v7191 = vpack.c.bf16 %v7058, %v7051
        %v7192 = vpack.c.bf16 %v7059, %v7052
        %v7193 = vpack.c.bf16 %v7060, %v7053
        %v7194 = vpack.c.bf16 %v7061, %v7054
        %v7195 = vpack.c.bf16 %v7062, %v7055
        %v7196 = vpack.c.bf16 %v7063, %v7056
        %v7197 = vpack.c.bf16 %v7071, %v7064
        %v7198 = vpack.c.bf16 %v7072, %v7065
        %v7199 = vpack.c.bf16 %v7073, %v7066
        %v7200 = vpack.c.bf16 %v7074, %v7067
        %v7201 = vpack.c.bf16 %v7075, %v7068
        %v7202 = vpack.c.bf16 %v7076, %v7069
        %v7203 = vpack.c.bf16 %v7077, %v7070
        %v7204 = vpack.c.bf16 %v7085, %v7078
        %v7205 = vpack.c.bf16 %v7086, %v7079
        %v7206 = vpack.c.bf16 %v7087, %v7080
        %v7207 = vpack.c.bf16 %v7088, %v7081
        %v7208 = vpack.c.bf16 %v7089, %v7082
        %v7209 = vpack.c.bf16 %v7090, %v7083
        %v7210 = vpack.c.bf16 %v7091, %v7084
        %v7211 = vpack.c.bf16 %v7099, %v7092
        %v7212 = vpack.c.bf16 %v7100, %v7093
        %v7213 = vpack.c.bf16 %v7101, %v7094
        %v7214 = vpack.c.bf16 %v7102, %v7095
        %v7215 = vpack.c.bf16 %v7103, %v7096
        %v7216 = vpack.c.bf16 %v7104, %v7097
        %v7217 = vpack.c.bf16 %v7105, %v7098
        %v7330 = vunpack.c.l.b16 %v7106
        %v7331 = vunpack.c.l.b16 %v7107
        %v7332 = vunpack.c.l.b16 %v7108
        %v7333 = vunpack.c.l.b16 %v7109
        %v7334 = vunpack.c.l.b16 %v7110
        %v7335 = vunpack.c.l.b16 %v7111
        %v7336 = vunpack.c.l.b16 %v7112
        %v7337 = vunpack.c.h.b16 %v7106
        %v7338 = vunpack.c.h.b16 %v7107
        %v7339 = vunpack.c.h.b16 %v7108
        %v7340 = vunpack.c.h.b16 %v7109
        %v7341 = vunpack.c.h.b16 %v7110
        %v7342 = vunpack.c.h.b16 %v7111
        %v7343 = vunpack.c.h.b16 %v7112
        %v7344 = vunpack.c.l.b16 %v7113
        %v7345 = vunpack.c.l.b16 %v7114
        %v7346 = vunpack.c.l.b16 %v7115
        %v7347 = vunpack.c.l.b16 %v7116
        %v7348 = vunpack.c.l.b16 %v7117
        %v7349 = vunpack.c.l.b16 %v7118
        %v7350 = vunpack.c.l.b16 %v7119
        %v7351 = vunpack.c.h.b16 %v7113
        %v7352 = vunpack.c.h.b16 %v7114
        %v7353 = vunpack.c.h.b16 %v7115
        %v7354 = vunpack.c.h.b16 %v7116
        %v7355 = vunpack.c.h.b16 %v7117
        %v7356 = vunpack.c.h.b16 %v7118
        %v7357 = vunpack.c.h.b16 %v7119
        %v7358 = vunpack.c.l.b16 %v7120
        %v7359 = vunpack.c.l.b16 %v7121
        %v7360 = vunpack.c.l.b16 %v7122
        %v7361 = vunpack.c.l.b16 %v7123
        %v7362 = vunpack.c.l.b16 %v7124
        %v7363 = vunpack.c.l.b16 %v7125
        %v7364 = vunpack.c.l.b16 %v7126
        %v7365 = vunpack.c.h.b16 %v7120
        %v7366 = vunpack.c.h.b16 %v7121
        %v7367 = vunpack.c.h.b16 %v7122
        %v7368 = vunpack.c.h.b16 %v7123
        %v7369 = vunpack.c.h.b16 %v7124
        %v7370 = vunpack.c.h.b16 %v7125
        %v7371 = vunpack.c.h.b16 %v7126
        %v7372 = vunpack.c.l.b16 %v7127
        %v7373 = vunpack.c.l.b16 %v7128
        %v7374 = vunpack.c.l.b16 %v7129
        %v7375 = vunpack.c.l.b16 %v7130
        %v7376 = vunpack.c.l.b16 %v7131
        %v7377 = vunpack.c.l.b16 %v7132
        %v7378 = vunpack.c.l.b16 %v7133
        %v7379 = vunpack.c.h.b16 %v7127
        %v7380 = vunpack.c.h.b16 %v7128
        %v7381 = vunpack.c.h.b16 %v7129
        %v7382 = vunpack.c.h.b16 %v7130
        %v7383 = vunpack.c.h.b16 %v7131
        %v7384 = vunpack.c.h.b16 %v7132
        %v7385 = vunpack.c.h.b16 %v7133
        %v7386 = vunpack.c.l.b16 %v7134
        %v7387 = vunpack.c.l.b16 %v7135
        %v7388 = vunpack.c.l.b16 %v7136
        %v7389 = vunpack.c.l.b16 %v7137
        %v7390 = vunpack.c.l.b16 %v7138
        %v7391 = vunpack.c.l.b16 %v7139
        %v7392 = vunpack.c.l.b16 %v7140
        %v7393 = vunpack.c.h.b16 %v7134
        %v7394 = vunpack.c.h.b16 %v7135
        %v7395 = vunpack.c.h.b16 %v7136
        %v7396 = vunpack.c.h.b16 %v7137
        %v7397 = vunpack.c.h.b16 %v7138
        %v7398 = vunpack.c.h.b16 %v7139
        %v7399 = vunpack.c.h.b16 %v7140
        %v7400 = vunpack.c.l.b16 %v7141
        %v7401 = vunpack.c.l.b16 %v7142
        %v7402 = vunpack.c.l.b16 %v7143
        %v7403 = vunpack.c.l.b16 %v7144
        %v7404 = vunpack.c.l.b16 %v7145
        %v7405 = vunpack.c.l.b16 %v7146
        %v7406 = vunpack.c.l.b16 %v7147
        %v7407 = vunpack.c.h.b16 %v7141
        %v7408 = vunpack.c.h.b16 %v7142
        %v7409 = vunpack.c.h.b16 %v7143
        %v7410 = vunpack.c.h.b16 %v7144
        %v7411 = vunpack.c.h.b16 %v7145
        %v7412 = vunpack.c.h.b16 %v7146
        %v7413 = vunpack.c.h.b16 %v7147
        %v7414 = vunpack.c.l.b16 %v7148
        %v7415 = vunpack.c.l.b16 %v7149
        %v7416 = vunpack.c.l.b16 %v7150
        %v7417 = vunpack.c.l.b16 %v7151
        %v7418 = vunpack.c.l.b16 %v7152
        %v7419 = vunpack.c.l.b16 %v7153
        %v7420 = vunpack.c.l.b16 %v7154
        %v7421 = vunpack.c.h.b16 %v7148
        %v7422 = vunpack.c.h.b16 %v7149
        %v7423 = vunpack.c.h.b16 %v7150
        %v7424 = vunpack.c.h.b16 %v7151
        %v7425 = vunpack.c.h.b16 %v7152
        %v7426 = vunpack.c.h.b16 %v7153
        %v7427 = vunpack.c.h.b16 %v7154
        %v7428 = vunpack.c.l.b16 %v7155
        %v7429 = vunpack.c.l.b16 %v7156
        %v7430 = vunpack.c.l.b16 %v7157
        %v7431 = vunpack.c.l.b16 %v7158
        %v7432 = vunpack.c.l.b16 %v7159
        %v7433 = vunpack.c.l.b16 %v7160
        %v7434 = vunpack.c.l.b16 %v7161
        %v7435 = vunpack.c.h.b16 %v7155
        %v7436 = vunpack.c.h.b16 %v7156
        %v7437 = vunpack.c.h.b16 %v7157
        %v7438 = vunpack.c.h.b16 %v7158
        %v7439 = vunpack.c.h.b16 %v7159
        %v7440 = vunpack.c.h.b16 %v7160
        %v7441 = vunpack.c.h.b16 %v7161
        %v7442 = vunpack.c.l.b16 %v7162
        %v7443 = vunpack.c.l.b16 %v7163
        %v7444 = vunpack.c.l.b16 %v7164
        %v7445 = vunpack.c.l.b16 %v7165
        %v7446 = vunpack.c.l.b16 %v7166
        %v7447 = vunpack.c.l.b16 %v7167
        %v7448 = vunpack.c.l.b16 %v7168
        %v7449 = vunpack.c.h.b16 %v7162
        %v7450 = vunpack.c.h.b16 %v7163
        %v7451 = vunpack.c.h.b16 %v7164
        %v7452 = vunpack.c.h.b16 %v7165
        %v7453 = vunpack.c.h.b16 %v7166
        %v7454 = vunpack.c.h.b16 %v7167
        %v7455 = vunpack.c.h.b16 %v7168
        %v7456 = vunpack.c.l.b16 %v7169
        %v7457 = vunpack.c.l.b16 %v7170
        %v7458 = vunpack.c.l.b16 %v7171
        %v7459 = vunpack.c.l.b16 %v7172
        %v7460 = vunpack.c.l.b16 %v7173
        %v7461 = vunpack.c.l.b16 %v7174
        %v7462 = vunpack.c.l.b16 %v7175
        %v7463 = vunpack.c.h.b16 %v7169
        %v7464 = vunpack.c.h.b16 %v7170
        %v7465 = vunpack.c.h.b16 %v7171
        %v7466 = vunpack.c.h.b16 %v7172
        %v7467 = vunpack.c.h.b16 %v7173
        %v7468 = vunpack.c.h.b16 %v7174
        %v7469 = vunpack.c.h.b16 %v7175
        %v7470 = vunpack.c.l.b16 %v7176
        %v7471 = vunpack.c.l.b16 %v7177
        %v7472 = vunpack.c.l.b16 %v7178
        %v7473 = vunpack.c.l.b16 %v7179
        %v7474 = vunpack.c.l.b16 %v7180
        %v7475 = vunpack.c.l.b16 %v7181
        %v7476 = vunpack.c.l.b16 %v7182
        %v7477 = vunpack.c.h.b16 %v7176
        %v7478 = vunpack.c.h.b16 %v7177
        %v7479 = vunpack.c.h.b16 %v7178
        %v7480 = vunpack.c.h.b16 %v7179
        %v7481 = vunpack.c.h.b16 %v7180
        %v7482 = vunpack.c.h.b16 %v7181
        %v7483 = vunpack.c.h.b16 %v7182
        %v7484 = vunpack.c.l.b16 %v7183
        %v7485 = vunpack.c.l.b16 %v7184
        %v7486 = vunpack.c.l.b16 %v7185
        %v7487 = vunpack.c.l.b16 %v7186
        %v7488 = vunpack.c.l.b16 %v7187
        %v7489 = vunpack.c.l.b16 %v7188
        %v7490 = vunpack.c.l.b16 %v7189
        %v7491 = vunpack.c.h.b16 %v7183
        %v7492 = vunpack.c.h.b16 %v7184
        %v7493 = vunpack.c.h.b16 %v7185
        %v7494 = vunpack.c.h.b16 %v7186
        %v7495 = vunpack.c.h.b16 %v7187
        %v7496 = vunpack.c.h.b16 %v7188
        %v7497 = vunpack.c.h.b16 %v7189
        %v7498 = vunpack.c.l.b16 %v7190
        %v7499 = vunpack.c.l.b16 %v7191
        %v7500 = vunpack.c.l.b16 %v7192
        %v7501 = vunpack.c.l.b16 %v7193
        %v7502 = vunpack.c.l.b16 %v7194
        %v7503 = vunpack.c.l.b16 %v7195
        %v7504 = vunpack.c.l.b16 %v7196
        %v7505 = vunpack.c.h.b16 %v7190
        %v7506 = vunpack.c.h.b16 %v7191
        %v7507 = vunpack.c.h.b16 %v7192
        %v7508 = vunpack.c.h.b16 %v7193
        %v7509 = vunpack.c.h.b16 %v7194
        %v7510 = vunpack.c.h.b16 %v7195
        %v7511 = vunpack.c.h.b16 %v7196
        %v7512 = vunpack.c.l.b16 %v7197
        %v7513 = vunpack.c.l.b16 %v7198
        %v7514 = vunpack.c.l.b16 %v7199
        %v7515 = vunpack.c.l.b16 %v7200
        %v7516 = vunpack.c.l.b16 %v7201
        %v7517 = vunpack.c.l.b16 %v7202
        %v7518 = vunpack.c.l.b16 %v7203
        %v7519 = vunpack.c.h.b16 %v7197
        %v7520 = vunpack.c.h.b16 %v7198
        %v7521 = vunpack.c.h.b16 %v7199
        %v7522 = vunpack.c.h.b16 %v7200
        %v7523 = vunpack.c.h.b16 %v7201
        %v7524 = vunpack.c.h.b16 %v7202
        %v7525 = vunpack.c.h.b16 %v7203
        %v7526 = vunpack.c.l.b16 %v7204
        %v7527 = vunpack.c.l.b16 %v7205
        %v7528 = vunpack.c.l.b16 %v7206
        %v7529 = vunpack.c.l.b16 %v7207
        %v7530 = vunpack.c.l.b16 %v7208
        %v7531 = vunpack.c.l.b16 %v7209
        %v7532 = vunpack.c.l.b16 %v7210
        %v7533 = vunpack.c.h.b16 %v7204
        %v7534 = vunpack.c.h.b16 %v7205
        %v7535 = vunpack.c.h.b16 %v7206
        %v7536 = vunpack.c.h.b16 %v7207
        %v7537 = vunpack.c.h.b16 %v7208
        %v7538 = vunpack.c.h.b16 %v7209
        %v7539 = vunpack.c.h.b16 %v7210
        %v7540 = vunpack.c.l.b16 %v7211
        %v7541 = vunpack.c.l.b16 %v7212
        %v7542 = vunpack.c.l.b16 %v7213
        %v7543 = vunpack.c.l.b16 %v7214
        %v7544 = vunpack.c.l.b16 %v7215
        %v7545 = vunpack.c.l.b16 %v7216
        %v7546 = vunpack.c.l.b16 %v7217
        %v7547 = vunpack.c.h.b16 %v7211
        %v7548 = vunpack.c.h.b16 %v7212
        %v7549 = vunpack.c.h.b16 %v7213
        %v7550 = vunpack.c.h.b16 %v7214
        %v7551 = vunpack.c.h.b16 %v7215
        %v7552 = vunpack.c.h.b16 %v7216
        %v7553 = vunpack.c.h.b16 %v7217
        %v7554 = vpack.c.b16 %v7331, %v7330
        %v7555 = vpack.c.b16 %v7333, %v7332
        %v7556 = vpack.c.b16 %v7335, %v7334
        %v7557 = vpack.c.b16 %v7336, %v7336
        %v7558 = vpack.c.b16 %v7338, %v7337
        %v7559 = vpack.c.b16 %v7340, %v7339
        %v7560 = vpack.c.b16 %v7342, %v7341
        %v7561 = vpack.c.b16 %v7343, %v7343
        %v7562 = vpack.c.b16 %v7345, %v7344
        %v7563 = vpack.c.b16 %v7347, %v7346
        %v7564 = vpack.c.b16 %v7349, %v7348
        %v7565 = vpack.c.b16 %v7350, %v7350
        %v7566 = vpack.c.b16 %v7352, %v7351
        %v7567 = vpack.c.b16 %v7354, %v7353
        %v7568 = vpack.c.b16 %v7356, %v7355
        %v7569 = vpack.c.b16 %v7357, %v7357
        %v7570 = vpack.c.b16 %v7359, %v7358
        %v7571 = vpack.c.b16 %v7361, %v7360
        %v7572 = vpack.c.b16 %v7363, %v7362
        %v7573 = vpack.c.b16 %v7364, %v7364
        %v7574 = vpack.c.b16 %v7366, %v7365
        %v7575 = vpack.c.b16 %v7368, %v7367
        %v7576 = vpack.c.b16 %v7370, %v7369
        %v7577 = vpack.c.b16 %v7371, %v7371
        %v7578 = vpack.c.b16 %v7373, %v7372
        %v7579 = vpack.c.b16 %v7375, %v7374
        %v7580 = vpack.c.b16 %v7377, %v7376
        %v7581 = vpack.c.b16 %v7378, %v7378
        %v7582 = vpack.c.b16 %v7380, %v7379
        %v7583 = vpack.c.b16 %v7382, %v7381
        %v7584 = vpack.c.b16 %v7384, %v7383
        %v7585 = vpack.c.b16 %v7385, %v7385
        %v7586 = vpack.c.b16 %v7387, %v7386
        %v7587 = vpack.c.b16 %v7389, %v7388
        %v7588 = vpack.c.b16 %v7391, %v7390
        %v7589 = vpack.c.b16 %v7392, %v7392
        %v7590 = vpack.c.b16 %v7394, %v7393
        %v7591 = vpack.c.b16 %v7396, %v7395
        %v7592 = vpack.c.b16 %v7398, %v7397
        %v7593 = vpack.c.b16 %v7399, %v7399
        %v7594 = vpack.c.b16 %v7401, %v7400
        %v7595 = vpack.c.b16 %v7403, %v7402
        %v7596 = vpack.c.b16 %v7405, %v7404
        %v7597 = vpack.c.b16 %v7406, %v7406
        %v7598 = vpack.c.b16 %v7408, %v7407
        %v7599 = vpack.c.b16 %v7410, %v7409
        %v7600 = vpack.c.b16 %v7412, %v7411
        %v7601 = vpack.c.b16 %v7413, %v7413
        %v7602 = vpack.c.b16 %v7415, %v7414
        %v7603 = vpack.c.b16 %v7417, %v7416
        %v7604 = vpack.c.b16 %v7419, %v7418
        %v7605 = vpack.c.b16 %v7420, %v7420
        %v7606 = vpack.c.b16 %v7422, %v7421
        %v7607 = vpack.c.b16 %v7424, %v7423
        %v7608 = vpack.c.b16 %v7426, %v7425
        %v7609 = vpack.c.b16 %v7427, %v7427
        %v7610 = vpack.c.b16 %v7429, %v7428
        %v7611 = vpack.c.b16 %v7431, %v7430
        %v7612 = vpack.c.b16 %v7433, %v7432
        %v7613 = vpack.c.b16 %v7434, %v7434
        %v7614 = vpack.c.b16 %v7436, %v7435
        %v7615 = vpack.c.b16 %v7438, %v7437
        %v7616 = vpack.c.b16 %v7440, %v7439
        %v7617 = vpack.c.b16 %v7441, %v7441
        %v7618 = vpack.c.b16 %v7443, %v7442
        %v7619 = vpack.c.b16 %v7445, %v7444
        %v7620 = vpack.c.b16 %v7447, %v7446
        %v7621 = vpack.c.b16 %v7448, %v7448
        %v7622 = vpack.c.b16 %v7450, %v7449
        %v7623 = vpack.c.b16 %v7452, %v7451
        %v7624 = vpack.c.b16 %v7454, %v7453
        %v7625 = vpack.c.b16 %v7455, %v7455
        %v7626 = vpack.c.b16 %v7457, %v7456
        %v7627 = vpack.c.b16 %v7459, %v7458
        %v7628 = vpack.c.b16 %v7461, %v7460
        %v7629 = vpack.c.b16 %v7462, %v7462
        %v7630 = vpack.c.b16 %v7464, %v7463
        %v7631 = vpack.c.b16 %v7466, %v7465
        %v7632 = vpack.c.b16 %v7468, %v7467
        %v7633 = vpack.c.b16 %v7469, %v7469
        %v7634 = vpack.c.b16 %v7471, %v7470
        %v7635 = vpack.c.b16 %v7473, %v7472
        %v7636 = vpack.c.b16 %v7475, %v7474
        %v7637 = vpack.c.b16 %v7476, %v7476
        %v7638 = vpack.c.b16 %v7478, %v7477
        %v7639 = vpack.c.b16 %v7480, %v7479
        %v7640 = vpack.c.b16 %v7482, %v7481
        %v7641 = vpack.c.b16 %v7483, %v7483
        %v7642 = vpack.c.b16 %v7485, %v7484
        %v7643 = vpack.c.b16 %v7487, %v7486
        %v7644 = vpack.c.b16 %v7489, %v7488
        %v7645 = vpack.c.b16 %v7490, %v7490
        %v7646 = vpack.c.b16 %v7492, %v7491
        %v7647 = vpack.c.b16 %v7494, %v7493
        %v7648 = vpack.c.b16 %v7496, %v7495
        %v7649 = vpack.c.b16 %v7497, %v7497
        %v7650 = vpack.c.b16 %v7499, %v7498
        %v7651 = vpack.c.b16 %v7501, %v7500
        %v7652 = vpack.c.b16 %v7503, %v7502
        %v7653 = vpack.c.b16 %v7504, %v7504
        %v7654 = vpack.c.b16 %v7506, %v7505
        %v7655 = vpack.c.b16 %v7508, %v7507
        %v7656 = vpack.c.b16 %v7510, %v7509
        %v7657 = vpack.c.b16 %v7511, %v7511
        %v7658 = vpack.c.b16 %v7513, %v7512
        %v7659 = vpack.c.b16 %v7515, %v7514
        %v7660 = vpack.c.b16 %v7517, %v7516
        %v7661 = vpack.c.b16 %v7518, %v7518
        %v7662 = vpack.c.b16 %v7520, %v7519
        %v7663 = vpack.c.b16 %v7522, %v7521
        %v7664 = vpack.c.b16 %v7524, %v7523
        %v7665 = vpack.c.b16 %v7525, %v7525
        %v7666 = vpack.c.b16 %v7527, %v7526
        %v7667 = vpack.c.b16 %v7529, %v7528
        %v7668 = vpack.c.b16 %v7531, %v7530
        %v7669 = vpack.c.b16 %v7532, %v7532
        %v7670 = vpack.c.b16 %v7534, %v7533
        %v7671 = vpack.c.b16 %v7536, %v7535
        %v7672 = vpack.c.b16 %v7538, %v7537
        %v7673 = vpack.c.b16 %v7539, %v7539
        %v7674 = vpack.c.b16 %v7541, %v7540
        %v7675 = vpack.c.b16 %v7543, %v7542
        %v7676 = vpack.c.b16 %v7545, %v7544
        %v7677 = vpack.c.b16 %v7546, %v7546
        %v7678 = vpack.c.b16 %v7548, %v7547
        %v7679 = vpack.c.b16 %v7550, %v7549
        %v7680 = vpack.c.b16 %v7552, %v7551
        %v7681 = vpack.c.b16 %v7553, %v7553
        %7810 = vst [vmem:[%s644] sm:$0xff] %v7554
        %7811 = vst [vmem:[%s644 + $0x8] sm:$0xff] %v7555
        %7812 = vst [vmem:[%s644 + $0x10] sm:$0xff] %v7556
        %7813 = vst [vmem:[%s644 + $0x18] sm:$0xf] %v7557
        %7814 = vst [vmem:[%s644 + $0x1c] sm:$0xff] %v7558
        %7815 = vst [vmem:[%s644 + $0x24] sm:$0xff] %v7559
        %7816 = vst [vmem:[%s644 + $0x2c] sm:$0xff] %v7560
        %7817 = vst [vmem:[%s644 + $0x34] sm:$0xf] %v7561
        %7818 = vst [vmem:[%s644 + $0x38] sm:$0xff] %v7562
        %7819 = vst [vmem:[%s644 + $0x40] sm:$0xff] %v7563
        %7820 = vst [vmem:[%s644 + $0x48] sm:$0xff] %v7564
        %7821 = vst [vmem:[%s644 + $0x50] sm:$0xf] %v7565
        %7822 = vst [vmem:[%s644 + $0x54] sm:$0xff] %v7566
        %7823 = vst [vmem:[%s644 + $0x5c] sm:$0xff] %v7567
        %7824 = vst [vmem:[%s644 + $0x64] sm:$0xff] %v7568
        %7825 = vst [vmem:[%s644 + $0x6c] sm:$0xf] %v7569
        %7826 = vst [vmem:[%s644 + $0x70] sm:$0xff] %v7570
        %7827 = vst [vmem:[%s644 + $0x78] sm:$0xff] %v7571
        %7828 = vst [vmem:[%s644 + $0x80] sm:$0xff] %v7572
        %7829 = vst [vmem:[%s644 + $0x88] sm:$0xf] %v7573
        %7830 = vst [vmem:[%s644 + $0x8c] sm:$0xff] %v7574
        %7831 = vst [vmem:[%s644 + $0x94] sm:$0xff] %v7575
        %7832 = vst [vmem:[%s644 + $0x9c] sm:$0xff] %v7576
        %7833 = vst [vmem:[%s644 + $0xa4] sm:$0xf] %v7577
        %7834 = vst [vmem:[%s644 + $0xa8] sm:$0xff] %v7578
        %7835 = vst [vmem:[%s644 + $0xb0] sm:$0xff] %v7579
        %7836 = vst [vmem:[%s644 + $0xb8] sm:$0xff] %v7580
        %7837 = vst [vmem:[%s644 + $0xc0] sm:$0xf] %v7581
        %7838 = vst [vmem:[%s644 + $0xc4] sm:$0xff] %v7582
        %7839 = vst [vmem:[%s644 + $0xcc] sm:$0xff] %v7583
        %7840 = vst [vmem:[%s644 + $0xd4] sm:$0xff] %v7584
        %7841 = vst [vmem:[%s644 + $0xdc] sm:$0xf] %v7585
        %7842 = vst [vmem:[%s644 + $0xe0] sm:$0xff] %v7586
        %7843 = vst [vmem:[%s644 + $0xe8] sm:$0xff] %v7587
        %7844 = vst [vmem:[%s644 + $0xf0] sm:$0xff] %v7588
        %7845 = vst [vmem:[%s644 + $0xf8] sm:$0xf] %v7589
        %7846 = vst [vmem:[%s644 + $0xfc] sm:$0xff] %v7590
        %7847 = vst [vmem:[%s644 + $0x104] sm:$0xff] %v7591
        %7848 = vst [vmem:[%s644 + $0x10c] sm:$0xff] %v7592
        %7849 = vst [vmem:[%s644 + $0x114] sm:$0xf] %v7593
        %7850 = vst [vmem:[%s644 + $0x118] sm:$0xff] %v7594
        %7851 = vst [vmem:[%s644 + $0x120] sm:$0xff] %v7595
        %7852 = vst [vmem:[%s644 + $0x128] sm:$0xff] %v7596
        %7853 = vst [vmem:[%s644 + $0x130] sm:$0xf] %v7597
        %7854 = vst [vmem:[%s644 + $0x134] sm:$0xff] %v7598
        %7855 = vst [vmem:[%s644 + $0x13c] sm:$0xff] %v7599
        %7856 = vst [vmem:[%s644 + $0x144] sm:$0xff] %v7600
        %7857 = vst [vmem:[%s644 + $0x14c] sm:$0xf] %v7601
        %7858 = vst [vmem:[%s644 + $0x150] sm:$0xff] %v7602
        %7859 = vst [vmem:[%s644 + $0x158] sm:$0xff] %v7603
        %7860 = vst [vmem:[%s644 + $0x160] sm:$0xff] %v7604
        %7861 = vst [vmem:[%s644 + $0x168] sm:$0xf] %v7605
        %7862 = vst [vmem:[%s644 + $0x16c] sm:$0xff] %v7606
        %7863 = vst [vmem:[%s644 + $0x174] sm:$0xff] %v7607
        %7864 = vst [vmem:[%s644 + $0x17c] sm:$0xff] %v7608
        %7865 = vst [vmem:[%s644 + $0x184] sm:$0xf] %v7609
        %7866 = vst [vmem:[%s644 + $0x188] sm:$0xff] %v7610
        %7867 = vst [vmem:[%s644 + $0x190] sm:$0xff] %v7611
        %7868 = vst [vmem:[%s644 + $0x198] sm:$0xff] %v7612
        %7869 = vst [vmem:[%s644 + $0x1a0] sm:$0xf] %v7613
        %7870 = vst [vmem:[%s644 + $0x1a4] sm:$0xff] %v7614
        %7871 = vst [vmem:[%s644 + $0x1ac] sm:$0xff] %v7615
        %7872 = vst [vmem:[%s644 + $0x1b4] sm:$0xff] %v7616
        %7873 = vst [vmem:[%s644 + $0x1bc] sm:$0xf] %v7617
        %7874 = vst [vmem:[%s644 + $0x1c0] sm:$0xff] %v7618
        %7875 = vst [vmem:[%s644 + $0x1c8] sm:$0xff] %v7619
        %7876 = vst [vmem:[%s644 + $0x1d0] sm:$0xff] %v7620
        %7877 = vst [vmem:[%s644 + $0x1d8] sm:$0xf] %v7621
        %7878 = vst [vmem:[%s644 + $0x1dc] sm:$0xff] %v7622
        %7879 = vst [vmem:[%s644 + $0x1e4] sm:$0xff] %v7623
        %7880 = vst [vmem:[%s644 + $0x1ec] sm:$0xff] %v7624
        %7881 = vst [vmem:[%s644 + $0x1f4] sm:$0xf] %v7625
        %7882 = vst [vmem:[%s644 + $0x1f8] sm:$0xff] %v7626
        %7883 = vst [vmem:[%s644 + $0x200] sm:$0xff] %v7627
        %7884 = vst [vmem:[%s644 + $0x208] sm:$0xff] %v7628
        %7885 = vst [vmem:[%s644 + $0x210] sm:$0xf] %v7629
        %7886 = vst [vmem:[%s644 + $0x214] sm:$0xff] %v7630
        %7887 = vst [vmem:[%s644 + $0x21c] sm:$0xff] %v7631
        %7888 = vst [vmem:[%s644 + $0x224] sm:$0xff] %v7632
        %7889 = vst [vmem:[%s644 + $0x22c] sm:$0xf] %v7633
        %7890 = vst [vmem:[%s644 + $0x230] sm:$0xff] %v7634
        %7891 = vst [vmem:[%s644 + $0x238] sm:$0xff] %v7635
        %7892 = vst [vmem:[%s644 + $0x240] sm:$0xff] %v7636
        %7893 = vst [vmem:[%s644 + $0x248] sm:$0xf] %v7637
        %7894 = vst [vmem:[%s644 + $0x24c] sm:$0xff] %v7638
        %7895 = vst [vmem:[%s644 + $0x254] sm:$0xff] %v7639
        %7896 = vst [vmem:[%s644 + $0x25c] sm:$0xff] %v7640
        %7897 = vst [vmem:[%s644 + $0x264] sm:$0xf] %v7641
        %7898 = vst [vmem:[%s644 + $0x268] sm:$0xff] %v7642
        %7899 = vst [vmem:[%s644 + $0x270] sm:$0xff] %v7643
        %7900 = vst [vmem:[%s644 + $0x278] sm:$0xff] %v7644
        %7901 = vst [vmem:[%s644 + $0x280] sm:$0xf] %v7645
        %7902 = vst [vmem:[%s644 + $0x284] sm:$0xff] %v7646
        %7903 = vst [vmem:[%s644 + $0x28c] sm:$0xff] %v7647
        %7904 = vst [vmem:[%s644 + $0x294] sm:$0xff] %v7648
        %7905 = vst [vmem:[%s644 + $0x29c] sm:$0xf] %v7649
        %7906 = vst [vmem:[%s644 + $0x2a0] sm:$0xff] %v7650
        %7907 = vst [vmem:[%s644 + $0x2a8] sm:$0xff] %v7651
        %7908 = vst [vmem:[%s644 + $0x2b0] sm:$0xff] %v7652
        %7909 = vst [vmem:[%s644 + $0x2b8] sm:$0xf] %v7653
        %7910 = vst [vmem:[%s644 + $0x2bc] sm:$0xff] %v7654
        %7911 = vst [vmem:[%s644 + $0x2c4] sm:$0xff] %v7655
        %7912 = vst [vmem:[%s644 + $0x2cc] sm:$0xff] %v7656
        %7913 = vst [vmem:[%s644 + $0x2d4] sm:$0xf] %v7657
        %7914 = vst [vmem:[%s644 + $0x2d8] sm:$0xff] %v7658
        %7915 = vst [vmem:[%s644 + $0x2e0] sm:$0xff] %v7659
        %7916 = vst [vmem:[%s644 + $0x2e8] sm:$0xff] %v7660
        %7917 = vst [vmem:[%s644 + $0x2f0] sm:$0xf] %v7661
        %7918 = vst [vmem:[%s644 + $0x2f4] sm:$0xff] %v7662
        %7919 = vst [vmem:[%s644 + $0x2fc] sm:$0xff] %v7663
        %7920 = vst [vmem:[%s644 + $0x304] sm:$0xff] %v7664
        %7921 = vst [vmem:[%s644 + $0x30c] sm:$0xf] %v7665
        %7922 = vst [vmem:[%s644 + $0x310] sm:$0xff] %v7666
        %7923 = vst [vmem:[%s644 + $0x318] sm:$0xff] %v7667
        %7924 = vst [vmem:[%s644 + $0x320] sm:$0xff] %v7668
        %7925 = vst [vmem:[%s644 + $0x328] sm:$0xf] %v7669
        %7926 = vst [vmem:[%s644 + $0x32c] sm:$0xff] %v7670
        %7927 = vst [vmem:[%s644 + $0x334] sm:$0xff] %v7671
        %7928 = vst [vmem:[%s644 + $0x33c] sm:$0xff] %v7672
        %7929 = vst [vmem:[%s644 + $0x344] sm:$0xf] %v7673
        %7930 = vst [vmem:[%s644 + $0x348] sm:$0xff] %v7674
        %7931 = vst [vmem:[%s644 + $0x350] sm:$0xff] %v7675
        %7932 = vst [vmem:[%s644 + $0x358] sm:$0xff] %v7676
        %7933 = vst [vmem:[%s644 + $0x360] sm:$0xf] %v7677
        %7934 = vst [vmem:[%s644 + $0x364] sm:$0xff] %v7678
        %7935 = vst [vmem:[%s644 + $0x36c] sm:$0xff] %v7679
        %7936 = vst [vmem:[%s644 + $0x374] sm:$0xff] %v7680
        %7937 = vst [vmem:[%s644 + $0x37c] sm:$0xf] %v7681
        %s7938 = sand.u32 %s354, 1
        %s7939 = scalar_lea.sflag [#allocation4], %s7938
        %s7940 = sand.u32 %s354, 1
        %s7941 = smul.addr %s7940, 896
        %s7942 = scalar_lea.vmem [#allocation16], %s7941
        %s7943 = sand.u32 %s380, 1
        %s7944 = scalar_lea.sflag [#allocation18], %s7943
        %s7945 = sand.u32 %s380, 1
        %s7946 = smul.addr %s7945, 256
        %s7947 = scalar_lea.vmem [#allocation17], %s7946
        // Predicated region
        $region109: #{tpu_custom_call.1} parent=75 // pred_check
          %p7948 = pneg %p364
        $region110: #{tpu_custom_call.1} parent=75 // pred_check_branch
          %7950 = sbr.rel (%p7948) target = $region112
        $region111: #{tpu_custom_call.1} parent=75 // pred_region
          %s7951 = smul.u32 32, %s42
          %s7953 = ssub.s32 14336, 14336
          %7954 = vsyncadd %s7939, %s7953
          %s7955 = smul.addr %s7951, 7
          %s7956 = smul.addr %s7955, 64
          %s7957 = scalar_lea.hbm %s14, %s7956
          %s7958 = sshll.u32 %s7942, 4
          %s7959 = int_to_ptr.vmem [resolvable:$true] %s7958
          %7964 = dma.vmem_to_hbm [thread:$0]  %s7959, 14336, %s7957, %s7939, 448, 448, 28
        $region112: #{tpu_custom_call.1} parent=75 // pred_fallthru
          _
        // Predicated region
        $region113: #{tpu_custom_call.1} parent=75 // pred_check
          %p7965 = pneg %p390
        $region114: #{tpu_custom_call.1} parent=75 // pred_check_branch
          %7967 = sbr.rel (%p7965) target = $region116
        $region115: #{tpu_custom_call.1} parent=75 // pred_region
          %s7968 = smul.u32 32, %s42
          %s7970 = ssub.s32 4096, 4096
          %7971 = vsyncadd %s7944, %s7970
          %s7972 = smul.addr %s7968, 128
          %s7973 = scalar_lea.hbm %s15, %s7972
          %s7974 = sshll.u32 %s7947, 4
          %s7975 = int_to_ptr.vmem [resolvable:$true] %s7974
          %7980 = dma.vmem_to_hbm [thread:$0]  %s7975, 4096, %s7973, %s7944, 128, 128, 8
        $region116: #{tpu_custom_call.1} parent=75 // pred_fallthru
          _
      $region76: #{tpu_custom_call.1} parent=5 // pred_fallthru
        _
      %p7981 = scmp.le.s32.totalorder 2, %s37
      // Predicated region
      $region117: #{tpu_custom_call.1} parent=5 // pred_check
        %p7982 = pneg %p7981
      $region118: #{tpu_custom_call.1} parent=5 // pred_check_branch
        %7984 = sbr.rel (%p7982) target = $region120
      $region119: #{tpu_custom_call.1} parent=5 // pred_region
        %s7985 = ssub.s32 %s37, 2
        // Predicated region
        $region121: #{tpu_custom_call.1} parent=119 // pred_check
          %p7986 = pneg %p370
        $region122: #{tpu_custom_call.1} parent=119 // pred_check_branch
          %7988 = sbr.rel (%p7986) target = $region124
        $region123: #{tpu_custom_call.1} parent=119 // pred_region
          %s7989 = sand.u32 %s355, 1
          %s7990 = scalar_lea.sflag [#allocation4], %s7989
          %s7991 = sand.u32 %s355, 1
          %s7992 = smul.addr %s7991, 896
          %s7993 = scalar_lea.vmem [#allocation16], %s7992
          %7994 = dma.done %s7990, 14336
        $region124: #{tpu_custom_call.1} parent=119 // pred_fallthru
          _
        // Predicated region
        $region125: #{tpu_custom_call.1} parent=119 // pred_check
          %p7995 = pneg %p396
        $region126: #{tpu_custom_call.1} parent=119 // pred_check_branch
          %7997 = sbr.rel (%p7995) target = $region128
        $region127: #{tpu_custom_call.1} parent=119 // pred_region
          %s7998 = sand.u32 %s381, 1
          %s7999 = scalar_lea.sflag [#allocation18], %s7998
          %s8000 = sand.u32 %s381, 1
          %s8001 = smul.addr %s8000, 256
          %s8002 = scalar_lea.vmem [#allocation17], %s8001
          %8003 = dma.done %s7999, 4096
        $region128: #{tpu_custom_call.1} parent=119 // pred_fallthru
          _
      $region120: #{tpu_custom_call.1} parent=5 // pred_fallthru
        _
    $region6: #{tpu_custom_call.1} parent=1 // loop_footer
      %s41 = sadd.s32 1, %s37
    $region7: #{tpu_custom_call.1} parent=1 // loop_footer_branch
      %36 = sbr.rel target = $region3
    $region8: #{tpu_custom_call.1} parent=1 // loop_exit
      _
    %8004 = vsyncpa [#allocation3], 1
    %s8005 = scalar_lea.sflag [#allocation3], 1
    %8006 = vsyncpa %s8005, 1
    %8007 = vsyncpa [#allocation6], 1
    %s8008 = scalar_lea.sflag [#allocation6], 1
    %8009 = vsyncpa %s8008, 1
    %8010 = vsyncpa [#allocation9], 1
    %8011 = vsyncpa [#allocation12], 1
    %8012 = vsyncpa [#allocation15], 1
    %8013 = vsyncpa [#allocation4], 1
    %s8014 = scalar_lea.sflag [#allocation4], 1
    %8015 = vsyncpa %s8014, 1
    %8016 = vsyncpa [#allocation18], 1
    %s8017 = scalar_lea.sflag [#allocation18], 1
    %8018 = vsyncpa %s8017, 1

</llo_original>
